<compile_context>
chip_gen: v5e
topology: v5e:2x2
jax: 0.10.0
libtpu: 0.0.40
codegen_flags: <defaults>
</compile_context>

<pallas_src>
import functools

import jax
import jax.numpy as jnp
from jax import lax
from jax.experimental import pallas as pl
from jax.experimental.pallas import tpu as pltpu

K = 4        # conv kernel size (module default)
S = 2        # conv stride (module default)
CPAD = 128   # lane-padded channel width
EPS = 1e-5
SLOPE = 0.2


def _out_dim(d):
    return (d - K) // S + 1


def _bn_lrelu(z, gamma, beta, n_valid, mask=None):
    # z: (R, CPAD) f32 conv output (no bias -- it cancels inside BatchNorm).
    # If mask is None, all invalid rows of z are exactly zero, so plain sums
    # over R rows equal sums over the n_valid valid rows.
    inv = 1.0 / float(n_valid)
    zm = z if mask is None else z * mask
    mean = jnp.sum(zm, axis=0, keepdims=True) * inv
    meansq = jnp.sum(zm * z, axis=0, keepdims=True) * inv
    var = jnp.maximum(meansq - mean * mean, 0.0)
    scale = gamma * lax.rsqrt(var + EPS)
    y = (z - mean) * scale + beta
    return jnp.where(y > 0.0, y, SLOPE * y)      # LeakyReLU(0.2)


def _disc_kernel(p1_ref, w1m_ref, bn1_ref, w2m_ref, bn2_ref, w3c_ref,
                 out_ref,
                 act1_ref, patch2_ref, *,
                 n, h1, h2, w2, P, n_even_h, n_even_w,
                 valid1, valid2, copy_len, act1_rows):
    # ---------------- layer 1: matmul + BN + LeakyReLU -> bf16 scratch ------
    z1 = jnp.dot(p1_ref[...], w1m_ref[...], preferred_element_type=jnp.float32)
    a1 = _bn_lrelu(z1, bn1_ref[0:1, :], bn1_ref[1:2, :], valid1)
    filled = n * h1 * P
    act1_ref[0:filled, :] = a1.astype(jnp.bfloat16)
    if act1_rows > filled:
        # Zero the tail so over-reads below stay finite (never NaN from
        # uninitialized VMEM).
        act1_ref[filled:act1_rows, :] = jnp.zeros(
            (act1_rows - filled, CPAD), jnp.bfloat16)

    # ---------------- layer-2 patch build: n*K*K coarse aligned copies ------
    # act1 rows: b*(h1*P) + h_perm*P + w_perm (h, w even-first permuted,
    # w padded to P).  patch2 rows: b*(h2*P) + ho*P + wo (wo padded to P).
    # Both share row stride P, so the whole (ho, wo) block of one (b, ki, kj)
    # tap is a single contiguous row range; rows with wo >= w2 carry harmless
    # garbage that the layer-2 BN masks out.
    for b in range(n):
        for ki in range(K):
            hb = (ki // 2) if ki % 2 == 0 else (n_even_h + ki // 2)
            for kj in range(K):
                wb = (kj // 2) if kj % 2 == 0 else (n_even_w + kj // 2)
                cb = ki * K + kj
                s0 = (b * h1 + hb) * P + wb
                d0 = b * h2 * P
                patch2_ref[d0:d0 + copy_len, cb * CPAD:(cb + 1) * CPAD] = (
                    act1_ref[s0:s0 + copy_len, :])

    # ---------------- layer 2: matmul + masked BN + LeakyReLU ---------------
    z2 = jnp.dot(patch2_ref[...], w2m_ref[...],
                 preferred_element_type=jnp.float32)
    r2 = n * h2 * P
    ridx = lax.broadcasted_iota(jnp.int32, (r2, CPAD), 0)
    mask = ((ridx % P) < w2).astype(jnp.float32)     # valid (b, ho, wo) rows
    a2 = _bn_lrelu(z2, bn2_ref[0:1, :], bn2_ref[1:2, :], valid2, mask=mask)

    # ---------------- layer 3 (Cout = 1): lane-dense MXU matmul -------------
    # Column cb = ki*K + kj of w3c holds that tap's weight vector; the tiny
    # (n*h3*w3, K*K) gather + bias add is finished in the XLA wrapper.
    out_ref[...] = jnp.dot(a2.astype(jnp.bfloat16), w3c_ref[...],
                           preferred_element_type=jnp.float32)


# ----------------------------------------------------------------------------
# Parameter preparation (one-time; hoisted out of the forward pass)
# ----------------------------------------------------------------------------
def prepare_params(params):
    w1 = params["w1"]                              # (c1, c0, K, K)
    w2 = params["w2"]                              # (c2, c1, K, K)
    w3 = params["w3"]                              # (1,  c2, K, K)
    b3 = params["b3"]                              # (1,)
    g1, bt1 = params["g1"], params["bt1"]
    g2, bt2 = params["g2"], params["bt2"]

    c1, c0 = w1.shape[0], w1.shape[1]
    c2 = w2.shape[0]
    assert c1 <= CPAD and c2 <= CPAD and c0 * K * K <= CPAD

    # layer 1: rows ordered (ci, ki, kj) -> padded to a full (128, 128) tile.
    w1m = jnp.transpose(w1.reshape(c1, c0 * K * K))
    w1m = jnp.pad(w1m, ((0, CPAD - c0 * K * K), (0, CPAD - c1)))
    w1m = w1m.astype(jnp.bfloat16)

    # layer 2: rows ordered (ki, kj, ci_padded), cols = c2 padded.
    w2m = jnp.transpose(w2, (2, 3, 1, 0))                      # (K, K, c1, c2)
    w2m = jnp.pad(w2m, ((0, 0), (0, 0), (0, CPAD - c1), (0, CPAD - c2)))
    w2m = w2m.reshape(K * K * CPAD, CPAD).astype(jnp.bfloat16)

    # layer 3 (Cout = 1): one column per (ki, kj) tap -> lane-dense matmul.
    w3c = w3[0].reshape(c2, K * K)
    w3c = jnp.pad(w3c, ((0, CPAD - c2), (0, CPAD - K * K))).astype(jnp.bfloat16)

    def bn_rows(gamma, beta, c):
        m = jnp.stack([gamma, beta]).astype(jnp.float32)       # (2, c)
        return jnp.pad(m, ((0, 0), (0, CPAD - c)))             # zero pad lanes

    # Conv biases b1/b2 are omitted: training-mode BatchNorm output is exactly
    # invariant to a per-channel constant shift of its input.
    return {
        "w1m": w1m, "bn1": bn_rows(g1, bt1, c1),
        "w2m": w2m, "bn2": bn_rows(g2, bt2, c2),
        "w3c": w3c, "b3": b3.reshape(()).astype(jnp.float32),
    }


# ----------------------------------------------------------------------------
# Forward pass: XLA glue (im2col + final 8x16 gather) + one fused Pallas call
# ----------------------------------------------------------------------------
def discriminator_forward(x_nchw, prep):
    n, c0, h0, w0 = x_nchw.shape
    h1, w1 = _out_dim(h0), _out_dim(w0)
    h2, w2 = _out_dim(h1), _out_dim(w1)
    h3, w3 = _out_dim(h2), _out_dim(w2)

    P = max(16, ((w1 + 15) // 16) * 16)     # padded w1 == patch2 group stride
    assert w2 <= P and c0 * K * K <= CPAD
    n_even_h = (h1 + 1) // 2
    n_even_w = (w1 + 1) // 2

    x = jnp.transpose(x_nchw, (0, 2, 3, 1)).astype(jnp.float32)    # NHWC

    # Layer-1 im2col (columns ordered (ci, ki, kj) to match w1m rows).
    cols = jnp.stack(
        [x[:, i:i + S * (h1 - 1) + 1:S, j:j + S * (w1 - 1) + 1:S, :]
         for i in range(K) for j in range(K)],
        axis=-1)                                       # (n, h1, w1, c0, K*K)
    cols = cols.reshape(n, h1, w1, c0 * K * K)
    # Even-first permutation of BOTH spatial axes (makes the in-kernel layer-2
    # patch extraction one contiguous slab per (b, ki, kj)).
    perm_h = jnp.asarray(list(range(0, h1, 2)) + list(range(1, h1, 2)),
                         dtype=jnp.int32)
    perm_w = jnp.asarray(list(range(0, w1, 2)) + list(range(1, w1, 2)),
                         dtype=jnp.int32)
    cols = jnp.take(cols, perm_h, axis=1)
    cols = jnp.take(cols, perm_w, axis=2)
    # Pad w -> P and the patch columns -> full 128 lanes (lane-dense LHS).
    cols = jnp.pad(cols, ((0, 0), (0, 0), (0, P - w1),
                          (0, CPAD - c0 * K * K)))
    patches1 = cols.reshape(n * h1 * P, CPAD).astype(jnp.bfloat16)

    # Scratch sizing: the slab copies over-read up to copy_len rows past their
    # start; give act1 a zeroed tail so every read stays in (finite) bounds.
    def _base(k, n_even):
        return (k // 2) if k % 2 == 0 else (n_even + k // 2)
    max_hb = max(_base(k, n_even_h) for k in range(K))
    max_wb = max(_base(k, n_even_w) for k in range(K))
    copy_len = h2 * P
    act1_rows = ((n - 1) * h1 + max_hb) * P + max_wb + copy_len
    act1_rows = max(((act1_rows + 15) // 16) * 16, n * h1 * P)

    kernel = functools.partial(
        _disc_kernel,
        n=n, h1=h1, h2=h2, w2=w2, P=P,
        n_even_h=n_even_h, n_even_w=n_even_w,
        valid1=n * h1 * w1, valid2=n * h2 * w2,
        copy_len=copy_len, act1_rows=act1_rows)

    vmem = pl.BlockSpec(memory_space=pltpu.MemorySpace.VMEM)

    tmp3 = pl.pallas_call(
        kernel,
        out_shape=jax.ShapeDtypeStruct((n * h2 * P, CPAD), jnp.float32),
        in_specs=[vmem] * 6,
        out_specs=vmem,
        scratch_shapes=[
            pltpu.VMEM((act1_rows, CPAD), jnp.bfloat16),            # act1
            pltpu.VMEM((n * h2 * P, K * K * CPAD), jnp.bfloat16),   # patch2
        ],
        compiler_params=pltpu.CompilerParams(
            vmem_limit_bytes=64 * 1024 * 1024),
    )(patches1, prep["w1m"], prep["bn1"], prep["w2m"], prep["bn2"],
      prep["w3c"])

    # Final layer-3 reduction: gather the K*K per-tap dot products for each of
    # the n*h3*w3 output positions, sum, add the (un-normalized) conv bias.
    rows = []
    for b in range(n):
        for ho in range(h3):
            for wo in range(w3):
                rows.append([(b * h2 + S * ho + ki) * P + (S * wo + kj)
                             for ki in range(K) for kj in range(K)])
    row_idx = jnp.asarray(rows, dtype=jnp.int32)           # (n*h3*w3, K*K)
    col_idx = jnp.arange(K * K, dtype=jnp.int32)[None, :]  # (1, K*K)
    gathered = tmp3[row_idx, col_idx]                      # (n*h3*w3, K*K)
    out = jnp.sum(gathered, axis=1) + prep["b3"]
    # Cout == 1, so this matches PyTorch's x.view(len(x), -1).
    return out.reshape(n, h3 * w3)


# ----------------------------------------------------------------------------
# Parameter init (torch-layout), matching the PyTorch module's structure
# ----------------------------------------------------------------------------
def init_params(key, im_chan=3, hidden_dim=16, kernel_size=4):
    ks = jax.random.split(key, 6)
    k = kernel_size

    def conv_init(kw_key, kb_key, cout, cin):
        fan_in = cin * k * k
        bound = 1.0 / (fan_in ** 0.5)
        w = jax.random.normal(kw_key, (cout, cin, k, k), jnp.float32) * 0.02
        b = jax.random.uniform(kb_key, (cout,), jnp.float32, -bound, bound)
        return w, b

    w1, b1 = conv_init(ks[0], ks[1], hidden_dim, im_chan)
    w2, b2 = conv_init(ks[2], ks[3], hidden_dim * 2, hidden_dim)
    w3, b3 = conv_init(ks[4], ks[5], 1, hidden_dim * 2)

    return {
        "w1": w1, "b1": b1,
        "g1": jnp.ones((hidden_dim,), jnp.float32),
        "bt1": jnp.zeros((hidden_dim,), jnp.float32),
        "w2": w2, "b2": b2,
        "g2": jnp.ones((hidden_dim * 2,), jnp.float32),
        "bt2": jnp.zeros((hidden_dim * 2,), jnp.float32),
        "w3": w3, "b3": b3,
    }


if __name__ == "__main__":
    key = jax.random.PRNGKey(0)
    k_in, k_par = jax.random.split(key)

    # N=2, C=3, 32x32 -> layer1 15x15 -> layer2 6x6 -> layer3 2x2 -> out (2, 4)
    x = jax.random.normal(k_in, (2, 3, 32, 32), jnp.float32)
    params = init_params(k_par)
    prep = prepare_params(params)

    fwd = jax.jit(discriminator_forward)
    out = jax.block_until_ready(fwd(x, prep))

    assert out.shape == (2, 4), out.shape
    assert bool(jnp.all(jnp.isfinite(out)))
    print("KERNEL_OK")
</pallas_src>

<mosaic_0001>
module attributes {stable_mosaic.version = 11 : i64} {
  func.func @_disc_kernel(%arg0: memref<480x128xbf16, #tpu.memory_space<vmem>>, %arg1: memref<128x128xbf16, #tpu.memory_space<vmem>>, %arg2: memref<2x128xf32, #tpu.memory_space<vmem>>, %arg3: memref<2048x128xbf16, #tpu.memory_space<vmem>>, %arg4: memref<2x128xf32, #tpu.memory_space<vmem>>, %arg5: memref<128x128xbf16, #tpu.memory_space<vmem>>, %arg6: memref<192x128xf32, #tpu.memory_space<vmem>>, %arg7: memref<496x128xbf16, #tpu.memory_space<vmem>>, %arg8: memref<192x2048xbf16, #tpu.memory_space<vmem>>) attributes {dimension_semantics = [], scalar_prefetch = 0 : i64, scratch_operands = 2 : i64, tpu.core_type = #tpu.core_type<tc>} {
    %c0 = arith.constant 0 : index
    %c0_0 = arith.constant 0 : index
    %0 = vector.load %arg0[%c0, %c0_0] : memref<480x128xbf16, #tpu.memory_space<vmem>>, vector<480x128xbf16>
    %c0_1 = arith.constant 0 : index
    %c0_2 = arith.constant 0 : index
    %1 = vector.load %arg1[%c0_1, %c0_2] : memref<128x128xbf16, #tpu.memory_space<vmem>>, vector<128x128xbf16>
    %cst = arith.constant dense<0.000000e+00> : vector<480x128xf32>
    %2 = tpu.matmul %0, %1, %cst {dimension_numbers = #tpu.dot_dimension_numbers<[1], [0], [0], [1], [0, 0, 1, 1], [], []>} : vector<480x128xbf16>, vector<128x128xbf16>, vector<480x128xf32> -> vector<480x128xf32>
    %c0_3 = arith.constant 0 : index
    %c0_4 = arith.constant 0 : index
    %3 = vector.load %arg2[%c0_3, %c0_4] : memref<2x128xf32, #tpu.memory_space<vmem>>, vector<1x128xf32>
    %c1 = arith.constant 1 : index
    %c0_5 = arith.constant 0 : index
    %4 = vector.load %arg2[%c1, %c0_5] : memref<2x128xf32, #tpu.memory_space<vmem>>, vector<1x128xf32>
    %cst_6 = arith.constant dense<0.000000e+00> : vector<128xf32>
    %5 = vector.multi_reduction <add>, %2, %cst_6 [0] : vector<480x128xf32> to vector<128xf32>
    %6 = vector.shape_cast %5 : vector<128xf32> to vector<1x128xf32>
    %cst_7 = arith.constant 0.00222222228 : f32
    %7 = vector.broadcast %cst_7 : f32 to vector<1x128xf32>
    %8 = arith.mulf %6, %7 : vector<1x128xf32>
    %9 = arith.mulf %2, %2 : vector<480x128xf32>
    %cst_8 = arith.constant dense<0.000000e+00> : vector<128xf32>
    %10 = vector.multi_reduction <add>, %9, %cst_8 [0] : vector<480x128xf32> to vector<128xf32>
    %11 = vector.shape_cast %10 : vector<128xf32> to vector<1x128xf32>
    %cst_9 = arith.constant 0.00222222228 : f32
    %12 = vector.broadcast %cst_9 : f32 to vector<1x128xf32>
    %13 = arith.mulf %11, %12 : vector<1x128xf32>
    %14 = arith.mulf %8, %8 : vector<1x128xf32>
    %15 = arith.subf %13, %14 : vector<1x128xf32>
    %cst_10 = arith.constant 0.000000e+00 : f32
    %16 = vector.broadcast %cst_10 : f32 to vector<1x128xf32>
    %17 = arith.maximumf %15, %16 : vector<1x128xf32>
    %cst_11 = arith.constant 9.99999974E-6 : f32
    %18 = vector.broadcast %cst_11 : f32 to vector<1x128xf32>
    %19 = arith.addf %17, %18 : vector<1x128xf32>
    %20 = math.rsqrt %19 : vector<1x128xf32>
    %21 = arith.mulf %3, %20 : vector<1x128xf32>
    %22 = vector.broadcast %8 : vector<1x128xf32> to vector<480x128xf32>
    %23 = arith.subf %2, %22 : vector<480x128xf32>
    %24 = vector.broadcast %21 : vector<1x128xf32> to vector<480x128xf32>
    %25 = arith.mulf %23, %24 : vector<480x128xf32>
    %26 = vector.broadcast %4 : vector<1x128xf32> to vector<480x128xf32>
    %27 = arith.addf %25, %26 : vector<480x128xf32>
    %cst_12 = arith.constant 0.000000e+00 : f32
    %28 = vector.broadcast %cst_12 : f32 to vector<480x128xf32>
    %29 = arith.cmpf ogt, %27, %28 : vector<480x128xf32>
    %cst_13 = arith.constant 2.000000e-01 : f32
    %30 = vector.broadcast %cst_13 : f32 to vector<480x128xf32>
    %31 = arith.mulf %30, %27 : vector<480x128xf32>
    %32 = arith.select %29, %27, %31 : vector<480x128xi1>, vector<480x128xf32>
    %33 = arith.truncf %32 : vector<480x128xf32> to vector<480x128xbf16>
    %c0_14 = arith.constant 0 : index
    %c0_15 = arith.constant 0 : index
    %34 = vector.load %arg7[%c0_14, %c0_15] : memref<496x128xbf16, #tpu.memory_space<vmem>>, vector<480x128xbf16>
    tpu.vector_store %arg7[%c0_14, %c0_15], %33 {strides = array<i32>} : memref<496x128xbf16, #tpu.memory_space<vmem>>, vector<480x128xbf16>,
    %cst_16 = arith.constant 0.000000e+00 : bf16
    %35 = vector.broadcast %cst_16 : bf16 to vector<16x128xbf16>
    %c480 = arith.constant 480 : index
    %c0_17 = arith.constant 0 : index
    %36 = vector.load %arg7[%c480, %c0_17] : memref<496x128xbf16, #tpu.memory_space<vmem>>, vector<16x128xbf16>
    tpu.vector_store %arg7[%c480, %c0_17], %35 {strides = array<i32>} : memref<496x128xbf16, #tpu.memory_space<vmem>>, vector<16x128xbf16>,
    %c0_18 = arith.constant 0 : index
    %c0_19 = arith.constant 0 : index
    %37 = vector.load %arg7[%c0_18, %c0_19] : memref<496x128xbf16, #tpu.memory_space<vmem>>, vector<96x128xbf16>
    %c0_20 = arith.constant 0 : index
    %c0_21 = arith.constant 0 : index
    %38 = vector.load %arg8[%c0_20, %c0_21] : memref<192x2048xbf16, #tpu.memory_space<vmem>>, vector<96x128xbf16>
    tpu.vector_store %arg8[%c0_20, %c0_21], %37 {strides = array<i32>} : memref<192x2048xbf16, #tpu.memory_space<vmem>>, vector<96x128xbf16>,
    %c8 = arith.constant 8 : index
    %c0_22 = arith.constant 0 : index
    %39 = vector.load %arg7[%c8, %c0_22] : memref<496x128xbf16, #tpu.memory_space<vmem>>, vector<96x128xbf16>
    %c0_23 = arith.constant 0 : index
    %c128 = arith.constant 128 : index
    %40 = vector.load %arg8[%c0_23, %c128] : memref<192x2048xbf16, #tpu.memory_space<vmem>>, vector<96x128xbf16>
    tpu.vector_store %arg8[%c0_23, %c128], %39 {strides = array<i32>} : memref<192x2048xbf16, #tpu.memory_space<vmem>>, vector<96x128xbf16>,
    %c1_24 = arith.constant 1 : index
    %c0_25 = arith.constant 0 : index
    %41 = vector.load %arg7[%c1_24, %c0_25] : memref<496x128xbf16, #tpu.memory_space<vmem>>, vector<96x128xbf16>
    %c0_26 = arith.constant 0 : index
    %c256 = arith.constant 256 : index
    %42 = vector.load %arg8[%c0_26, %c256] : memref<192x2048xbf16, #tpu.memory_space<vmem>>, vector<96x128xbf16>
    tpu.vector_store %arg8[%c0_26, %c256], %41 {strides = array<i32>} : memref<192x2048xbf16, #tpu.memory_space<vmem>>, vector<96x128xbf16>,
    %c9 = arith.constant 9 : index
    %c0_27 = arith.constant 0 : index
    %43 = vector.load %arg7[%c9, %c0_27] : memref<496x128xbf16, #tpu.memory_space<vmem>>, vector<96x128xbf16>
    %c0_28 = arith.constant 0 : index
    %c384 = arith.constant 384 : index
    %44 = vector.load %arg8[%c0_28, %c384] : memref<192x2048xbf16, #tpu.memory_space<vmem>>, vector<96x128xbf16>
    tpu.vector_store %arg8[%c0_28, %c384], %43 {strides = array<i32>} : memref<192x2048xbf16, #tpu.memory_space<vmem>>, vector<96x128xbf16>,
    %c128_29 = arith.constant 128 : index
    %c0_30 = arith.constant 0 : index
    %45 = vector.load %arg7[%c128_29, %c0_30] : memref<496x128xbf16, #tpu.memory_space<vmem>>, vector<96x128xbf16>
    %c0_31 = arith.constant 0 : index
    %c512 = arith.constant 512 : index
    %46 = vector.load %arg8[%c0_31, %c512] : memref<192x2048xbf16, #tpu.memory_space<vmem>>, vector<96x128xbf16>
    tpu.vector_store %arg8[%c0_31, %c512], %45 {strides = array<i32>} : memref<192x2048xbf16, #tpu.memory_space<vmem>>, vector<96x128xbf16>,
    %c136 = arith.constant 136 : index
    %c0_32 = arith.constant 0 : index
    %47 = vector.load %arg7[%c136, %c0_32] : memref<496x128xbf16, #tpu.memory_space<vmem>>, vector<96x128xbf16>
    %c0_33 = arith.constant 0 : index
    %c640 = arith.constant 640 : index
    %48 = vector.load %arg8[%c0_33, %c640] : memref<192x2048xbf16, #tpu.memory_space<vmem>>, vector<96x128xbf16>
    tpu.vector_store %arg8[%c0_33, %c640], %47 {strides = array<i32>} : memref<192x2048xbf16, #tpu.memory_space<vmem>>, vector<96x128xbf16>,
    %c129 = arith.constant 129 : index
    %c0_34 = arith.constant 0 : index
    %49 = vector.load %arg7[%c129, %c0_34] : memref<496x128xbf16, #tpu.memory_space<vmem>>, vector<96x128xbf16>
    %c0_35 = arith.constant 0 : index
    %c768 = arith.constant 768 : index
    %50 = vector.load %arg8[%c0_35, %c768] : memref<192x2048xbf16, #tpu.memory_space<vmem>>, vector<96x128xbf16>
    tpu.vector_store %arg8[%c0_35, %c768], %49 {strides = array<i32>} : memref<192x2048xbf16, #tpu.memory_space<vmem>>, vector<96x128xbf16>,
    %c137 = arith.constant 137 : index
    %c0_36 = arith.constant 0 : index
    %51 = vector.load %arg7[%c137, %c0_36] : memref<496x128xbf16, #tpu.memory_space<vmem>>, vector<96x128xbf16>
    %c0_37 = arith.constant 0 : index
    %c896 = arith.constant 896 : index
    %52 = vector.load %arg8[%c0_37, %c896] : memref<192x2048xbf16, #tpu.memory_space<vmem>>, vector<96x128xbf16>
    tpu.vector_store %arg8[%c0_37, %c896], %51 {strides = array<i32>} : memref<192x2048xbf16, #tpu.memory_space<vmem>>, vector<96x128xbf16>,
    %c16 = arith.constant 16 : index
    %c0_38 = arith.constant 0 : index
    %53 = vector.load %arg7[%c16, %c0_38] : memref<496x128xbf16, #tpu.memory_space<vmem>>, vector<96x128xbf16>
    %c0_39 = arith.constant 0 : index
    %c1024 = arith.constant 1024 : index
    %54 = vector.load %arg8[%c0_39, %c1024] : memref<192x2048xbf16, #tpu.memory_space<vmem>>, vector<96x128xbf16>
    tpu.vector_store %arg8[%c0_39, %c1024], %53 {strides = array<i32>} : memref<192x2048xbf16, #tpu.memory_space<vmem>>, vector<96x128xbf16>,
    %c24 = arith.constant 24 : index
    %c0_40 = arith.constant 0 : index
    %55 = vector.load %arg7[%c24, %c0_40] : memref<496x128xbf16, #tpu.memory_space<vmem>>, vector<96x128xbf16>
    %c0_41 = arith.constant 0 : index
    %c1152 = arith.constant 1152 : index
    %56 = vector.load %arg8[%c0_41, %c1152] : memref<192x2048xbf16, #tpu.memory_space<vmem>>, vector<96x128xbf16>
    tpu.vector_store %arg8[%c0_41, %c1152], %55 {strides = array<i32>} : memref<192x2048xbf16, #tpu.memory_space<vmem>>, vector<96x128xbf16>,
    %c17 = arith.constant 17 : index
    %c0_42 = arith.constant 0 : index
    %57 = vector.load %arg7[%c17, %c0_42] : memref<496x128xbf16, #tpu.memory_space<vmem>>, vector<96x128xbf16>
    %c0_43 = arith.constant 0 : index
    %c1280 = arith.constant 1280 : index
    %58 = vector.load %arg8[%c0_43, %c1280] : memref<192x2048xbf16, #tpu.memory_space<vmem>>, vector<96x128xbf16>
    tpu.vector_store %arg8[%c0_43, %c1280], %57 {strides = array<i32>} : memref<192x2048xbf16, #tpu.memory_space<vmem>>, vector<96x128xbf16>,
    %c25 = arith.constant 25 : index
    %c0_44 = arith.constant 0 : index
    %59 = vector.load %arg7[%c25, %c0_44] : memref<496x128xbf16, #tpu.memory_space<vmem>>, vector<96x128xbf16>
    %c0_45 = arith.constant 0 : index
    %c1408 = arith.constant 1408 : index
    %60 = vector.load %arg8[%c0_45, %c1408] : memref<192x2048xbf16, #tpu.memory_space<vmem>>, vector<96x128xbf16>
    tpu.vector_store %arg8[%c0_45, %c1408], %59 {strides = array<i32>} : memref<192x2048xbf16, #tpu.memory_space<vmem>>, vector<96x128xbf16>,
    %c144 = arith.constant 144 : index
    %c0_46 = arith.constant 0 : index
    %61 = vector.load %arg7[%c144, %c0_46] : memref<496x128xbf16, #tpu.memory_space<vmem>>, vector<96x128xbf16>
    %c0_47 = arith.constant 0 : index
    %c1536 = arith.constant 1536 : index
    %62 = vector.load %arg8[%c0_47, %c1536] : memref<192x2048xbf16, #tpu.memory_space<vmem>>, vector<96x128xbf16>
    tpu.vector_store %arg8[%c0_47, %c1536], %61 {strides = array<i32>} : memref<192x2048xbf16, #tpu.memory_space<vmem>>, vector<96x128xbf16>,
    %c152 = arith.constant 152 : index
    %c0_48 = arith.constant 0 : index
    %63 = vector.load %arg7[%c152, %c0_48] : memref<496x128xbf16, #tpu.memory_space<vmem>>, vector<96x128xbf16>
    %c0_49 = arith.constant 0 : index
    %c1664 = arith.constant 1664 : index
    %64 = vector.load %arg8[%c0_49, %c1664] : memref<192x2048xbf16, #tpu.memory_space<vmem>>, vector<96x128xbf16>
    tpu.vector_store %arg8[%c0_49, %c1664], %63 {strides = array<i32>} : memref<192x2048xbf16, #tpu.memory_space<vmem>>, vector<96x128xbf16>,
    %c145 = arith.constant 145 : index
    %c0_50 = arith.constant 0 : index
    %65 = vector.load %arg7[%c145, %c0_50] : memref<496x128xbf16, #tpu.memory_space<vmem>>, vector<96x128xbf16>
    %c0_51 = arith.constant 0 : index
    %c1792 = arith.constant 1792 : index
    %66 = vector.load %arg8[%c0_51, %c1792] : memref<192x2048xbf16, #tpu.memory_space<vmem>>, vector<96x128xbf16>
    tpu.vector_store %arg8[%c0_51, %c1792], %65 {strides = array<i32>} : memref<192x2048xbf16, #tpu.memory_space<vmem>>, vector<96x128xbf16>,
    %c153 = arith.constant 153 : index
    %c0_52 = arith.constant 0 : index
    %67 = vector.load %arg7[%c153, %c0_52] : memref<496x128xbf16, #tpu.memory_space<vmem>>, vector<96x128xbf16>
    %c0_53 = arith.constant 0 : index
    %c1920 = arith.constant 1920 : index
    %68 = vector.load %arg8[%c0_53, %c1920] : memref<192x2048xbf16, #tpu.memory_space<vmem>>, vector<96x128xbf16>
    tpu.vector_store %arg8[%c0_53, %c1920], %67 {strides = array<i32>} : memref<192x2048xbf16, #tpu.memory_space<vmem>>, vector<96x128xbf16>,
    %c240 = arith.constant 240 : index
    %c0_54 = arith.constant 0 : index
    %69 = vector.load %arg7[%c240, %c0_54] : memref<496x128xbf16, #tpu.memory_space<vmem>>, vector<96x128xbf16>
    %c96 = arith.constant 96 : index
    %c0_55 = arith.constant 0 : index
    %70 = vector.load %arg8[%c96, %c0_55] : memref<192x2048xbf16, #tpu.memory_space<vmem>>, vector<96x128xbf16>
    tpu.vector_store %arg8[%c96, %c0_55], %69 {strides = array<i32>} : memref<192x2048xbf16, #tpu.memory_space<vmem>>, vector<96x128xbf16>,
    %c248 = arith.constant 248 : index
    %c0_56 = arith.constant 0 : index
    %71 = vector.load %arg7[%c248, %c0_56] : memref<496x128xbf16, #tpu.memory_space<vmem>>, vector<96x128xbf16>
    %c96_57 = arith.constant 96 : index
    %c128_58 = arith.constant 128 : index
    %72 = vector.load %arg8[%c96_57, %c128_58] : memref<192x2048xbf16, #tpu.memory_space<vmem>>, vector<96x128xbf16>
    tpu.vector_store %arg8[%c96_57, %c128_58], %71 {strides = array<i32>} : memref<192x2048xbf16, #tpu.memory_space<vmem>>, vector<96x128xbf16>,
    %c241 = arith.constant 241 : index
    %c0_59 = arith.constant 0 : index
    %73 = vector.load %arg7[%c241, %c0_59] : memref<496x128xbf16, #tpu.memory_space<vmem>>, vector<96x128xbf16>
    %c96_60 = arith.constant 96 : index
    %c256_61 = arith.constant 256 : index
    %74 = vector.load %arg8[%c96_60, %c256_61] : memref<192x2048xbf16, #tpu.memory_space<vmem>>, vector<96x128xbf16>
    tpu.vector_store %arg8[%c96_60, %c256_61], %73 {strides = array<i32>} : memref<192x2048xbf16, #tpu.memory_space<vmem>>, vector<96x128xbf16>,
    %c249 = arith.constant 249 : index
    %c0_62 = arith.constant 0 : index
    %75 = vector.load %arg7[%c249, %c0_62] : memref<496x128xbf16, #tpu.memory_space<vmem>>, vector<96x128xbf16>
    %c96_63 = arith.constant 96 : index
    %c384_64 = arith.constant 384 : index
    %76 = vector.load %arg8[%c96_63, %c384_64] : memref<192x2048xbf16, #tpu.memory_space<vmem>>, vector<96x128xbf16>
    tpu.vector_store %arg8[%c96_63, %c384_64], %75 {strides = array<i32>} : memref<192x2048xbf16, #tpu.memory_space<vmem>>, vector<96x128xbf16>,
    %c368 = arith.constant 368 : index
    %c0_65 = arith.constant 0 : index
    %77 = vector.load %arg7[%c368, %c0_65] : memref<496x128xbf16, #tpu.memory_space<vmem>>, vector<96x128xbf16>
    %c96_66 = arith.constant 96 : index
    %c512_67 = arith.constant 512 : index
    %78 = vector.load %arg8[%c96_66, %c512_67] : memref<192x2048xbf16, #tpu.memory_space<vmem>>, vector<96x128xbf16>
    tpu.vector_store %arg8[%c96_66, %c512_67], %77 {strides = array<i32>} : memref<192x2048xbf16, #tpu.memory_space<vmem>>, vector<96x128xbf16>,
    %c376 = arith.constant 376 : index
    %c0_68 = arith.constant 0 : index
    %79 = vector.load %arg7[%c376, %c0_68] : memref<496x128xbf16, #tpu.memory_space<vmem>>, vector<96x128xbf16>
    %c96_69 = arith.constant 96 : index
    %c640_70 = arith.constant 640 : index
    %80 = vector.load %arg8[%c96_69, %c640_70] : memref<192x2048xbf16, #tpu.memory_space<vmem>>, vector<96x128xbf16>
    tpu.vector_store %arg8[%c96_69, %c640_70], %79 {strides = array<i32>} : memref<192x2048xbf16, #tpu.memory_space<vmem>>, vector<96x128xbf16>,
    %c369 = arith.constant 369 : index
    %c0_71 = arith.constant 0 : index
    %81 = vector.load %arg7[%c369, %c0_71] : memref<496x128xbf16, #tpu.memory_space<vmem>>, vector<96x128xbf16>
    %c96_72 = arith.constant 96 : index
    %c768_73 = arith.constant 768 : index
    %82 = vector.load %arg8[%c96_72, %c768_73] : memref<192x2048xbf16, #tpu.memory_space<vmem>>, vector<96x128xbf16>
    tpu.vector_store %arg8[%c96_72, %c768_73], %81 {strides = array<i32>} : memref<192x2048xbf16, #tpu.memory_space<vmem>>, vector<96x128xbf16>,
    %c377 = arith.constant 377 : index
    %c0_74 = arith.constant 0 : index
    %83 = vector.load %arg7[%c377, %c0_74] : memref<496x128xbf16, #tpu.memory_space<vmem>>, vector<96x128xbf16>
    %c96_75 = arith.constant 96 : index
    %c896_76 = arith.constant 896 : index
    %84 = vector.load %arg8[%c96_75, %c896_76] : memref<192x2048xbf16, #tpu.memory_space<vmem>>, vector<96x128xbf16>
    tpu.vector_store %arg8[%c96_75, %c896_76], %83 {strides = array<i32>} : memref<192x2048xbf16, #tpu.memory_space<vmem>>, vector<96x128xbf16>,
    %c256_77 = arith.constant 256 : index
    %c0_78 = arith.constant 0 : index
    %85 = vector.load %arg7[%c256_77, %c0_78] : memref<496x128xbf16, #tpu.memory_space<vmem>>, vector<96x128xbf16>
    %c96_79 = arith.constant 96 : index
    %c1024_80 = arith.constant 1024 : index
    %86 = vector.load %arg8[%c96_79, %c1024_80] : memref<192x2048xbf16, #tpu.memory_space<vmem>>, vector<96x128xbf16>
    tpu.vector_store %arg8[%c96_79, %c1024_80], %85 {strides = array<i32>} : memref<192x2048xbf16, #tpu.memory_space<vmem>>, vector<96x128xbf16>,
    %c264 = arith.constant 264 : index
    %c0_81 = arith.constant 0 : index
    %87 = vector.load %arg7[%c264, %c0_81] : memref<496x128xbf16, #tpu.memory_space<vmem>>, vector<96x128xbf16>
    %c96_82 = arith.constant 96 : index
    %c1152_83 = arith.constant 1152 : index
    %88 = vector.load %arg8[%c96_82, %c1152_83] : memref<192x2048xbf16, #tpu.memory_space<vmem>>, vector<96x128xbf16>
    tpu.vector_store %arg8[%c96_82, %c1152_83], %87 {strides = array<i32>} : memref<192x2048xbf16, #tpu.memory_space<vmem>>, vector<96x128xbf16>,
    %c257 = arith.constant 257 : index
    %c0_84 = arith.constant 0 : index
    %89 = vector.load %arg7[%c257, %c0_84] : memref<496x128xbf16, #tpu.memory_space<vmem>>, vector<96x128xbf16>
    %c96_85 = arith.constant 96 : index
    %c1280_86 = arith.constant 1280 : index
    %90 = vector.load %arg8[%c96_85, %c1280_86] : memref<192x2048xbf16, #tpu.memory_space<vmem>>, vector<96x128xbf16>
    tpu.vector_store %arg8[%c96_85, %c1280_86], %89 {strides = array<i32>} : memref<192x2048xbf16, #tpu.memory_space<vmem>>, vector<96x128xbf16>,
    %c265 = arith.constant 265 : index
    %c0_87 = arith.constant 0 : index
    %91 = vector.load %arg7[%c265, %c0_87] : memref<496x128xbf16, #tpu.memory_space<vmem>>, vector<96x128xbf16>
    %c96_88 = arith.constant 96 : index
    %c1408_89 = arith.constant 1408 : index
    %92 = vector.load %arg8[%c96_88, %c1408_89] : memref<192x2048xbf16, #tpu.memory_space<vmem>>, vector<96x128xbf16>
    tpu.vector_store %arg8[%c96_88, %c1408_89], %91 {strides = array<i32>} : memref<192x2048xbf16, #tpu.memory_space<vmem>>, vector<96x128xbf16>,
    %c384_90 = arith.constant 384 : index
    %c0_91 = arith.constant 0 : index
    %93 = vector.load %arg7[%c384_90, %c0_91] : memref<496x128xbf16, #tpu.memory_space<vmem>>, vector<96x128xbf16>
    %c96_92 = arith.constant 96 : index
    %c1536_93 = arith.constant 1536 : index
    %94 = vector.load %arg8[%c96_92, %c1536_93] : memref<192x2048xbf16, #tpu.memory_space<vmem>>, vector<96x128xbf16>
    tpu.vector_store %arg8[%c96_92, %c1536_93], %93 {strides = array<i32>} : memref<192x2048xbf16, #tpu.memory_space<vmem>>, vector<96x128xbf16>,
    %c392 = arith.constant 392 : index
    %c0_94 = arith.constant 0 : index
    %95 = vector.load %arg7[%c392, %c0_94] : memref<496x128xbf16, #tpu.memory_space<vmem>>, vector<96x128xbf16>
    %c96_95 = arith.constant 96 : index
    %c1664_96 = arith.constant 1664 : index
    %96 = vector.load %arg8[%c96_95, %c1664_96] : memref<192x2048xbf16, #tpu.memory_space<vmem>>, vector<96x128xbf16>
    tpu.vector_store %arg8[%c96_95, %c1664_96], %95 {strides = array<i32>} : memref<192x2048xbf16, #tpu.memory_space<vmem>>, vector<96x128xbf16>,
    %c385 = arith.constant 385 : index
    %c0_97 = arith.constant 0 : index
    %97 = vector.load %arg7[%c385, %c0_97] : memref<496x128xbf16, #tpu.memory_space<vmem>>, vector<96x128xbf16>
    %c96_98 = arith.constant 96 : index
    %c1792_99 = arith.constant 1792 : index
    %98 = vector.load %arg8[%c96_98, %c1792_99] : memref<192x2048xbf16, #tpu.memory_space<vmem>>, vector<96x128xbf16>
    tpu.vector_store %arg8[%c96_98, %c1792_99], %97 {strides = array<i32>} : memref<192x2048xbf16, #tpu.memory_space<vmem>>, vector<96x128xbf16>,
    %c393 = arith.constant 393 : index
    %c0_100 = arith.constant 0 : index
    %99 = vector.load %arg7[%c393, %c0_100] : memref<496x128xbf16, #tpu.memory_space<vmem>>, vector<96x128xbf16>
    %c96_101 = arith.constant 96 : index
    %c1920_102 = arith.constant 1920 : index
    %100 = vector.load %arg8[%c96_101, %c1920_102] : memref<192x2048xbf16, #tpu.memory_space<vmem>>, vector<96x128xbf16>
    tpu.vector_store %arg8[%c96_101, %c1920_102], %99 {strides = array<i32>} : memref<192x2048xbf16, #tpu.memory_space<vmem>>, vector<96x128xbf16>,
    %c0_103 = arith.constant 0 : index
    %c0_104 = arith.constant 0 : index
    %101 = vector.load %arg8[%c0_103, %c0_104] : memref<192x2048xbf16, #tpu.memory_space<vmem>>, vector<192x2048xbf16>
    %c0_105 = arith.constant 0 : index
    %c0_106 = arith.constant 0 : index
    %102 = vector.load %arg3[%c0_105, %c0_106] : memref<2048x128xbf16, #tpu.memory_space<vmem>>, vector<2048x128xbf16>
    %cst_107 = arith.constant dense<0.000000e+00> : vector<192x128xf32>
    %103 = tpu.matmul %101, %102, %cst_107 {dimension_numbers = #tpu.dot_dimension_numbers<[1], [0], [0], [1], [0, 0, 1, 1], [], []>} : vector<192x2048xbf16>, vector<2048x128xbf16>, vector<192x128xf32> -> vector<192x128xf32>
    %104 = tpu.iota {dimensions = array<i32: 0>} : vector<192x128xi32>
    %c16_i32 = arith.constant 16 : i32
    %c0_i32 = arith.constant 0 : i32
    %105 = arith.cmpi eq, %c16_i32, %c0_i32 : i32
    %c1_i32 = arith.constant 1 : i32
    %106 = arith.select %105, %c1_i32, %c16_i32 : i32
    %107 = vector.broadcast %106 : i32 to vector<192x128xi32>
    %108 = arith.remsi %104, %107 : vector<192x128xi32>
    %c0_i32_108 = arith.constant 0 : i32
    %109 = vector.broadcast %c0_i32_108 : i32 to vector<192x128xi32>
    %110 = arith.cmpi ne, %108, %109 : vector<192x128xi32>
    %c0_i32_109 = arith.constant 0 : i32
    %111 = vector.broadcast %c0_i32_109 : i32 to vector<192x128xi32>
    %112 = arith.cmpi slt, %108, %111 : vector<192x128xi32>
    %c0_i32_110 = arith.constant 0 : i32
    %113 = arith.cmpi slt, %106, %c0_i32_110 : i32
    %114 = vector.broadcast %113 : i1 to vector<192x128xi1>
    %115 = vector.broadcast %114 : vector<192x128xi1> to vector<192x128xi1>
    %116 = arith.xori %112, %115 : vector<192x128xi1>
    %117 = arith.andi %116, %110 : vector<192x128xi1>
    %118 = vector.broadcast %106 : i32 to vector<192x128xi32>
    %119 = arith.addi %108, %118 : vector<192x128xi32>
    %120 = arith.select %117, %119, %108 : vector<192x128xi1>, vector<192x128xi32>
    %c6_i32 = arith.constant 6 : i32
    %121 = vector.broadcast %c6_i32 : i32 to vector<192x128xi32>
    %122 = arith.cmpi slt, %120, %121 : vector<192x128xi32>
    %123 = arith.extui %122 : vector<192x128xi1> to vector<192x128xi32>
    %124 = arith.sitofp %123 : vector<192x128xi32> to vector<192x128xf32>
    %c0_111 = arith.constant 0 : index
    %c0_112 = arith.constant 0 : index
    %125 = vector.load %arg4[%c0_111, %c0_112] : memref<2x128xf32, #tpu.memory_space<vmem>>, vector<1x128xf32>
    %c1_113 = arith.constant 1 : index
    %c0_114 = arith.constant 0 : index
    %126 = vector.load %arg4[%c1_113, %c0_114] : memref<2x128xf32, #tpu.memory_space<vmem>>, vector<1x128xf32>
    %127 = arith.mulf %103, %124 : vector<192x128xf32>
    %cst_115 = arith.constant dense<0.000000e+00> : vector<128xf32>
    %128 = vector.multi_reduction <add>, %127, %cst_115 [0] : vector<192x128xf32> to vector<128xf32>
    %129 = vector.shape_cast %128 : vector<128xf32> to vector<1x128xf32>
    %cst_116 = arith.constant 0.013888889 : f32
    %130 = vector.broadcast %cst_116 : f32 to vector<1x128xf32>
    %131 = arith.mulf %129, %130 : vector<1x128xf32>
    %132 = arith.mulf %127, %103 : vector<192x128xf32>
    %cst_117 = arith.constant dense<0.000000e+00> : vector<128xf32>
    %133 = vector.multi_reduction <add>, %132, %cst_117 [0] : vector<192x128xf32> to vector<128xf32>
    %134 = vector.shape_cast %133 : vector<128xf32> to vector<1x128xf32>
    %cst_118 = arith.constant 0.013888889 : f32
    %135 = vector.broadcast %cst_118 : f32 to vector<1x128xf32>
    %136 = arith.mulf %134, %135 : vector<1x128xf32>
    %137 = arith.mulf %131, %131 : vector<1x128xf32>
    %138 = arith.subf %136, %137 : vector<1x128xf32>
    %cst_119 = arith.constant 0.000000e+00 : f32
    %139 = vector.broadcast %cst_119 : f32 to vector<1x128xf32>
    %140 = arith.maximumf %138, %139 : vector<1x128xf32>
    %cst_120 = arith.constant 9.99999974E-6 : f32
    %141 = vector.broadcast %cst_120 : f32 to vector<1x128xf32>
    %142 = arith.addf %140, %141 : vector<1x128xf32>
    %143 = math.rsqrt %142 : vector<1x128xf32>
    %144 = arith.mulf %125, %143 : vector<1x128xf32>
    %145 = vector.broadcast %131 : vector<1x128xf32> to vector<192x128xf32>
    %146 = arith.subf %103, %145 : vector<192x128xf32>
    %147 = vector.broadcast %144 : vector<1x128xf32> to vector<192x128xf32>
    %148 = arith.mulf %146, %147 : vector<192x128xf32>
    %149 = vector.broadcast %126 : vector<1x128xf32> to vector<192x128xf32>
    %150 = arith.addf %148, %149 : vector<192x128xf32>
    %cst_121 = arith.constant 0.000000e+00 : f32
    %151 = vector.broadcast %cst_121 : f32 to vector<192x128xf32>
    %152 = arith.cmpf ogt, %150, %151 : vector<192x128xf32>
    %cst_122 = arith.constant 2.000000e-01 : f32
    %153 = vector.broadcast %cst_122 : f32 to vector<192x128xf32>
    %154 = arith.mulf %153, %150 : vector<192x128xf32>
    %155 = arith.select %152, %150, %154 : vector<192x128xi1>, vector<192x128xf32>
    %156 = arith.truncf %155 : vector<192x128xf32> to vector<192x128xbf16>
    %c0_123 = arith.constant 0 : index
    %c0_124 = arith.constant 0 : index
    %157 = vector.load %arg5[%c0_123, %c0_124] : memref<128x128xbf16, #tpu.memory_space<vmem>>, vector<128x128xbf16>
    %cst_125 = arith.constant dense<0.000000e+00> : vector<192x128xf32>
    %158 = tpu.matmul %156, %157, %cst_125 {dimension_numbers = #tpu.dot_dimension_numbers<[1], [0], [0], [1], [0, 0, 1, 1], [], []>} : vector<192x128xbf16>, vector<128x128xbf16>, vector<192x128xf32> -> vector<192x128xf32>
    %c0_126 = arith.constant 0 : index
    %c0_127 = arith.constant 0 : index
    %159 = vector.load %arg6[%c0_126, %c0_127] : memref<192x128xf32, #tpu.memory_space<vmem>>, vector<192x128xf32>
    tpu.vector_store %arg6[%c0_126, %c0_127], %158 {strides = array<i32>} : memref<192x128xf32, #tpu.memory_space<vmem>>, vector<192x128xf32>,
    return
  }
}

</mosaic_0001>

<llo_original>
// kernel: discriminator_forward.1
$region0: #{discriminator_forward.1}
  #allocation0 [shape = 'u32[]', space=smem, size = 0x4, offset = 0x4, fixed_abs, tag = 'smem constant byte address 0x4 - core index']
  #allocation1 [shape = 'u32[72,128]{1,0:T(1,128)}', space=vmem, size = 0x9000, scoped, tag = 'internal scratch']
  #allocation2 [shape = 'bf16[496,128]{1,0:T(8,128)(2,1)}', space=vmem, size = 0x1f000, scoped, tag = 'scratch operand']
  #allocation3 [shape = 'bf16[192,2048]{1,0:T(8,128)(2,1)}', space=vmem, size = 0xc0000, scoped, tag = 'scratch operand']
  %s0 = inlined_call_operand.vmem [shape: bf16[480,128], index: 0, kind: input, shape index: {}]
  %s1 = inlined_call_operand.vmem [shape: bf16[128,128], index: 1, kind: input, shape index: {}]
  %s2 = inlined_call_operand.vmem [shape: f32[2,128], index: 2, kind: input, shape index: {}]
  %s3 = inlined_call_operand.vmem [shape: bf16[2048,128], index: 3, kind: input, shape index: {}]
  %s4 = inlined_call_operand.vmem [shape: f32[2,128], index: 4, kind: input, shape index: {}]
  %s5 = inlined_call_operand.vmem [shape: bf16[128,128], index: 5, kind: input, shape index: {}]
  %s6 = inlined_call_operand.vmem [shape: f32[192,128], index: 6, kind: output, shape index: {}]
  %s7 = sld [smem:[#allocation0]]
  $region34: #{discriminator_forward.1} parent=0
    _
  %s9 = ssub.s32 1, %s7
  %s10 = scalar_select 0, %s9, %s7
  // Predicated region
  $region2: #{discriminator_forward.1} parent=0 // pred_check
    _
  $region3: #{discriminator_forward.1} parent=0 // pred_check_branch
    %12 = sbr.rel (0) target = $region5
  $region4: #{discriminator_forward.1} parent=0 // pred_region
    _
  $region5: #{discriminator_forward.1} parent=0 // pred_fallthru
    _
  // Predicated region
  $region6: #{discriminator_forward.1} parent=0 // pred_check
    _
  $region7: #{discriminator_forward.1} parent=0 // pred_check_branch
    %14 = sbr.rel (0) target = $region9
  $region8: #{discriminator_forward.1} parent=0 // pred_region
    _
  $region9: #{discriminator_forward.1} parent=0 // pred_fallthru
    _
  // Predicated region
  $region10: #{discriminator_forward.1} parent=0 // pred_check
    _
  $region11: #{discriminator_forward.1} parent=0 // pred_check_branch
    %16 = sbr.rel (0) target = $region13
  $region12: #{discriminator_forward.1} parent=0 // pred_region
    _
  $region13: #{discriminator_forward.1} parent=0 // pred_fallthru
    _
  // Predicated region
  $region14: #{discriminator_forward.1} parent=0 // pred_check
    _
  $region15: #{discriminator_forward.1} parent=0 // pred_check_branch
    %18 = sbr.rel (0) target = $region17
  $region16: #{discriminator_forward.1} parent=0 // pred_region
    _
  $region17: #{discriminator_forward.1} parent=0 // pred_fallthru
    _
  // Predicated region
  $region18: #{discriminator_forward.1} parent=0 // pred_check
    _
  $region19: #{discriminator_forward.1} parent=0 // pred_check_branch
    %20 = sbr.rel (0) target = $region21
  $region20: #{discriminator_forward.1} parent=0 // pred_region
    _
  $region21: #{discriminator_forward.1} parent=0 // pred_fallthru
    _
  // Predicated region
  $region22: #{discriminator_forward.1} parent=0 // pred_check
    _
  $region23: #{discriminator_forward.1} parent=0 // pred_check_branch
    %22 = sbr.rel (0) target = $region25
  $region24: #{discriminator_forward.1} parent=0 // pred_region
    _
  $region25: #{discriminator_forward.1} parent=0 // pred_fallthru
    _
  %v24 = vld [vmem:[%s0] sm:$0xf]
  %v25 = vld [vmem:[%s0 + $0x4] sm:$0xf]
  %v26 = vld [vmem:[%s0 + $0x8] sm:$0xf]
  %v27 = vld [vmem:[%s0 + $0xc] sm:$0xf]
  %v28 = vld [vmem:[%s0 + $0x10] sm:$0xf]
  %v29 = vld [vmem:[%s0 + $0x14] sm:$0xf]
  %v30 = vld [vmem:[%s0 + $0x18] sm:$0xf]
  %v31 = vld [vmem:[%s0 + $0x1c] sm:$0xf]
  %v32 = vld [vmem:[%s0 + $0x20] sm:$0xf]
  %v33 = vld [vmem:[%s0 + $0x24] sm:$0xf]
  %v34 = vld [vmem:[%s0 + $0x28] sm:$0xf]
  %v35 = vld [vmem:[%s0 + $0x2c] sm:$0xf]
  %v36 = vld [vmem:[%s0 + $0x30] sm:$0xf]
  %v37 = vld [vmem:[%s0 + $0x34] sm:$0xf]
  %v38 = vld [vmem:[%s0 + $0x38] sm:$0xf]
  %v39 = vld [vmem:[%s0 + $0x3c] sm:$0xf]
  %v40 = vld [vmem:[%s0 + $0x40] sm:$0xf]
  %v41 = vld [vmem:[%s0 + $0x44] sm:$0xf]
  %v42 = vld [vmem:[%s0 + $0x48] sm:$0xf]
  %v43 = vld [vmem:[%s0 + $0x4c] sm:$0xf]
  %v44 = vld [vmem:[%s0 + $0x50] sm:$0xf]
  %v45 = vld [vmem:[%s0 + $0x54] sm:$0xf]
  %v46 = vld [vmem:[%s0 + $0x58] sm:$0xf]
  %v47 = vld [vmem:[%s0 + $0x5c] sm:$0xf]
  %v48 = vld [vmem:[%s0 + $0x60] sm:$0xf]
  %v49 = vld [vmem:[%s0 + $0x64] sm:$0xf]
  %v50 = vld [vmem:[%s0 + $0x68] sm:$0xf]
  %v51 = vld [vmem:[%s0 + $0x6c] sm:$0xf]
  %v52 = vld [vmem:[%s0 + $0x70] sm:$0xf]
  %v53 = vld [vmem:[%s0 + $0x74] sm:$0xf]
  %v54 = vld [vmem:[%s0 + $0x78] sm:$0xf]
  %v55 = vld [vmem:[%s0 + $0x7c] sm:$0xf]
  %v56 = vld [vmem:[%s0 + $0x80] sm:$0xf]
  %v57 = vld [vmem:[%s0 + $0x84] sm:$0xf]
  %v58 = vld [vmem:[%s0 + $0x88] sm:$0xf]
  %v59 = vld [vmem:[%s0 + $0x8c] sm:$0xf]
  %v60 = vld [vmem:[%s0 + $0x90] sm:$0xf]
  %v61 = vld [vmem:[%s0 + $0x94] sm:$0xf]
  %v62 = vld [vmem:[%s0 + $0x98] sm:$0xf]
  %v63 = vld [vmem:[%s0 + $0x9c] sm:$0xf]
  %v64 = vld [vmem:[%s0 + $0xa0] sm:$0xf]
  %v65 = vld [vmem:[%s0 + $0xa4] sm:$0xf]
  %v66 = vld [vmem:[%s0 + $0xa8] sm:$0xf]
  %v67 = vld [vmem:[%s0 + $0xac] sm:$0xf]
  %v68 = vld [vmem:[%s0 + $0xb0] sm:$0xf]
  %v69 = vld [vmem:[%s0 + $0xb4] sm:$0xf]
  %v70 = vld [vmem:[%s0 + $0xb8] sm:$0xf]
  %v71 = vld [vmem:[%s0 + $0xbc] sm:$0xf]
  %v72 = vld [vmem:[%s0 + $0xc0] sm:$0xf]
  %v73 = vld [vmem:[%s0 + $0xc4] sm:$0xf]
  %v74 = vld [vmem:[%s0 + $0xc8] sm:$0xf]
  %v75 = vld [vmem:[%s0 + $0xcc] sm:$0xf]
  %v76 = vld [vmem:[%s0 + $0xd0] sm:$0xf]
  %v77 = vld [vmem:[%s0 + $0xd4] sm:$0xf]
  %v78 = vld [vmem:[%s0 + $0xd8] sm:$0xf]
  %v79 = vld [vmem:[%s0 + $0xdc] sm:$0xf]
  %v80 = vld [vmem:[%s0 + $0xe0] sm:$0xf]
  %v81 = vld [vmem:[%s0 + $0xe4] sm:$0xf]
  %v82 = vld [vmem:[%s0 + $0xe8] sm:$0xf]
  %v83 = vld [vmem:[%s0 + $0xec] sm:$0xf]
  %v84 = vld [vmem:[%s1] sm:$0xf]
  %v85 = vld [vmem:[%s1 + $0x4] sm:$0xf]
  %v86 = vld [vmem:[%s1 + $0x8] sm:$0xf]
  %v87 = vld [vmem:[%s1 + $0xc] sm:$0xf]
  %v88 = vld [vmem:[%s1 + $0x10] sm:$0xf]
  %v89 = vld [vmem:[%s1 + $0x14] sm:$0xf]
  %v90 = vld [vmem:[%s1 + $0x18] sm:$0xf]
  %v91 = vld [vmem:[%s1 + $0x1c] sm:$0xf]
  %v92 = vld [vmem:[%s1 + $0x20] sm:$0xf]
  %v93 = vld [vmem:[%s1 + $0x24] sm:$0xf]
  %v94 = vld [vmem:[%s1 + $0x28] sm:$0xf]
  %v95 = vld [vmem:[%s1 + $0x2c] sm:$0xf]
  %v96 = vld [vmem:[%s1 + $0x30] sm:$0xf]
  %v97 = vld [vmem:[%s1 + $0x34] sm:$0xf]
  %v98 = vld [vmem:[%s1 + $0x38] sm:$0xf]
  %v99 = vld [vmem:[%s1 + $0x3c] sm:$0xf]
  %v160 = vunpack.c.l.b16 %v24
  %v161 = vunpack.c.l.b16 %v25
  %v162 = vunpack.c.l.b16 %v26
  %v163 = vunpack.c.l.b16 %v27
  %v164 = vunpack.c.l.b16 %v28
  %v165 = vunpack.c.l.b16 %v29
  %v166 = vunpack.c.l.b16 %v30
  %v167 = vunpack.c.l.b16 %v31
  %v168 = vunpack.c.l.b16 %v32
  %v169 = vunpack.c.l.b16 %v33
  %v170 = vunpack.c.l.b16 %v34
  %v171 = vunpack.c.l.b16 %v35
  %v172 = vunpack.c.l.b16 %v36
  %v173 = vunpack.c.l.b16 %v37
  %v174 = vunpack.c.l.b16 %v38
  %v175 = vunpack.c.l.b16 %v39
  %v176 = vunpack.c.l.b16 %v40
  %v177 = vunpack.c.l.b16 %v41
  %v178 = vunpack.c.l.b16 %v42
  %v179 = vunpack.c.l.b16 %v43
  %v180 = vunpack.c.l.b16 %v44
  %v181 = vunpack.c.l.b16 %v45
  %v182 = vunpack.c.l.b16 %v46
  %v183 = vunpack.c.l.b16 %v47
  %v184 = vunpack.c.l.b16 %v48
  %v185 = vunpack.c.l.b16 %v49
  %v186 = vunpack.c.l.b16 %v50
  %v187 = vunpack.c.l.b16 %v51
  %v188 = vunpack.c.l.b16 %v52
  %v189 = vunpack.c.l.b16 %v53
  %v190 = vunpack.c.l.b16 %v54
  %v191 = vunpack.c.l.b16 %v55
  %v192 = vunpack.c.l.b16 %v56
  %v193 = vunpack.c.l.b16 %v57
  %v194 = vunpack.c.l.b16 %v58
  %v195 = vunpack.c.l.b16 %v59
  %v196 = vunpack.c.l.b16 %v60
  %v197 = vunpack.c.l.b16 %v61
  %v198 = vunpack.c.l.b16 %v62
  %v199 = vunpack.c.l.b16 %v63
  %v200 = vunpack.c.l.b16 %v64
  %v201 = vunpack.c.l.b16 %v65
  %v202 = vunpack.c.l.b16 %v66
  %v203 = vunpack.c.l.b16 %v67
  %v204 = vunpack.c.l.b16 %v68
  %v205 = vunpack.c.l.b16 %v69
  %v206 = vunpack.c.l.b16 %v70
  %v207 = vunpack.c.l.b16 %v71
  %v208 = vunpack.c.l.b16 %v72
  %v209 = vunpack.c.l.b16 %v73
  %v210 = vunpack.c.l.b16 %v74
  %v211 = vunpack.c.l.b16 %v75
  %v212 = vunpack.c.l.b16 %v76
  %v213 = vunpack.c.l.b16 %v77
  %v214 = vunpack.c.l.b16 %v78
  %v215 = vunpack.c.l.b16 %v79
  %v216 = vunpack.c.l.b16 %v80
  %v217 = vunpack.c.l.b16 %v81
  %v218 = vunpack.c.l.b16 %v82
  %v219 = vunpack.c.l.b16 %v83
  %v220 = vpack.c.b16 %v161, %v160
  %v221 = vpack.c.b16 %v163, %v162
  %v222 = vpack.c.b16 %v165, %v164
  %v223 = vpack.c.b16 %v167, %v166
  %v224 = vpack.c.b16 %v169, %v168
  %v225 = vpack.c.b16 %v171, %v170
  %v226 = vpack.c.b16 %v173, %v172
  %v227 = vpack.c.b16 %v175, %v174
  %v228 = vpack.c.b16 %v177, %v176
  %v229 = vpack.c.b16 %v179, %v178
  %v230 = vpack.c.b16 %v181, %v180
  %v231 = vpack.c.b16 %v183, %v182
  %v232 = vpack.c.b16 %v185, %v184
  %v233 = vpack.c.b16 %v187, %v186
  %v234 = vpack.c.b16 %v189, %v188
  %v235 = vpack.c.b16 %v191, %v190
  %v236 = vpack.c.b16 %v193, %v192
  %v237 = vpack.c.b16 %v195, %v194
  %v238 = vpack.c.b16 %v197, %v196
  %v239 = vpack.c.b16 %v199, %v198
  %v240 = vpack.c.b16 %v201, %v200
  %v241 = vpack.c.b16 %v203, %v202
  %v242 = vpack.c.b16 %v205, %v204
  %v243 = vpack.c.b16 %v207, %v206
  %v244 = vpack.c.b16 %v209, %v208
  %v245 = vpack.c.b16 %v211, %v210
  %v246 = vpack.c.b16 %v213, %v212
  %v247 = vpack.c.b16 %v215, %v214
  %v248 = vpack.c.b16 %v217, %v216
  %v249 = vpack.c.b16 %v219, %v218
  %v296 = vunpack.c.l.b16 %v84
  %v297 = vunpack.c.l.b16 %v85
  %v298 = vunpack.c.l.b16 %v86
  %v299 = vunpack.c.l.b16 %v87
  %v300 = vunpack.c.l.b16 %v88
  %v301 = vunpack.c.l.b16 %v89
  %v302 = vunpack.c.l.b16 %v90
  %v303 = vunpack.c.l.b16 %v91
  %v304 = vunpack.c.l.b16 %v92
  %v305 = vunpack.c.l.b16 %v93
  %v306 = vunpack.c.l.b16 %v94
  %v307 = vunpack.c.l.b16 %v95
  %v308 = vunpack.c.l.b16 %v96
  %v309 = vunpack.c.l.b16 %v97
  %v310 = vunpack.c.l.b16 %v98
  %v311 = vunpack.c.l.b16 %v99
  %v312 = vpack.c.b16 %v297, %v296
  %v313 = vpack.c.b16 %v299, %v298
  %v314 = vpack.c.b16 %v301, %v300
  %v315 = vpack.c.b16 %v303, %v302
  %v316 = vpack.c.b16 %v305, %v304
  %v317 = vpack.c.b16 %v307, %v306
  %v318 = vpack.c.b16 %v309, %v308
  %v319 = vpack.c.b16 %v311, %v310
  %328 = vmatpush.bf16.msra.mxu0 %v319
  %329 = vmatpush.bf16.msra.mxu0 %v318
  %330 = vmatpush.bf16.msra.mxu0 %v317
  %331 = vmatpush.bf16.msra.mxu0 %v316
  %332 = vmatpush.bf16.msra.mxu0 %v315
  %333 = vmatpush.bf16.msra.mxu0 %v314
  %334 = vmatpush.bf16.msra.mxu0 %v313
  %335 = vmatpush.bf16.msra.mxu0 %v312
  %336 = vmatmul.bf16.gmra.mxu0 %v220
  %v337 = vpop.f32.mrf.mxu0
  %v338 = vadd.f32 0.0, %v337
  %v339 = vpop.f32.mrf.mxu0
  %v340 = vadd.f32 0.0, %v339
  %341 = vmatmul.bf16.gmra.mxu0 %v221
  %v342 = vpop.f32.mrf.mxu0
  %v343 = vadd.f32 0.0, %v342
  %v344 = vpop.f32.mrf.mxu0
  %v345 = vadd.f32 0.0, %v344
  %346 = vmatmul.bf16.gmra.mxu0 %v222
  %v347 = vpop.f32.mrf.mxu0
  %v348 = vadd.f32 0.0, %v347
  %v349 = vpop.f32.mrf.mxu0
  %v350 = vadd.f32 0.0, %v349
  %351 = vmatmul.bf16.gmra.mxu0 %v223
  %v352 = vpop.f32.mrf.mxu0
  %v353 = vadd.f32 0.0, %v352
  %v354 = vpop.f32.mrf.mxu0
  %v355 = vadd.f32 0.0, %v354
  %356 = vmatmul.bf16.gmra.mxu0 %v224
  %v357 = vpop.f32.mrf.mxu0
  %v358 = vadd.f32 0.0, %v357
  %v359 = vpop.f32.mrf.mxu0
  %v360 = vadd.f32 0.0, %v359
  %361 = vmatmul.bf16.gmra.mxu0 %v225
  %v362 = vpop.f32.mrf.mxu0
  %v363 = vadd.f32 0.0, %v362
  %v364 = vpop.f32.mrf.mxu0
  %v365 = vadd.f32 0.0, %v364
  %366 = vmatmul.bf16.gmra.mxu0 %v226
  %v367 = vpop.f32.mrf.mxu0
  %v368 = vadd.f32 0.0, %v367
  %v369 = vpop.f32.mrf.mxu0
  %v370 = vadd.f32 0.0, %v369
  %371 = vmatmul.bf16.gmra.mxu0 %v227
  %v372 = vpop.f32.mrf.mxu0
  %v373 = vadd.f32 0.0, %v372
  %v374 = vpop.f32.mrf.mxu0
  %v375 = vadd.f32 0.0, %v374
  %376 = vmatmul.bf16.gmra.mxu0 %v228
  %v377 = vpop.f32.mrf.mxu0
  %v378 = vadd.f32 0.0, %v377
  %v379 = vpop.f32.mrf.mxu0
  %v380 = vadd.f32 0.0, %v379
  %381 = vmatmul.bf16.gmra.mxu0 %v229
  %v382 = vpop.f32.mrf.mxu0
  %v383 = vadd.f32 0.0, %v382
  %v384 = vpop.f32.mrf.mxu0
  %v385 = vadd.f32 0.0, %v384
  %386 = vmatmul.bf16.gmra.mxu0 %v230
  %v387 = vpop.f32.mrf.mxu0
  %v388 = vadd.f32 0.0, %v387
  %v389 = vpop.f32.mrf.mxu0
  %v390 = vadd.f32 0.0, %v389
  %391 = vmatmul.bf16.gmra.mxu0 %v231
  %v392 = vpop.f32.mrf.mxu0
  %v393 = vadd.f32 0.0, %v392
  %v394 = vpop.f32.mrf.mxu0
  %v395 = vadd.f32 0.0, %v394
  %396 = vmatmul.bf16.gmra.mxu0 %v232
  %v397 = vpop.f32.mrf.mxu0
  %v398 = vadd.f32 0.0, %v397
  %v399 = vpop.f32.mrf.mxu0
  %v400 = vadd.f32 0.0, %v399
  %401 = vmatmul.bf16.gmra.mxu0 %v233
  %v402 = vpop.f32.mrf.mxu0
  %v403 = vadd.f32 0.0, %v402
  %v404 = vpop.f32.mrf.mxu0
  %v405 = vadd.f32 0.0, %v404
  %406 = vmatmul.bf16.gmra.mxu0 %v234
  %v407 = vpop.f32.mrf.mxu0
  %v408 = vadd.f32 0.0, %v407
  %v409 = vpop.f32.mrf.mxu0
  %v410 = vadd.f32 0.0, %v409
  %411 = vmatmul.bf16.gmra.mxu0 %v235
  %v412 = vpop.f32.mrf.mxu0
  %v413 = vadd.f32 0.0, %v412
  %v414 = vpop.f32.mrf.mxu0
  %v415 = vadd.f32 0.0, %v414
  %416 = vmatmul.bf16.gmra.mxu0 %v236
  %v417 = vpop.f32.mrf.mxu0
  %v418 = vadd.f32 0.0, %v417
  %v419 = vpop.f32.mrf.mxu0
  %v420 = vadd.f32 0.0, %v419
  %421 = vmatmul.bf16.gmra.mxu0 %v237
  %v422 = vpop.f32.mrf.mxu0
  %v423 = vadd.f32 0.0, %v422
  %v424 = vpop.f32.mrf.mxu0
  %v425 = vadd.f32 0.0, %v424
  %426 = vmatmul.bf16.gmra.mxu0 %v238
  %v427 = vpop.f32.mrf.mxu0
  %v428 = vadd.f32 0.0, %v427
  %v429 = vpop.f32.mrf.mxu0
  %v430 = vadd.f32 0.0, %v429
  %431 = vmatmul.bf16.gmra.mxu0 %v239
  %v432 = vpop.f32.mrf.mxu0
  %v433 = vadd.f32 0.0, %v432
  %v434 = vpop.f32.mrf.mxu0
  %v435 = vadd.f32 0.0, %v434
  %436 = vmatmul.bf16.gmra.mxu0 %v240
  %v437 = vpop.f32.mrf.mxu0
  %v438 = vadd.f32 0.0, %v437
  %v439 = vpop.f32.mrf.mxu0
  %v440 = vadd.f32 0.0, %v439
  %441 = vmatmul.bf16.gmra.mxu0 %v241
  %v442 = vpop.f32.mrf.mxu0
  %v443 = vadd.f32 0.0, %v442
  %v444 = vpop.f32.mrf.mxu0
  %v445 = vadd.f32 0.0, %v444
  %446 = vmatmul.bf16.gmra.mxu0 %v242
  %v447 = vpop.f32.mrf.mxu0
  %v448 = vadd.f32 0.0, %v447
  %v449 = vpop.f32.mrf.mxu0
  %v450 = vadd.f32 0.0, %v449
  %451 = vmatmul.bf16.gmra.mxu0 %v243
  %v452 = vpop.f32.mrf.mxu0
  %v453 = vadd.f32 0.0, %v452
  %v454 = vpop.f32.mrf.mxu0
  %v455 = vadd.f32 0.0, %v454
  %456 = vmatmul.bf16.gmra.mxu0 %v244
  %v457 = vpop.f32.mrf.mxu0
  %v458 = vadd.f32 0.0, %v457
  %v459 = vpop.f32.mrf.mxu0
  %v460 = vadd.f32 0.0, %v459
  %461 = vmatmul.bf16.gmra.mxu0 %v245
  %v462 = vpop.f32.mrf.mxu0
  %v463 = vadd.f32 0.0, %v462
  %v464 = vpop.f32.mrf.mxu0
  %v465 = vadd.f32 0.0, %v464
  %466 = vmatmul.bf16.gmra.mxu0 %v246
  %v467 = vpop.f32.mrf.mxu0
  %v468 = vadd.f32 0.0, %v467
  %v469 = vpop.f32.mrf.mxu0
  %v470 = vadd.f32 0.0, %v469
  %471 = vmatmul.bf16.gmra.mxu0 %v247
  %v472 = vpop.f32.mrf.mxu0
  %v473 = vadd.f32 0.0, %v472
  %v474 = vpop.f32.mrf.mxu0
  %v475 = vadd.f32 0.0, %v474
  %476 = vmatmul.bf16.gmra.mxu0 %v248
  %v477 = vpop.f32.mrf.mxu0
  %v478 = vadd.f32 0.0, %v477
  %v479 = vpop.f32.mrf.mxu0
  %v480 = vadd.f32 0.0, %v479
  %481 = vmatmul.bf16.gmra.mxu0 %v249
  %v482 = vpop.f32.mrf.mxu0
  %v483 = vadd.f32 0.0, %v482
  %v484 = vpop.f32.mrf.mxu0
  %v485 = vadd.f32 0.0, %v484
  %486 = vdwg.mxu0
  %v487 = vld [vmem:[%s2] sm:$0x1]
  %v488 = vld [vmem:[%s2 + $0x1] sm:$0x1]
  %v489 = vadd.f32 %v338, %v340
  %v490 = vadd.f32 %v489, %v343
  %v491 = vadd.f32 %v490, %v345
  %v492 = vadd.f32 %v491, %v348
  %v493 = vadd.f32 %v492, %v350
  %v494 = vadd.f32 %v493, %v353
  %v495 = vadd.f32 %v494, %v355
  %v496 = vadd.f32 %v495, %v358
  %v497 = vadd.f32 %v496, %v360
  %v498 = vadd.f32 %v497, %v363
  %v499 = vadd.f32 %v498, %v365
  %v500 = vadd.f32 %v499, %v368
  %v501 = vadd.f32 %v500, %v370
  %v502 = vadd.f32 %v501, %v373
  %v503 = vadd.f32 %v502, %v375
  %v504 = vadd.f32 %v503, %v378
  %v505 = vadd.f32 %v504, %v380
  %v506 = vadd.f32 %v505, %v383
  %v507 = vadd.f32 %v506, %v385
  %v508 = vadd.f32 %v507, %v388
  %v509 = vadd.f32 %v508, %v390
  %v510 = vadd.f32 %v509, %v393
  %v511 = vadd.f32 %v510, %v395
  %v512 = vadd.f32 %v511, %v398
  %v513 = vadd.f32 %v512, %v400
  %v514 = vadd.f32 %v513, %v403
  %v515 = vadd.f32 %v514, %v405
  %v516 = vadd.f32 %v515, %v408
  %v517 = vadd.f32 %v516, %v410
  %v518 = vadd.f32 %v517, %v413
  %v519 = vadd.f32 %v518, %v415
  %v520 = vadd.f32 %v519, %v418
  %v521 = vadd.f32 %v520, %v420
  %v522 = vadd.f32 %v521, %v423
  %v523 = vadd.f32 %v522, %v425
  %v524 = vadd.f32 %v523, %v428
  %v525 = vadd.f32 %v524, %v430
  %v526 = vadd.f32 %v525, %v433
  %v527 = vadd.f32 %v526, %v435
  %v528 = vadd.f32 %v527, %v438
  %v529 = vadd.f32 %v528, %v440
  %v530 = vadd.f32 %v529, %v443
  %v531 = vadd.f32 %v530, %v445
  %v532 = vadd.f32 %v531, %v448
  %v533 = vadd.f32 %v532, %v450
  %v534 = vadd.f32 %v533, %v453
  %v535 = vadd.f32 %v534, %v455
  %v536 = vadd.f32 %v535, %v458
  %v537 = vadd.f32 %v536, %v460
  %v538 = vadd.f32 %v537, %v463
  %v539 = vadd.f32 %v538, %v465
  %v540 = vadd.f32 %v539, %v468
  %v541 = vadd.f32 %v540, %v470
  %v542 = vadd.f32 %v541, %v473
  %v543 = vadd.f32 %v542, %v475
  %v544 = vadd.f32 %v543, %v478
  %v545 = vadd.f32 %v544, %v480
  %v546 = vadd.f32 %v545, %v483
  %v547 = vadd.f32 %v546, %v485
  %v548 = vrot.slane %v547, 4
  %v549 = vadd.f32 %v547, %v548
  %v550 = vrot.slane %v549, 2
  %v551 = vadd.f32 %v549, %v550
  %v552 = vrot.slane %v551, 1
  %v553 = vadd.f32 %v551, %v552
  %v554 = vmul.f32 %v553, 0.0022222223
  %v555 = vmul.f32 %v338, %v338
  %v556 = vmul.f32 %v340, %v340
  %v557 = vmul.f32 %v343, %v343
  %v558 = vmul.f32 %v345, %v345
  %v559 = vmul.f32 %v348, %v348
  %v560 = vmul.f32 %v350, %v350
  %v561 = vmul.f32 %v353, %v353
  %v562 = vmul.f32 %v355, %v355
  %v563 = vmul.f32 %v358, %v358
  %v564 = vmul.f32 %v360, %v360
  %v565 = vmul.f32 %v363, %v363
  %v566 = vmul.f32 %v365, %v365
  %v567 = vmul.f32 %v368, %v368
  %v568 = vmul.f32 %v370, %v370
  %v569 = vmul.f32 %v373, %v373
  %v570 = vmul.f32 %v375, %v375
  %v571 = vmul.f32 %v378, %v378
  %v572 = vmul.f32 %v380, %v380
  %v573 = vmul.f32 %v383, %v383
  %v574 = vmul.f32 %v385, %v385
  %v575 = vmul.f32 %v388, %v388
  %v576 = vmul.f32 %v390, %v390
  %v577 = vmul.f32 %v393, %v393
  %v578 = vmul.f32 %v395, %v395
  %v579 = vmul.f32 %v398, %v398
  %v580 = vmul.f32 %v400, %v400
  %v581 = vmul.f32 %v403, %v403
  %v582 = vmul.f32 %v405, %v405
  %v583 = vmul.f32 %v408, %v408
  %v584 = vmul.f32 %v410, %v410
  %v585 = vmul.f32 %v413, %v413
  %v586 = vmul.f32 %v415, %v415
  %v587 = vmul.f32 %v418, %v418
  %v588 = vmul.f32 %v420, %v420
  %v589 = vmul.f32 %v423, %v423
  %v590 = vmul.f32 %v425, %v425
  %v591 = vmul.f32 %v428, %v428
  %v592 = vmul.f32 %v430, %v430
  %v593 = vmul.f32 %v433, %v433
  %v594 = vmul.f32 %v435, %v435
  %v595 = vmul.f32 %v438, %v438
  %v596 = vmul.f32 %v440, %v440
  %v597 = vmul.f32 %v443, %v443
  %v598 = vmul.f32 %v445, %v445
  %v599 = vmul.f32 %v448, %v448
  %v600 = vmul.f32 %v450, %v450
  %v601 = vmul.f32 %v453, %v453
  %v602 = vmul.f32 %v455, %v455
  %v603 = vmul.f32 %v458, %v458
  %v604 = vmul.f32 %v460, %v460
  %v605 = vmul.f32 %v463, %v463
  %v606 = vmul.f32 %v465, %v465
  %v607 = vmul.f32 %v468, %v468
  %v608 = vmul.f32 %v470, %v470
  %v609 = vmul.f32 %v473, %v473
  %v610 = vmul.f32 %v475, %v475
  %v611 = vmul.f32 %v478, %v478
  %v612 = vmul.f32 %v480, %v480
  %v613 = vmul.f32 %v483, %v483
  %v614 = vmul.f32 %v485, %v485
  %v615 = vadd.f32 %v555, %v556
  %v616 = vadd.f32 %v615, %v557
  %v617 = vadd.f32 %v616, %v558
  %v618 = vadd.f32 %v617, %v559
  %v619 = vadd.f32 %v618, %v560
  %v620 = vadd.f32 %v619, %v561
  %v621 = vadd.f32 %v620, %v562
  %v622 = vadd.f32 %v621, %v563
  %v623 = vadd.f32 %v622, %v564
  %v624 = vadd.f32 %v623, %v565
  %v625 = vadd.f32 %v624, %v566
  %v626 = vadd.f32 %v625, %v567
  %v627 = vadd.f32 %v626, %v568
  %v628 = vadd.f32 %v627, %v569
  %v629 = vadd.f32 %v628, %v570
  %v630 = vadd.f32 %v629, %v571
  %v631 = vadd.f32 %v630, %v572
  %v632 = vadd.f32 %v631, %v573
  %v633 = vadd.f32 %v632, %v574
  %v634 = vadd.f32 %v633, %v575
  %v635 = vadd.f32 %v634, %v576
  %v636 = vadd.f32 %v635, %v577
  %v637 = vadd.f32 %v636, %v578
  %v638 = vadd.f32 %v637, %v579
  %v639 = vadd.f32 %v638, %v580
  %v640 = vadd.f32 %v639, %v581
  %v641 = vadd.f32 %v640, %v582
  %v642 = vadd.f32 %v641, %v583
  %v643 = vadd.f32 %v642, %v584
  %v644 = vadd.f32 %v643, %v585
  %v645 = vadd.f32 %v644, %v586
  %v646 = vadd.f32 %v645, %v587
  %v647 = vadd.f32 %v646, %v588
  %v648 = vadd.f32 %v647, %v589
  %v649 = vadd.f32 %v648, %v590
  %v650 = vadd.f32 %v649, %v591
  %v651 = vadd.f32 %v650, %v592
  %v652 = vadd.f32 %v651, %v593
  %v653 = vadd.f32 %v652, %v594
  %v654 = vadd.f32 %v653, %v595
  %v655 = vadd.f32 %v654, %v596
  %v656 = vadd.f32 %v655, %v597
  %v657 = vadd.f32 %v656, %v598
  %v658 = vadd.f32 %v657, %v599
  %v659 = vadd.f32 %v658, %v600
  %v660 = vadd.f32 %v659, %v601
  %v661 = vadd.f32 %v660, %v602
  %v662 = vadd.f32 %v661, %v603
  %v663 = vadd.f32 %v662, %v604
  %v664 = vadd.f32 %v663, %v605
  %v665 = vadd.f32 %v664, %v606
  %v666 = vadd.f32 %v665, %v607
  %v667 = vadd.f32 %v666, %v608
  %v668 = vadd.f32 %v667, %v609
  %v669 = vadd.f32 %v668, %v610
  %v670 = vadd.f32 %v669, %v611
  %v671 = vadd.f32 %v670, %v612
  %v672 = vadd.f32 %v671, %v613
  %v673 = vadd.f32 %v672, %v614
  %v674 = vrot.slane %v673, 4
  %v675 = vadd.f32 %v673, %v674
  %v676 = vrot.slane %v675, 2
  %v677 = vadd.f32 %v675, %v676
  %v678 = vrot.slane %v677, 1
  %v679 = vadd.f32 %v677, %v678
  %v680 = vmul.f32 %v679, 0.0022222223
  %v681 = vmul.f32 %v554, %v554
  %v682 = vsub.f32 %v680, %v681
  %v683 = vmax.f32 %v682, 0.0
  %v684 = vadd.f32 %v683, 1e-05
  %v685 = vrsqrt.pop %v684
  %v686 = vmul.f32 %v685, %v684
  %v687 = vmul.f32 %v686, %v685
  %v688 = vmul.f32 0.5, %v687
  %v689 = vsub.f32 1.5, %v688
  %v690 = vmul.f32 %v685, %v689
  %vm691 = vweird.f32 %v684
  %vm692 = vweird.f32 %v685
  %vm693 = vmor %vm691, %vm692
  %v694 = vsel %vm693, %v685, %v690
  %v695 = vmul.f32 %v487, %v694
  %v696 = vsub.f32 %v338, %v554
  %v697 = vsub.f32 %v340, %v554
  %v698 = vsub.f32 %v343, %v554
  %v699 = vsub.f32 %v345, %v554
  %v700 = vsub.f32 %v348, %v554
  %v701 = vsub.f32 %v350, %v554
  %v702 = vsub.f32 %v353, %v554
  %v703 = vsub.f32 %v355, %v554
  %v704 = vsub.f32 %v358, %v554
  %v705 = vsub.f32 %v360, %v554
  %v706 = vsub.f32 %v363, %v554
  %v707 = vsub.f32 %v365, %v554
  %v708 = vsub.f32 %v368, %v554
  %v709 = vsub.f32 %v370, %v554
  %v710 = vsub.f32 %v373, %v554
  %v711 = vsub.f32 %v375, %v554
  %v712 = vsub.f32 %v378, %v554
  %v713 = vsub.f32 %v380, %v554
  %v714 = vsub.f32 %v383, %v554
  %v715 = vsub.f32 %v385, %v554
  %v716 = vsub.f32 %v388, %v554
  %v717 = vsub.f32 %v390, %v554
  %v718 = vsub.f32 %v393, %v554
  %v719 = vsub.f32 %v395, %v554
  %v720 = vsub.f32 %v398, %v554
  %v721 = vsub.f32 %v400, %v554
  %v722 = vsub.f32 %v403, %v554
  %v723 = vsub.f32 %v405, %v554
  %v724 = vsub.f32 %v408, %v554
  %v725 = vsub.f32 %v410, %v554
  %v726 = vsub.f32 %v413, %v554
  %v727 = vsub.f32 %v415, %v554
  %v728 = vsub.f32 %v418, %v554
  %v729 = vsub.f32 %v420, %v554
  %v730 = vsub.f32 %v423, %v554
  %v731 = vsub.f32 %v425, %v554
  %v732 = vsub.f32 %v428, %v554
  %v733 = vsub.f32 %v430, %v554
  %v734 = vsub.f32 %v433, %v554
  %v735 = vsub.f32 %v435, %v554
  %v736 = vsub.f32 %v438, %v554
  %v737 = vsub.f32 %v440, %v554
  %v738 = vsub.f32 %v443, %v554
  %v739 = vsub.f32 %v445, %v554
  %v740 = vsub.f32 %v448, %v554
  %v741 = vsub.f32 %v450, %v554
  %v742 = vsub.f32 %v453, %v554
  %v743 = vsub.f32 %v455, %v554
  %v744 = vsub.f32 %v458, %v554
  %v745 = vsub.f32 %v460, %v554
  %v746 = vsub.f32 %v463, %v554
  %v747 = vsub.f32 %v465, %v554
  %v748 = vsub.f32 %v468, %v554
  %v749 = vsub.f32 %v470, %v554
  %v750 = vsub.f32 %v473, %v554
  %v751 = vsub.f32 %v475, %v554
  %v752 = vsub.f32 %v478, %v554
  %v753 = vsub.f32 %v480, %v554
  %v754 = vsub.f32 %v483, %v554
  %v755 = vsub.f32 %v485, %v554
  %v756 = vperm.slane %v695, 0
  %v757 = vmul.f32 %v696, %v756
  %v758 = vmul.f32 %v697, %v756
  %v759 = vmul.f32 %v698, %v756
  %v760 = vmul.f32 %v699, %v756
  %v761 = vmul.f32 %v700, %v756
  %v762 = vmul.f32 %v701, %v756
  %v763 = vmul.f32 %v702, %v756
  %v764 = vmul.f32 %v703, %v756
  %v765 = vmul.f32 %v704, %v756
  %v766 = vmul.f32 %v705, %v756
  %v767 = vmul.f32 %v706, %v756
  %v768 = vmul.f32 %v707, %v756
  %v769 = vmul.f32 %v708, %v756
  %v770 = vmul.f32 %v709, %v756
  %v771 = vmul.f32 %v710, %v756
  %v772 = vmul.f32 %v711, %v756
  %v773 = vmul.f32 %v712, %v756
  %v774 = vmul.f32 %v713, %v756
  %v775 = vmul.f32 %v714, %v756
  %v776 = vmul.f32 %v715, %v756
  %v777 = vmul.f32 %v716, %v756
  %v778 = vmul.f32 %v717, %v756
  %v779 = vmul.f32 %v718, %v756
  %v780 = vmul.f32 %v719, %v756
  %v781 = vmul.f32 %v720, %v756
  %v782 = vmul.f32 %v721, %v756
  %v783 = vmul.f32 %v722, %v756
  %v784 = vmul.f32 %v723, %v756
  %v785 = vmul.f32 %v724, %v756
  %v786 = vmul.f32 %v725, %v756
  %v787 = vmul.f32 %v726, %v756
  %v788 = vmul.f32 %v727, %v756
  %v789 = vmul.f32 %v728, %v756
  %v790 = vmul.f32 %v729, %v756
  %v791 = vmul.f32 %v730, %v756
  %v792 = vmul.f32 %v731, %v756
  %v793 = vmul.f32 %v732, %v756
  %v794 = vmul.f32 %v733, %v756
  %v795 = vmul.f32 %v734, %v756
  %v796 = vmul.f32 %v735, %v756
  %v797 = vmul.f32 %v736, %v756
  %v798 = vmul.f32 %v737, %v756
  %v799 = vmul.f32 %v738, %v756
  %v800 = vmul.f32 %v739, %v756
  %v801 = vmul.f32 %v740, %v756
  %v802 = vmul.f32 %v741, %v756
  %v803 = vmul.f32 %v742, %v756
  %v804 = vmul.f32 %v743, %v756
  %v805 = vmul.f32 %v744, %v756
  %v806 = vmul.f32 %v745, %v756
  %v807 = vmul.f32 %v746, %v756
  %v808 = vmul.f32 %v747, %v756
  %v809 = vmul.f32 %v748, %v756
  %v810 = vmul.f32 %v749, %v756
  %v811 = vmul.f32 %v750, %v756
  %v812 = vmul.f32 %v751, %v756
  %v813 = vmul.f32 %v752, %v756
  %v814 = vmul.f32 %v753, %v756
  %v815 = vmul.f32 %v754, %v756
  %v816 = vmul.f32 %v755, %v756
  %v817 = vperm.slane %v488, 0
  %v818 = vadd.f32 %v757, %v817
  %v819 = vadd.f32 %v758, %v817
  %v820 = vadd.f32 %v759, %v817
  %v821 = vadd.f32 %v760, %v817
  %v822 = vadd.f32 %v761, %v817
  %v823 = vadd.f32 %v762, %v817
  %v824 = vadd.f32 %v763, %v817
  %v825 = vadd.f32 %v764, %v817
  %v826 = vadd.f32 %v765, %v817
  %v827 = vadd.f32 %v766, %v817
  %v828 = vadd.f32 %v767, %v817
  %v829 = vadd.f32 %v768, %v817
  %v830 = vadd.f32 %v769, %v817
  %v831 = vadd.f32 %v770, %v817
  %v832 = vadd.f32 %v771, %v817
  %v833 = vadd.f32 %v772, %v817
  %v834 = vadd.f32 %v773, %v817
  %v835 = vadd.f32 %v774, %v817
  %v836 = vadd.f32 %v775, %v817
  %v837 = vadd.f32 %v776, %v817
  %v838 = vadd.f32 %v777, %v817
  %v839 = vadd.f32 %v778, %v817
  %v840 = vadd.f32 %v779, %v817
  %v841 = vadd.f32 %v780, %v817
  %v842 = vadd.f32 %v781, %v817
  %v843 = vadd.f32 %v782, %v817
  %v844 = vadd.f32 %v783, %v817
  %v845 = vadd.f32 %v784, %v817
  %v846 = vadd.f32 %v785, %v817
  %v847 = vadd.f32 %v786, %v817
  %v848 = vadd.f32 %v787, %v817
  %v849 = vadd.f32 %v788, %v817
  %v850 = vadd.f32 %v789, %v817
  %v851 = vadd.f32 %v790, %v817
  %v852 = vadd.f32 %v791, %v817
  %v853 = vadd.f32 %v792, %v817
  %v854 = vadd.f32 %v793, %v817
  %v855 = vadd.f32 %v794, %v817
  %v856 = vadd.f32 %v795, %v817
  %v857 = vadd.f32 %v796, %v817
  %v858 = vadd.f32 %v797, %v817
  %v859 = vadd.f32 %v798, %v817
  %v860 = vadd.f32 %v799, %v817
  %v861 = vadd.f32 %v800, %v817
  %v862 = vadd.f32 %v801, %v817
  %v863 = vadd.f32 %v802, %v817
  %v864 = vadd.f32 %v803, %v817
  %v865 = vadd.f32 %v804, %v817
  %v866 = vadd.f32 %v805, %v817
  %v867 = vadd.f32 %v806, %v817
  %v868 = vadd.f32 %v807, %v817
  %v869 = vadd.f32 %v808, %v817
  %v870 = vadd.f32 %v809, %v817
  %v871 = vadd.f32 %v810, %v817
  %v872 = vadd.f32 %v811, %v817
  %v873 = vadd.f32 %v812, %v817
  %v874 = vadd.f32 %v813, %v817
  %v875 = vadd.f32 %v814, %v817
  %v876 = vadd.f32 %v815, %v817
  %v877 = vadd.f32 %v816, %v817
  %vm878 = vcmp.gt.f32.partialorder %v818, 0.0
  %vm879 = vcmp.gt.f32.partialorder %v819, 0.0
  %vm880 = vcmp.gt.f32.partialorder %v820, 0.0
  %vm881 = vcmp.gt.f32.partialorder %v821, 0.0
  %vm882 = vcmp.gt.f32.partialorder %v822, 0.0
  %vm883 = vcmp.gt.f32.partialorder %v823, 0.0
  %vm884 = vcmp.gt.f32.partialorder %v824, 0.0
  %vm885 = vcmp.gt.f32.partialorder %v825, 0.0
  %vm886 = vcmp.gt.f32.partialorder %v826, 0.0
  %vm887 = vcmp.gt.f32.partialorder %v827, 0.0
  %vm888 = vcmp.gt.f32.partialorder %v828, 0.0
  %vm889 = vcmp.gt.f32.partialorder %v829, 0.0
  %vm890 = vcmp.gt.f32.partialorder %v830, 0.0
  %vm891 = vcmp.gt.f32.partialorder %v831, 0.0
  %vm892 = vcmp.gt.f32.partialorder %v832, 0.0
  %vm893 = vcmp.gt.f32.partialorder %v833, 0.0
  %vm894 = vcmp.gt.f32.partialorder %v834, 0.0
  %vm895 = vcmp.gt.f32.partialorder %v835, 0.0
  %vm896 = vcmp.gt.f32.partialorder %v836, 0.0
  %vm897 = vcmp.gt.f32.partialorder %v837, 0.0
  %vm898 = vcmp.gt.f32.partialorder %v838, 0.0
  %vm899 = vcmp.gt.f32.partialorder %v839, 0.0
  %vm900 = vcmp.gt.f32.partialorder %v840, 0.0
  %vm901 = vcmp.gt.f32.partialorder %v841, 0.0
  %vm902 = vcmp.gt.f32.partialorder %v842, 0.0
  %vm903 = vcmp.gt.f32.partialorder %v843, 0.0
  %vm904 = vcmp.gt.f32.partialorder %v844, 0.0
  %vm905 = vcmp.gt.f32.partialorder %v845, 0.0
  %vm906 = vcmp.gt.f32.partialorder %v846, 0.0
  %vm907 = vcmp.gt.f32.partialorder %v847, 0.0
  %vm908 = vcmp.gt.f32.partialorder %v848, 0.0
  %vm909 = vcmp.gt.f32.partialorder %v849, 0.0
  %vm910 = vcmp.gt.f32.partialorder %v850, 0.0
  %vm911 = vcmp.gt.f32.partialorder %v851, 0.0
  %vm912 = vcmp.gt.f32.partialorder %v852, 0.0
  %vm913 = vcmp.gt.f32.partialorder %v853, 0.0
  %vm914 = vcmp.gt.f32.partialorder %v854, 0.0
  %vm915 = vcmp.gt.f32.partialorder %v855, 0.0
  %vm916 = vcmp.gt.f32.partialorder %v856, 0.0
  %vm917 = vcmp.gt.f32.partialorder %v857, 0.0
  %vm918 = vcmp.gt.f32.partialorder %v858, 0.0
  %vm919 = vcmp.gt.f32.partialorder %v859, 0.0
  %vm920 = vcmp.gt.f32.partialorder %v860, 0.0
  %vm921 = vcmp.gt.f32.partialorder %v861, 0.0
  %vm922 = vcmp.gt.f32.partialorder %v862, 0.0
  %vm923 = vcmp.gt.f32.partialorder %v863, 0.0
  %vm924 = vcmp.gt.f32.partialorder %v864, 0.0
  %vm925 = vcmp.gt.f32.partialorder %v865, 0.0
  %vm926 = vcmp.gt.f32.partialorder %v866, 0.0
  %vm927 = vcmp.gt.f32.partialorder %v867, 0.0
  %vm928 = vcmp.gt.f32.partialorder %v868, 0.0
  %vm929 = vcmp.gt.f32.partialorder %v869, 0.0
  %vm930 = vcmp.gt.f32.partialorder %v870, 0.0
  %vm931 = vcmp.gt.f32.partialorder %v871, 0.0
  %vm932 = vcmp.gt.f32.partialorder %v872, 0.0
  %vm933 = vcmp.gt.f32.partialorder %v873, 0.0
  %vm934 = vcmp.gt.f32.partialorder %v874, 0.0
  %vm935 = vcmp.gt.f32.partialorder %v875, 0.0
  %vm936 = vcmp.gt.f32.partialorder %v876, 0.0
  %vm937 = vcmp.gt.f32.partialorder %v877, 0.0
  %v938 = vmul.f32 %v818, 0.2
  %v939 = vmul.f32 %v819, 0.2
  %v940 = vmul.f32 %v820, 0.2
  %v941 = vmul.f32 %v821, 0.2
  %v942 = vmul.f32 %v822, 0.2
  %v943 = vmul.f32 %v823, 0.2
  %v944 = vmul.f32 %v824, 0.2
  %v945 = vmul.f32 %v825, 0.2
  %v946 = vmul.f32 %v826, 0.2
  %v947 = vmul.f32 %v827, 0.2
  %v948 = vmul.f32 %v828, 0.2
  %v949 = vmul.f32 %v829, 0.2
  %v950 = vmul.f32 %v830, 0.2
  %v951 = vmul.f32 %v831, 0.2
  %v952 = vmul.f32 %v832, 0.2
  %v953 = vmul.f32 %v833, 0.2
  %v954 = vmul.f32 %v834, 0.2
  %v955 = vmul.f32 %v835, 0.2
  %v956 = vmul.f32 %v836, 0.2
  %v957 = vmul.f32 %v837, 0.2
  %v958 = vmul.f32 %v838, 0.2
  %v959 = vmul.f32 %v839, 0.2
  %v960 = vmul.f32 %v840, 0.2
  %v961 = vmul.f32 %v841, 0.2
  %v962 = vmul.f32 %v842, 0.2
  %v963 = vmul.f32 %v843, 0.2
  %v964 = vmul.f32 %v844, 0.2
  %v965 = vmul.f32 %v845, 0.2
  %v966 = vmul.f32 %v846, 0.2
  %v967 = vmul.f32 %v847, 0.2
  %v968 = vmul.f32 %v848, 0.2
  %v969 = vmul.f32 %v849, 0.2
  %v970 = vmul.f32 %v850, 0.2
  %v971 = vmul.f32 %v851, 0.2
  %v972 = vmul.f32 %v852, 0.2
  %v973 = vmul.f32 %v853, 0.2
  %v974 = vmul.f32 %v854, 0.2
  %v975 = vmul.f32 %v855, 0.2
  %v976 = vmul.f32 %v856, 0.2
  %v977 = vmul.f32 %v857, 0.2
  %v978 = vmul.f32 %v858, 0.2
  %v979 = vmul.f32 %v859, 0.2
  %v980 = vmul.f32 %v860, 0.2
  %v981 = vmul.f32 %v861, 0.2
  %v982 = vmul.f32 %v862, 0.2
  %v983 = vmul.f32 %v863, 0.2
  %v984 = vmul.f32 %v864, 0.2
  %v985 = vmul.f32 %v865, 0.2
  %v986 = vmul.f32 %v866, 0.2
  %v987 = vmul.f32 %v867, 0.2
  %v988 = vmul.f32 %v868, 0.2
  %v989 = vmul.f32 %v869, 0.2
  %v990 = vmul.f32 %v870, 0.2
  %v991 = vmul.f32 %v871, 0.2
  %v992 = vmul.f32 %v872, 0.2
  %v993 = vmul.f32 %v873, 0.2
  %v994 = vmul.f32 %v874, 0.2
  %v995 = vmul.f32 %v875, 0.2
  %v996 = vmul.f32 %v876, 0.2
  %v997 = vmul.f32 %v877, 0.2
  %v998 = vsel %vm878, %v818, %v938
  %v999 = vsel %vm879, %v819, %v939
  %v1000 = vsel %vm880, %v820, %v940
  %v1001 = vsel %vm881, %v821, %v941
  %v1002 = vsel %vm882, %v822, %v942
  %v1003 = vsel %vm883, %v823, %v943
  %v1004 = vsel %vm884, %v824, %v944
  %v1005 = vsel %vm885, %v825, %v945
  %v1006 = vsel %vm886, %v826, %v946
  %v1007 = vsel %vm887, %v827, %v947
  %v1008 = vsel %vm888, %v828, %v948
  %v1009 = vsel %vm889, %v829, %v949
  %v1010 = vsel %vm890, %v830, %v950
  %v1011 = vsel %vm891, %v831, %v951
  %v1012 = vsel %vm892, %v832, %v952
  %v1013 = vsel %vm893, %v833, %v953
  %v1014 = vsel %vm894, %v834, %v954
  %v1015 = vsel %vm895, %v835, %v955
  %v1016 = vsel %vm896, %v836, %v956
  %v1017 = vsel %vm897, %v837, %v957
  %v1018 = vsel %vm898, %v838, %v958
  %v1019 = vsel %vm899, %v839, %v959
  %v1020 = vsel %vm900, %v840, %v960
  %v1021 = vsel %vm901, %v841, %v961
  %v1022 = vsel %vm902, %v842, %v962
  %v1023 = vsel %vm903, %v843, %v963
  %v1024 = vsel %vm904, %v844, %v964
  %v1025 = vsel %vm905, %v845, %v965
  %v1026 = vsel %vm906, %v846, %v966
  %v1027 = vsel %vm907, %v847, %v967
  %v1028 = vsel %vm908, %v848, %v968
  %v1029 = vsel %vm909, %v849, %v969
  %v1030 = vsel %vm910, %v850, %v970
  %v1031 = vsel %vm911, %v851, %v971
  %v1032 = vsel %vm912, %v852, %v972
  %v1033 = vsel %vm913, %v853, %v973
  %v1034 = vsel %vm914, %v854, %v974
  %v1035 = vsel %vm915, %v855, %v975
  %v1036 = vsel %vm916, %v856, %v976
  %v1037 = vsel %vm917, %v857, %v977
  %v1038 = vsel %vm918, %v858, %v978
  %v1039 = vsel %vm919, %v859, %v979
  %v1040 = vsel %vm920, %v860, %v980
  %v1041 = vsel %vm921, %v861, %v981
  %v1042 = vsel %vm922, %v862, %v982
  %v1043 = vsel %vm923, %v863, %v983
  %v1044 = vsel %vm924, %v864, %v984
  %v1045 = vsel %vm925, %v865, %v985
  %v1046 = vsel %vm926, %v866, %v986
  %v1047 = vsel %vm927, %v867, %v987
  %v1048 = vsel %vm928, %v868, %v988
  %v1049 = vsel %vm929, %v869, %v989
  %v1050 = vsel %vm930, %v870, %v990
  %v1051 = vsel %vm931, %v871, %v991
  %v1052 = vsel %vm932, %v872, %v992
  %v1053 = vsel %vm933, %v873, %v993
  %v1054 = vsel %vm934, %v874, %v994
  %v1055 = vsel %vm935, %v875, %v995
  %v1056 = vsel %vm936, %v876, %v996
  %v1057 = vsel %vm937, %v877, %v997
  %v1058 = vpack.c.bf16 %v998, %v998
  %v1059 = vpack.c.bf16 %v999, %v999
  %v1060 = vpack.c.bf16 %v1000, %v1000
  %v1061 = vpack.c.bf16 %v1001, %v1001
  %v1062 = vpack.c.bf16 %v1002, %v1002
  %v1063 = vpack.c.bf16 %v1003, %v1003
  %v1064 = vpack.c.bf16 %v1004, %v1004
  %v1065 = vpack.c.bf16 %v1005, %v1005
  %v1066 = vpack.c.bf16 %v1006, %v1006
  %v1067 = vpack.c.bf16 %v1007, %v1007
  %v1068 = vpack.c.bf16 %v1008, %v1008
  %v1069 = vpack.c.bf16 %v1009, %v1009
  %v1070 = vpack.c.bf16 %v1010, %v1010
  %v1071 = vpack.c.bf16 %v1011, %v1011
  %v1072 = vpack.c.bf16 %v1012, %v1012
  %v1073 = vpack.c.bf16 %v1013, %v1013
  %v1074 = vpack.c.bf16 %v1014, %v1014
  %v1075 = vpack.c.bf16 %v1015, %v1015
  %v1076 = vpack.c.bf16 %v1016, %v1016
  %v1077 = vpack.c.bf16 %v1017, %v1017
  %v1078 = vpack.c.bf16 %v1018, %v1018
  %v1079 = vpack.c.bf16 %v1019, %v1019
  %v1080 = vpack.c.bf16 %v1020, %v1020
  %v1081 = vpack.c.bf16 %v1021, %v1021
  %v1082 = vpack.c.bf16 %v1022, %v1022
  %v1083 = vpack.c.bf16 %v1023, %v1023
  %v1084 = vpack.c.bf16 %v1024, %v1024
  %v1085 = vpack.c.bf16 %v1025, %v1025
  %v1086 = vpack.c.bf16 %v1026, %v1026
  %v1087 = vpack.c.bf16 %v1027, %v1027
  %v1088 = vpack.c.bf16 %v1028, %v1028
  %v1089 = vpack.c.bf16 %v1029, %v1029
  %v1090 = vpack.c.bf16 %v1030, %v1030
  %v1091 = vpack.c.bf16 %v1031, %v1031
  %v1092 = vpack.c.bf16 %v1032, %v1032
  %v1093 = vpack.c.bf16 %v1033, %v1033
  %v1094 = vpack.c.bf16 %v1034, %v1034
  %v1095 = vpack.c.bf16 %v1035, %v1035
  %v1096 = vpack.c.bf16 %v1036, %v1036
  %v1097 = vpack.c.bf16 %v1037, %v1037
  %v1098 = vpack.c.bf16 %v1038, %v1038
  %v1099 = vpack.c.bf16 %v1039, %v1039
  %v1100 = vpack.c.bf16 %v1040, %v1040
  %v1101 = vpack.c.bf16 %v1041, %v1041
  %v1102 = vpack.c.bf16 %v1042, %v1042
  %v1103 = vpack.c.bf16 %v1043, %v1043
  %v1104 = vpack.c.bf16 %v1044, %v1044
  %v1105 = vpack.c.bf16 %v1045, %v1045
  %v1106 = vpack.c.bf16 %v1046, %v1046
  %v1107 = vpack.c.bf16 %v1047, %v1047
  %v1108 = vpack.c.bf16 %v1048, %v1048
  %v1109 = vpack.c.bf16 %v1049, %v1049
  %v1110 = vpack.c.bf16 %v1050, %v1050
  %v1111 = vpack.c.bf16 %v1051, %v1051
  %v1112 = vpack.c.bf16 %v1052, %v1052
  %v1113 = vpack.c.bf16 %v1053, %v1053
  %v1114 = vpack.c.bf16 %v1054, %v1054
  %v1115 = vpack.c.bf16 %v1055, %v1055
  %v1116 = vpack.c.bf16 %v1056, %v1056
  %v1117 = vpack.c.bf16 %v1057, %v1057
  %1118 = vst [vmem:[#allocation2] sm:$0xf] %v1058
  %1119 = vst [vmem:[#allocation2 + $0x4] sm:$0xf] %v1059
  %1120 = vst [vmem:[#allocation2 + $0x8] sm:$0xf] %v1060
  %1121 = vst [vmem:[#allocation2 + $0xc] sm:$0xf] %v1061
  %1122 = vst [vmem:[#allocation2 + $0x10] sm:$0xf] %v1062
  %1123 = vst [vmem:[#allocation2 + $0x14] sm:$0xf] %v1063
  %1124 = vst [vmem:[#allocation2 + $0x18] sm:$0xf] %v1064
  %1125 = vst [vmem:[#allocation2 + $0x1c] sm:$0xf] %v1065
  %1126 = vst [vmem:[#allocation2 + $0x20] sm:$0xf] %v1066
  %1127 = vst [vmem:[#allocation2 + $0x24] sm:$0xf] %v1067
  %1128 = vst [vmem:[#allocation2 + $0x28] sm:$0xf] %v1068
  %1129 = vst [vmem:[#allocation2 + $0x2c] sm:$0xf] %v1069
  %1130 = vst [vmem:[#allocation2 + $0x30] sm:$0xf] %v1070
  %1131 = vst [vmem:[#allocation2 + $0x34] sm:$0xf] %v1071
  %1132 = vst [vmem:[#allocation2 + $0x38] sm:$0xf] %v1072
  %1133 = vst [vmem:[#allocation2 + $0x3c] sm:$0xf] %v1073
  %1134 = vst [vmem:[#allocation2 + $0x40] sm:$0xf] %v1074
  %1135 = vst [vmem:[#allocation2 + $0x44] sm:$0xf] %v1075
  %1136 = vst [vmem:[#allocation2 + $0x48] sm:$0xf] %v1076
  %1137 = vst [vmem:[#allocation2 + $0x4c] sm:$0xf] %v1077
  %1138 = vst [vmem:[#allocation2 + $0x50] sm:$0xf] %v1078
  %1139 = vst [vmem:[#allocation2 + $0x54] sm:$0xf] %v1079
  %1140 = vst [vmem:[#allocation2 + $0x58] sm:$0xf] %v1080
  %1141 = vst [vmem:[#allocation2 + $0x5c] sm:$0xf] %v1081
  %1142 = vst [vmem:[#allocation2 + $0x60] sm:$0xf] %v1082
  %1143 = vst [vmem:[#allocation2 + $0x64] sm:$0xf] %v1083
  %1144 = vst [vmem:[#allocation2 + $0x68] sm:$0xf] %v1084
  %1145 = vst [vmem:[#allocation2 + $0x6c] sm:$0xf] %v1085
  %1146 = vst [vmem:[#allocation2 + $0x70] sm:$0xf] %v1086
  %1147 = vst [vmem:[#allocation2 + $0x74] sm:$0xf] %v1087
  %1148 = vst [vmem:[#allocation2 + $0x78] sm:$0xf] %v1088
  %1149 = vst [vmem:[#allocation2 + $0x7c] sm:$0xf] %v1089
  %1150 = vst [vmem:[#allocation2 + $0x80] sm:$0xf] %v1090
  %1151 = vst [vmem:[#allocation2 + $0x84] sm:$0xf] %v1091
  %1152 = vst [vmem:[#allocation2 + $0x88] sm:$0xf] %v1092
  %1153 = vst [vmem:[#allocation2 + $0x8c] sm:$0xf] %v1093
  %1154 = vst [vmem:[#allocation2 + $0x90] sm:$0xf] %v1094
  %1155 = vst [vmem:[#allocation2 + $0x94] sm:$0xf] %v1095
  %1156 = vst [vmem:[#allocation2 + $0x98] sm:$0xf] %v1096
  %1157 = vst [vmem:[#allocation2 + $0x9c] sm:$0xf] %v1097
  %1158 = vst [vmem:[#allocation2 + $0xa0] sm:$0xf] %v1098
  %1159 = vst [vmem:[#allocation2 + $0xa4] sm:$0xf] %v1099
  %1160 = vst [vmem:[#allocation2 + $0xa8] sm:$0xf] %v1100
  %1161 = vst [vmem:[#allocation2 + $0xac] sm:$0xf] %v1101
  %1162 = vst [vmem:[#allocation2 + $0xb0] sm:$0xf] %v1102
  %1163 = vst [vmem:[#allocation2 + $0xb4] sm:$0xf] %v1103
  %1164 = vst [vmem:[#allocation2 + $0xb8] sm:$0xf] %v1104
  %1165 = vst [vmem:[#allocation2 + $0xbc] sm:$0xf] %v1105
  %1166 = vst [vmem:[#allocation2 + $0xc0] sm:$0xf] %v1106
  %1167 = vst [vmem:[#allocation2 + $0xc4] sm:$0xf] %v1107
  %1168 = vst [vmem:[#allocation2 + $0xc8] sm:$0xf] %v1108
  %1169 = vst [vmem:[#allocation2 + $0xcc] sm:$0xf] %v1109
  %1170 = vst [vmem:[#allocation2 + $0xd0] sm:$0xf] %v1110
  %1171 = vst [vmem:[#allocation2 + $0xd4] sm:$0xf] %v1111
  %1172 = vst [vmem:[#allocation2 + $0xd8] sm:$0xf] %v1112
  %1173 = vst [vmem:[#allocation2 + $0xdc] sm:$0xf] %v1113
  %1174 = vst [vmem:[#allocation2 + $0xe0] sm:$0xf] %v1114
  %1175 = vst [vmem:[#allocation2 + $0xe4] sm:$0xf] %v1115
  %1176 = vst [vmem:[#allocation2 + $0xe8] sm:$0xf] %v1116
  %1177 = vst [vmem:[#allocation2 + $0xec] sm:$0xf] %v1117
  %1178 = vst [vmem:[#allocation2 + $0xf0] sm:$0xf] 0
  %1179 = vst [vmem:[#allocation2 + $0xf4] sm:$0xf] 0
  %v1180 = vld [vmem:[#allocation2] sm:$0xf]
  %v1181 = vld [vmem:[#allocation2 + $0x4] sm:$0xf]
  %v1182 = vld [vmem:[#allocation2 + $0x8] sm:$0xf]
  %v1183 = vld [vmem:[#allocation2 + $0xc] sm:$0xf]
  %v1184 = vld [vmem:[#allocation2 + $0x10] sm:$0xf]
  %v1185 = vld [vmem:[#allocation2 + $0x14] sm:$0xf]
  %v1186 = vld [vmem:[#allocation2 + $0x18] sm:$0xf]
  %v1187 = vld [vmem:[#allocation2 + $0x1c] sm:$0xf]
  %v1188 = vld [vmem:[#allocation2 + $0x20] sm:$0xf]
  %v1189 = vld [vmem:[#allocation2 + $0x24] sm:$0xf]
  %v1190 = vld [vmem:[#allocation2 + $0x28] sm:$0xf]
  %v1191 = vld [vmem:[#allocation2 + $0x2c] sm:$0xf]
  %1192 = vst [vmem:[#allocation3] sm:$0xf] %v1180
  %1193 = vst [vmem:[#allocation3 + $0x40] sm:$0xf] %v1181
  %1194 = vst [vmem:[#allocation3 + $0x80] sm:$0xf] %v1182
  %1195 = vst [vmem:[#allocation3 + $0xc0] sm:$0xf] %v1183
  %1196 = vst [vmem:[#allocation3 + $0x100] sm:$0xf] %v1184
  %1197 = vst [vmem:[#allocation3 + $0x140] sm:$0xf] %v1185
  %1198 = vst [vmem:[#allocation3 + $0x180] sm:$0xf] %v1186
  %1199 = vst [vmem:[#allocation3 + $0x1c0] sm:$0xf] %v1187
  %1200 = vst [vmem:[#allocation3 + $0x200] sm:$0xf] %v1188
  %1201 = vst [vmem:[#allocation3 + $0x240] sm:$0xf] %v1189
  %1202 = vst [vmem:[#allocation3 + $0x280] sm:$0xf] %v1190
  %1203 = vst [vmem:[#allocation3 + $0x2c0] sm:$0xf] %v1191
  %v1204 = vld [vmem:[#allocation2 + $0x4] sm:$0xf]
  %v1205 = vld [vmem:[#allocation2 + $0x8] sm:$0xf]
  %v1206 = vld [vmem:[#allocation2 + $0xc] sm:$0xf]
  %v1207 = vld [vmem:[#allocation2 + $0x10] sm:$0xf]
  %v1208 = vld [vmem:[#allocation2 + $0x14] sm:$0xf]
  %v1209 = vld [vmem:[#allocation2 + $0x18] sm:$0xf]
  %v1210 = vld [vmem:[#allocation2 + $0x1c] sm:$0xf]
  %v1211 = vld [vmem:[#allocation2 + $0x20] sm:$0xf]
  %v1212 = vld [vmem:[#allocation2 + $0x24] sm:$0xf]
  %v1213 = vld [vmem:[#allocation2 + $0x28] sm:$0xf]
  %v1214 = vld [vmem:[#allocation2 + $0x2c] sm:$0xf]
  %v1215 = vld [vmem:[#allocation2 + $0x30] sm:$0xf]
  %1216 = vst [vmem:[#allocation3 + $0x4] sm:$0xf] %v1204
  %1217 = vst [vmem:[#allocation3 + $0x44] sm:$0xf] %v1205
  %1218 = vst [vmem:[#allocation3 + $0x84] sm:$0xf] %v1206
  %1219 = vst [vmem:[#allocation3 + $0xc4] sm:$0xf] %v1207
  %1220 = vst [vmem:[#allocation3 + $0x104] sm:$0xf] %v1208
  %1221 = vst [vmem:[#allocation3 + $0x144] sm:$0xf] %v1209
  %1222 = vst [vmem:[#allocation3 + $0x184] sm:$0xf] %v1210
  %1223 = vst [vmem:[#allocation3 + $0x1c4] sm:$0xf] %v1211
  %1224 = vst [vmem:[#allocation3 + $0x204] sm:$0xf] %v1212
  %1225 = vst [vmem:[#allocation3 + $0x244] sm:$0xf] %v1213
  %1226 = vst [vmem:[#allocation3 + $0x284] sm:$0xf] %v1214
  %1227 = vst [vmem:[#allocation3 + $0x2c4] sm:$0xf] %v1215
  %v1228 = vld [vmem:[#allocation2] sm:$0xf]
  %v1229 = vld [vmem:[#allocation2 + $0x4] sm:$0xf]
  %v1230 = vld [vmem:[#allocation2 + $0x8] sm:$0xf]
  %v1231 = vld [vmem:[#allocation2 + $0xc] sm:$0xf]
  %v1232 = vld [vmem:[#allocation2 + $0x10] sm:$0xf]
  %v1233 = vld [vmem:[#allocation2 + $0x14] sm:$0xf]
  %v1234 = vld [vmem:[#allocation2 + $0x18] sm:$0xf]
  %v1235 = vld [vmem:[#allocation2 + $0x1c] sm:$0xf]
  %v1236 = vld [vmem:[#allocation2 + $0x20] sm:$0xf]
  %v1237 = vld [vmem:[#allocation2 + $0x24] sm:$0xf]
  %v1238 = vld [vmem:[#allocation2 + $0x28] sm:$0xf]
  %v1239 = vld [vmem:[#allocation2 + $0x2c] sm:$0xf]
  %v1240 = vld [vmem:[#allocation2 + $0x30] sm:$0x1]
  %vm1241 = vsmask.f32 3328
  %vm1242 = vsmask.f32 7440
  %vm1243 = vmor %vm1241, %vm1242
  %v1245 = vshrl.u32 %v1228, 16
  %v1247 = vrot.slane %v1245, 4
  %v1248 = vshll.u32 %v1228, 16
  %v1250 = vrot.slane %v1248, 5
  %v1251 = vor.u32 %v1247, %v1250
  %v1252 = vrot.slane %v1251, 4
  %v1254 = vshll.u32 %v1229, 16
  %v1256 = vrot.slane %v1254, 5
  %v1257 = vsel %vm1243, %v1252, %v1256
  %v1258 = vshrl.u32 %v1229, 16
  %v1260 = vrot.slane %v1258, 4
  %v1261 = vor.u32 %v1260, %v1256
  %v1262 = vrot.slane %v1261, 4
  %v1264 = vshll.u32 %v1230, 16
  %v1266 = vrot.slane %v1264, 5
  %v1267 = vsel %vm1243, %v1262, %v1266
  %v1268 = vshrl.u32 %v1230, 16
  %v1270 = vrot.slane %v1268, 4
  %v1271 = vor.u32 %v1270, %v1266
  %v1272 = vrot.slane %v1271, 4
  %v1274 = vshll.u32 %v1231, 16
  %v1276 = vrot.slane %v1274, 5
  %v1277 = vsel %vm1243, %v1272, %v1276
  %v1278 = vshrl.u32 %v1231, 16
  %v1280 = vrot.slane %v1278, 4
  %v1281 = vor.u32 %v1280, %v1276
  %v1282 = vrot.slane %v1281, 4
  %v1284 = vshll.u32 %v1232, 16
  %v1286 = vrot.slane %v1284, 5
  %v1287 = vsel %vm1243, %v1282, %v1286
  %v1288 = vshrl.u32 %v1232, 16
  %v1290 = vrot.slane %v1288, 4
  %v1291 = vor.u32 %v1290, %v1286
  %v1292 = vrot.slane %v1291, 4
  %v1294 = vshll.u32 %v1233, 16
  %v1296 = vrot.slane %v1294, 5
  %v1297 = vsel %vm1243, %v1292, %v1296
  %v1298 = vshrl.u32 %v1233, 16
  %v1300 = vrot.slane %v1298, 4
  %v1301 = vor.u32 %v1300, %v1296
  %v1302 = vrot.slane %v1301, 4
  %v1304 = vshll.u32 %v1234, 16
  %v1306 = vrot.slane %v1304, 5
  %v1307 = vsel %vm1243, %v1302, %v1306
  %v1308 = vshrl.u32 %v1234, 16
  %v1310 = vrot.slane %v1308, 4
  %v1311 = vor.u32 %v1310, %v1306
  %v1312 = vrot.slane %v1311, 4
  %v1314 = vshll.u32 %v1235, 16
  %v1316 = vrot.slane %v1314, 5
  %v1317 = vsel %vm1243, %v1312, %v1316
  %v1318 = vshrl.u32 %v1235, 16
  %v1320 = vrot.slane %v1318, 4
  %v1321 = vor.u32 %v1320, %v1316
  %v1322 = vrot.slane %v1321, 4
  %v1324 = vshll.u32 %v1236, 16
  %v1326 = vrot.slane %v1324, 5
  %v1327 = vsel %vm1243, %v1322, %v1326
  %v1328 = vshrl.u32 %v1236, 16
  %v1330 = vrot.slane %v1328, 4
  %v1331 = vor.u32 %v1330, %v1326
  %v1332 = vrot.slane %v1331, 4
  %v1334 = vshll.u32 %v1237, 16
  %v1336 = vrot.slane %v1334, 5
  %v1337 = vsel %vm1243, %v1332, %v1336
  %v1338 = vshrl.u32 %v1237, 16
  %v1340 = vrot.slane %v1338, 4
  %v1341 = vor.u32 %v1340, %v1336
  %v1342 = vrot.slane %v1341, 4
  %v1344 = vshll.u32 %v1238, 16
  %v1346 = vrot.slane %v1344, 5
  %v1347 = vsel %vm1243, %v1342, %v1346
  %v1348 = vshrl.u32 %v1238, 16
  %v1350 = vrot.slane %v1348, 4
  %v1351 = vor.u32 %v1350, %v1346
  %v1352 = vrot.slane %v1351, 4
  %v1354 = vshll.u32 %v1239, 16
  %v1356 = vrot.slane %v1354, 5
  %v1357 = vsel %vm1243, %v1352, %v1356
  %v1358 = vshrl.u32 %v1239, 16
  %v1360 = vrot.slane %v1358, 4
  %v1361 = vor.u32 %v1360, %v1356
  %v1362 = vrot.slane %v1361, 4
  %v1364 = vshll.u32 %v1240, 16
  %v1366 = vrot.slane %v1364, 5
  %v1367 = vsel %vm1243, %v1362, %v1366
  %1380 = vst [vmem:[#allocation3 + $0x8] sm:$0xf] %v1257
  %1381 = vst [vmem:[#allocation3 + $0x48] sm:$0xf] %v1267
  %1382 = vst [vmem:[#allocation3 + $0x88] sm:$0xf] %v1277
  %1383 = vst [vmem:[#allocation3 + $0xc8] sm:$0xf] %v1287
  %1384 = vst [vmem:[#allocation3 + $0x108] sm:$0xf] %v1297
  %1385 = vst [vmem:[#allocation3 + $0x148] sm:$0xf] %v1307
  %1386 = vst [vmem:[#allocation3 + $0x188] sm:$0xf] %v1317
  %1387 = vst [vmem:[#allocation3 + $0x1c8] sm:$0xf] %v1327
  %1388 = vst [vmem:[#allocation3 + $0x208] sm:$0xf] %v1337
  %1389 = vst [vmem:[#allocation3 + $0x248] sm:$0xf] %v1347
  %1390 = vst [vmem:[#allocation3 + $0x288] sm:$0xf] %v1357
  %1391 = vst [vmem:[#allocation3 + $0x2c8] sm:$0xf] %v1367
  %v1392 = vld [vmem:[#allocation2 + $0x4] sm:$0xf]
  %v1393 = vld [vmem:[#allocation2 + $0x8] sm:$0xf]
  %v1394 = vld [vmem:[#allocation2 + $0xc] sm:$0xf]
  %v1395 = vld [vmem:[#allocation2 + $0x10] sm:$0xf]
  %v1396 = vld [vmem:[#allocation2 + $0x14] sm:$0xf]
  %v1397 = vld [vmem:[#allocation2 + $0x18] sm:$0xf]
  %v1398 = vld [vmem:[#allocation2 + $0x1c] sm:$0xf]
  %v1399 = vld [vmem:[#allocation2 + $0x20] sm:$0xf]
  %v1400 = vld [vmem:[#allocation2 + $0x24] sm:$0xf]
  %v1401 = vld [vmem:[#allocation2 + $0x28] sm:$0xf]
  %v1402 = vld [vmem:[#allocation2 + $0x2c] sm:$0xf]
  %v1403 = vld [vmem:[#allocation2 + $0x30] sm:$0xf]
  %v1404 = vld [vmem:[#allocation2 + $0x34] sm:$0x1]
  %v1406 = vshrl.u32 %v1392, 16
  %v1408 = vrot.slane %v1406, 4
  %v1409 = vshll.u32 %v1392, 16
  %v1411 = vrot.slane %v1409, 5
  %v1412 = vor.u32 %v1408, %v1411
  %v1413 = vrot.slane %v1412, 4
  %v1415 = vshll.u32 %v1393, 16
  %v1417 = vrot.slane %v1415, 5
  %v1418 = vsel %vm1243, %v1413, %v1417
  %v1419 = vshrl.u32 %v1393, 16
  %v1421 = vrot.slane %v1419, 4
  %v1422 = vor.u32 %v1421, %v1417
  %v1423 = vrot.slane %v1422, 4
  %v1425 = vshll.u32 %v1394, 16
  %v1427 = vrot.slane %v1425, 5
  %v1428 = vsel %vm1243, %v1423, %v1427
  %v1429 = vshrl.u32 %v1394, 16
  %v1431 = vrot.slane %v1429, 4
  %v1432 = vor.u32 %v1431, %v1427
  %v1433 = vrot.slane %v1432, 4
  %v1435 = vshll.u32 %v1395, 16
  %v1437 = vrot.slane %v1435, 5
  %v1438 = vsel %vm1243, %v1433, %v1437
  %v1439 = vshrl.u32 %v1395, 16
  %v1441 = vrot.slane %v1439, 4
  %v1442 = vor.u32 %v1441, %v1437
  %v1443 = vrot.slane %v1442, 4
  %v1445 = vshll.u32 %v1396, 16
  %v1447 = vrot.slane %v1445, 5
  %v1448 = vsel %vm1243, %v1443, %v1447
  %v1449 = vshrl.u32 %v1396, 16
  %v1451 = vrot.slane %v1449, 4
  %v1452 = vor.u32 %v1451, %v1447
  %v1453 = vrot.slane %v1452, 4
  %v1455 = vshll.u32 %v1397, 16
  %v1457 = vrot.slane %v1455, 5
  %v1458 = vsel %vm1243, %v1453, %v1457
  %v1459 = vshrl.u32 %v1397, 16
  %v1461 = vrot.slane %v1459, 4
  %v1462 = vor.u32 %v1461, %v1457
  %v1463 = vrot.slane %v1462, 4
  %v1465 = vshll.u32 %v1398, 16
  %v1467 = vrot.slane %v1465, 5
  %v1468 = vsel %vm1243, %v1463, %v1467
  %v1469 = vshrl.u32 %v1398, 16
  %v1471 = vrot.slane %v1469, 4
  %v1472 = vor.u32 %v1471, %v1467
  %v1473 = vrot.slane %v1472, 4
  %v1475 = vshll.u32 %v1399, 16
  %v1477 = vrot.slane %v1475, 5
  %v1478 = vsel %vm1243, %v1473, %v1477
  %v1479 = vshrl.u32 %v1399, 16
  %v1481 = vrot.slane %v1479, 4
  %v1482 = vor.u32 %v1481, %v1477
  %v1483 = vrot.slane %v1482, 4
  %v1485 = vshll.u32 %v1400, 16
  %v1487 = vrot.slane %v1485, 5
  %v1488 = vsel %vm1243, %v1483, %v1487
  %v1489 = vshrl.u32 %v1400, 16
  %v1491 = vrot.slane %v1489, 4
  %v1492 = vor.u32 %v1491, %v1487
  %v1493 = vrot.slane %v1492, 4
  %v1495 = vshll.u32 %v1401, 16
  %v1497 = vrot.slane %v1495, 5
  %v1498 = vsel %vm1243, %v1493, %v1497
  %v1499 = vshrl.u32 %v1401, 16
  %v1501 = vrot.slane %v1499, 4
  %v1502 = vor.u32 %v1501, %v1497
  %v1503 = vrot.slane %v1502, 4
  %v1505 = vshll.u32 %v1402, 16
  %v1507 = vrot.slane %v1505, 5
  %v1508 = vsel %vm1243, %v1503, %v1507
  %v1509 = vshrl.u32 %v1402, 16
  %v1511 = vrot.slane %v1509, 4
  %v1512 = vor.u32 %v1511, %v1507
  %v1513 = vrot.slane %v1512, 4
  %v1515 = vshll.u32 %v1403, 16
  %v1517 = vrot.slane %v1515, 5
  %v1518 = vsel %vm1243, %v1513, %v1517
  %v1519 = vshrl.u32 %v1403, 16
  %v1521 = vrot.slane %v1519, 4
  %v1522 = vor.u32 %v1521, %v1517
  %v1523 = vrot.slane %v1522, 4
  %v1525 = vshll.u32 %v1404, 16
  %v1527 = vrot.slane %v1525, 5
  %v1528 = vsel %vm1243, %v1523, %v1527
  %1541 = vst [vmem:[#allocation3 + $0xc] sm:$0xf] %v1418
  %1542 = vst [vmem:[#allocation3 + $0x4c] sm:$0xf] %v1428
  %1543 = vst [vmem:[#allocation3 + $0x8c] sm:$0xf] %v1438
  %1544 = vst [vmem:[#allocation3 + $0xcc] sm:$0xf] %v1448
  %1545 = vst [vmem:[#allocation3 + $0x10c] sm:$0xf] %v1458
  %1546 = vst [vmem:[#allocation3 + $0x14c] sm:$0xf] %v1468
  %1547 = vst [vmem:[#allocation3 + $0x18c] sm:$0xf] %v1478
  %1548 = vst [vmem:[#allocation3 + $0x1cc] sm:$0xf] %v1488
  %1549 = vst [vmem:[#allocation3 + $0x20c] sm:$0xf] %v1498
  %1550 = vst [vmem:[#allocation3 + $0x24c] sm:$0xf] %v1508
  %1551 = vst [vmem:[#allocation3 + $0x28c] sm:$0xf] %v1518
  %1552 = vst [vmem:[#allocation3 + $0x2cc] sm:$0xf] %v1528
  %v1553 = vld [vmem:[#allocation2 + $0x40] sm:$0xf]
  %v1554 = vld [vmem:[#allocation2 + $0x44] sm:$0xf]
  %v1555 = vld [vmem:[#allocation2 + $0x48] sm:$0xf]
  %v1556 = vld [vmem:[#allocation2 + $0x4c] sm:$0xf]
  %v1557 = vld [vmem:[#allocation2 + $0x50] sm:$0xf]
  %v1558 = vld [vmem:[#allocation2 + $0x54] sm:$0xf]
  %v1559 = vld [vmem:[#allocation2 + $0x58] sm:$0xf]
  %v1560 = vld [vmem:[#allocation2 + $0x5c] sm:$0xf]
  %v1561 = vld [vmem:[#allocation2 + $0x60] sm:$0xf]
  %v1562 = vld [vmem:[#allocation2 + $0x64] sm:$0xf]
  %v1563 = vld [vmem:[#allocation2 + $0x68] sm:$0xf]
  %v1564 = vld [vmem:[#allocation2 + $0x6c] sm:$0xf]
  %1565 = vst [vmem:[#allocation3 + $0x10] sm:$0xf] %v1553
  %1566 = vst [vmem:[#allocation3 + $0x50] sm:$0xf] %v1554
  %1567 = vst [vmem:[#allocation3 + $0x90] sm:$0xf] %v1555
  %1568 = vst [vmem:[#allocation3 + $0xd0] sm:$0xf] %v1556
  %1569 = vst [vmem:[#allocation3 + $0x110] sm:$0xf] %v1557
  %1570 = vst [vmem:[#allocation3 + $0x150] sm:$0xf] %v1558
  %1571 = vst [vmem:[#allocation3 + $0x190] sm:$0xf] %v1559
  %1572 = vst [vmem:[#allocation3 + $0x1d0] sm:$0xf] %v1560
  %1573 = vst [vmem:[#allocation3 + $0x210] sm:$0xf] %v1561
  %1574 = vst [vmem:[#allocation3 + $0x250] sm:$0xf] %v1562
  %1575 = vst [vmem:[#allocation3 + $0x290] sm:$0xf] %v1563
  %1576 = vst [vmem:[#allocation3 + $0x2d0] sm:$0xf] %v1564
  %v1577 = vld [vmem:[#allocation2 + $0x44] sm:$0xf]
  %v1578 = vld [vmem:[#allocation2 + $0x48] sm:$0xf]
  %v1579 = vld [vmem:[#allocation2 + $0x4c] sm:$0xf]
  %v1580 = vld [vmem:[#allocation2 + $0x50] sm:$0xf]
  %v1581 = vld [vmem:[#allocation2 + $0x54] sm:$0xf]
  %v1582 = vld [vmem:[#allocation2 + $0x58] sm:$0xf]
  %v1583 = vld [vmem:[#allocation2 + $0x5c] sm:$0xf]
  %v1584 = vld [vmem:[#allocation2 + $0x60] sm:$0xf]
  %v1585 = vld [vmem:[#allocation2 + $0x64] sm:$0xf]
  %v1586 = vld [vmem:[#allocation2 + $0x68] sm:$0xf]
  %v1587 = vld [vmem:[#allocation2 + $0x6c] sm:$0xf]
  %v1588 = vld [vmem:[#allocation2 + $0x70] sm:$0xf]
  %1589 = vst [vmem:[#allocation3 + $0x14] sm:$0xf] %v1577
  %1590 = vst [vmem:[#allocation3 + $0x54] sm:$0xf] %v1578
  %1591 = vst [vmem:[#allocation3 + $0x94] sm:$0xf] %v1579
  %1592 = vst [vmem:[#allocation3 + $0xd4] sm:$0xf] %v1580
  %1593 = vst [vmem:[#allocation3 + $0x114] sm:$0xf] %v1581
  %1594 = vst [vmem:[#allocation3 + $0x154] sm:$0xf] %v1582
  %1595 = vst [vmem:[#allocation3 + $0x194] sm:$0xf] %v1583
  %1596 = vst [vmem:[#allocation3 + $0x1d4] sm:$0xf] %v1584
  %1597 = vst [vmem:[#allocation3 + $0x214] sm:$0xf] %v1585
  %1598 = vst [vmem:[#allocation3 + $0x254] sm:$0xf] %v1586
  %1599 = vst [vmem:[#allocation3 + $0x294] sm:$0xf] %v1587
  %1600 = vst [vmem:[#allocation3 + $0x2d4] sm:$0xf] %v1588
  %v1601 = vld [vmem:[#allocation2 + $0x40] sm:$0xf]
  %v1602 = vld [vmem:[#allocation2 + $0x44] sm:$0xf]
  %v1603 = vld [vmem:[#allocation2 + $0x48] sm:$0xf]
  %v1604 = vld [vmem:[#allocation2 + $0x4c] sm:$0xf]
  %v1605 = vld [vmem:[#allocation2 + $0x50] sm:$0xf]
  %v1606 = vld [vmem:[#allocation2 + $0x54] sm:$0xf]
  %v1607 = vld [vmem:[#allocation2 + $0x58] sm:$0xf]
  %v1608 = vld [vmem:[#allocation2 + $0x5c] sm:$0xf]
  %v1609 = vld [vmem:[#allocation2 + $0x60] sm:$0xf]
  %v1610 = vld [vmem:[#allocation2 + $0x64] sm:$0xf]
  %v1611 = vld [vmem:[#allocation2 + $0x68] sm:$0xf]
  %v1612 = vld [vmem:[#allocation2 + $0x6c] sm:$0xf]
  %v1613 = vld [vmem:[#allocation2 + $0x70] sm:$0x1]
  %v1615 = vshrl.u32 %v1601, 16
  %v1617 = vrot.slane %v1615, 4
  %v1618 = vshll.u32 %v1601, 16
  %v1620 = vrot.slane %v1618, 5
  %v1621 = vor.u32 %v1617, %v1620
  %v1622 = vrot.slane %v1621, 4
  %v1624 = vshll.u32 %v1602, 16
  %v1626 = vrot.slane %v1624, 5
  %v1627 = vsel %vm1243, %v1622, %v1626
  %v1628 = vshrl.u32 %v1602, 16
  %v1630 = vrot.slane %v1628, 4
  %v1631 = vor.u32 %v1630, %v1626
  %v1632 = vrot.slane %v1631, 4
  %v1634 = vshll.u32 %v1603, 16
  %v1636 = vrot.slane %v1634, 5
  %v1637 = vsel %vm1243, %v1632, %v1636
  %v1638 = vshrl.u32 %v1603, 16
  %v1640 = vrot.slane %v1638, 4
  %v1641 = vor.u32 %v1640, %v1636
  %v1642 = vrot.slane %v1641, 4
  %v1644 = vshll.u32 %v1604, 16
  %v1646 = vrot.slane %v1644, 5
  %v1647 = vsel %vm1243, %v1642, %v1646
  %v1648 = vshrl.u32 %v1604, 16
  %v1650 = vrot.slane %v1648, 4
  %v1651 = vor.u32 %v1650, %v1646
  %v1652 = vrot.slane %v1651, 4
  %v1654 = vshll.u32 %v1605, 16
  %v1656 = vrot.slane %v1654, 5
  %v1657 = vsel %vm1243, %v1652, %v1656
  %v1658 = vshrl.u32 %v1605, 16
  %v1660 = vrot.slane %v1658, 4
  %v1661 = vor.u32 %v1660, %v1656
  %v1662 = vrot.slane %v1661, 4
  %v1664 = vshll.u32 %v1606, 16
  %v1666 = vrot.slane %v1664, 5
  %v1667 = vsel %vm1243, %v1662, %v1666
  %v1668 = vshrl.u32 %v1606, 16
  %v1670 = vrot.slane %v1668, 4
  %v1671 = vor.u32 %v1670, %v1666
  %v1672 = vrot.slane %v1671, 4
  %v1674 = vshll.u32 %v1607, 16
  %v1676 = vrot.slane %v1674, 5
  %v1677 = vsel %vm1243, %v1672, %v1676
  %v1678 = vshrl.u32 %v1607, 16
  %v1680 = vrot.slane %v1678, 4
  %v1681 = vor.u32 %v1680, %v1676
  %v1682 = vrot.slane %v1681, 4
  %v1684 = vshll.u32 %v1608, 16
  %v1686 = vrot.slane %v1684, 5
  %v1687 = vsel %vm1243, %v1682, %v1686
  %v1688 = vshrl.u32 %v1608, 16
  %v1690 = vrot.slane %v1688, 4
  %v1691 = vor.u32 %v1690, %v1686
  %v1692 = vrot.slane %v1691, 4
  %v1694 = vshll.u32 %v1609, 16
  %v1696 = vrot.slane %v1694, 5
  %v1697 = vsel %vm1243, %v1692, %v1696
  %v1698 = vshrl.u32 %v1609, 16
  %v1700 = vrot.slane %v1698, 4
  %v1701 = vor.u32 %v1700, %v1696
  %v1702 = vrot.slane %v1701, 4
  %v1704 = vshll.u32 %v1610, 16
  %v1706 = vrot.slane %v1704, 5
  %v1707 = vsel %vm1243, %v1702, %v1706
  %v1708 = vshrl.u32 %v1610, 16
  %v1710 = vrot.slane %v1708, 4
  %v1711 = vor.u32 %v1710, %v1706
  %v1712 = vrot.slane %v1711, 4
  %v1714 = vshll.u32 %v1611, 16
  %v1716 = vrot.slane %v1714, 5
  %v1717 = vsel %vm1243, %v1712, %v1716
  %v1718 = vshrl.u32 %v1611, 16
  %v1720 = vrot.slane %v1718, 4
  %v1721 = vor.u32 %v1720, %v1716
  %v1722 = vrot.slane %v1721, 4
  %v1724 = vshll.u32 %v1612, 16
  %v1726 = vrot.slane %v1724, 5
  %v1727 = vsel %vm1243, %v1722, %v1726
  %v1728 = vshrl.u32 %v1612, 16
  %v1730 = vrot.slane %v1728, 4
  %v1731 = vor.u32 %v1730, %v1726
  %v1732 = vrot.slane %v1731, 4
  %v1734 = vshll.u32 %v1613, 16
  %v1736 = vrot.slane %v1734, 5
  %v1737 = vsel %vm1243, %v1732, %v1736
  %1750 = vst [vmem:[#allocation3 + $0x18] sm:$0xf] %v1627
  %1751 = vst [vmem:[#allocation3 + $0x58] sm:$0xf] %v1637
  %1752 = vst [vmem:[#allocation3 + $0x98] sm:$0xf] %v1647
  %1753 = vst [vmem:[#allocation3 + $0xd8] sm:$0xf] %v1657
  %1754 = vst [vmem:[#allocation3 + $0x118] sm:$0xf] %v1667
  %1755 = vst [vmem:[#allocation3 + $0x158] sm:$0xf] %v1677
  %1756 = vst [vmem:[#allocation3 + $0x198] sm:$0xf] %v1687
  %1757 = vst [vmem:[#allocation3 + $0x1d8] sm:$0xf] %v1697
  %1758 = vst [vmem:[#allocation3 + $0x218] sm:$0xf] %v1707
  %1759 = vst [vmem:[#allocation3 + $0x258] sm:$0xf] %v1717
  %1760 = vst [vmem:[#allocation3 + $0x298] sm:$0xf] %v1727
  %1761 = vst [vmem:[#allocation3 + $0x2d8] sm:$0xf] %v1737
  %v1762 = vld [vmem:[#allocation2 + $0x44] sm:$0xf]
  %v1763 = vld [vmem:[#allocation2 + $0x48] sm:$0xf]
  %v1764 = vld [vmem:[#allocation2 + $0x4c] sm:$0xf]
  %v1765 = vld [vmem:[#allocation2 + $0x50] sm:$0xf]
  %v1766 = vld [vmem:[#allocation2 + $0x54] sm:$0xf]
  %v1767 = vld [vmem:[#allocation2 + $0x58] sm:$0xf]
  %v1768 = vld [vmem:[#allocation2 + $0x5c] sm:$0xf]
  %v1769 = vld [vmem:[#allocation2 + $0x60] sm:$0xf]
  %v1770 = vld [vmem:[#allocation2 + $0x64] sm:$0xf]
  %v1771 = vld [vmem:[#allocation2 + $0x68] sm:$0xf]
  %v1772 = vld [vmem:[#allocation2 + $0x6c] sm:$0xf]
  %v1773 = vld [vmem:[#allocation2 + $0x70] sm:$0xf]
  %v1774 = vld [vmem:[#allocation2 + $0x74] sm:$0x1]
  %v1776 = vshrl.u32 %v1762, 16
  %v1778 = vrot.slane %v1776, 4
  %v1779 = vshll.u32 %v1762, 16
  %v1781 = vrot.slane %v1779, 5
  %v1782 = vor.u32 %v1778, %v1781
  %v1783 = vrot.slane %v1782, 4
  %v1785 = vshll.u32 %v1763, 16
  %v1787 = vrot.slane %v1785, 5
  %v1788 = vsel %vm1243, %v1783, %v1787
  %v1789 = vshrl.u32 %v1763, 16
  %v1791 = vrot.slane %v1789, 4
  %v1792 = vor.u32 %v1791, %v1787
  %v1793 = vrot.slane %v1792, 4
  %v1795 = vshll.u32 %v1764, 16
  %v1797 = vrot.slane %v1795, 5
  %v1798 = vsel %vm1243, %v1793, %v1797
  %v1799 = vshrl.u32 %v1764, 16
  %v1801 = vrot.slane %v1799, 4
  %v1802 = vor.u32 %v1801, %v1797
  %v1803 = vrot.slane %v1802, 4
  %v1805 = vshll.u32 %v1765, 16
  %v1807 = vrot.slane %v1805, 5
  %v1808 = vsel %vm1243, %v1803, %v1807
  %v1809 = vshrl.u32 %v1765, 16
  %v1811 = vrot.slane %v1809, 4
  %v1812 = vor.u32 %v1811, %v1807
  %v1813 = vrot.slane %v1812, 4
  %v1815 = vshll.u32 %v1766, 16
  %v1817 = vrot.slane %v1815, 5
  %v1818 = vsel %vm1243, %v1813, %v1817
  %v1819 = vshrl.u32 %v1766, 16
  %v1821 = vrot.slane %v1819, 4
  %v1822 = vor.u32 %v1821, %v1817
  %v1823 = vrot.slane %v1822, 4
  %v1825 = vshll.u32 %v1767, 16
  %v1827 = vrot.slane %v1825, 5
  %v1828 = vsel %vm1243, %v1823, %v1827
  %v1829 = vshrl.u32 %v1767, 16
  %v1831 = vrot.slane %v1829, 4
  %v1832 = vor.u32 %v1831, %v1827
  %v1833 = vrot.slane %v1832, 4
  %v1835 = vshll.u32 %v1768, 16
  %v1837 = vrot.slane %v1835, 5
  %v1838 = vsel %vm1243, %v1833, %v1837
  %v1839 = vshrl.u32 %v1768, 16
  %v1841 = vrot.slane %v1839, 4
  %v1842 = vor.u32 %v1841, %v1837
  %v1843 = vrot.slane %v1842, 4
  %v1845 = vshll.u32 %v1769, 16
  %v1847 = vrot.slane %v1845, 5
  %v1848 = vsel %vm1243, %v1843, %v1847
  %v1849 = vshrl.u32 %v1769, 16
  %v1851 = vrot.slane %v1849, 4
  %v1852 = vor.u32 %v1851, %v1847
  %v1853 = vrot.slane %v1852, 4
  %v1855 = vshll.u32 %v1770, 16
  %v1857 = vrot.slane %v1855, 5
  %v1858 = vsel %vm1243, %v1853, %v1857
  %v1859 = vshrl.u32 %v1770, 16
  %v1861 = vrot.slane %v1859, 4
  %v1862 = vor.u32 %v1861, %v1857
  %v1863 = vrot.slane %v1862, 4
  %v1865 = vshll.u32 %v1771, 16
  %v1867 = vrot.slane %v1865, 5
  %v1868 = vsel %vm1243, %v1863, %v1867
  %v1869 = vshrl.u32 %v1771, 16
  %v1871 = vrot.slane %v1869, 4
  %v1872 = vor.u32 %v1871, %v1867
  %v1873 = vrot.slane %v1872, 4
  %v1875 = vshll.u32 %v1772, 16
  %v1877 = vrot.slane %v1875, 5
  %v1878 = vsel %vm1243, %v1873, %v1877
  %v1879 = vshrl.u32 %v1772, 16
  %v1881 = vrot.slane %v1879, 4
  %v1882 = vor.u32 %v1881, %v1877
  %v1883 = vrot.slane %v1882, 4
  %v1885 = vshll.u32 %v1773, 16
  %v1887 = vrot.slane %v1885, 5
  %v1888 = vsel %vm1243, %v1883, %v1887
  %v1889 = vshrl.u32 %v1773, 16
  %v1891 = vrot.slane %v1889, 4
  %v1892 = vor.u32 %v1891, %v1887
  %v1893 = vrot.slane %v1892, 4
  %v1895 = vshll.u32 %v1774, 16
  %v1897 = vrot.slane %v1895, 5
  %v1898 = vsel %vm1243, %v1893, %v1897
  %1911 = vst [vmem:[#allocation3 + $0x1c] sm:$0xf] %v1788
  %1912 = vst [vmem:[#allocation3 + $0x5c] sm:$0xf] %v1798
  %1913 = vst [vmem:[#allocation3 + $0x9c] sm:$0xf] %v1808
  %1914 = vst [vmem:[#allocation3 + $0xdc] sm:$0xf] %v1818
  %1915 = vst [vmem:[#allocation3 + $0x11c] sm:$0xf] %v1828
  %1916 = vst [vmem:[#allocation3 + $0x15c] sm:$0xf] %v1838
  %1917 = vst [vmem:[#allocation3 + $0x19c] sm:$0xf] %v1848
  %1918 = vst [vmem:[#allocation3 + $0x1dc] sm:$0xf] %v1858
  %1919 = vst [vmem:[#allocation3 + $0x21c] sm:$0xf] %v1868
  %1920 = vst [vmem:[#allocation3 + $0x25c] sm:$0xf] %v1878
  %1921 = vst [vmem:[#allocation3 + $0x29c] sm:$0xf] %v1888
  %1922 = vst [vmem:[#allocation3 + $0x2dc] sm:$0xf] %v1898
  %v1923 = vld [vmem:[#allocation2 + $0x8] sm:$0xf]
  %v1924 = vld [vmem:[#allocation2 + $0xc] sm:$0xf]
  %v1925 = vld [vmem:[#allocation2 + $0x10] sm:$0xf]
  %v1926 = vld [vmem:[#allocation2 + $0x14] sm:$0xf]
  %v1927 = vld [vmem:[#allocation2 + $0x18] sm:$0xf]
  %v1928 = vld [vmem:[#allocation2 + $0x1c] sm:$0xf]
  %v1929 = vld [vmem:[#allocation2 + $0x20] sm:$0xf]
  %v1930 = vld [vmem:[#allocation2 + $0x24] sm:$0xf]
  %v1931 = vld [vmem:[#allocation2 + $0x28] sm:$0xf]
  %v1932 = vld [vmem:[#allocation2 + $0x2c] sm:$0xf]
  %v1933 = vld [vmem:[#allocation2 + $0x30] sm:$0xf]
  %v1934 = vld [vmem:[#allocation2 + $0x34] sm:$0xf]
  %1935 = vst [vmem:[#allocation3 + $0x20] sm:$0xf] %v1923
  %1936 = vst [vmem:[#allocation3 + $0x60] sm:$0xf] %v1924
  %1937 = vst [vmem:[#allocation3 + $0xa0] sm:$0xf] %v1925
  %1938 = vst [vmem:[#allocation3 + $0xe0] sm:$0xf] %v1926
  %1939 = vst [vmem:[#allocation3 + $0x120] sm:$0xf] %v1927
  %1940 = vst [vmem:[#allocation3 + $0x160] sm:$0xf] %v1928
  %1941 = vst [vmem:[#allocation3 + $0x1a0] sm:$0xf] %v1929
  %1942 = vst [vmem:[#allocation3 + $0x1e0] sm:$0xf] %v1930
  %1943 = vst [vmem:[#allocation3 + $0x220] sm:$0xf] %v1931
  %1944 = vst [vmem:[#allocation3 + $0x260] sm:$0xf] %v1932
  %1945 = vst [vmem:[#allocation3 + $0x2a0] sm:$0xf] %v1933
  %1946 = vst [vmem:[#allocation3 + $0x2e0] sm:$0xf] %v1934
  %v1947 = vld [vmem:[#allocation2 + $0xc] sm:$0xf]
  %v1948 = vld [vmem:[#allocation2 + $0x10] sm:$0xf]
  %v1949 = vld [vmem:[#allocation2 + $0x14] sm:$0xf]
  %v1950 = vld [vmem:[#allocation2 + $0x18] sm:$0xf]
  %v1951 = vld [vmem:[#allocation2 + $0x1c] sm:$0xf]
  %v1952 = vld [vmem:[#allocation2 + $0x20] sm:$0xf]
  %v1953 = vld [vmem:[#allocation2 + $0x24] sm:$0xf]
  %v1954 = vld [vmem:[#allocation2 + $0x28] sm:$0xf]
  %v1955 = vld [vmem:[#allocation2 + $0x2c] sm:$0xf]
  %v1956 = vld [vmem:[#allocation2 + $0x30] sm:$0xf]
  %v1957 = vld [vmem:[#allocation2 + $0x34] sm:$0xf]
  %v1958 = vld [vmem:[#allocation2 + $0x38] sm:$0xf]
  %1959 = vst [vmem:[#allocation3 + $0x24] sm:$0xf] %v1947
  %1960 = vst [vmem:[#allocation3 + $0x64] sm:$0xf] %v1948
  %1961 = vst [vmem:[#allocation3 + $0xa4] sm:$0xf] %v1949
  %1962 = vst [vmem:[#allocation3 + $0xe4] sm:$0xf] %v1950
  %1963 = vst [vmem:[#allocation3 + $0x124] sm:$0xf] %v1951
  %1964 = vst [vmem:[#allocation3 + $0x164] sm:$0xf] %v1952
  %1965 = vst [vmem:[#allocation3 + $0x1a4] sm:$0xf] %v1953
  %1966 = vst [vmem:[#allocation3 + $0x1e4] sm:$0xf] %v1954
  %1967 = vst [vmem:[#allocation3 + $0x224] sm:$0xf] %v1955
  %1968 = vst [vmem:[#allocation3 + $0x264] sm:$0xf] %v1956
  %1969 = vst [vmem:[#allocation3 + $0x2a4] sm:$0xf] %v1957
  %1970 = vst [vmem:[#allocation3 + $0x2e4] sm:$0xf] %v1958
  %v1971 = vld [vmem:[#allocation2 + $0x8] sm:$0xf]
  %v1972 = vld [vmem:[#allocation2 + $0xc] sm:$0xf]
  %v1973 = vld [vmem:[#allocation2 + $0x10] sm:$0xf]
  %v1974 = vld [vmem:[#allocation2 + $0x14] sm:$0xf]
  %v1975 = vld [vmem:[#allocation2 + $0x18] sm:$0xf]
  %v1976 = vld [vmem:[#allocation2 + $0x1c] sm:$0xf]
  %v1977 = vld [vmem:[#allocation2 + $0x20] sm:$0xf]
  %v1978 = vld [vmem:[#allocation2 + $0x24] sm:$0xf]
  %v1979 = vld [vmem:[#allocation2 + $0x28] sm:$0xf]
  %v1980 = vld [vmem:[#allocation2 + $0x2c] sm:$0xf]
  %v1981 = vld [vmem:[#allocation2 + $0x30] sm:$0xf]
  %v1982 = vld [vmem:[#allocation2 + $0x34] sm:$0xf]
  %v1983 = vld [vmem:[#allocation2 + $0x38] sm:$0x1]
  %v1985 = vshrl.u32 %v1971, 16
  %v1987 = vrot.slane %v1985, 4
  %v1988 = vshll.u32 %v1971, 16
  %v1990 = vrot.slane %v1988, 5
  %v1991 = vor.u32 %v1987, %v1990
  %v1992 = vrot.slane %v1991, 4
  %v1994 = vshll.u32 %v1972, 16
  %v1996 = vrot.slane %v1994, 5
  %v1997 = vsel %vm1243, %v1992, %v1996
  %v1998 = vshrl.u32 %v1972, 16
  %v2000 = vrot.slane %v1998, 4
  %v2001 = vor.u32 %v2000, %v1996
  %v2002 = vrot.slane %v2001, 4
  %v2004 = vshll.u32 %v1973, 16
  %v2006 = vrot.slane %v2004, 5
  %v2007 = vsel %vm1243, %v2002, %v2006
  %v2008 = vshrl.u32 %v1973, 16
  %v2010 = vrot.slane %v2008, 4
  %v2011 = vor.u32 %v2010, %v2006
  %v2012 = vrot.slane %v2011, 4
  %v2014 = vshll.u32 %v1974, 16
  %v2016 = vrot.slane %v2014, 5
  %v2017 = vsel %vm1243, %v2012, %v2016
  %v2018 = vshrl.u32 %v1974, 16
  %v2020 = vrot.slane %v2018, 4
  %v2021 = vor.u32 %v2020, %v2016
  %v2022 = vrot.slane %v2021, 4
  %v2024 = vshll.u32 %v1975, 16
  %v2026 = vrot.slane %v2024, 5
  %v2027 = vsel %vm1243, %v2022, %v2026
  %v2028 = vshrl.u32 %v1975, 16
  %v2030 = vrot.slane %v2028, 4
  %v2031 = vor.u32 %v2030, %v2026
  %v2032 = vrot.slane %v2031, 4
  %v2034 = vshll.u32 %v1976, 16
  %v2036 = vrot.slane %v2034, 5
  %v2037 = vsel %vm1243, %v2032, %v2036
  %v2038 = vshrl.u32 %v1976, 16
  %v2040 = vrot.slane %v2038, 4
  %v2041 = vor.u32 %v2040, %v2036
  %v2042 = vrot.slane %v2041, 4
  %v2044 = vshll.u32 %v1977, 16
  %v2046 = vrot.slane %v2044, 5
  %v2047 = vsel %vm1243, %v2042, %v2046
  %v2048 = vshrl.u32 %v1977, 16
  %v2050 = vrot.slane %v2048, 4
  %v2051 = vor.u32 %v2050, %v2046
  %v2052 = vrot.slane %v2051, 4
  %v2054 = vshll.u32 %v1978, 16
  %v2056 = vrot.slane %v2054, 5
  %v2057 = vsel %vm1243, %v2052, %v2056
  %v2058 = vshrl.u32 %v1978, 16
  %v2060 = vrot.slane %v2058, 4
  %v2061 = vor.u32 %v2060, %v2056
  %v2062 = vrot.slane %v2061, 4
  %v2064 = vshll.u32 %v1979, 16
  %v2066 = vrot.slane %v2064, 5
  %v2067 = vsel %vm1243, %v2062, %v2066
  %v2068 = vshrl.u32 %v1979, 16
  %v2070 = vrot.slane %v2068, 4
  %v2071 = vor.u32 %v2070, %v2066
  %v2072 = vrot.slane %v2071, 4
  %v2074 = vshll.u32 %v1980, 16
  %v2076 = vrot.slane %v2074, 5
  %v2077 = vsel %vm1243, %v2072, %v2076
  %v2078 = vshrl.u32 %v1980, 16
  %v2080 = vrot.slane %v2078, 4
  %v2081 = vor.u32 %v2080, %v2076
  %v2082 = vrot.slane %v2081, 4
  %v2084 = vshll.u32 %v1981, 16
  %v2086 = vrot.slane %v2084, 5
  %v2087 = vsel %vm1243, %v2082, %v2086
  %v2088 = vshrl.u32 %v1981, 16
  %v2090 = vrot.slane %v2088, 4
  %v2091 = vor.u32 %v2090, %v2086
  %v2092 = vrot.slane %v2091, 4
  %v2094 = vshll.u32 %v1982, 16
  %v2096 = vrot.slane %v2094, 5
  %v2097 = vsel %vm1243, %v2092, %v2096
  %v2098 = vshrl.u32 %v1982, 16
  %v2100 = vrot.slane %v2098, 4
  %v2101 = vor.u32 %v2100, %v2096
  %v2102 = vrot.slane %v2101, 4
  %v2104 = vshll.u32 %v1983, 16
  %v2106 = vrot.slane %v2104, 5
  %v2107 = vsel %vm1243, %v2102, %v2106
  %2120 = vst [vmem:[#allocation3 + $0x28] sm:$0xf] %v1997
  %2121 = vst [vmem:[#allocation3 + $0x68] sm:$0xf] %v2007
  %2122 = vst [vmem:[#allocation3 + $0xa8] sm:$0xf] %v2017
  %2123 = vst [vmem:[#allocation3 + $0xe8] sm:$0xf] %v2027
  %2124 = vst [vmem:[#allocation3 + $0x128] sm:$0xf] %v2037
  %2125 = vst [vmem:[#allocation3 + $0x168] sm:$0xf] %v2047
  %2126 = vst [vmem:[#allocation3 + $0x1a8] sm:$0xf] %v2057
  %2127 = vst [vmem:[#allocation3 + $0x1e8] sm:$0xf] %v2067
  %2128 = vst [vmem:[#allocation3 + $0x228] sm:$0xf] %v2077
  %2129 = vst [vmem:[#allocation3 + $0x268] sm:$0xf] %v2087
  %2130 = vst [vmem:[#allocation3 + $0x2a8] sm:$0xf] %v2097
  %2131 = vst [vmem:[#allocation3 + $0x2e8] sm:$0xf] %v2107
  %v2132 = vld [vmem:[#allocation2 + $0xc] sm:$0xf]
  %v2133 = vld [vmem:[#allocation2 + $0x10] sm:$0xf]
  %v2134 = vld [vmem:[#allocation2 + $0x14] sm:$0xf]
  %v2135 = vld [vmem:[#allocation2 + $0x18] sm:$0xf]
  %v2136 = vld [vmem:[#allocation2 + $0x1c] sm:$0xf]
  %v2137 = vld [vmem:[#allocation2 + $0x20] sm:$0xf]
  %v2138 = vld [vmem:[#allocation2 + $0x24] sm:$0xf]
  %v2139 = vld [vmem:[#allocation2 + $0x28] sm:$0xf]
  %v2140 = vld [vmem:[#allocation2 + $0x2c] sm:$0xf]
  %v2141 = vld [vmem:[#allocation2 + $0x30] sm:$0xf]
  %v2142 = vld [vmem:[#allocation2 + $0x34] sm:$0xf]
  %v2143 = vld [vmem:[#allocation2 + $0x38] sm:$0xf]
  %v2144 = vld [vmem:[#allocation2 + $0x3c] sm:$0x1]
  %v2146 = vshrl.u32 %v2132, 16
  %v2148 = vrot.slane %v2146, 4
  %v2149 = vshll.u32 %v2132, 16
  %v2151 = vrot.slane %v2149, 5
  %v2152 = vor.u32 %v2148, %v2151
  %v2153 = vrot.slane %v2152, 4
  %v2155 = vshll.u32 %v2133, 16
  %v2157 = vrot.slane %v2155, 5
  %v2158 = vsel %vm1243, %v2153, %v2157
  %v2159 = vshrl.u32 %v2133, 16
  %v2161 = vrot.slane %v2159, 4
  %v2162 = vor.u32 %v2161, %v2157
  %v2163 = vrot.slane %v2162, 4
  %v2165 = vshll.u32 %v2134, 16
  %v2167 = vrot.slane %v2165, 5
  %v2168 = vsel %vm1243, %v2163, %v2167
  %v2169 = vshrl.u32 %v2134, 16
  %v2171 = vrot.slane %v2169, 4
  %v2172 = vor.u32 %v2171, %v2167
  %v2173 = vrot.slane %v2172, 4
  %v2175 = vshll.u32 %v2135, 16
  %v2177 = vrot.slane %v2175, 5
  %v2178 = vsel %vm1243, %v2173, %v2177
  %v2179 = vshrl.u32 %v2135, 16
  %v2181 = vrot.slane %v2179, 4
  %v2182 = vor.u32 %v2181, %v2177
  %v2183 = vrot.slane %v2182, 4
  %v2185 = vshll.u32 %v2136, 16
  %v2187 = vrot.slane %v2185, 5
  %v2188 = vsel %vm1243, %v2183, %v2187
  %v2189 = vshrl.u32 %v2136, 16
  %v2191 = vrot.slane %v2189, 4
  %v2192 = vor.u32 %v2191, %v2187
  %v2193 = vrot.slane %v2192, 4
  %v2195 = vshll.u32 %v2137, 16
  %v2197 = vrot.slane %v2195, 5
  %v2198 = vsel %vm1243, %v2193, %v2197
  %v2199 = vshrl.u32 %v2137, 16
  %v2201 = vrot.slane %v2199, 4
  %v2202 = vor.u32 %v2201, %v2197
  %v2203 = vrot.slane %v2202, 4
  %v2205 = vshll.u32 %v2138, 16
  %v2207 = vrot.slane %v2205, 5
  %v2208 = vsel %vm1243, %v2203, %v2207
  %v2209 = vshrl.u32 %v2138, 16
  %v2211 = vrot.slane %v2209, 4
  %v2212 = vor.u32 %v2211, %v2207
  %v2213 = vrot.slane %v2212, 4
  %v2215 = vshll.u32 %v2139, 16
  %v2217 = vrot.slane %v2215, 5
  %v2218 = vsel %vm1243, %v2213, %v2217
  %v2219 = vshrl.u32 %v2139, 16
  %v2221 = vrot.slane %v2219, 4
  %v2222 = vor.u32 %v2221, %v2217
  %v2223 = vrot.slane %v2222, 4
  %v2225 = vshll.u32 %v2140, 16
  %v2227 = vrot.slane %v2225, 5
  %v2228 = vsel %vm1243, %v2223, %v2227
  %v2229 = vshrl.u32 %v2140, 16
  %v2231 = vrot.slane %v2229, 4
  %v2232 = vor.u32 %v2231, %v2227
  %v2233 = vrot.slane %v2232, 4
  %v2235 = vshll.u32 %v2141, 16
  %v2237 = vrot.slane %v2235, 5
  %v2238 = vsel %vm1243, %v2233, %v2237
  %v2239 = vshrl.u32 %v2141, 16
  %v2241 = vrot.slane %v2239, 4
  %v2242 = vor.u32 %v2241, %v2237
  %v2243 = vrot.slane %v2242, 4
  %v2245 = vshll.u32 %v2142, 16
  %v2247 = vrot.slane %v2245, 5
  %v2248 = vsel %vm1243, %v2243, %v2247
  %v2249 = vshrl.u32 %v2142, 16
  %v2251 = vrot.slane %v2249, 4
  %v2252 = vor.u32 %v2251, %v2247
  %v2253 = vrot.slane %v2252, 4
  %v2255 = vshll.u32 %v2143, 16
  %v2257 = vrot.slane %v2255, 5
  %v2258 = vsel %vm1243, %v2253, %v2257
  %v2259 = vshrl.u32 %v2143, 16
  %v2261 = vrot.slane %v2259, 4
  %v2262 = vor.u32 %v2261, %v2257
  %v2263 = vrot.slane %v2262, 4
  %v2265 = vshll.u32 %v2144, 16
  %v2267 = vrot.slane %v2265, 5
  %v2268 = vsel %vm1243, %v2263, %v2267
  %2281 = vst [vmem:[#allocation3 + $0x2c] sm:$0xf] %v2158
  %2282 = vst [vmem:[#allocation3 + $0x6c] sm:$0xf] %v2168
  %2283 = vst [vmem:[#allocation3 + $0xac] sm:$0xf] %v2178
  %2284 = vst [vmem:[#allocation3 + $0xec] sm:$0xf] %v2188
  %2285 = vst [vmem:[#allocation3 + $0x12c] sm:$0xf] %v2198
  %2286 = vst [vmem:[#allocation3 + $0x16c] sm:$0xf] %v2208
  %2287 = vst [vmem:[#allocation3 + $0x1ac] sm:$0xf] %v2218
  %2288 = vst [vmem:[#allocation3 + $0x1ec] sm:$0xf] %v2228
  %2289 = vst [vmem:[#allocation3 + $0x22c] sm:$0xf] %v2238
  %2290 = vst [vmem:[#allocation3 + $0x26c] sm:$0xf] %v2248
  %2291 = vst [vmem:[#allocation3 + $0x2ac] sm:$0xf] %v2258
  %2292 = vst [vmem:[#allocation3 + $0x2ec] sm:$0xf] %v2268
  %v2293 = vld [vmem:[#allocation2 + $0x48] sm:$0xf]
  %v2294 = vld [vmem:[#allocation2 + $0x4c] sm:$0xf]
  %v2295 = vld [vmem:[#allocation2 + $0x50] sm:$0xf]
  %v2296 = vld [vmem:[#allocation2 + $0x54] sm:$0xf]
  %v2297 = vld [vmem:[#allocation2 + $0x58] sm:$0xf]
  %v2298 = vld [vmem:[#allocation2 + $0x5c] sm:$0xf]
  %v2299 = vld [vmem:[#allocation2 + $0x60] sm:$0xf]
  %v2300 = vld [vmem:[#allocation2 + $0x64] sm:$0xf]
  %v2301 = vld [vmem:[#allocation2 + $0x68] sm:$0xf]
  %v2302 = vld [vmem:[#allocation2 + $0x6c] sm:$0xf]
  %v2303 = vld [vmem:[#allocation2 + $0x70] sm:$0xf]
  %v2304 = vld [vmem:[#allocation2 + $0x74] sm:$0xf]
  %2305 = vst [vmem:[#allocation3 + $0x30] sm:$0xf] %v2293
  %2306 = vst [vmem:[#allocation3 + $0x70] sm:$0xf] %v2294
  %2307 = vst [vmem:[#allocation3 + $0xb0] sm:$0xf] %v2295
  %2308 = vst [vmem:[#allocation3 + $0xf0] sm:$0xf] %v2296
  %2309 = vst [vmem:[#allocation3 + $0x130] sm:$0xf] %v2297
  %2310 = vst [vmem:[#allocation3 + $0x170] sm:$0xf] %v2298
  %2311 = vst [vmem:[#allocation3 + $0x1b0] sm:$0xf] %v2299
  %2312 = vst [vmem:[#allocation3 + $0x1f0] sm:$0xf] %v2300
  %2313 = vst [vmem:[#allocation3 + $0x230] sm:$0xf] %v2301
  %2314 = vst [vmem:[#allocation3 + $0x270] sm:$0xf] %v2302
  %2315 = vst [vmem:[#allocation3 + $0x2b0] sm:$0xf] %v2303
  %2316 = vst [vmem:[#allocation3 + $0x2f0] sm:$0xf] %v2304
  %v2317 = vld [vmem:[#allocation2 + $0x4c] sm:$0xf]
  %v2318 = vld [vmem:[#allocation2 + $0x50] sm:$0xf]
  %v2319 = vld [vmem:[#allocation2 + $0x54] sm:$0xf]
  %v2320 = vld [vmem:[#allocation2 + $0x58] sm:$0xf]
  %v2321 = vld [vmem:[#allocation2 + $0x5c] sm:$0xf]
  %v2322 = vld [vmem:[#allocation2 + $0x60] sm:$0xf]
  %v2323 = vld [vmem:[#allocation2 + $0x64] sm:$0xf]
  %v2324 = vld [vmem:[#allocation2 + $0x68] sm:$0xf]
  %v2325 = vld [vmem:[#allocation2 + $0x6c] sm:$0xf]
  %v2326 = vld [vmem:[#allocation2 + $0x70] sm:$0xf]
  %v2327 = vld [vmem:[#allocation2 + $0x74] sm:$0xf]
  %v2328 = vld [vmem:[#allocation2 + $0x78] sm:$0xf]
  %2329 = vst [vmem:[#allocation3 + $0x34] sm:$0xf] %v2317
  %2330 = vst [vmem:[#allocation3 + $0x74] sm:$0xf] %v2318
  %2331 = vst [vmem:[#allocation3 + $0xb4] sm:$0xf] %v2319
  %2332 = vst [vmem:[#allocation3 + $0xf4] sm:$0xf] %v2320
  %2333 = vst [vmem:[#allocation3 + $0x134] sm:$0xf] %v2321
  %2334 = vst [vmem:[#allocation3 + $0x174] sm:$0xf] %v2322
  %2335 = vst [vmem:[#allocation3 + $0x1b4] sm:$0xf] %v2323
  %2336 = vst [vmem:[#allocation3 + $0x1f4] sm:$0xf] %v2324
  %2337 = vst [vmem:[#allocation3 + $0x234] sm:$0xf] %v2325
  %2338 = vst [vmem:[#allocation3 + $0x274] sm:$0xf] %v2326
  %2339 = vst [vmem:[#allocation3 + $0x2b4] sm:$0xf] %v2327
  %2340 = vst [vmem:[#allocation3 + $0x2f4] sm:$0xf] %v2328
  %v2341 = vld [vmem:[#allocation2 + $0x48] sm:$0xf]
  %v2342 = vld [vmem:[#allocation2 + $0x4c] sm:$0xf]
  %v2343 = vld [vmem:[#allocation2 + $0x50] sm:$0xf]
  %v2344 = vld [vmem:[#allocation2 + $0x54] sm:$0xf]
  %v2345 = vld [vmem:[#allocation2 + $0x58] sm:$0xf]
  %v2346 = vld [vmem:[#allocation2 + $0x5c] sm:$0xf]
  %v2347 = vld [vmem:[#allocation2 + $0x60] sm:$0xf]
  %v2348 = vld [vmem:[#allocation2 + $0x64] sm:$0xf]
  %v2349 = vld [vmem:[#allocation2 + $0x68] sm:$0xf]
  %v2350 = vld [vmem:[#allocation2 + $0x6c] sm:$0xf]
  %v2351 = vld [vmem:[#allocation2 + $0x70] sm:$0xf]
  %v2352 = vld [vmem:[#allocation2 + $0x74] sm:$0xf]
  %v2353 = vld [vmem:[#allocation2 + $0x78] sm:$0x1]
  %v2355 = vshrl.u32 %v2341, 16
  %v2357 = vrot.slane %v2355, 4
  %v2358 = vshll.u32 %v2341, 16
  %v2360 = vrot.slane %v2358, 5
  %v2361 = vor.u32 %v2357, %v2360
  %v2362 = vrot.slane %v2361, 4
  %v2364 = vshll.u32 %v2342, 16
  %v2366 = vrot.slane %v2364, 5
  %v2367 = vsel %vm1243, %v2362, %v2366
  %v2368 = vshrl.u32 %v2342, 16
  %v2370 = vrot.slane %v2368, 4
  %v2371 = vor.u32 %v2370, %v2366
  %v2372 = vrot.slane %v2371, 4
  %v2374 = vshll.u32 %v2343, 16
  %v2376 = vrot.slane %v2374, 5
  %v2377 = vsel %vm1243, %v2372, %v2376
  %v2378 = vshrl.u32 %v2343, 16
  %v2380 = vrot.slane %v2378, 4
  %v2381 = vor.u32 %v2380, %v2376
  %v2382 = vrot.slane %v2381, 4
  %v2384 = vshll.u32 %v2344, 16
  %v2386 = vrot.slane %v2384, 5
  %v2387 = vsel %vm1243, %v2382, %v2386
  %v2388 = vshrl.u32 %v2344, 16
  %v2390 = vrot.slane %v2388, 4
  %v2391 = vor.u32 %v2390, %v2386
  %v2392 = vrot.slane %v2391, 4
  %v2394 = vshll.u32 %v2345, 16
  %v2396 = vrot.slane %v2394, 5
  %v2397 = vsel %vm1243, %v2392, %v2396
  %v2398 = vshrl.u32 %v2345, 16
  %v2400 = vrot.slane %v2398, 4
  %v2401 = vor.u32 %v2400, %v2396
  %v2402 = vrot.slane %v2401, 4
  %v2404 = vshll.u32 %v2346, 16
  %v2406 = vrot.slane %v2404, 5
  %v2407 = vsel %vm1243, %v2402, %v2406
  %v2408 = vshrl.u32 %v2346, 16
  %v2410 = vrot.slane %v2408, 4
  %v2411 = vor.u32 %v2410, %v2406
  %v2412 = vrot.slane %v2411, 4
  %v2414 = vshll.u32 %v2347, 16
  %v2416 = vrot.slane %v2414, 5
  %v2417 = vsel %vm1243, %v2412, %v2416
  %v2418 = vshrl.u32 %v2347, 16
  %v2420 = vrot.slane %v2418, 4
  %v2421 = vor.u32 %v2420, %v2416
  %v2422 = vrot.slane %v2421, 4
  %v2424 = vshll.u32 %v2348, 16
  %v2426 = vrot.slane %v2424, 5
  %v2427 = vsel %vm1243, %v2422, %v2426
  %v2428 = vshrl.u32 %v2348, 16
  %v2430 = vrot.slane %v2428, 4
  %v2431 = vor.u32 %v2430, %v2426
  %v2432 = vrot.slane %v2431, 4
  %v2434 = vshll.u32 %v2349, 16
  %v2436 = vrot.slane %v2434, 5
  %v2437 = vsel %vm1243, %v2432, %v2436
  %v2438 = vshrl.u32 %v2349, 16
  %v2440 = vrot.slane %v2438, 4
  %v2441 = vor.u32 %v2440, %v2436
  %v2442 = vrot.slane %v2441, 4
  %v2444 = vshll.u32 %v2350, 16
  %v2446 = vrot.slane %v2444, 5
  %v2447 = vsel %vm1243, %v2442, %v2446
  %v2448 = vshrl.u32 %v2350, 16
  %v2450 = vrot.slane %v2448, 4
  %v2451 = vor.u32 %v2450, %v2446
  %v2452 = vrot.slane %v2451, 4
  %v2454 = vshll.u32 %v2351, 16
  %v2456 = vrot.slane %v2454, 5
  %v2457 = vsel %vm1243, %v2452, %v2456
  %v2458 = vshrl.u32 %v2351, 16
  %v2460 = vrot.slane %v2458, 4
  %v2461 = vor.u32 %v2460, %v2456
  %v2462 = vrot.slane %v2461, 4
  %v2464 = vshll.u32 %v2352, 16
  %v2466 = vrot.slane %v2464, 5
  %v2467 = vsel %vm1243, %v2462, %v2466
  %v2468 = vshrl.u32 %v2352, 16
  %v2470 = vrot.slane %v2468, 4
  %v2471 = vor.u32 %v2470, %v2466
  %v2472 = vrot.slane %v2471, 4
  %v2474 = vshll.u32 %v2353, 16
  %v2476 = vrot.slane %v2474, 5
  %v2477 = vsel %vm1243, %v2472, %v2476
  %2490 = vst [vmem:[#allocation3 + $0x38] sm:$0xf] %v2367
  %2491 = vst [vmem:[#allocation3 + $0x78] sm:$0xf] %v2377
  %2492 = vst [vmem:[#allocation3 + $0xb8] sm:$0xf] %v2387
  %2493 = vst [vmem:[#allocation3 + $0xf8] sm:$0xf] %v2397
  %2494 = vst [vmem:[#allocation3 + $0x138] sm:$0xf] %v2407
  %2495 = vst [vmem:[#allocation3 + $0x178] sm:$0xf] %v2417
  %2496 = vst [vmem:[#allocation3 + $0x1b8] sm:$0xf] %v2427
  %2497 = vst [vmem:[#allocation3 + $0x1f8] sm:$0xf] %v2437
  %2498 = vst [vmem:[#allocation3 + $0x238] sm:$0xf] %v2447
  %2499 = vst [vmem:[#allocation3 + $0x278] sm:$0xf] %v2457
  %2500 = vst [vmem:[#allocation3 + $0x2b8] sm:$0xf] %v2467
  %2501 = vst [vmem:[#allocation3 + $0x2f8] sm:$0xf] %v2477
  %v2502 = vld [vmem:[#allocation2 + $0x4c] sm:$0xf]
  %v2503 = vld [vmem:[#allocation2 + $0x50] sm:$0xf]
  %v2504 = vld [vmem:[#allocation2 + $0x54] sm:$0xf]
  %v2505 = vld [vmem:[#allocation2 + $0x58] sm:$0xf]
  %v2506 = vld [vmem:[#allocation2 + $0x5c] sm:$0xf]
  %v2507 = vld [vmem:[#allocation2 + $0x60] sm:$0xf]
  %v2508 = vld [vmem:[#allocation2 + $0x64] sm:$0xf]
  %v2509 = vld [vmem:[#allocation2 + $0x68] sm:$0xf]
  %v2510 = vld [vmem:[#allocation2 + $0x6c] sm:$0xf]
  %v2511 = vld [vmem:[#allocation2 + $0x70] sm:$0xf]
  %v2512 = vld [vmem:[#allocation2 + $0x74] sm:$0xf]
  %v2513 = vld [vmem:[#allocation2 + $0x78] sm:$0xf]
  %v2514 = vld [vmem:[#allocation2 + $0x7c] sm:$0x1]
  %v2516 = vshrl.u32 %v2502, 16
  %v2518 = vrot.slane %v2516, 4
  %v2519 = vshll.u32 %v2502, 16
  %v2521 = vrot.slane %v2519, 5
  %v2522 = vor.u32 %v2518, %v2521
  %v2523 = vrot.slane %v2522, 4
  %v2525 = vshll.u32 %v2503, 16
  %v2527 = vrot.slane %v2525, 5
  %v2528 = vsel %vm1243, %v2523, %v2527
  %v2529 = vshrl.u32 %v2503, 16
  %v2531 = vrot.slane %v2529, 4
  %v2532 = vor.u32 %v2531, %v2527
  %v2533 = vrot.slane %v2532, 4
  %v2535 = vshll.u32 %v2504, 16
  %v2537 = vrot.slane %v2535, 5
  %v2538 = vsel %vm1243, %v2533, %v2537
  %v2539 = vshrl.u32 %v2504, 16
  %v2541 = vrot.slane %v2539, 4
  %v2542 = vor.u32 %v2541, %v2537
  %v2543 = vrot.slane %v2542, 4
  %v2545 = vshll.u32 %v2505, 16
  %v2547 = vrot.slane %v2545, 5
  %v2548 = vsel %vm1243, %v2543, %v2547
  %v2549 = vshrl.u32 %v2505, 16
  %v2551 = vrot.slane %v2549, 4
  %v2552 = vor.u32 %v2551, %v2547
  %v2553 = vrot.slane %v2552, 4
  %v2555 = vshll.u32 %v2506, 16
  %v2557 = vrot.slane %v2555, 5
  %v2558 = vsel %vm1243, %v2553, %v2557
  %v2559 = vshrl.u32 %v2506, 16
  %v2561 = vrot.slane %v2559, 4
  %v2562 = vor.u32 %v2561, %v2557
  %v2563 = vrot.slane %v2562, 4
  %v2565 = vshll.u32 %v2507, 16
  %v2567 = vrot.slane %v2565, 5
  %v2568 = vsel %vm1243, %v2563, %v2567
  %v2569 = vshrl.u32 %v2507, 16
  %v2571 = vrot.slane %v2569, 4
  %v2572 = vor.u32 %v2571, %v2567
  %v2573 = vrot.slane %v2572, 4
  %v2575 = vshll.u32 %v2508, 16
  %v2577 = vrot.slane %v2575, 5
  %v2578 = vsel %vm1243, %v2573, %v2577
  %v2579 = vshrl.u32 %v2508, 16
  %v2581 = vrot.slane %v2579, 4
  %v2582 = vor.u32 %v2581, %v2577
  %v2583 = vrot.slane %v2582, 4
  %v2585 = vshll.u32 %v2509, 16
  %v2587 = vrot.slane %v2585, 5
  %v2588 = vsel %vm1243, %v2583, %v2587
  %v2589 = vshrl.u32 %v2509, 16
  %v2591 = vrot.slane %v2589, 4
  %v2592 = vor.u32 %v2591, %v2587
  %v2593 = vrot.slane %v2592, 4
  %v2595 = vshll.u32 %v2510, 16
  %v2597 = vrot.slane %v2595, 5
  %v2598 = vsel %vm1243, %v2593, %v2597
  %v2599 = vshrl.u32 %v2510, 16
  %v2601 = vrot.slane %v2599, 4
  %v2602 = vor.u32 %v2601, %v2597
  %v2603 = vrot.slane %v2602, 4
  %v2605 = vshll.u32 %v2511, 16
  %v2607 = vrot.slane %v2605, 5
  %v2608 = vsel %vm1243, %v2603, %v2607
  %v2609 = vshrl.u32 %v2511, 16
  %v2611 = vrot.slane %v2609, 4
  %v2612 = vor.u32 %v2611, %v2607
  %v2613 = vrot.slane %v2612, 4
  %v2615 = vshll.u32 %v2512, 16
  %v2617 = vrot.slane %v2615, 5
  %v2618 = vsel %vm1243, %v2613, %v2617
  %v2619 = vshrl.u32 %v2512, 16
  %v2621 = vrot.slane %v2619, 4
  %v2622 = vor.u32 %v2621, %v2617
  %v2623 = vrot.slane %v2622, 4
  %v2625 = vshll.u32 %v2513, 16
  %v2627 = vrot.slane %v2625, 5
  %v2628 = vsel %vm1243, %v2623, %v2627
  %v2629 = vshrl.u32 %v2513, 16
  %v2631 = vrot.slane %v2629, 4
  %v2632 = vor.u32 %v2631, %v2627
  %v2633 = vrot.slane %v2632, 4
  %v2635 = vshll.u32 %v2514, 16
  %v2637 = vrot.slane %v2635, 5
  %v2638 = vsel %vm1243, %v2633, %v2637
  %2651 = vst [vmem:[#allocation3 + $0x3c] sm:$0xf] %v2528
  %2652 = vst [vmem:[#allocation3 + $0x7c] sm:$0xf] %v2538
  %2653 = vst [vmem:[#allocation3 + $0xbc] sm:$0xf] %v2548
  %2654 = vst [vmem:[#allocation3 + $0xfc] sm:$0xf] %v2558
  %2655 = vst [vmem:[#allocation3 + $0x13c] sm:$0xf] %v2568
  %2656 = vst [vmem:[#allocation3 + $0x17c] sm:$0xf] %v2578
  %2657 = vst [vmem:[#allocation3 + $0x1bc] sm:$0xf] %v2588
  %2658 = vst [vmem:[#allocation3 + $0x1fc] sm:$0xf] %v2598
  %2659 = vst [vmem:[#allocation3 + $0x23c] sm:$0xf] %v2608
  %2660 = vst [vmem:[#allocation3 + $0x27c] sm:$0xf] %v2618
  %2661 = vst [vmem:[#allocation3 + $0x2bc] sm:$0xf] %v2628
  %2662 = vst [vmem:[#allocation3 + $0x2fc] sm:$0xf] %v2638
  %v2663 = vld [vmem:[#allocation2 + $0x78] sm:$0xf]
  %v2664 = vld [vmem:[#allocation2 + $0x7c] sm:$0xf]
  %v2665 = vld [vmem:[#allocation2 + $0x80] sm:$0xf]
  %v2666 = vld [vmem:[#allocation2 + $0x84] sm:$0xf]
  %v2667 = vld [vmem:[#allocation2 + $0x88] sm:$0xf]
  %v2668 = vld [vmem:[#allocation2 + $0x8c] sm:$0xf]
  %v2669 = vld [vmem:[#allocation2 + $0x90] sm:$0xf]
  %v2670 = vld [vmem:[#allocation2 + $0x94] sm:$0xf]
  %v2671 = vld [vmem:[#allocation2 + $0x98] sm:$0xf]
  %v2672 = vld [vmem:[#allocation2 + $0x9c] sm:$0xf]
  %v2673 = vld [vmem:[#allocation2 + $0xa0] sm:$0xf]
  %v2674 = vld [vmem:[#allocation2 + $0xa4] sm:$0xf]
  %2675 = vst [vmem:[#allocation3 + $0x300] sm:$0xf] %v2663
  %2676 = vst [vmem:[#allocation3 + $0x340] sm:$0xf] %v2664
  %2677 = vst [vmem:[#allocation3 + $0x380] sm:$0xf] %v2665
  %2678 = vst [vmem:[#allocation3 + $0x3c0] sm:$0xf] %v2666
  %2679 = vst [vmem:[#allocation3 + $0x400] sm:$0xf] %v2667
  %2680 = vst [vmem:[#allocation3 + $0x440] sm:$0xf] %v2668
  %2681 = vst [vmem:[#allocation3 + $0x480] sm:$0xf] %v2669
  %2682 = vst [vmem:[#allocation3 + $0x4c0] sm:$0xf] %v2670
  %2683 = vst [vmem:[#allocation3 + $0x500] sm:$0xf] %v2671
  %2684 = vst [vmem:[#allocation3 + $0x540] sm:$0xf] %v2672
  %2685 = vst [vmem:[#allocation3 + $0x580] sm:$0xf] %v2673
  %2686 = vst [vmem:[#allocation3 + $0x5c0] sm:$0xf] %v2674
  %v2687 = vld [vmem:[#allocation2 + $0x7c] sm:$0xf]
  %v2688 = vld [vmem:[#allocation2 + $0x80] sm:$0xf]
  %v2689 = vld [vmem:[#allocation2 + $0x84] sm:$0xf]
  %v2690 = vld [vmem:[#allocation2 + $0x88] sm:$0xf]
  %v2691 = vld [vmem:[#allocation2 + $0x8c] sm:$0xf]
  %v2692 = vld [vmem:[#allocation2 + $0x90] sm:$0xf]
  %v2693 = vld [vmem:[#allocation2 + $0x94] sm:$0xf]
  %v2694 = vld [vmem:[#allocation2 + $0x98] sm:$0xf]
  %v2695 = vld [vmem:[#allocation2 + $0x9c] sm:$0xf]
  %v2696 = vld [vmem:[#allocation2 + $0xa0] sm:$0xf]
  %v2697 = vld [vmem:[#allocation2 + $0xa4] sm:$0xf]
  %v2698 = vld [vmem:[#allocation2 + $0xa8] sm:$0xf]
  %2699 = vst [vmem:[#allocation3 + $0x304] sm:$0xf] %v2687
  %2700 = vst [vmem:[#allocation3 + $0x344] sm:$0xf] %v2688
  %2701 = vst [vmem:[#allocation3 + $0x384] sm:$0xf] %v2689
  %2702 = vst [vmem:[#allocation3 + $0x3c4] sm:$0xf] %v2690
  %2703 = vst [vmem:[#allocation3 + $0x404] sm:$0xf] %v2691
  %2704 = vst [vmem:[#allocation3 + $0x444] sm:$0xf] %v2692
  %2705 = vst [vmem:[#allocation3 + $0x484] sm:$0xf] %v2693
  %2706 = vst [vmem:[#allocation3 + $0x4c4] sm:$0xf] %v2694
  %2707 = vst [vmem:[#allocation3 + $0x504] sm:$0xf] %v2695
  %2708 = vst [vmem:[#allocation3 + $0x544] sm:$0xf] %v2696
  %2709 = vst [vmem:[#allocation3 + $0x584] sm:$0xf] %v2697
  %2710 = vst [vmem:[#allocation3 + $0x5c4] sm:$0xf] %v2698
  %v2711 = vld [vmem:[#allocation2 + $0x78] sm:$0xf]
  %v2712 = vld [vmem:[#allocation2 + $0x7c] sm:$0xf]
  %v2713 = vld [vmem:[#allocation2 + $0x80] sm:$0xf]
  %v2714 = vld [vmem:[#allocation2 + $0x84] sm:$0xf]
  %v2715 = vld [vmem:[#allocation2 + $0x88] sm:$0xf]
  %v2716 = vld [vmem:[#allocation2 + $0x8c] sm:$0xf]
  %v2717 = vld [vmem:[#allocation2 + $0x90] sm:$0xf]
  %v2718 = vld [vmem:[#allocation2 + $0x94] sm:$0xf]
  %v2719 = vld [vmem:[#allocation2 + $0x98] sm:$0xf]
  %v2720 = vld [vmem:[#allocation2 + $0x9c] sm:$0xf]
  %v2721 = vld [vmem:[#allocation2 + $0xa0] sm:$0xf]
  %v2722 = vld [vmem:[#allocation2 + $0xa4] sm:$0xf]
  %v2723 = vld [vmem:[#allocation2 + $0xa8] sm:$0x1]
  %v2725 = vshrl.u32 %v2711, 16
  %v2727 = vrot.slane %v2725, 4
  %v2728 = vshll.u32 %v2711, 16
  %v2730 = vrot.slane %v2728, 5
  %v2731 = vor.u32 %v2727, %v2730
  %v2732 = vrot.slane %v2731, 4
  %v2734 = vshll.u32 %v2712, 16
  %v2736 = vrot.slane %v2734, 5
  %v2737 = vsel %vm1243, %v2732, %v2736
  %v2738 = vshrl.u32 %v2712, 16
  %v2740 = vrot.slane %v2738, 4
  %v2741 = vor.u32 %v2740, %v2736
  %v2742 = vrot.slane %v2741, 4
  %v2744 = vshll.u32 %v2713, 16
  %v2746 = vrot.slane %v2744, 5
  %v2747 = vsel %vm1243, %v2742, %v2746
  %v2748 = vshrl.u32 %v2713, 16
  %v2750 = vrot.slane %v2748, 4
  %v2751 = vor.u32 %v2750, %v2746
  %v2752 = vrot.slane %v2751, 4
  %v2754 = vshll.u32 %v2714, 16
  %v2756 = vrot.slane %v2754, 5
  %v2757 = vsel %vm1243, %v2752, %v2756
  %v2758 = vshrl.u32 %v2714, 16
  %v2760 = vrot.slane %v2758, 4
  %v2761 = vor.u32 %v2760, %v2756
  %v2762 = vrot.slane %v2761, 4
  %v2764 = vshll.u32 %v2715, 16
  %v2766 = vrot.slane %v2764, 5
  %v2767 = vsel %vm1243, %v2762, %v2766
  %v2768 = vshrl.u32 %v2715, 16
  %v2770 = vrot.slane %v2768, 4
  %v2771 = vor.u32 %v2770, %v2766
  %v2772 = vrot.slane %v2771, 4
  %v2774 = vshll.u32 %v2716, 16
  %v2776 = vrot.slane %v2774, 5
  %v2777 = vsel %vm1243, %v2772, %v2776
  %v2778 = vshrl.u32 %v2716, 16
  %v2780 = vrot.slane %v2778, 4
  %v2781 = vor.u32 %v2780, %v2776
  %v2782 = vrot.slane %v2781, 4
  %v2784 = vshll.u32 %v2717, 16
  %v2786 = vrot.slane %v2784, 5
  %v2787 = vsel %vm1243, %v2782, %v2786
  %v2788 = vshrl.u32 %v2717, 16
  %v2790 = vrot.slane %v2788, 4
  %v2791 = vor.u32 %v2790, %v2786
  %v2792 = vrot.slane %v2791, 4
  %v2794 = vshll.u32 %v2718, 16
  %v2796 = vrot.slane %v2794, 5
  %v2797 = vsel %vm1243, %v2792, %v2796
  %v2798 = vshrl.u32 %v2718, 16
  %v2800 = vrot.slane %v2798, 4
  %v2801 = vor.u32 %v2800, %v2796
  %v2802 = vrot.slane %v2801, 4
  %v2804 = vshll.u32 %v2719, 16
  %v2806 = vrot.slane %v2804, 5
  %v2807 = vsel %vm1243, %v2802, %v2806
  %v2808 = vshrl.u32 %v2719, 16
  %v2810 = vrot.slane %v2808, 4
  %v2811 = vor.u32 %v2810, %v2806
  %v2812 = vrot.slane %v2811, 4
  %v2814 = vshll.u32 %v2720, 16
  %v2816 = vrot.slane %v2814, 5
  %v2817 = vsel %vm1243, %v2812, %v2816
  %v2818 = vshrl.u32 %v2720, 16
  %v2820 = vrot.slane %v2818, 4
  %v2821 = vor.u32 %v2820, %v2816
  %v2822 = vrot.slane %v2821, 4
  %v2824 = vshll.u32 %v2721, 16
  %v2826 = vrot.slane %v2824, 5
  %v2827 = vsel %vm1243, %v2822, %v2826
  %v2828 = vshrl.u32 %v2721, 16
  %v2830 = vrot.slane %v2828, 4
  %v2831 = vor.u32 %v2830, %v2826
  %v2832 = vrot.slane %v2831, 4
  %v2834 = vshll.u32 %v2722, 16
  %v2836 = vrot.slane %v2834, 5
  %v2837 = vsel %vm1243, %v2832, %v2836
  %v2838 = vshrl.u32 %v2722, 16
  %v2840 = vrot.slane %v2838, 4
  %v2841 = vor.u32 %v2840, %v2836
  %v2842 = vrot.slane %v2841, 4
  %v2844 = vshll.u32 %v2723, 16
  %v2846 = vrot.slane %v2844, 5
  %v2847 = vsel %vm1243, %v2842, %v2846
  %2860 = vst [vmem:[#allocation3 + $0x308] sm:$0xf] %v2737
  %2861 = vst [vmem:[#allocation3 + $0x348] sm:$0xf] %v2747
  %2862 = vst [vmem:[#allocation3 + $0x388] sm:$0xf] %v2757
  %2863 = vst [vmem:[#allocation3 + $0x3c8] sm:$0xf] %v2767
  %2864 = vst [vmem:[#allocation3 + $0x408] sm:$0xf] %v2777
  %2865 = vst [vmem:[#allocation3 + $0x448] sm:$0xf] %v2787
  %2866 = vst [vmem:[#allocation3 + $0x488] sm:$0xf] %v2797
  %2867 = vst [vmem:[#allocation3 + $0x4c8] sm:$0xf] %v2807
  %2868 = vst [vmem:[#allocation3 + $0x508] sm:$0xf] %v2817
  %2869 = vst [vmem:[#allocation3 + $0x548] sm:$0xf] %v2827
  %2870 = vst [vmem:[#allocation3 + $0x588] sm:$0xf] %v2837
  %2871 = vst [vmem:[#allocation3 + $0x5c8] sm:$0xf] %v2847
  %v2872 = vld [vmem:[#allocation2 + $0x7c] sm:$0xf]
  %v2873 = vld [vmem:[#allocation2 + $0x80] sm:$0xf]
  %v2874 = vld [vmem:[#allocation2 + $0x84] sm:$0xf]
  %v2875 = vld [vmem:[#allocation2 + $0x88] sm:$0xf]
  %v2876 = vld [vmem:[#allocation2 + $0x8c] sm:$0xf]
  %v2877 = vld [vmem:[#allocation2 + $0x90] sm:$0xf]
  %v2878 = vld [vmem:[#allocation2 + $0x94] sm:$0xf]
  %v2879 = vld [vmem:[#allocation2 + $0x98] sm:$0xf]
  %v2880 = vld [vmem:[#allocation2 + $0x9c] sm:$0xf]
  %v2881 = vld [vmem:[#allocation2 + $0xa0] sm:$0xf]
  %v2882 = vld [vmem:[#allocation2 + $0xa4] sm:$0xf]
  %v2883 = vld [vmem:[#allocation2 + $0xa8] sm:$0xf]
  %v2884 = vld [vmem:[#allocation2 + $0xac] sm:$0x1]
  %v2886 = vshrl.u32 %v2872, 16
  %v2888 = vrot.slane %v2886, 4
  %v2889 = vshll.u32 %v2872, 16
  %v2891 = vrot.slane %v2889, 5
  %v2892 = vor.u32 %v2888, %v2891
  %v2893 = vrot.slane %v2892, 4
  %v2895 = vshll.u32 %v2873, 16
  %v2897 = vrot.slane %v2895, 5
  %v2898 = vsel %vm1243, %v2893, %v2897
  %v2899 = vshrl.u32 %v2873, 16
  %v2901 = vrot.slane %v2899, 4
  %v2902 = vor.u32 %v2901, %v2897
  %v2903 = vrot.slane %v2902, 4
  %v2905 = vshll.u32 %v2874, 16
  %v2907 = vrot.slane %v2905, 5
  %v2908 = vsel %vm1243, %v2903, %v2907
  %v2909 = vshrl.u32 %v2874, 16
  %v2911 = vrot.slane %v2909, 4
  %v2912 = vor.u32 %v2911, %v2907
  %v2913 = vrot.slane %v2912, 4
  %v2915 = vshll.u32 %v2875, 16
  %v2917 = vrot.slane %v2915, 5
  %v2918 = vsel %vm1243, %v2913, %v2917
  %v2919 = vshrl.u32 %v2875, 16
  %v2921 = vrot.slane %v2919, 4
  %v2922 = vor.u32 %v2921, %v2917
  %v2923 = vrot.slane %v2922, 4
  %v2925 = vshll.u32 %v2876, 16
  %v2927 = vrot.slane %v2925, 5
  %v2928 = vsel %vm1243, %v2923, %v2927
  %v2929 = vshrl.u32 %v2876, 16
  %v2931 = vrot.slane %v2929, 4
  %v2932 = vor.u32 %v2931, %v2927
  %v2933 = vrot.slane %v2932, 4
  %v2935 = vshll.u32 %v2877, 16
  %v2937 = vrot.slane %v2935, 5
  %v2938 = vsel %vm1243, %v2933, %v2937
  %v2939 = vshrl.u32 %v2877, 16
  %v2941 = vrot.slane %v2939, 4
  %v2942 = vor.u32 %v2941, %v2937
  %v2943 = vrot.slane %v2942, 4
  %v2945 = vshll.u32 %v2878, 16
  %v2947 = vrot.slane %v2945, 5
  %v2948 = vsel %vm1243, %v2943, %v2947
  %v2949 = vshrl.u32 %v2878, 16
  %v2951 = vrot.slane %v2949, 4
  %v2952 = vor.u32 %v2951, %v2947
  %v2953 = vrot.slane %v2952, 4
  %v2955 = vshll.u32 %v2879, 16
  %v2957 = vrot.slane %v2955, 5
  %v2958 = vsel %vm1243, %v2953, %v2957
  %v2959 = vshrl.u32 %v2879, 16
  %v2961 = vrot.slane %v2959, 4
  %v2962 = vor.u32 %v2961, %v2957
  %v2963 = vrot.slane %v2962, 4
  %v2965 = vshll.u32 %v2880, 16
  %v2967 = vrot.slane %v2965, 5
  %v2968 = vsel %vm1243, %v2963, %v2967
  %v2969 = vshrl.u32 %v2880, 16
  %v2971 = vrot.slane %v2969, 4
  %v2972 = vor.u32 %v2971, %v2967
  %v2973 = vrot.slane %v2972, 4
  %v2975 = vshll.u32 %v2881, 16
  %v2977 = vrot.slane %v2975, 5
  %v2978 = vsel %vm1243, %v2973, %v2977
  %v2979 = vshrl.u32 %v2881, 16
  %v2981 = vrot.slane %v2979, 4
  %v2982 = vor.u32 %v2981, %v2977
  %v2983 = vrot.slane %v2982, 4
  %v2985 = vshll.u32 %v2882, 16
  %v2987 = vrot.slane %v2985, 5
  %v2988 = vsel %vm1243, %v2983, %v2987
  %v2989 = vshrl.u32 %v2882, 16
  %v2991 = vrot.slane %v2989, 4
  %v2992 = vor.u32 %v2991, %v2987
  %v2993 = vrot.slane %v2992, 4
  %v2995 = vshll.u32 %v2883, 16
  %v2997 = vrot.slane %v2995, 5
  %v2998 = vsel %vm1243, %v2993, %v2997
  %v2999 = vshrl.u32 %v2883, 16
  %v3001 = vrot.slane %v2999, 4
  %v3002 = vor.u32 %v3001, %v2997
  %v3003 = vrot.slane %v3002, 4
  %v3005 = vshll.u32 %v2884, 16
  %v3007 = vrot.slane %v3005, 5
  %v3008 = vsel %vm1243, %v3003, %v3007
  %3021 = vst [vmem:[#allocation3 + $0x30c] sm:$0xf] %v2898
  %3022 = vst [vmem:[#allocation3 + $0x34c] sm:$0xf] %v2908
  %3023 = vst [vmem:[#allocation3 + $0x38c] sm:$0xf] %v2918
  %3024 = vst [vmem:[#allocation3 + $0x3cc] sm:$0xf] %v2928
  %3025 = vst [vmem:[#allocation3 + $0x40c] sm:$0xf] %v2938
  %3026 = vst [vmem:[#allocation3 + $0x44c] sm:$0xf] %v2948
  %3027 = vst [vmem:[#allocation3 + $0x48c] sm:$0xf] %v2958
  %3028 = vst [vmem:[#allocation3 + $0x4cc] sm:$0xf] %v2968
  %3029 = vst [vmem:[#allocation3 + $0x50c] sm:$0xf] %v2978
  %3030 = vst [vmem:[#allocation3 + $0x54c] sm:$0xf] %v2988
  %3031 = vst [vmem:[#allocation3 + $0x58c] sm:$0xf] %v2998
  %3032 = vst [vmem:[#allocation3 + $0x5cc] sm:$0xf] %v3008
  %v3033 = vld [vmem:[#allocation2 + $0xb8] sm:$0xf]
  %v3034 = vld [vmem:[#allocation2 + $0xbc] sm:$0xf]
  %v3035 = vld [vmem:[#allocation2 + $0xc0] sm:$0xf]
  %v3036 = vld [vmem:[#allocation2 + $0xc4] sm:$0xf]
  %v3037 = vld [vmem:[#allocation2 + $0xc8] sm:$0xf]
  %v3038 = vld [vmem:[#allocation2 + $0xcc] sm:$0xf]
  %v3039 = vld [vmem:[#allocation2 + $0xd0] sm:$0xf]
  %v3040 = vld [vmem:[#allocation2 + $0xd4] sm:$0xf]
  %v3041 = vld [vmem:[#allocation2 + $0xd8] sm:$0xf]
  %v3042 = vld [vmem:[#allocation2 + $0xdc] sm:$0xf]
  %v3043 = vld [vmem:[#allocation2 + $0xe0] sm:$0xf]
  %v3044 = vld [vmem:[#allocation2 + $0xe4] sm:$0xf]
  %3045 = vst [vmem:[#allocation3 + $0x310] sm:$0xf] %v3033
  %3046 = vst [vmem:[#allocation3 + $0x350] sm:$0xf] %v3034
  %3047 = vst [vmem:[#allocation3 + $0x390] sm:$0xf] %v3035
  %3048 = vst [vmem:[#allocation3 + $0x3d0] sm:$0xf] %v3036
  %3049 = vst [vmem:[#allocation3 + $0x410] sm:$0xf] %v3037
  %3050 = vst [vmem:[#allocation3 + $0x450] sm:$0xf] %v3038
  %3051 = vst [vmem:[#allocation3 + $0x490] sm:$0xf] %v3039
  %3052 = vst [vmem:[#allocation3 + $0x4d0] sm:$0xf] %v3040
  %3053 = vst [vmem:[#allocation3 + $0x510] sm:$0xf] %v3041
  %3054 = vst [vmem:[#allocation3 + $0x550] sm:$0xf] %v3042
  %3055 = vst [vmem:[#allocation3 + $0x590] sm:$0xf] %v3043
  %3056 = vst [vmem:[#allocation3 + $0x5d0] sm:$0xf] %v3044
  %v3057 = vld [vmem:[#allocation2 + $0xbc] sm:$0xf]
  %v3058 = vld [vmem:[#allocation2 + $0xc0] sm:$0xf]
  %v3059 = vld [vmem:[#allocation2 + $0xc4] sm:$0xf]
  %v3060 = vld [vmem:[#allocation2 + $0xc8] sm:$0xf]
  %v3061 = vld [vmem:[#allocation2 + $0xcc] sm:$0xf]
  %v3062 = vld [vmem:[#allocation2 + $0xd0] sm:$0xf]
  %v3063 = vld [vmem:[#allocation2 + $0xd4] sm:$0xf]
  %v3064 = vld [vmem:[#allocation2 + $0xd8] sm:$0xf]
  %v3065 = vld [vmem:[#allocation2 + $0xdc] sm:$0xf]
  %v3066 = vld [vmem:[#allocation2 + $0xe0] sm:$0xf]
  %v3067 = vld [vmem:[#allocation2 + $0xe4] sm:$0xf]
  %v3068 = vld [vmem:[#allocation2 + $0xe8] sm:$0xf]
  %3069 = vst [vmem:[#allocation3 + $0x314] sm:$0xf] %v3057
  %3070 = vst [vmem:[#allocation3 + $0x354] sm:$0xf] %v3058
  %3071 = vst [vmem:[#allocation3 + $0x394] sm:$0xf] %v3059
  %3072 = vst [vmem:[#allocation3 + $0x3d4] sm:$0xf] %v3060
  %3073 = vst [vmem:[#allocation3 + $0x414] sm:$0xf] %v3061
  %3074 = vst [vmem:[#allocation3 + $0x454] sm:$0xf] %v3062
  %3075 = vst [vmem:[#allocation3 + $0x494] sm:$0xf] %v3063
  %3076 = vst [vmem:[#allocation3 + $0x4d4] sm:$0xf] %v3064
  %3077 = vst [vmem:[#allocation3 + $0x514] sm:$0xf] %v3065
  %3078 = vst [vmem:[#allocation3 + $0x554] sm:$0xf] %v3066
  %3079 = vst [vmem:[#allocation3 + $0x594] sm:$0xf] %v3067
  %3080 = vst [vmem:[#allocation3 + $0x5d4] sm:$0xf] %v3068
  %v3081 = vld [vmem:[#allocation2 + $0xb8] sm:$0xf]
  %v3082 = vld [vmem:[#allocation2 + $0xbc] sm:$0xf]
  %v3083 = vld [vmem:[#allocation2 + $0xc0] sm:$0xf]
  %v3084 = vld [vmem:[#allocation2 + $0xc4] sm:$0xf]
  %v3085 = vld [vmem:[#allocation2 + $0xc8] sm:$0xf]
  %v3086 = vld [vmem:[#allocation2 + $0xcc] sm:$0xf]
  %v3087 = vld [vmem:[#allocation2 + $0xd0] sm:$0xf]
  %v3088 = vld [vmem:[#allocation2 + $0xd4] sm:$0xf]
  %v3089 = vld [vmem:[#allocation2 + $0xd8] sm:$0xf]
  %v3090 = vld [vmem:[#allocation2 + $0xdc] sm:$0xf]
  %v3091 = vld [vmem:[#allocation2 + $0xe0] sm:$0xf]
  %v3092 = vld [vmem:[#allocation2 + $0xe4] sm:$0xf]
  %v3093 = vld [vmem:[#allocation2 + $0xe8] sm:$0x1]
  %v3095 = vshrl.u32 %v3081, 16
  %v3097 = vrot.slane %v3095, 4
  %v3098 = vshll.u32 %v3081, 16
  %v3100 = vrot.slane %v3098, 5
  %v3101 = vor.u32 %v3097, %v3100
  %v3102 = vrot.slane %v3101, 4
  %v3104 = vshll.u32 %v3082, 16
  %v3106 = vrot.slane %v3104, 5
  %v3107 = vsel %vm1243, %v3102, %v3106
  %v3108 = vshrl.u32 %v3082, 16
  %v3110 = vrot.slane %v3108, 4
  %v3111 = vor.u32 %v3110, %v3106
  %v3112 = vrot.slane %v3111, 4
  %v3114 = vshll.u32 %v3083, 16
  %v3116 = vrot.slane %v3114, 5
  %v3117 = vsel %vm1243, %v3112, %v3116
  %v3118 = vshrl.u32 %v3083, 16
  %v3120 = vrot.slane %v3118, 4
  %v3121 = vor.u32 %v3120, %v3116
  %v3122 = vrot.slane %v3121, 4
  %v3124 = vshll.u32 %v3084, 16
  %v3126 = vrot.slane %v3124, 5
  %v3127 = vsel %vm1243, %v3122, %v3126
  %v3128 = vshrl.u32 %v3084, 16
  %v3130 = vrot.slane %v3128, 4
  %v3131 = vor.u32 %v3130, %v3126
  %v3132 = vrot.slane %v3131, 4
  %v3134 = vshll.u32 %v3085, 16
  %v3136 = vrot.slane %v3134, 5
  %v3137 = vsel %vm1243, %v3132, %v3136
  %v3138 = vshrl.u32 %v3085, 16
  %v3140 = vrot.slane %v3138, 4
  %v3141 = vor.u32 %v3140, %v3136
  %v3142 = vrot.slane %v3141, 4
  %v3144 = vshll.u32 %v3086, 16
  %v3146 = vrot.slane %v3144, 5
  %v3147 = vsel %vm1243, %v3142, %v3146
  %v3148 = vshrl.u32 %v3086, 16
  %v3150 = vrot.slane %v3148, 4
  %v3151 = vor.u32 %v3150, %v3146
  %v3152 = vrot.slane %v3151, 4
  %v3154 = vshll.u32 %v3087, 16
  %v3156 = vrot.slane %v3154, 5
  %v3157 = vsel %vm1243, %v3152, %v3156
  %v3158 = vshrl.u32 %v3087, 16
  %v3160 = vrot.slane %v3158, 4
  %v3161 = vor.u32 %v3160, %v3156
  %v3162 = vrot.slane %v3161, 4
  %v3164 = vshll.u32 %v3088, 16
  %v3166 = vrot.slane %v3164, 5
  %v3167 = vsel %vm1243, %v3162, %v3166
  %v3168 = vshrl.u32 %v3088, 16
  %v3170 = vrot.slane %v3168, 4
  %v3171 = vor.u32 %v3170, %v3166
  %v3172 = vrot.slane %v3171, 4
  %v3174 = vshll.u32 %v3089, 16
  %v3176 = vrot.slane %v3174, 5
  %v3177 = vsel %vm1243, %v3172, %v3176
  %v3178 = vshrl.u32 %v3089, 16
  %v3180 = vrot.slane %v3178, 4
  %v3181 = vor.u32 %v3180, %v3176
  %v3182 = vrot.slane %v3181, 4
  %v3184 = vshll.u32 %v3090, 16
  %v3186 = vrot.slane %v3184, 5
  %v3187 = vsel %vm1243, %v3182, %v3186
  %v3188 = vshrl.u32 %v3090, 16
  %v3190 = vrot.slane %v3188, 4
  %v3191 = vor.u32 %v3190, %v3186
  %v3192 = vrot.slane %v3191, 4
  %v3194 = vshll.u32 %v3091, 16
  %v3196 = vrot.slane %v3194, 5
  %v3197 = vsel %vm1243, %v3192, %v3196
  %v3198 = vshrl.u32 %v3091, 16
  %v3200 = vrot.slane %v3198, 4
  %v3201 = vor.u32 %v3200, %v3196
  %v3202 = vrot.slane %v3201, 4
  %v3204 = vshll.u32 %v3092, 16
  %v3206 = vrot.slane %v3204, 5
  %v3207 = vsel %vm1243, %v3202, %v3206
  %v3208 = vshrl.u32 %v3092, 16
  %v3210 = vrot.slane %v3208, 4
  %v3211 = vor.u32 %v3210, %v3206
  %v3212 = vrot.slane %v3211, 4
  %v3214 = vshll.u32 %v3093, 16
  %v3216 = vrot.slane %v3214, 5
  %v3217 = vsel %vm1243, %v3212, %v3216
  %3230 = vst [vmem:[#allocation3 + $0x318] sm:$0xf] %v3107
  %3231 = vst [vmem:[#allocation3 + $0x358] sm:$0xf] %v3117
  %3232 = vst [vmem:[#allocation3 + $0x398] sm:$0xf] %v3127
  %3233 = vst [vmem:[#allocation3 + $0x3d8] sm:$0xf] %v3137
  %3234 = vst [vmem:[#allocation3 + $0x418] sm:$0xf] %v3147
  %3235 = vst [vmem:[#allocation3 + $0x458] sm:$0xf] %v3157
  %3236 = vst [vmem:[#allocation3 + $0x498] sm:$0xf] %v3167
  %3237 = vst [vmem:[#allocation3 + $0x4d8] sm:$0xf] %v3177
  %3238 = vst [vmem:[#allocation3 + $0x518] sm:$0xf] %v3187
  %3239 = vst [vmem:[#allocation3 + $0x558] sm:$0xf] %v3197
  %3240 = vst [vmem:[#allocation3 + $0x598] sm:$0xf] %v3207
  %3241 = vst [vmem:[#allocation3 + $0x5d8] sm:$0xf] %v3217
  %v3242 = vld [vmem:[#allocation2 + $0xbc] sm:$0xf]
  %v3243 = vld [vmem:[#allocation2 + $0xc0] sm:$0xf]
  %v3244 = vld [vmem:[#allocation2 + $0xc4] sm:$0xf]
  %v3245 = vld [vmem:[#allocation2 + $0xc8] sm:$0xf]
  %v3246 = vld [vmem:[#allocation2 + $0xcc] sm:$0xf]
  %v3247 = vld [vmem:[#allocation2 + $0xd0] sm:$0xf]
  %v3248 = vld [vmem:[#allocation2 + $0xd4] sm:$0xf]
  %v3249 = vld [vmem:[#allocation2 + $0xd8] sm:$0xf]
  %v3250 = vld [vmem:[#allocation2 + $0xdc] sm:$0xf]
  %v3251 = vld [vmem:[#allocation2 + $0xe0] sm:$0xf]
  %v3252 = vld [vmem:[#allocation2 + $0xe4] sm:$0xf]
  %v3253 = vld [vmem:[#allocation2 + $0xe8] sm:$0xf]
  %v3254 = vld [vmem:[#allocation2 + $0xec] sm:$0x1]
  %v3256 = vshrl.u32 %v3242, 16
  %v3258 = vrot.slane %v3256, 4
  %v3259 = vshll.u32 %v3242, 16
  %v3261 = vrot.slane %v3259, 5
  %v3262 = vor.u32 %v3258, %v3261
  %v3263 = vrot.slane %v3262, 4
  %v3265 = vshll.u32 %v3243, 16
  %v3267 = vrot.slane %v3265, 5
  %v3268 = vsel %vm1243, %v3263, %v3267
  %v3269 = vshrl.u32 %v3243, 16
  %v3271 = vrot.slane %v3269, 4
  %v3272 = vor.u32 %v3271, %v3267
  %v3273 = vrot.slane %v3272, 4
  %v3275 = vshll.u32 %v3244, 16
  %v3277 = vrot.slane %v3275, 5
  %v3278 = vsel %vm1243, %v3273, %v3277
  %v3279 = vshrl.u32 %v3244, 16
  %v3281 = vrot.slane %v3279, 4
  %v3282 = vor.u32 %v3281, %v3277
  %v3283 = vrot.slane %v3282, 4
  %v3285 = vshll.u32 %v3245, 16
  %v3287 = vrot.slane %v3285, 5
  %v3288 = vsel %vm1243, %v3283, %v3287
  %v3289 = vshrl.u32 %v3245, 16
  %v3291 = vrot.slane %v3289, 4
  %v3292 = vor.u32 %v3291, %v3287
  %v3293 = vrot.slane %v3292, 4
  %v3295 = vshll.u32 %v3246, 16
  %v3297 = vrot.slane %v3295, 5
  %v3298 = vsel %vm1243, %v3293, %v3297
  %v3299 = vshrl.u32 %v3246, 16
  %v3301 = vrot.slane %v3299, 4
  %v3302 = vor.u32 %v3301, %v3297
  %v3303 = vrot.slane %v3302, 4
  %v3305 = vshll.u32 %v3247, 16
  %v3307 = vrot.slane %v3305, 5
  %v3308 = vsel %vm1243, %v3303, %v3307
  %v3309 = vshrl.u32 %v3247, 16
  %v3311 = vrot.slane %v3309, 4
  %v3312 = vor.u32 %v3311, %v3307
  %v3313 = vrot.slane %v3312, 4
  %v3315 = vshll.u32 %v3248, 16
  %v3317 = vrot.slane %v3315, 5
  %v3318 = vsel %vm1243, %v3313, %v3317
  %v3319 = vshrl.u32 %v3248, 16
  %v3321 = vrot.slane %v3319, 4
  %v3322 = vor.u32 %v3321, %v3317
  %v3323 = vrot.slane %v3322, 4
  %v3325 = vshll.u32 %v3249, 16
  %v3327 = vrot.slane %v3325, 5
  %v3328 = vsel %vm1243, %v3323, %v3327
  %v3329 = vshrl.u32 %v3249, 16
  %v3331 = vrot.slane %v3329, 4
  %v3332 = vor.u32 %v3331, %v3327
  %v3333 = vrot.slane %v3332, 4
  %v3335 = vshll.u32 %v3250, 16
  %v3337 = vrot.slane %v3335, 5
  %v3338 = vsel %vm1243, %v3333, %v3337
  %v3339 = vshrl.u32 %v3250, 16
  %v3341 = vrot.slane %v3339, 4
  %v3342 = vor.u32 %v3341, %v3337
  %v3343 = vrot.slane %v3342, 4
  %v3345 = vshll.u32 %v3251, 16
  %v3347 = vrot.slane %v3345, 5
  %v3348 = vsel %vm1243, %v3343, %v3347
  %v3349 = vshrl.u32 %v3251, 16
  %v3351 = vrot.slane %v3349, 4
  %v3352 = vor.u32 %v3351, %v3347
  %v3353 = vrot.slane %v3352, 4
  %v3355 = vshll.u32 %v3252, 16
  %v3357 = vrot.slane %v3355, 5
  %v3358 = vsel %vm1243, %v3353, %v3357
  %v3359 = vshrl.u32 %v3252, 16
  %v3361 = vrot.slane %v3359, 4
  %v3362 = vor.u32 %v3361, %v3357
  %v3363 = vrot.slane %v3362, 4
  %v3365 = vshll.u32 %v3253, 16
  %v3367 = vrot.slane %v3365, 5
  %v3368 = vsel %vm1243, %v3363, %v3367
  %v3369 = vshrl.u32 %v3253, 16
  %v3371 = vrot.slane %v3369, 4
  %v3372 = vor.u32 %v3371, %v3367
  %v3373 = vrot.slane %v3372, 4
  %v3375 = vshll.u32 %v3254, 16
  %v3377 = vrot.slane %v3375, 5
  %v3378 = vsel %vm1243, %v3373, %v3377
  %3391 = vst [vmem:[#allocation3 + $0x31c] sm:$0xf] %v3268
  %3392 = vst [vmem:[#allocation3 + $0x35c] sm:$0xf] %v3278
  %3393 = vst [vmem:[#allocation3 + $0x39c] sm:$0xf] %v3288
  %3394 = vst [vmem:[#allocation3 + $0x3dc] sm:$0xf] %v3298
  %3395 = vst [vmem:[#allocation3 + $0x41c] sm:$0xf] %v3308
  %3396 = vst [vmem:[#allocation3 + $0x45c] sm:$0xf] %v3318
  %3397 = vst [vmem:[#allocation3 + $0x49c] sm:$0xf] %v3328
  %3398 = vst [vmem:[#allocation3 + $0x4dc] sm:$0xf] %v3338
  %3399 = vst [vmem:[#allocation3 + $0x51c] sm:$0xf] %v3348
  %3400 = vst [vmem:[#allocation3 + $0x55c] sm:$0xf] %v3358
  %3401 = vst [vmem:[#allocation3 + $0x59c] sm:$0xf] %v3368
  %3402 = vst [vmem:[#allocation3 + $0x5dc] sm:$0xf] %v3378
  %v3403 = vld [vmem:[#allocation2 + $0x80] sm:$0xf]
  %v3404 = vld [vmem:[#allocation2 + $0x84] sm:$0xf]
  %v3405 = vld [vmem:[#allocation2 + $0x88] sm:$0xf]
  %v3406 = vld [vmem:[#allocation2 + $0x8c] sm:$0xf]
  %v3407 = vld [vmem:[#allocation2 + $0x90] sm:$0xf]
  %v3408 = vld [vmem:[#allocation2 + $0x94] sm:$0xf]
  %v3409 = vld [vmem:[#allocation2 + $0x98] sm:$0xf]
  %v3410 = vld [vmem:[#allocation2 + $0x9c] sm:$0xf]
  %v3411 = vld [vmem:[#allocation2 + $0xa0] sm:$0xf]
  %v3412 = vld [vmem:[#allocation2 + $0xa4] sm:$0xf]
  %v3413 = vld [vmem:[#allocation2 + $0xa8] sm:$0xf]
  %v3414 = vld [vmem:[#allocation2 + $0xac] sm:$0xf]
  %3415 = vst [vmem:[#allocation3 + $0x320] sm:$0xf] %v3403
  %3416 = vst [vmem:[#allocation3 + $0x360] sm:$0xf] %v3404
  %3417 = vst [vmem:[#allocation3 + $0x3a0] sm:$0xf] %v3405
  %3418 = vst [vmem:[#allocation3 + $0x3e0] sm:$0xf] %v3406
  %3419 = vst [vmem:[#allocation3 + $0x420] sm:$0xf] %v3407
  %3420 = vst [vmem:[#allocation3 + $0x460] sm:$0xf] %v3408
  %3421 = vst [vmem:[#allocation3 + $0x4a0] sm:$0xf] %v3409
  %3422 = vst [vmem:[#allocation3 + $0x4e0] sm:$0xf] %v3410
  %3423 = vst [vmem:[#allocation3 + $0x520] sm:$0xf] %v3411
  %3424 = vst [vmem:[#allocation3 + $0x560] sm:$0xf] %v3412
  %3425 = vst [vmem:[#allocation3 + $0x5a0] sm:$0xf] %v3413
  %3426 = vst [vmem:[#allocation3 + $0x5e0] sm:$0xf] %v3414
  %v3427 = vld [vmem:[#allocation2 + $0x84] sm:$0xf]
  %v3428 = vld [vmem:[#allocation2 + $0x88] sm:$0xf]
  %v3429 = vld [vmem:[#allocation2 + $0x8c] sm:$0xf]
  %v3430 = vld [vmem:[#allocation2 + $0x90] sm:$0xf]
  %v3431 = vld [vmem:[#allocation2 + $0x94] sm:$0xf]
  %v3432 = vld [vmem:[#allocation2 + $0x98] sm:$0xf]
  %v3433 = vld [vmem:[#allocation2 + $0x9c] sm:$0xf]
  %v3434 = vld [vmem:[#allocation2 + $0xa0] sm:$0xf]
  %v3435 = vld [vmem:[#allocation2 + $0xa4] sm:$0xf]
  %v3436 = vld [vmem:[#allocation2 + $0xa8] sm:$0xf]
  %v3437 = vld [vmem:[#allocation2 + $0xac] sm:$0xf]
  %v3438 = vld [vmem:[#allocation2 + $0xb0] sm:$0xf]
  %3439 = vst [vmem:[#allocation3 + $0x324] sm:$0xf] %v3427
  %3440 = vst [vmem:[#allocation3 + $0x364] sm:$0xf] %v3428
  %3441 = vst [vmem:[#allocation3 + $0x3a4] sm:$0xf] %v3429
  %3442 = vst [vmem:[#allocation3 + $0x3e4] sm:$0xf] %v3430
  %3443 = vst [vmem:[#allocation3 + $0x424] sm:$0xf] %v3431
  %3444 = vst [vmem:[#allocation3 + $0x464] sm:$0xf] %v3432
  %3445 = vst [vmem:[#allocation3 + $0x4a4] sm:$0xf] %v3433
  %3446 = vst [vmem:[#allocation3 + $0x4e4] sm:$0xf] %v3434
  %3447 = vst [vmem:[#allocation3 + $0x524] sm:$0xf] %v3435
  %3448 = vst [vmem:[#allocation3 + $0x564] sm:$0xf] %v3436
  %3449 = vst [vmem:[#allocation3 + $0x5a4] sm:$0xf] %v3437
  %3450 = vst [vmem:[#allocation3 + $0x5e4] sm:$0xf] %v3438
  %v3451 = vld [vmem:[#allocation2 + $0x80] sm:$0xf]
  %v3452 = vld [vmem:[#allocation2 + $0x84] sm:$0xf]
  %v3453 = vld [vmem:[#allocation2 + $0x88] sm:$0xf]
  %v3454 = vld [vmem:[#allocation2 + $0x8c] sm:$0xf]
  %v3455 = vld [vmem:[#allocation2 + $0x90] sm:$0xf]
  %v3456 = vld [vmem:[#allocation2 + $0x94] sm:$0xf]
  %v3457 = vld [vmem:[#allocation2 + $0x98] sm:$0xf]
  %v3458 = vld [vmem:[#allocation2 + $0x9c] sm:$0xf]
  %v3459 = vld [vmem:[#allocation2 + $0xa0] sm:$0xf]
  %v3460 = vld [vmem:[#allocation2 + $0xa4] sm:$0xf]
  %v3461 = vld [vmem:[#allocation2 + $0xa8] sm:$0xf]
  %v3462 = vld [vmem:[#allocation2 + $0xac] sm:$0xf]
  %v3463 = vld [vmem:[#allocation2 + $0xb0] sm:$0x1]
  %v3465 = vshrl.u32 %v3451, 16
  %v3467 = vrot.slane %v3465, 4
  %v3468 = vshll.u32 %v3451, 16
  %v3470 = vrot.slane %v3468, 5
  %v3471 = vor.u32 %v3467, %v3470
  %v3472 = vrot.slane %v3471, 4
  %v3474 = vshll.u32 %v3452, 16
  %v3476 = vrot.slane %v3474, 5
  %v3477 = vsel %vm1243, %v3472, %v3476
  %v3478 = vshrl.u32 %v3452, 16
  %v3480 = vrot.slane %v3478, 4
  %v3481 = vor.u32 %v3480, %v3476
  %v3482 = vrot.slane %v3481, 4
  %v3484 = vshll.u32 %v3453, 16
  %v3486 = vrot.slane %v3484, 5
  %v3487 = vsel %vm1243, %v3482, %v3486
  %v3488 = vshrl.u32 %v3453, 16
  %v3490 = vrot.slane %v3488, 4
  %v3491 = vor.u32 %v3490, %v3486
  %v3492 = vrot.slane %v3491, 4
  %v3494 = vshll.u32 %v3454, 16
  %v3496 = vrot.slane %v3494, 5
  %v3497 = vsel %vm1243, %v3492, %v3496
  %v3498 = vshrl.u32 %v3454, 16
  %v3500 = vrot.slane %v3498, 4
  %v3501 = vor.u32 %v3500, %v3496
  %v3502 = vrot.slane %v3501, 4
  %v3504 = vshll.u32 %v3455, 16
  %v3506 = vrot.slane %v3504, 5
  %v3507 = vsel %vm1243, %v3502, %v3506
  %v3508 = vshrl.u32 %v3455, 16
  %v3510 = vrot.slane %v3508, 4
  %v3511 = vor.u32 %v3510, %v3506
  %v3512 = vrot.slane %v3511, 4
  %v3514 = vshll.u32 %v3456, 16
  %v3516 = vrot.slane %v3514, 5
  %v3517 = vsel %vm1243, %v3512, %v3516
  %v3518 = vshrl.u32 %v3456, 16
  %v3520 = vrot.slane %v3518, 4
  %v3521 = vor.u32 %v3520, %v3516
  %v3522 = vrot.slane %v3521, 4
  %v3524 = vshll.u32 %v3457, 16
  %v3526 = vrot.slane %v3524, 5
  %v3527 = vsel %vm1243, %v3522, %v3526
  %v3528 = vshrl.u32 %v3457, 16
  %v3530 = vrot.slane %v3528, 4
  %v3531 = vor.u32 %v3530, %v3526
  %v3532 = vrot.slane %v3531, 4
  %v3534 = vshll.u32 %v3458, 16
  %v3536 = vrot.slane %v3534, 5
  %v3537 = vsel %vm1243, %v3532, %v3536
  %v3538 = vshrl.u32 %v3458, 16
  %v3540 = vrot.slane %v3538, 4
  %v3541 = vor.u32 %v3540, %v3536
  %v3542 = vrot.slane %v3541, 4
  %v3544 = vshll.u32 %v3459, 16
  %v3546 = vrot.slane %v3544, 5
  %v3547 = vsel %vm1243, %v3542, %v3546
  %v3548 = vshrl.u32 %v3459, 16
  %v3550 = vrot.slane %v3548, 4
  %v3551 = vor.u32 %v3550, %v3546
  %v3552 = vrot.slane %v3551, 4
  %v3554 = vshll.u32 %v3460, 16
  %v3556 = vrot.slane %v3554, 5
  %v3557 = vsel %vm1243, %v3552, %v3556
  %v3558 = vshrl.u32 %v3460, 16
  %v3560 = vrot.slane %v3558, 4
  %v3561 = vor.u32 %v3560, %v3556
  %v3562 = vrot.slane %v3561, 4
  %v3564 = vshll.u32 %v3461, 16
  %v3566 = vrot.slane %v3564, 5
  %v3567 = vsel %vm1243, %v3562, %v3566
  %v3568 = vshrl.u32 %v3461, 16
  %v3570 = vrot.slane %v3568, 4
  %v3571 = vor.u32 %v3570, %v3566
  %v3572 = vrot.slane %v3571, 4
  %v3574 = vshll.u32 %v3462, 16
  %v3576 = vrot.slane %v3574, 5
  %v3577 = vsel %vm1243, %v3572, %v3576
  %v3578 = vshrl.u32 %v3462, 16
  %v3580 = vrot.slane %v3578, 4
  %v3581 = vor.u32 %v3580, %v3576
  %v3582 = vrot.slane %v3581, 4
  %v3584 = vshll.u32 %v3463, 16
  %v3586 = vrot.slane %v3584, 5
  %v3587 = vsel %vm1243, %v3582, %v3586
  %3600 = vst [vmem:[#allocation3 + $0x328] sm:$0xf] %v3477
  %3601 = vst [vmem:[#allocation3 + $0x368] sm:$0xf] %v3487
  %3602 = vst [vmem:[#allocation3 + $0x3a8] sm:$0xf] %v3497
  %3603 = vst [vmem:[#allocation3 + $0x3e8] sm:$0xf] %v3507
  %3604 = vst [vmem:[#allocation3 + $0x428] sm:$0xf] %v3517
  %3605 = vst [vmem:[#allocation3 + $0x468] sm:$0xf] %v3527
  %3606 = vst [vmem:[#allocation3 + $0x4a8] sm:$0xf] %v3537
  %3607 = vst [vmem:[#allocation3 + $0x4e8] sm:$0xf] %v3547
  %3608 = vst [vmem:[#allocation3 + $0x528] sm:$0xf] %v3557
  %3609 = vst [vmem:[#allocation3 + $0x568] sm:$0xf] %v3567
  %3610 = vst [vmem:[#allocation3 + $0x5a8] sm:$0xf] %v3577
  %3611 = vst [vmem:[#allocation3 + $0x5e8] sm:$0xf] %v3587
  %v3612 = vld [vmem:[#allocation2 + $0x84] sm:$0xf]
  %v3613 = vld [vmem:[#allocation2 + $0x88] sm:$0xf]
  %v3614 = vld [vmem:[#allocation2 + $0x8c] sm:$0xf]
  %v3615 = vld [vmem:[#allocation2 + $0x90] sm:$0xf]
  %v3616 = vld [vmem:[#allocation2 + $0x94] sm:$0xf]
  %v3617 = vld [vmem:[#allocation2 + $0x98] sm:$0xf]
  %v3618 = vld [vmem:[#allocation2 + $0x9c] sm:$0xf]
  %v3619 = vld [vmem:[#allocation2 + $0xa0] sm:$0xf]
  %v3620 = vld [vmem:[#allocation2 + $0xa4] sm:$0xf]
  %v3621 = vld [vmem:[#allocation2 + $0xa8] sm:$0xf]
  %v3622 = vld [vmem:[#allocation2 + $0xac] sm:$0xf]
  %v3623 = vld [vmem:[#allocation2 + $0xb0] sm:$0xf]
  %v3624 = vld [vmem:[#allocation2 + $0xb4] sm:$0x1]
  %v3626 = vshrl.u32 %v3612, 16
  %v3628 = vrot.slane %v3626, 4
  %v3629 = vshll.u32 %v3612, 16
  %v3631 = vrot.slane %v3629, 5
  %v3632 = vor.u32 %v3628, %v3631
  %v3633 = vrot.slane %v3632, 4
  %v3635 = vshll.u32 %v3613, 16
  %v3637 = vrot.slane %v3635, 5
  %v3638 = vsel %vm1243, %v3633, %v3637
  %v3639 = vshrl.u32 %v3613, 16
  %v3641 = vrot.slane %v3639, 4
  %v3642 = vor.u32 %v3641, %v3637
  %v3643 = vrot.slane %v3642, 4
  %v3645 = vshll.u32 %v3614, 16
  %v3647 = vrot.slane %v3645, 5
  %v3648 = vsel %vm1243, %v3643, %v3647
  %v3649 = vshrl.u32 %v3614, 16
  %v3651 = vrot.slane %v3649, 4
  %v3652 = vor.u32 %v3651, %v3647
  %v3653 = vrot.slane %v3652, 4
  %v3655 = vshll.u32 %v3615, 16
  %v3657 = vrot.slane %v3655, 5
  %v3658 = vsel %vm1243, %v3653, %v3657
  %v3659 = vshrl.u32 %v3615, 16
  %v3661 = vrot.slane %v3659, 4
  %v3662 = vor.u32 %v3661, %v3657
  %v3663 = vrot.slane %v3662, 4
  %v3665 = vshll.u32 %v3616, 16
  %v3667 = vrot.slane %v3665, 5
  %v3668 = vsel %vm1243, %v3663, %v3667
  %v3669 = vshrl.u32 %v3616, 16
  %v3671 = vrot.slane %v3669, 4
  %v3672 = vor.u32 %v3671, %v3667
  %v3673 = vrot.slane %v3672, 4
  %v3675 = vshll.u32 %v3617, 16
  %v3677 = vrot.slane %v3675, 5
  %v3678 = vsel %vm1243, %v3673, %v3677
  %v3679 = vshrl.u32 %v3617, 16
  %v3681 = vrot.slane %v3679, 4
  %v3682 = vor.u32 %v3681, %v3677
  %v3683 = vrot.slane %v3682, 4
  %v3685 = vshll.u32 %v3618, 16
  %v3687 = vrot.slane %v3685, 5
  %v3688 = vsel %vm1243, %v3683, %v3687
  %v3689 = vshrl.u32 %v3618, 16
  %v3691 = vrot.slane %v3689, 4
  %v3692 = vor.u32 %v3691, %v3687
  %v3693 = vrot.slane %v3692, 4
  %v3695 = vshll.u32 %v3619, 16
  %v3697 = vrot.slane %v3695, 5
  %v3698 = vsel %vm1243, %v3693, %v3697
  %v3699 = vshrl.u32 %v3619, 16
  %v3701 = vrot.slane %v3699, 4
  %v3702 = vor.u32 %v3701, %v3697
  %v3703 = vrot.slane %v3702, 4
  %v3705 = vshll.u32 %v3620, 16
  %v3707 = vrot.slane %v3705, 5
  %v3708 = vsel %vm1243, %v3703, %v3707
  %v3709 = vshrl.u32 %v3620, 16
  %v3711 = vrot.slane %v3709, 4
  %v3712 = vor.u32 %v3711, %v3707
  %v3713 = vrot.slane %v3712, 4
  %v3715 = vshll.u32 %v3621, 16
  %v3717 = vrot.slane %v3715, 5
  %v3718 = vsel %vm1243, %v3713, %v3717
  %v3719 = vshrl.u32 %v3621, 16
  %v3721 = vrot.slane %v3719, 4
  %v3722 = vor.u32 %v3721, %v3717
  %v3723 = vrot.slane %v3722, 4
  %v3725 = vshll.u32 %v3622, 16
  %v3727 = vrot.slane %v3725, 5
  %v3728 = vsel %vm1243, %v3723, %v3727
  %v3729 = vshrl.u32 %v3622, 16
  %v3731 = vrot.slane %v3729, 4
  %v3732 = vor.u32 %v3731, %v3727
  %v3733 = vrot.slane %v3732, 4
  %v3735 = vshll.u32 %v3623, 16
  %v3737 = vrot.slane %v3735, 5
  %v3738 = vsel %vm1243, %v3733, %v3737
  %v3739 = vshrl.u32 %v3623, 16
  %v3741 = vrot.slane %v3739, 4
  %v3742 = vor.u32 %v3741, %v3737
  %v3743 = vrot.slane %v3742, 4
  %v3745 = vshll.u32 %v3624, 16
  %v3747 = vrot.slane %v3745, 5
  %v3748 = vsel %vm1243, %v3743, %v3747
  %3761 = vst [vmem:[#allocation3 + $0x32c] sm:$0xf] %v3638
  %3762 = vst [vmem:[#allocation3 + $0x36c] sm:$0xf] %v3648
  %3763 = vst [vmem:[#allocation3 + $0x3ac] sm:$0xf] %v3658
  %3764 = vst [vmem:[#allocation3 + $0x3ec] sm:$0xf] %v3668
  %3765 = vst [vmem:[#allocation3 + $0x42c] sm:$0xf] %v3678
  %3766 = vst [vmem:[#allocation3 + $0x46c] sm:$0xf] %v3688
  %3767 = vst [vmem:[#allocation3 + $0x4ac] sm:$0xf] %v3698
  %3768 = vst [vmem:[#allocation3 + $0x4ec] sm:$0xf] %v3708
  %3769 = vst [vmem:[#allocation3 + $0x52c] sm:$0xf] %v3718
  %3770 = vst [vmem:[#allocation3 + $0x56c] sm:$0xf] %v3728
  %3771 = vst [vmem:[#allocation3 + $0x5ac] sm:$0xf] %v3738
  %3772 = vst [vmem:[#allocation3 + $0x5ec] sm:$0xf] %v3748
  %v3773 = vld [vmem:[#allocation2 + $0xc0] sm:$0xf]
  %v3774 = vld [vmem:[#allocation2 + $0xc4] sm:$0xf]
  %v3775 = vld [vmem:[#allocation2 + $0xc8] sm:$0xf]
  %v3776 = vld [vmem:[#allocation2 + $0xcc] sm:$0xf]
  %v3777 = vld [vmem:[#allocation2 + $0xd0] sm:$0xf]
  %v3778 = vld [vmem:[#allocation2 + $0xd4] sm:$0xf]
  %v3779 = vld [vmem:[#allocation2 + $0xd8] sm:$0xf]
  %v3780 = vld [vmem:[#allocation2 + $0xdc] sm:$0xf]
  %v3781 = vld [vmem:[#allocation2 + $0xe0] sm:$0xf]
  %v3782 = vld [vmem:[#allocation2 + $0xe4] sm:$0xf]
  %v3783 = vld [vmem:[#allocation2 + $0xe8] sm:$0xf]
  %v3784 = vld [vmem:[#allocation2 + $0xec] sm:$0xf]
  %3785 = vst [vmem:[#allocation3 + $0x330] sm:$0xf] %v3773
  %3786 = vst [vmem:[#allocation3 + $0x370] sm:$0xf] %v3774
  %3787 = vst [vmem:[#allocation3 + $0x3b0] sm:$0xf] %v3775
  %3788 = vst [vmem:[#allocation3 + $0x3f0] sm:$0xf] %v3776
  %3789 = vst [vmem:[#allocation3 + $0x430] sm:$0xf] %v3777
  %3790 = vst [vmem:[#allocation3 + $0x470] sm:$0xf] %v3778
  %3791 = vst [vmem:[#allocation3 + $0x4b0] sm:$0xf] %v3779
  %3792 = vst [vmem:[#allocation3 + $0x4f0] sm:$0xf] %v3780
  %3793 = vst [vmem:[#allocation3 + $0x530] sm:$0xf] %v3781
  %3794 = vst [vmem:[#allocation3 + $0x570] sm:$0xf] %v3782
  %3795 = vst [vmem:[#allocation3 + $0x5b0] sm:$0xf] %v3783
  %3796 = vst [vmem:[#allocation3 + $0x5f0] sm:$0xf] %v3784
  %v3797 = vld [vmem:[#allocation2 + $0xc4] sm:$0xf]
  %v3798 = vld [vmem:[#allocation2 + $0xc8] sm:$0xf]
  %v3799 = vld [vmem:[#allocation2 + $0xcc] sm:$0xf]
  %v3800 = vld [vmem:[#allocation2 + $0xd0] sm:$0xf]
  %v3801 = vld [vmem:[#allocation2 + $0xd4] sm:$0xf]
  %v3802 = vld [vmem:[#allocation2 + $0xd8] sm:$0xf]
  %v3803 = vld [vmem:[#allocation2 + $0xdc] sm:$0xf]
  %v3804 = vld [vmem:[#allocation2 + $0xe0] sm:$0xf]
  %v3805 = vld [vmem:[#allocation2 + $0xe4] sm:$0xf]
  %v3806 = vld [vmem:[#allocation2 + $0xe8] sm:$0xf]
  %v3807 = vld [vmem:[#allocation2 + $0xec] sm:$0xf]
  %v3808 = vld [vmem:[#allocation2 + $0xf0] sm:$0xf]
  %3809 = vst [vmem:[#allocation3 + $0x334] sm:$0xf] %v3797
  %3810 = vst [vmem:[#allocation3 + $0x374] sm:$0xf] %v3798
  %3811 = vst [vmem:[#allocation3 + $0x3b4] sm:$0xf] %v3799
  %3812 = vst [vmem:[#allocation3 + $0x3f4] sm:$0xf] %v3800
  %3813 = vst [vmem:[#allocation3 + $0x434] sm:$0xf] %v3801
  %3814 = vst [vmem:[#allocation3 + $0x474] sm:$0xf] %v3802
  %3815 = vst [vmem:[#allocation3 + $0x4b4] sm:$0xf] %v3803
  %3816 = vst [vmem:[#allocation3 + $0x4f4] sm:$0xf] %v3804
  %3817 = vst [vmem:[#allocation3 + $0x534] sm:$0xf] %v3805
  %3818 = vst [vmem:[#allocation3 + $0x574] sm:$0xf] %v3806
  %3819 = vst [vmem:[#allocation3 + $0x5b4] sm:$0xf] %v3807
  %3820 = vst [vmem:[#allocation3 + $0x5f4] sm:$0xf] %v3808
  %v3821 = vld [vmem:[#allocation2 + $0xc0] sm:$0xf]
  %v3822 = vld [vmem:[#allocation2 + $0xc4] sm:$0xf]
  %v3823 = vld [vmem:[#allocation2 + $0xc8] sm:$0xf]
  %v3824 = vld [vmem:[#allocation2 + $0xcc] sm:$0xf]
  %v3825 = vld [vmem:[#allocation2 + $0xd0] sm:$0xf]
  %v3826 = vld [vmem:[#allocation2 + $0xd4] sm:$0xf]
  %v3827 = vld [vmem:[#allocation2 + $0xd8] sm:$0xf]
  %v3828 = vld [vmem:[#allocation2 + $0xdc] sm:$0xf]
  %v3829 = vld [vmem:[#allocation2 + $0xe0] sm:$0xf]
  %v3830 = vld [vmem:[#allocation2 + $0xe4] sm:$0xf]
  %v3831 = vld [vmem:[#allocation2 + $0xe8] sm:$0xf]
  %v3832 = vld [vmem:[#allocation2 + $0xec] sm:$0xf]
  %v3833 = vld [vmem:[#allocation2 + $0xf0] sm:$0x1]
  %v3835 = vshrl.u32 %v3821, 16
  %v3837 = vrot.slane %v3835, 4
  %v3838 = vshll.u32 %v3821, 16
  %v3840 = vrot.slane %v3838, 5
  %v3841 = vor.u32 %v3837, %v3840
  %v3842 = vrot.slane %v3841, 4
  %v3844 = vshll.u32 %v3822, 16
  %v3846 = vrot.slane %v3844, 5
  %v3847 = vsel %vm1243, %v3842, %v3846
  %v3848 = vshrl.u32 %v3822, 16
  %v3850 = vrot.slane %v3848, 4
  %v3851 = vor.u32 %v3850, %v3846
  %v3852 = vrot.slane %v3851, 4
  %v3854 = vshll.u32 %v3823, 16
  %v3856 = vrot.slane %v3854, 5
  %v3857 = vsel %vm1243, %v3852, %v3856
  %v3858 = vshrl.u32 %v3823, 16
  %v3860 = vrot.slane %v3858, 4
  %v3861 = vor.u32 %v3860, %v3856
  %v3862 = vrot.slane %v3861, 4
  %v3864 = vshll.u32 %v3824, 16
  %v3866 = vrot.slane %v3864, 5
  %v3867 = vsel %vm1243, %v3862, %v3866
  %v3868 = vshrl.u32 %v3824, 16
  %v3870 = vrot.slane %v3868, 4
  %v3871 = vor.u32 %v3870, %v3866
  %v3872 = vrot.slane %v3871, 4
  %v3874 = vshll.u32 %v3825, 16
  %v3876 = vrot.slane %v3874, 5
  %v3877 = vsel %vm1243, %v3872, %v3876
  %v3878 = vshrl.u32 %v3825, 16
  %v3880 = vrot.slane %v3878, 4
  %v3881 = vor.u32 %v3880, %v3876
  %v3882 = vrot.slane %v3881, 4
  %v3884 = vshll.u32 %v3826, 16
  %v3886 = vrot.slane %v3884, 5
  %v3887 = vsel %vm1243, %v3882, %v3886
  %v3888 = vshrl.u32 %v3826, 16
  %v3890 = vrot.slane %v3888, 4
  %v3891 = vor.u32 %v3890, %v3886
  %v3892 = vrot.slane %v3891, 4
  %v3894 = vshll.u32 %v3827, 16
  %v3896 = vrot.slane %v3894, 5
  %v3897 = vsel %vm1243, %v3892, %v3896
  %v3898 = vshrl.u32 %v3827, 16
  %v3900 = vrot.slane %v3898, 4
  %v3901 = vor.u32 %v3900, %v3896
  %v3902 = vrot.slane %v3901, 4
  %v3904 = vshll.u32 %v3828, 16
  %v3906 = vrot.slane %v3904, 5
  %v3907 = vsel %vm1243, %v3902, %v3906
  %v3908 = vshrl.u32 %v3828, 16
  %v3910 = vrot.slane %v3908, 4
  %v3911 = vor.u32 %v3910, %v3906
  %v3912 = vrot.slane %v3911, 4
  %v3914 = vshll.u32 %v3829, 16
  %v3916 = vrot.slane %v3914, 5
  %v3917 = vsel %vm1243, %v3912, %v3916
  %v3918 = vshrl.u32 %v3829, 16
  %v3920 = vrot.slane %v3918, 4
  %v3921 = vor.u32 %v3920, %v3916
  %v3922 = vrot.slane %v3921, 4
  %v3924 = vshll.u32 %v3830, 16
  %v3926 = vrot.slane %v3924, 5
  %v3927 = vsel %vm1243, %v3922, %v3926
  %v3928 = vshrl.u32 %v3830, 16
  %v3930 = vrot.slane %v3928, 4
  %v3931 = vor.u32 %v3930, %v3926
  %v3932 = vrot.slane %v3931, 4
  %v3934 = vshll.u32 %v3831, 16
  %v3936 = vrot.slane %v3934, 5
  %v3937 = vsel %vm1243, %v3932, %v3936
  %v3938 = vshrl.u32 %v3831, 16
  %v3940 = vrot.slane %v3938, 4
  %v3941 = vor.u32 %v3940, %v3936
  %v3942 = vrot.slane %v3941, 4
  %v3944 = vshll.u32 %v3832, 16
  %v3946 = vrot.slane %v3944, 5
  %v3947 = vsel %vm1243, %v3942, %v3946
  %v3948 = vshrl.u32 %v3832, 16
  %v3950 = vrot.slane %v3948, 4
  %v3951 = vor.u32 %v3950, %v3946
  %v3952 = vrot.slane %v3951, 4
  %v3954 = vshll.u32 %v3833, 16
  %v3956 = vrot.slane %v3954, 5
  %v3957 = vsel %vm1243, %v3952, %v3956
  %3970 = vst [vmem:[#allocation3 + $0x338] sm:$0xf] %v3847
  %3971 = vst [vmem:[#allocation3 + $0x378] sm:$0xf] %v3857
  %3972 = vst [vmem:[#allocation3 + $0x3b8] sm:$0xf] %v3867
  %3973 = vst [vmem:[#allocation3 + $0x3f8] sm:$0xf] %v3877
  %3974 = vst [vmem:[#allocation3 + $0x438] sm:$0xf] %v3887
  %3975 = vst [vmem:[#allocation3 + $0x478] sm:$0xf] %v3897
  %3976 = vst [vmem:[#allocation3 + $0x4b8] sm:$0xf] %v3907
  %3977 = vst [vmem:[#allocation3 + $0x4f8] sm:$0xf] %v3917
  %3978 = vst [vmem:[#allocation3 + $0x538] sm:$0xf] %v3927
  %3979 = vst [vmem:[#allocation3 + $0x578] sm:$0xf] %v3937
  %3980 = vst [vmem:[#allocation3 + $0x5b8] sm:$0xf] %v3947
  %3981 = vst [vmem:[#allocation3 + $0x5f8] sm:$0xf] %v3957
  %v3982 = vld [vmem:[#allocation2 + $0xc4] sm:$0xf]
  %v3983 = vld [vmem:[#allocation2 + $0xc8] sm:$0xf]
  %v3984 = vld [vmem:[#allocation2 + $0xcc] sm:$0xf]
  %v3985 = vld [vmem:[#allocation2 + $0xd0] sm:$0xf]
  %v3986 = vld [vmem:[#allocation2 + $0xd4] sm:$0xf]
  %v3987 = vld [vmem:[#allocation2 + $0xd8] sm:$0xf]
  %v3988 = vld [vmem:[#allocation2 + $0xdc] sm:$0xf]
  %v3989 = vld [vmem:[#allocation2 + $0xe0] sm:$0xf]
  %v3990 = vld [vmem:[#allocation2 + $0xe4] sm:$0xf]
  %v3991 = vld [vmem:[#allocation2 + $0xe8] sm:$0xf]
  %v3992 = vld [vmem:[#allocation2 + $0xec] sm:$0xf]
  %v3993 = vld [vmem:[#allocation2 + $0xf0] sm:$0xf]
  %v3994 = vld [vmem:[#allocation2 + $0xf4] sm:$0x1]
  %v3996 = vshrl.u32 %v3982, 16
  %v3998 = vrot.slane %v3996, 4
  %v3999 = vshll.u32 %v3982, 16
  %v4001 = vrot.slane %v3999, 5
  %v4002 = vor.u32 %v3998, %v4001
  %v4003 = vrot.slane %v4002, 4
  %v4005 = vshll.u32 %v3983, 16
  %v4007 = vrot.slane %v4005, 5
  %v4008 = vsel %vm1243, %v4003, %v4007
  %v4009 = vshrl.u32 %v3983, 16
  %v4011 = vrot.slane %v4009, 4
  %v4012 = vor.u32 %v4011, %v4007
  %v4013 = vrot.slane %v4012, 4
  %v4015 = vshll.u32 %v3984, 16
  %v4017 = vrot.slane %v4015, 5
  %v4018 = vsel %vm1243, %v4013, %v4017
  %v4019 = vshrl.u32 %v3984, 16
  %v4021 = vrot.slane %v4019, 4
  %v4022 = vor.u32 %v4021, %v4017
  %v4023 = vrot.slane %v4022, 4
  %v4025 = vshll.u32 %v3985, 16
  %v4027 = vrot.slane %v4025, 5
  %v4028 = vsel %vm1243, %v4023, %v4027
  %v4029 = vshrl.u32 %v3985, 16
  %v4031 = vrot.slane %v4029, 4
  %v4032 = vor.u32 %v4031, %v4027
  %v4033 = vrot.slane %v4032, 4
  %v4035 = vshll.u32 %v3986, 16
  %v4037 = vrot.slane %v4035, 5
  %v4038 = vsel %vm1243, %v4033, %v4037
  %v4039 = vshrl.u32 %v3986, 16
  %v4041 = vrot.slane %v4039, 4
  %v4042 = vor.u32 %v4041, %v4037
  %v4043 = vrot.slane %v4042, 4
  %v4045 = vshll.u32 %v3987, 16
  %v4047 = vrot.slane %v4045, 5
  %v4048 = vsel %vm1243, %v4043, %v4047
  %v4049 = vshrl.u32 %v3987, 16
  %v4051 = vrot.slane %v4049, 4
  %v4052 = vor.u32 %v4051, %v4047
  %v4053 = vrot.slane %v4052, 4
  %v4055 = vshll.u32 %v3988, 16
  %v4057 = vrot.slane %v4055, 5
  %v4058 = vsel %vm1243, %v4053, %v4057
  %v4059 = vshrl.u32 %v3988, 16
  %v4061 = vrot.slane %v4059, 4
  %v4062 = vor.u32 %v4061, %v4057
  %v4063 = vrot.slane %v4062, 4
  %v4065 = vshll.u32 %v3989, 16
  %v4067 = vrot.slane %v4065, 5
  %v4068 = vsel %vm1243, %v4063, %v4067
  %v4069 = vshrl.u32 %v3989, 16
  %v4071 = vrot.slane %v4069, 4
  %v4072 = vor.u32 %v4071, %v4067
  %v4073 = vrot.slane %v4072, 4
  %v4075 = vshll.u32 %v3990, 16
  %v4077 = vrot.slane %v4075, 5
  %v4078 = vsel %vm1243, %v4073, %v4077
  %v4079 = vshrl.u32 %v3990, 16
  %v4081 = vrot.slane %v4079, 4
  %v4082 = vor.u32 %v4081, %v4077
  %v4083 = vrot.slane %v4082, 4
  %v4085 = vshll.u32 %v3991, 16
  %v4087 = vrot.slane %v4085, 5
  %v4088 = vsel %vm1243, %v4083, %v4087
  %v4089 = vshrl.u32 %v3991, 16
  %v4091 = vrot.slane %v4089, 4
  %v4092 = vor.u32 %v4091, %v4087
  %v4093 = vrot.slane %v4092, 4
  %v4095 = vshll.u32 %v3992, 16
  %v4097 = vrot.slane %v4095, 5
  %v4098 = vsel %vm1243, %v4093, %v4097
  %v4099 = vshrl.u32 %v3992, 16
  %v4101 = vrot.slane %v4099, 4
  %v4102 = vor.u32 %v4101, %v4097
  %v4103 = vrot.slane %v4102, 4
  %v4105 = vshll.u32 %v3993, 16
  %v4107 = vrot.slane %v4105, 5
  %v4108 = vsel %vm1243, %v4103, %v4107
  %v4109 = vshrl.u32 %v3993, 16
  %v4111 = vrot.slane %v4109, 4
  %v4112 = vor.u32 %v4111, %v4107
  %v4113 = vrot.slane %v4112, 4
  %v4115 = vshll.u32 %v3994, 16
  %v4117 = vrot.slane %v4115, 5
  %v4118 = vsel %vm1243, %v4113, %v4117
  %4131 = vst [vmem:[#allocation3 + $0x33c] sm:$0xf] %v4008
  %4132 = vst [vmem:[#allocation3 + $0x37c] sm:$0xf] %v4018
  %4133 = vst [vmem:[#allocation3 + $0x3bc] sm:$0xf] %v4028
  %4134 = vst [vmem:[#allocation3 + $0x3fc] sm:$0xf] %v4038
  %4135 = vst [vmem:[#allocation3 + $0x43c] sm:$0xf] %v4048
  %4136 = vst [vmem:[#allocation3 + $0x47c] sm:$0xf] %v4058
  %4137 = vst [vmem:[#allocation3 + $0x4bc] sm:$0xf] %v4068
  %4138 = vst [vmem:[#allocation3 + $0x4fc] sm:$0xf] %v4078
  %4139 = vst [vmem:[#allocation3 + $0x53c] sm:$0xf] %v4088
  %4140 = vst [vmem:[#allocation3 + $0x57c] sm:$0xf] %v4098
  %4141 = vst [vmem:[#allocation3 + $0x5bc] sm:$0xf] %v4108
  %4142 = vst [vmem:[#allocation3 + $0x5fc] sm:$0xf] %v4118
  %v4143 = vld [vmem:[#allocation3] sm:$0xff]
  %v4144 = vld [vmem:[#allocation3 + $0x8] sm:$0xff]
  %v4145 = vld [vmem:[#allocation3 + $0x10] sm:$0xff]
  %v4146 = vld [vmem:[#allocation3 + $0x18] sm:$0xff]
  %v4147 = vld [vmem:[#allocation3 + $0x20] sm:$0xff]
  %v4148 = vld [vmem:[#allocation3 + $0x28] sm:$0xff]
  %v4149 = vld [vmem:[#allocation3 + $0x30] sm:$0xff]
  %v4150 = vld [vmem:[#allocation3 + $0x38] sm:$0xff]
  %v4151 = vld [vmem:[#allocation3 + $0x40] sm:$0xff]
  %v4152 = vld [vmem:[#allocation3 + $0x48] sm:$0xff]
  %v4153 = vld [vmem:[#allocation3 + $0x50] sm:$0xff]
  %v4154 = vld [vmem:[#allocation3 + $0x58] sm:$0xff]
  %v4155 = vld [vmem:[#allocation3 + $0x60] sm:$0xff]
  %v4156 = vld [vmem:[#allocation3 + $0x68] sm:$0xff]
  %v4157 = vld [vmem:[#allocation3 + $0x70] sm:$0xff]
  %v4158 = vld [vmem:[#allocation3 + $0x78] sm:$0xff]
  %v4159 = vld [vmem:[#allocation3 + $0x80] sm:$0xff]
  %v4160 = vld [vmem:[#allocation3 + $0x88] sm:$0xff]
  %v4161 = vld [vmem:[#allocation3 + $0x90] sm:$0xff]
  %v4162 = vld [vmem:[#allocation3 + $0x98] sm:$0xff]
  %v4163 = vld [vmem:[#allocation3 + $0xa0] sm:$0xff]
  %v4164 = vld [vmem:[#allocation3 + $0xa8] sm:$0xff]
  %v4165 = vld [vmem:[#allocation3 + $0xb0] sm:$0xff]
  %v4166 = vld [vmem:[#allocation3 + $0xb8] sm:$0xff]
  %v4167 = vld [vmem:[#allocation3 + $0xc0] sm:$0xff]
  %v4168 = vld [vmem:[#allocation3 + $0xc8] sm:$0xff]
  %v4169 = vld [vmem:[#allocation3 + $0xd0] sm:$0xff]
  %v4170 = vld [vmem:[#allocation3 + $0xd8] sm:$0xff]
  %v4171 = vld [vmem:[#allocation3 + $0xe0] sm:$0xff]
  %v4172 = vld [vmem:[#allocation3 + $0xe8] sm:$0xff]
  %v4173 = vld [vmem:[#allocation3 + $0xf0] sm:$0xff]
  %v4174 = vld [vmem:[#allocation3 + $0xf8] sm:$0xff]
  %v4175 = vld [vmem:[#allocation3 + $0x100] sm:$0xff]
  %v4176 = vld [vmem:[#allocation3 + $0x108] sm:$0xff]
  %v4177 = vld [vmem:[#allocation3 + $0x110] sm:$0xff]
  %v4178 = vld [vmem:[#allocation3 + $0x118] sm:$0xff]
  %v4179 = vld [vmem:[#allocation3 + $0x120] sm:$0xff]
  %v4180 = vld [vmem:[#allocation3 + $0x128] sm:$0xff]
  %v4181 = vld [vmem:[#allocation3 + $0x130] sm:$0xff]
  %v4182 = vld [vmem:[#allocation3 + $0x138] sm:$0xff]
  %v4183 = vld [vmem:[#allocation3 + $0x140] sm:$0xff]
  %v4184 = vld [vmem:[#allocation3 + $0x148] sm:$0xff]
  %v4185 = vld [vmem:[#allocation3 + $0x150] sm:$0xff]
  %v4186 = vld [vmem:[#allocation3 + $0x158] sm:$0xff]
  %v4187 = vld [vmem:[#allocation3 + $0x160] sm:$0xff]
  %v4188 = vld [vmem:[#allocation3 + $0x168] sm:$0xff]
  %v4189 = vld [vmem:[#allocation3 + $0x170] sm:$0xff]
  %v4190 = vld [vmem:[#allocation3 + $0x178] sm:$0xff]
  %v4191 = vld [vmem:[#allocation3 + $0x180] sm:$0xff]
  %v4192 = vld [vmem:[#allocation3 + $0x188] sm:$0xff]
  %v4193 = vld [vmem:[#allocation3 + $0x190] sm:$0xff]
  %v4194 = vld [vmem:[#allocation3 + $0x198] sm:$0xff]
  %v4195 = vld [vmem:[#allocation3 + $0x1a0] sm:$0xff]
  %v4196 = vld [vmem:[#allocation3 + $0x1a8] sm:$0xff]
  %v4197 = vld [vmem:[#allocation3 + $0x1b0] sm:$0xff]
  %v4198 = vld [vmem:[#allocation3 + $0x1b8] sm:$0xff]
  %v4199 = vld [vmem:[#allocation3 + $0x1c0] sm:$0xff]
  %v4200 = vld [vmem:[#allocation3 + $0x1c8] sm:$0xff]
  %v4201 = vld [vmem:[#allocation3 + $0x1d0] sm:$0xff]
  %v4202 = vld [vmem:[#allocation3 + $0x1d8] sm:$0xff]
  %v4203 = vld [vmem:[#allocation3 + $0x1e0] sm:$0xff]
  %v4204 = vld [vmem:[#allocation3 + $0x1e8] sm:$0xff]
  %v4205 = vld [vmem:[#allocation3 + $0x1f0] sm:$0xff]
  %v4206 = vld [vmem:[#allocation3 + $0x1f8] sm:$0xff]
  %v4207 = vld [vmem:[#allocation3 + $0x200] sm:$0xff]
  %v4208 = vld [vmem:[#allocation3 + $0x208] sm:$0xff]
  %v4209 = vld [vmem:[#allocation3 + $0x210] sm:$0xff]
  %v4210 = vld [vmem:[#allocation3 + $0x218] sm:$0xff]
  %v4211 = vld [vmem:[#allocation3 + $0x220] sm:$0xff]
  %v4212 = vld [vmem:[#allocation3 + $0x228] sm:$0xff]
  %v4213 = vld [vmem:[#allocation3 + $0x230] sm:$0xff]
  %v4214 = vld [vmem:[#allocation3 + $0x238] sm:$0xff]
  %v4215 = vld [vmem:[#allocation3 + $0x240] sm:$0xff]
  %v4216 = vld [vmem:[#allocation3 + $0x248] sm:$0xff]
  %v4217 = vld [vmem:[#allocation3 + $0x250] sm:$0xff]
  %v4218 = vld [vmem:[#allocation3 + $0x258] sm:$0xff]
  %v4219 = vld [vmem:[#allocation3 + $0x260] sm:$0xff]
  %v4220 = vld [vmem:[#allocation3 + $0x268] sm:$0xff]
  %v4221 = vld [vmem:[#allocation3 + $0x270] sm:$0xff]
  %v4222 = vld [vmem:[#allocation3 + $0x278] sm:$0xff]
  %v4223 = vld [vmem:[#allocation3 + $0x280] sm:$0xff]
  %v4224 = vld [vmem:[#allocation3 + $0x288] sm:$0xff]
  %v4225 = vld [vmem:[#allocation3 + $0x290] sm:$0xff]
  %v4226 = vld [vmem:[#allocation3 + $0x298] sm:$0xff]
  %v4227 = vld [vmem:[#allocation3 + $0x2a0] sm:$0xff]
  %v4228 = vld [vmem:[#allocation3 + $0x2a8] sm:$0xff]
  %v4229 = vld [vmem:[#allocation3 + $0x2b0] sm:$0xff]
  %v4230 = vld [vmem:[#allocation3 + $0x2b8] sm:$0xff]
  %v4231 = vld [vmem:[#allocation3 + $0x2c0] sm:$0xff]
  %v4232 = vld [vmem:[#allocation3 + $0x2c8] sm:$0xff]
  %v4233 = vld [vmem:[#allocation3 + $0x2d0] sm:$0xff]
  %v4234 = vld [vmem:[#allocation3 + $0x2d8] sm:$0xff]
  %v4235 = vld [vmem:[#allocation3 + $0x2e0] sm:$0xff]
  %v4236 = vld [vmem:[#allocation3 + $0x2e8] sm:$0xff]
  %v4237 = vld [vmem:[#allocation3 + $0x2f0] sm:$0xff]
  %v4238 = vld [vmem:[#allocation3 + $0x2f8] sm:$0xff]
  %v4239 = vld [vmem:[#allocation3 + $0x300] sm:$0xff]
  %v4240 = vld [vmem:[#allocation3 + $0x308] sm:$0xff]
  %v4241 = vld [vmem:[#allocation3 + $0x310] sm:$0xff]
  %v4242 = vld [vmem:[#allocation3 + $0x318] sm:$0xff]
  %v4243 = vld [vmem:[#allocation3 + $0x320] sm:$0xff]
  %v4244 = vld [vmem:[#allocation3 + $0x328] sm:$0xff]
  %v4245 = vld [vmem:[#allocation3 + $0x330] sm:$0xff]
  %v4246 = vld [vmem:[#allocation3 + $0x338] sm:$0xff]
  %v4247 = vld [vmem:[#allocation3 + $0x340] sm:$0xff]
  %v4248 = vld [vmem:[#allocation3 + $0x348] sm:$0xff]
  %v4249 = vld [vmem:[#allocation3 + $0x350] sm:$0xff]
  %v4250 = vld [vmem:[#allocation3 + $0x358] sm:$0xff]
  %v4251 = vld [vmem:[#allocation3 + $0x360] sm:$0xff]
  %v4252 = vld [vmem:[#allocation3 + $0x368] sm:$0xff]
  %v4253 = vld [vmem:[#allocation3 + $0x370] sm:$0xff]
  %v4254 = vld [vmem:[#allocation3 + $0x378] sm:$0xff]
  %v4255 = vld [vmem:[#allocation3 + $0x380] sm:$0xff]
  %v4256 = vld [vmem:[#allocation3 + $0x388] sm:$0xff]
  %v4257 = vld [vmem:[#allocation3 + $0x390] sm:$0xff]
  %v4258 = vld [vmem:[#allocation3 + $0x398] sm:$0xff]
  %v4259 = vld [vmem:[#allocation3 + $0x3a0] sm:$0xff]
  %v4260 = vld [vmem:[#allocation3 + $0x3a8] sm:$0xff]
  %v4261 = vld [vmem:[#allocation3 + $0x3b0] sm:$0xff]
  %v4262 = vld [vmem:[#allocation3 + $0x3b8] sm:$0xff]
  %v4263 = vld [vmem:[#allocation3 + $0x3c0] sm:$0xff]
  %v4264 = vld [vmem:[#allocation3 + $0x3c8] sm:$0xff]
  %v4265 = vld [vmem:[#allocation3 + $0x3d0] sm:$0xff]
  %v4266 = vld [vmem:[#allocation3 + $0x3d8] sm:$0xff]
  %v4267 = vld [vmem:[#allocation3 + $0x3e0] sm:$0xff]
  %v4268 = vld [vmem:[#allocation3 + $0x3e8] sm:$0xff]
  %v4269 = vld [vmem:[#allocation3 + $0x3f0] sm:$0xff]
  %v4270 = vld [vmem:[#allocation3 + $0x3f8] sm:$0xff]
  %v4271 = vld [vmem:[#allocation3 + $0x400] sm:$0xff]
  %v4272 = vld [vmem:[#allocation3 + $0x408] sm:$0xff]
  %v4273 = vld [vmem:[#allocation3 + $0x410] sm:$0xff]
  %v4274 = vld [vmem:[#allocation3 + $0x418] sm:$0xff]
  %v4275 = vld [vmem:[#allocation3 + $0x420] sm:$0xff]
  %v4276 = vld [vmem:[#allocation3 + $0x428] sm:$0xff]
  %v4277 = vld [vmem:[#allocation3 + $0x430] sm:$0xff]
  %v4278 = vld [vmem:[#allocation3 + $0x438] sm:$0xff]
  %v4279 = vld [vmem:[#allocation3 + $0x440] sm:$0xff]
  %v4280 = vld [vmem:[#allocation3 + $0x448] sm:$0xff]
  %v4281 = vld [vmem:[#allocation3 + $0x450] sm:$0xff]
  %v4282 = vld [vmem:[#allocation3 + $0x458] sm:$0xff]
  %v4283 = vld [vmem:[#allocation3 + $0x460] sm:$0xff]
  %v4284 = vld [vmem:[#allocation3 + $0x468] sm:$0xff]
  %v4285 = vld [vmem:[#allocation3 + $0x470] sm:$0xff]
  %v4286 = vld [vmem:[#allocation3 + $0x478] sm:$0xff]
  %v4287 = vld [vmem:[#allocation3 + $0x480] sm:$0xff]
  %v4288 = vld [vmem:[#allocation3 + $0x488] sm:$0xff]
  %v4289 = vld [vmem:[#allocation3 + $0x490] sm:$0xff]
  %v4290 = vld [vmem:[#allocation3 + $0x498] sm:$0xff]
  %v4291 = vld [vmem:[#allocation3 + $0x4a0] sm:$0xff]
  %v4292 = vld [vmem:[#allocation3 + $0x4a8] sm:$0xff]
  %v4293 = vld [vmem:[#allocation3 + $0x4b0] sm:$0xff]
  %v4294 = vld [vmem:[#allocation3 + $0x4b8] sm:$0xff]
  %v4295 = vld [vmem:[#allocation3 + $0x4c0] sm:$0xff]
  %v4296 = vld [vmem:[#allocation3 + $0x4c8] sm:$0xff]
  %v4297 = vld [vmem:[#allocation3 + $0x4d0] sm:$0xff]
  %v4298 = vld [vmem:[#allocation3 + $0x4d8] sm:$0xff]
  %v4299 = vld [vmem:[#allocation3 + $0x4e0] sm:$0xff]
  %v4300 = vld [vmem:[#allocation3 + $0x4e8] sm:$0xff]
  %v4301 = vld [vmem:[#allocation3 + $0x4f0] sm:$0xff]
  %v4302 = vld [vmem:[#allocation3 + $0x4f8] sm:$0xff]
  %v4303 = vld [vmem:[#allocation3 + $0x500] sm:$0xff]
  %v4304 = vld [vmem:[#allocation3 + $0x508] sm:$0xff]
  %v4305 = vld [vmem:[#allocation3 + $0x510] sm:$0xff]
  %v4306 = vld [vmem:[#allocation3 + $0x518] sm:$0xff]
  %v4307 = vld [vmem:[#allocation3 + $0x520] sm:$0xff]
  %v4308 = vld [vmem:[#allocation3 + $0x528] sm:$0xff]
  %v4309 = vld [vmem:[#allocation3 + $0x530] sm:$0xff]
  %v4310 = vld [vmem:[#allocation3 + $0x538] sm:$0xff]
  %v4311 = vld [vmem:[#allocation3 + $0x540] sm:$0xff]
  %v4312 = vld [vmem:[#allocation3 + $0x548] sm:$0xff]
  %v4313 = vld [vmem:[#allocation3 + $0x550] sm:$0xff]
  %v4314 = vld [vmem:[#allocation3 + $0x558] sm:$0xff]
  %v4315 = vld [vmem:[#allocation3 + $0x560] sm:$0xff]
  %v4316 = vld [vmem:[#allocation3 + $0x568] sm:$0xff]
  %v4317 = vld [vmem:[#allocation3 + $0x570] sm:$0xff]
  %v4318 = vld [vmem:[#allocation3 + $0x578] sm:$0xff]
  %v4319 = vld [vmem:[#allocation3 + $0x580] sm:$0xff]
  %v4320 = vld [vmem:[#allocation3 + $0x588] sm:$0xff]
  %v4321 = vld [vmem:[#allocation3 + $0x590] sm:$0xff]
  %v4322 = vld [vmem:[#allocation3 + $0x598] sm:$0xff]
  %v4323 = vld [vmem:[#allocation3 + $0x5a0] sm:$0xff]
  %v4324 = vld [vmem:[#allocation3 + $0x5a8] sm:$0xff]
  %v4325 = vld [vmem:[#allocation3 + $0x5b0] sm:$0xff]
  %v4326 = vld [vmem:[#allocation3 + $0x5b8] sm:$0xff]
  %v4327 = vld [vmem:[#allocation3 + $0x5c0] sm:$0xff]
  %v4328 = vld [vmem:[#allocation3 + $0x5c8] sm:$0xff]
  %v4329 = vld [vmem:[#allocation3 + $0x5d0] sm:$0xff]
  %v4330 = vld [vmem:[#allocation3 + $0x5d8] sm:$0xff]
  %v4331 = vld [vmem:[#allocation3 + $0x5e0] sm:$0xff]
  %v4332 = vld [vmem:[#allocation3 + $0x5e8] sm:$0xff]
  %v4333 = vld [vmem:[#allocation3 + $0x5f0] sm:$0xff]
  %v4334 = vld [vmem:[#allocation3 + $0x5f8] sm:$0xff]
  %v4335 = vld [vmem:[%s3] sm:$0xf]
  %v4336 = vld [vmem:[%s3 + $0x4] sm:$0xf]
  %v4337 = vld [vmem:[%s3 + $0x8] sm:$0xf]
  %v4338 = vld [vmem:[%s3 + $0xc] sm:$0xf]
  %v4339 = vld [vmem:[%s3 + $0x10] sm:$0xf]
  %v4340 = vld [vmem:[%s3 + $0x14] sm:$0xf]
  %v4341 = vld [vmem:[%s3 + $0x18] sm:$0xf]
  %v4342 = vld [vmem:[%s3 + $0x1c] sm:$0xf]
  %v4343 = vld [vmem:[%s3 + $0x20] sm:$0xf]
  %v4344 = vld [vmem:[%s3 + $0x24] sm:$0xf]
  %v4345 = vld [vmem:[%s3 + $0x28] sm:$0xf]
  %v4346 = vld [vmem:[%s3 + $0x2c] sm:$0xf]
  %v4347 = vld [vmem:[%s3 + $0x30] sm:$0xf]
  %v4348 = vld [vmem:[%s3 + $0x34] sm:$0xf]
  %v4349 = vld [vmem:[%s3 + $0x38] sm:$0xf]
  %v4350 = vld [vmem:[%s3 + $0x3c] sm:$0xf]
  %v4351 = vld [vmem:[%s3 + $0x40] sm:$0xf]
  %v4352 = vld [vmem:[%s3 + $0x44] sm:$0xf]
  %v4353 = vld [vmem:[%s3 + $0x48] sm:$0xf]
  %v4354 = vld [vmem:[%s3 + $0x4c] sm:$0xf]
  %v4355 = vld [vmem:[%s3 + $0x50] sm:$0xf]
  %v4356 = vld [vmem:[%s3 + $0x54] sm:$0xf]
  %v4357 = vld [vmem:[%s3 + $0x58] sm:$0xf]
  %v4358 = vld [vmem:[%s3 + $0x5c] sm:$0xf]
  %v4359 = vld [vmem:[%s3 + $0x60] sm:$0xf]
  %v4360 = vld [vmem:[%s3 + $0x64] sm:$0xf]
  %v4361 = vld [vmem:[%s3 + $0x68] sm:$0xf]
  %v4362 = vld [vmem:[%s3 + $0x6c] sm:$0xf]
  %v4363 = vld [vmem:[%s3 + $0x70] sm:$0xf]
  %v4364 = vld [vmem:[%s3 + $0x74] sm:$0xf]
  %v4365 = vld [vmem:[%s3 + $0x78] sm:$0xf]
  %v4366 = vld [vmem:[%s3 + $0x7c] sm:$0xf]
  %v4367 = vld [vmem:[%s3 + $0x80] sm:$0xf]
  %v4368 = vld [vmem:[%s3 + $0x84] sm:$0xf]
  %v4369 = vld [vmem:[%s3 + $0x88] sm:$0xf]
  %v4370 = vld [vmem:[%s3 + $0x8c] sm:$0xf]
  %v4371 = vld [vmem:[%s3 + $0x90] sm:$0xf]
  %v4372 = vld [vmem:[%s3 + $0x94] sm:$0xf]
  %v4373 = vld [vmem:[%s3 + $0x98] sm:$0xf]
  %v4374 = vld [vmem:[%s3 + $0x9c] sm:$0xf]
  %v4375 = vld [vmem:[%s3 + $0xa0] sm:$0xf]
  %v4376 = vld [vmem:[%s3 + $0xa4] sm:$0xf]
  %v4377 = vld [vmem:[%s3 + $0xa8] sm:$0xf]
  %v4378 = vld [vmem:[%s3 + $0xac] sm:$0xf]
  %v4379 = vld [vmem:[%s3 + $0xb0] sm:$0xf]
  %v4380 = vld [vmem:[%s3 + $0xb4] sm:$0xf]
  %v4381 = vld [vmem:[%s3 + $0xb8] sm:$0xf]
  %v4382 = vld [vmem:[%s3 + $0xbc] sm:$0xf]
  %v4383 = vld [vmem:[%s3 + $0xc0] sm:$0xf]
  %v4384 = vld [vmem:[%s3 + $0xc4] sm:$0xf]
  %v4385 = vld [vmem:[%s3 + $0xc8] sm:$0xf]
  %v4386 = vld [vmem:[%s3 + $0xcc] sm:$0xf]
  %v4387 = vld [vmem:[%s3 + $0xd0] sm:$0xf]
  %v4388 = vld [vmem:[%s3 + $0xd4] sm:$0xf]
  %v4389 = vld [vmem:[%s3 + $0xd8] sm:$0xf]
  %v4390 = vld [vmem:[%s3 + $0xdc] sm:$0xf]
  %v4391 = vld [vmem:[%s3 + $0xe0] sm:$0xf]
  %v4392 = vld [vmem:[%s3 + $0xe4] sm:$0xf]
  %v4393 = vld [vmem:[%s3 + $0xe8] sm:$0xf]
  %v4394 = vld [vmem:[%s3 + $0xec] sm:$0xf]
  %v4395 = vld [vmem:[%s3 + $0xf0] sm:$0xf]
  %v4396 = vld [vmem:[%s3 + $0xf4] sm:$0xf]
  %v4397 = vld [vmem:[%s3 + $0xf8] sm:$0xf]
  %v4398 = vld [vmem:[%s3 + $0xfc] sm:$0xf]
  %v4399 = vld [vmem:[%s3 + $0x100] sm:$0xf]
  %v4400 = vld [vmem:[%s3 + $0x104] sm:$0xf]
  %v4401 = vld [vmem:[%s3 + $0x108] sm:$0xf]
  %v4402 = vld [vmem:[%s3 + $0x10c] sm:$0xf]
  %v4403 = vld [vmem:[%s3 + $0x110] sm:$0xf]
  %v4404 = vld [vmem:[%s3 + $0x114] sm:$0xf]
  %v4405 = vld [vmem:[%s3 + $0x118] sm:$0xf]
  %v4406 = vld [vmem:[%s3 + $0x11c] sm:$0xf]
  %v4407 = vld [vmem:[%s3 + $0x120] sm:$0xf]
  %v4408 = vld [vmem:[%s3 + $0x124] sm:$0xf]
  %v4409 = vld [vmem:[%s3 + $0x128] sm:$0xf]
  %v4410 = vld [vmem:[%s3 + $0x12c] sm:$0xf]
  %v4411 = vld [vmem:[%s3 + $0x130] sm:$0xf]
  %v4412 = vld [vmem:[%s3 + $0x134] sm:$0xf]
  %v4413 = vld [vmem:[%s3 + $0x138] sm:$0xf]
  %v4414 = vld [vmem:[%s3 + $0x13c] sm:$0xf]
  %v4415 = vld [vmem:[%s3 + $0x140] sm:$0xf]
  %v4416 = vld [vmem:[%s3 + $0x144] sm:$0xf]
  %v4417 = vld [vmem:[%s3 + $0x148] sm:$0xf]
  %v4418 = vld [vmem:[%s3 + $0x14c] sm:$0xf]
  %v4419 = vld [vmem:[%s3 + $0x150] sm:$0xf]
  %v4420 = vld [vmem:[%s3 + $0x154] sm:$0xf]
  %v4421 = vld [vmem:[%s3 + $0x158] sm:$0xf]
  %v4422 = vld [vmem:[%s3 + $0x15c] sm:$0xf]
  %v4423 = vld [vmem:[%s3 + $0x160] sm:$0xf]
  %v4424 = vld [vmem:[%s3 + $0x164] sm:$0xf]
  %v4425 = vld [vmem:[%s3 + $0x168] sm:$0xf]
  %v4426 = vld [vmem:[%s3 + $0x16c] sm:$0xf]
  %v4427 = vld [vmem:[%s3 + $0x170] sm:$0xf]
  %v4428 = vld [vmem:[%s3 + $0x174] sm:$0xf]
  %v4429 = vld [vmem:[%s3 + $0x178] sm:$0xf]
  %v4430 = vld [vmem:[%s3 + $0x17c] sm:$0xf]
  %v4431 = vld [vmem:[%s3 + $0x180] sm:$0xf]
  %v4432 = vld [vmem:[%s3 + $0x184] sm:$0xf]
  %v4433 = vld [vmem:[%s3 + $0x188] sm:$0xf]
  %v4434 = vld [vmem:[%s3 + $0x18c] sm:$0xf]
  %v4435 = vld [vmem:[%s3 + $0x190] sm:$0xf]
  %v4436 = vld [vmem:[%s3 + $0x194] sm:$0xf]
  %v4437 = vld [vmem:[%s3 + $0x198] sm:$0xf]
  %v4438 = vld [vmem:[%s3 + $0x19c] sm:$0xf]
  %v4439 = vld [vmem:[%s3 + $0x1a0] sm:$0xf]
  %v4440 = vld [vmem:[%s3 + $0x1a4] sm:$0xf]
  %v4441 = vld [vmem:[%s3 + $0x1a8] sm:$0xf]
  %v4442 = vld [vmem:[%s3 + $0x1ac] sm:$0xf]
  %v4443 = vld [vmem:[%s3 + $0x1b0] sm:$0xf]
  %v4444 = vld [vmem:[%s3 + $0x1b4] sm:$0xf]
  %v4445 = vld [vmem:[%s3 + $0x1b8] sm:$0xf]
  %v4446 = vld [vmem:[%s3 + $0x1bc] sm:$0xf]
  %v4447 = vld [vmem:[%s3 + $0x1c0] sm:$0xf]
  %v4448 = vld [vmem:[%s3 + $0x1c4] sm:$0xf]
  %v4449 = vld [vmem:[%s3 + $0x1c8] sm:$0xf]
  %v4450 = vld [vmem:[%s3 + $0x1cc] sm:$0xf]
  %v4451 = vld [vmem:[%s3 + $0x1d0] sm:$0xf]
  %v4452 = vld [vmem:[%s3 + $0x1d4] sm:$0xf]
  %v4453 = vld [vmem:[%s3 + $0x1d8] sm:$0xf]
  %v4454 = vld [vmem:[%s3 + $0x1dc] sm:$0xf]
  %v4455 = vld [vmem:[%s3 + $0x1e0] sm:$0xf]
  %v4456 = vld [vmem:[%s3 + $0x1e4] sm:$0xf]
  %v4457 = vld [vmem:[%s3 + $0x1e8] sm:$0xf]
  %v4458 = vld [vmem:[%s3 + $0x1ec] sm:$0xf]
  %v4459 = vld [vmem:[%s3 + $0x1f0] sm:$0xf]
  %v4460 = vld [vmem:[%s3 + $0x1f4] sm:$0xf]
  %v4461 = vld [vmem:[%s3 + $0x1f8] sm:$0xf]
  %v4462 = vld [vmem:[%s3 + $0x1fc] sm:$0xf]
  %v4463 = vld [vmem:[%s3 + $0x200] sm:$0xf]
  %v4464 = vld [vmem:[%s3 + $0x204] sm:$0xf]
  %v4465 = vld [vmem:[%s3 + $0x208] sm:$0xf]
  %v4466 = vld [vmem:[%s3 + $0x20c] sm:$0xf]
  %v4467 = vld [vmem:[%s3 + $0x210] sm:$0xf]
  %v4468 = vld [vmem:[%s3 + $0x214] sm:$0xf]
  %v4469 = vld [vmem:[%s3 + $0x218] sm:$0xf]
  %v4470 = vld [vmem:[%s3 + $0x21c] sm:$0xf]
  %v4471 = vld [vmem:[%s3 + $0x220] sm:$0xf]
  %v4472 = vld [vmem:[%s3 + $0x224] sm:$0xf]
  %v4473 = vld [vmem:[%s3 + $0x228] sm:$0xf]
  %v4474 = vld [vmem:[%s3 + $0x22c] sm:$0xf]
  %v4475 = vld [vmem:[%s3 + $0x230] sm:$0xf]
  %v4476 = vld [vmem:[%s3 + $0x234] sm:$0xf]
  %v4477 = vld [vmem:[%s3 + $0x238] sm:$0xf]
  %v4478 = vld [vmem:[%s3 + $0x23c] sm:$0xf]
  %v4479 = vld [vmem:[%s3 + $0x240] sm:$0xf]
  %v4480 = vld [vmem:[%s3 + $0x244] sm:$0xf]
  %v4481 = vld [vmem:[%s3 + $0x248] sm:$0xf]
  %v4482 = vld [vmem:[%s3 + $0x24c] sm:$0xf]
  %v4483 = vld [vmem:[%s3 + $0x250] sm:$0xf]
  %v4484 = vld [vmem:[%s3 + $0x254] sm:$0xf]
  %v4485 = vld [vmem:[%s3 + $0x258] sm:$0xf]
  %v4486 = vld [vmem:[%s3 + $0x25c] sm:$0xf]
  %v4487 = vld [vmem:[%s3 + $0x260] sm:$0xf]
  %v4488 = vld [vmem:[%s3 + $0x264] sm:$0xf]
  %v4489 = vld [vmem:[%s3 + $0x268] sm:$0xf]
  %v4490 = vld [vmem:[%s3 + $0x26c] sm:$0xf]
  %v4491 = vld [vmem:[%s3 + $0x270] sm:$0xf]
  %v4492 = vld [vmem:[%s3 + $0x274] sm:$0xf]
  %v4493 = vld [vmem:[%s3 + $0x278] sm:$0xf]
  %v4494 = vld [vmem:[%s3 + $0x27c] sm:$0xf]
  %v4495 = vld [vmem:[%s3 + $0x280] sm:$0xf]
  %v4496 = vld [vmem:[%s3 + $0x284] sm:$0xf]
  %v4497 = vld [vmem:[%s3 + $0x288] sm:$0xf]
  %v4498 = vld [vmem:[%s3 + $0x28c] sm:$0xf]
  %v4499 = vld [vmem:[%s3 + $0x290] sm:$0xf]
  %v4500 = vld [vmem:[%s3 + $0x294] sm:$0xf]
  %v4501 = vld [vmem:[%s3 + $0x298] sm:$0xf]
  %v4502 = vld [vmem:[%s3 + $0x29c] sm:$0xf]
  %v4503 = vld [vmem:[%s3 + $0x2a0] sm:$0xf]
  %v4504 = vld [vmem:[%s3 + $0x2a4] sm:$0xf]
  %v4505 = vld [vmem:[%s3 + $0x2a8] sm:$0xf]
  %v4506 = vld [vmem:[%s3 + $0x2ac] sm:$0xf]
  %v4507 = vld [vmem:[%s3 + $0x2b0] sm:$0xf]
  %v4508 = vld [vmem:[%s3 + $0x2b4] sm:$0xf]
  %v4509 = vld [vmem:[%s3 + $0x2b8] sm:$0xf]
  %v4510 = vld [vmem:[%s3 + $0x2bc] sm:$0xf]
  %v4511 = vld [vmem:[%s3 + $0x2c0] sm:$0xf]
  %v4512 = vld [vmem:[%s3 + $0x2c4] sm:$0xf]
  %v4513 = vld [vmem:[%s3 + $0x2c8] sm:$0xf]
  %v4514 = vld [vmem:[%s3 + $0x2cc] sm:$0xf]
  %v4515 = vld [vmem:[%s3 + $0x2d0] sm:$0xf]
  %v4516 = vld [vmem:[%s3 + $0x2d4] sm:$0xf]
  %v4517 = vld [vmem:[%s3 + $0x2d8] sm:$0xf]
  %v4518 = vld [vmem:[%s3 + $0x2dc] sm:$0xf]
  %v4519 = vld [vmem:[%s3 + $0x2e0] sm:$0xf]
  %v4520 = vld [vmem:[%s3 + $0x2e4] sm:$0xf]
  %v4521 = vld [vmem:[%s3 + $0x2e8] sm:$0xf]
  %v4522 = vld [vmem:[%s3 + $0x2ec] sm:$0xf]
  %v4523 = vld [vmem:[%s3 + $0x2f0] sm:$0xf]
  %v4524 = vld [vmem:[%s3 + $0x2f4] sm:$0xf]
  %v4525 = vld [vmem:[%s3 + $0x2f8] sm:$0xf]
  %v4526 = vld [vmem:[%s3 + $0x2fc] sm:$0xf]
  %v4527 = vld [vmem:[%s3 + $0x300] sm:$0xf]
  %v4528 = vld [vmem:[%s3 + $0x304] sm:$0xf]
  %v4529 = vld [vmem:[%s3 + $0x308] sm:$0xf]
  %v4530 = vld [vmem:[%s3 + $0x30c] sm:$0xf]
  %v4531 = vld [vmem:[%s3 + $0x310] sm:$0xf]
  %v4532 = vld [vmem:[%s3 + $0x314] sm:$0xf]
  %v4533 = vld [vmem:[%s3 + $0x318] sm:$0xf]
  %v4534 = vld [vmem:[%s3 + $0x31c] sm:$0xf]
  %v4535 = vld [vmem:[%s3 + $0x320] sm:$0xf]
  %v4536 = vld [vmem:[%s3 + $0x324] sm:$0xf]
  %v4537 = vld [vmem:[%s3 + $0x328] sm:$0xf]
  %v4538 = vld [vmem:[%s3 + $0x32c] sm:$0xf]
  %v4539 = vld [vmem:[%s3 + $0x330] sm:$0xf]
  %v4540 = vld [vmem:[%s3 + $0x334] sm:$0xf]
  %v4541 = vld [vmem:[%s3 + $0x338] sm:$0xf]
  %v4542 = vld [vmem:[%s3 + $0x33c] sm:$0xf]
  %v4543 = vld [vmem:[%s3 + $0x340] sm:$0xf]
  %v4544 = vld [vmem:[%s3 + $0x344] sm:$0xf]
  %v4545 = vld [vmem:[%s3 + $0x348] sm:$0xf]
  %v4546 = vld [vmem:[%s3 + $0x34c] sm:$0xf]
  %v4547 = vld [vmem:[%s3 + $0x350] sm:$0xf]
  %v4548 = vld [vmem:[%s3 + $0x354] sm:$0xf]
  %v4549 = vld [vmem:[%s3 + $0x358] sm:$0xf]
  %v4550 = vld [vmem:[%s3 + $0x35c] sm:$0xf]
  %v4551 = vld [vmem:[%s3 + $0x360] sm:$0xf]
  %v4552 = vld [vmem:[%s3 + $0x364] sm:$0xf]
  %v4553 = vld [vmem:[%s3 + $0x368] sm:$0xf]
  %v4554 = vld [vmem:[%s3 + $0x36c] sm:$0xf]
  %v4555 = vld [vmem:[%s3 + $0x370] sm:$0xf]
  %v4556 = vld [vmem:[%s3 + $0x374] sm:$0xf]
  %v4557 = vld [vmem:[%s3 + $0x378] sm:$0xf]
  %v4558 = vld [vmem:[%s3 + $0x37c] sm:$0xf]
  %v4559 = vld [vmem:[%s3 + $0x380] sm:$0xf]
  %v4560 = vld [vmem:[%s3 + $0x384] sm:$0xf]
  %v4561 = vld [vmem:[%s3 + $0x388] sm:$0xf]
  %v4562 = vld [vmem:[%s3 + $0x38c] sm:$0xf]
  %v4563 = vld [vmem:[%s3 + $0x390] sm:$0xf]
  %v4564 = vld [vmem:[%s3 + $0x394] sm:$0xf]
  %v4565 = vld [vmem:[%s3 + $0x398] sm:$0xf]
  %v4566 = vld [vmem:[%s3 + $0x39c] sm:$0xf]
  %v4567 = vld [vmem:[%s3 + $0x3a0] sm:$0xf]
  %v4568 = vld [vmem:[%s3 + $0x3a4] sm:$0xf]
  %v4569 = vld [vmem:[%s3 + $0x3a8] sm:$0xf]
  %v4570 = vld [vmem:[%s3 + $0x3ac] sm:$0xf]
  %v4571 = vld [vmem:[%s3 + $0x3b0] sm:$0xf]
  %v4572 = vld [vmem:[%s3 + $0x3b4] sm:$0xf]
  %v4573 = vld [vmem:[%s3 + $0x3b8] sm:$0xf]
  %v4574 = vld [vmem:[%s3 + $0x3bc] sm:$0xf]
  %v4575 = vld [vmem:[%s3 + $0x3c0] sm:$0xf]
  %v4576 = vld [vmem:[%s3 + $0x3c4] sm:$0xf]
  %v4577 = vld [vmem:[%s3 + $0x3c8] sm:$0xf]
  %v4578 = vld [vmem:[%s3 + $0x3cc] sm:$0xf]
  %v4579 = vld [vmem:[%s3 + $0x3d0] sm:$0xf]
  %v4580 = vld [vmem:[%s3 + $0x3d4] sm:$0xf]
  %v4581 = vld [vmem:[%s3 + $0x3d8] sm:$0xf]
  %v4582 = vld [vmem:[%s3 + $0x3dc] sm:$0xf]
  %v4583 = vld [vmem:[%s3 + $0x3e0] sm:$0xf]
  %v4584 = vld [vmem:[%s3 + $0x3e4] sm:$0xf]
  %v4585 = vld [vmem:[%s3 + $0x3e8] sm:$0xf]
  %v4586 = vld [vmem:[%s3 + $0x3ec] sm:$0xf]
  %v4587 = vld [vmem:[%s3 + $0x3f0] sm:$0xf]
  %v4588 = vld [vmem:[%s3 + $0x3f4] sm:$0xf]
  %v4589 = vld [vmem:[%s3 + $0x3f8] sm:$0xf]
  %v4590 = vld [vmem:[%s3 + $0x3fc] sm:$0xf]
  %v4783 = vunpack.c.l.b16 %v4143
  %v4784 = vunpack.c.h.b16 %v4143
  %v4785 = vunpack.c.l.b16 %v4144
  %v4786 = vunpack.c.h.b16 %v4144
  %v4787 = vunpack.c.l.b16 %v4145
  %v4788 = vunpack.c.h.b16 %v4145
  %v4789 = vunpack.c.l.b16 %v4146
  %v4790 = vunpack.c.h.b16 %v4146
  %v4791 = vunpack.c.l.b16 %v4147
  %v4792 = vunpack.c.h.b16 %v4147
  %v4793 = vunpack.c.l.b16 %v4148
  %v4794 = vunpack.c.h.b16 %v4148
  %v4795 = vunpack.c.l.b16 %v4149
  %v4796 = vunpack.c.h.b16 %v4149
  %v4797 = vunpack.c.l.b16 %v4150
  %v4798 = vunpack.c.h.b16 %v4150
  %v4799 = vunpack.c.l.b16 %v4151
  %v4800 = vunpack.c.h.b16 %v4151
  %v4801 = vunpack.c.l.b16 %v4152
  %v4802 = vunpack.c.h.b16 %v4152
  %v4803 = vunpack.c.l.b16 %v4153
  %v4804 = vunpack.c.h.b16 %v4153
  %v4805 = vunpack.c.l.b16 %v4154
  %v4806 = vunpack.c.h.b16 %v4154
  %v4807 = vunpack.c.l.b16 %v4155
  %v4808 = vunpack.c.h.b16 %v4155
  %v4809 = vunpack.c.l.b16 %v4156
  %v4810 = vunpack.c.h.b16 %v4156
  %v4811 = vunpack.c.l.b16 %v4157
  %v4812 = vunpack.c.h.b16 %v4157
  %v4813 = vunpack.c.l.b16 %v4158
  %v4814 = vunpack.c.h.b16 %v4158
  %v4815 = vunpack.c.l.b16 %v4159
  %v4816 = vunpack.c.h.b16 %v4159
  %v4817 = vunpack.c.l.b16 %v4160
  %v4818 = vunpack.c.h.b16 %v4160
  %v4819 = vunpack.c.l.b16 %v4161
  %v4820 = vunpack.c.h.b16 %v4161
  %v4821 = vunpack.c.l.b16 %v4162
  %v4822 = vunpack.c.h.b16 %v4162
  %v4823 = vunpack.c.l.b16 %v4163
  %v4824 = vunpack.c.h.b16 %v4163
  %v4825 = vunpack.c.l.b16 %v4164
  %v4826 = vunpack.c.h.b16 %v4164
  %v4827 = vunpack.c.l.b16 %v4165
  %v4828 = vunpack.c.h.b16 %v4165
  %v4829 = vunpack.c.l.b16 %v4166
  %v4830 = vunpack.c.h.b16 %v4166
  %v4831 = vunpack.c.l.b16 %v4167
  %v4832 = vunpack.c.h.b16 %v4167
  %v4833 = vunpack.c.l.b16 %v4168
  %v4834 = vunpack.c.h.b16 %v4168
  %v4835 = vunpack.c.l.b16 %v4169
  %v4836 = vunpack.c.h.b16 %v4169
  %v4837 = vunpack.c.l.b16 %v4170
  %v4838 = vunpack.c.h.b16 %v4170
  %v4839 = vunpack.c.l.b16 %v4171
  %v4840 = vunpack.c.h.b16 %v4171
  %v4841 = vunpack.c.l.b16 %v4172
  %v4842 = vunpack.c.h.b16 %v4172
  %v4843 = vunpack.c.l.b16 %v4173
  %v4844 = vunpack.c.h.b16 %v4173
  %v4845 = vunpack.c.l.b16 %v4174
  %v4846 = vunpack.c.h.b16 %v4174
  %v4847 = vunpack.c.l.b16 %v4175
  %v4848 = vunpack.c.h.b16 %v4175
  %v4849 = vunpack.c.l.b16 %v4176
  %v4850 = vunpack.c.h.b16 %v4176
  %v4851 = vunpack.c.l.b16 %v4177
  %v4852 = vunpack.c.h.b16 %v4177
  %v4853 = vunpack.c.l.b16 %v4178
  %v4854 = vunpack.c.h.b16 %v4178
  %v4855 = vunpack.c.l.b16 %v4179
  %v4856 = vunpack.c.h.b16 %v4179
  %v4857 = vunpack.c.l.b16 %v4180
  %v4858 = vunpack.c.h.b16 %v4180
  %v4859 = vunpack.c.l.b16 %v4181
  %v4860 = vunpack.c.h.b16 %v4181
  %v4861 = vunpack.c.l.b16 %v4182
  %v4862 = vunpack.c.h.b16 %v4182
  %v4863 = vunpack.c.l.b16 %v4183
  %v4864 = vunpack.c.h.b16 %v4183
  %v4865 = vunpack.c.l.b16 %v4184
  %v4866 = vunpack.c.h.b16 %v4184
  %v4867 = vunpack.c.l.b16 %v4185
  %v4868 = vunpack.c.h.b16 %v4185
  %v4869 = vunpack.c.l.b16 %v4186
  %v4870 = vunpack.c.h.b16 %v4186
  %v4871 = vunpack.c.l.b16 %v4187
  %v4872 = vunpack.c.h.b16 %v4187
  %v4873 = vunpack.c.l.b16 %v4188
  %v4874 = vunpack.c.h.b16 %v4188
  %v4875 = vunpack.c.l.b16 %v4189
  %v4876 = vunpack.c.h.b16 %v4189
  %v4877 = vunpack.c.l.b16 %v4190
  %v4878 = vunpack.c.h.b16 %v4190
  %v4879 = vunpack.c.l.b16 %v4191
  %v4880 = vunpack.c.h.b16 %v4191
  %v4881 = vunpack.c.l.b16 %v4192
  %v4882 = vunpack.c.h.b16 %v4192
  %v4883 = vunpack.c.l.b16 %v4193
  %v4884 = vunpack.c.h.b16 %v4193
  %v4885 = vunpack.c.l.b16 %v4194
  %v4886 = vunpack.c.h.b16 %v4194
  %v4887 = vunpack.c.l.b16 %v4195
  %v4888 = vunpack.c.h.b16 %v4195
  %v4889 = vunpack.c.l.b16 %v4196
  %v4890 = vunpack.c.h.b16 %v4196
  %v4891 = vunpack.c.l.b16 %v4197
  %v4892 = vunpack.c.h.b16 %v4197
  %v4893 = vunpack.c.l.b16 %v4198
  %v4894 = vunpack.c.h.b16 %v4198
  %v4895 = vunpack.c.l.b16 %v4199
  %v4896 = vunpack.c.h.b16 %v4199
  %v4897 = vunpack.c.l.b16 %v4200
  %v4898 = vunpack.c.h.b16 %v4200
  %v4899 = vunpack.c.l.b16 %v4201
  %v4900 = vunpack.c.h.b16 %v4201
  %v4901 = vunpack.c.l.b16 %v4202
  %v4902 = vunpack.c.h.b16 %v4202
  %v4903 = vunpack.c.l.b16 %v4203
  %v4904 = vunpack.c.h.b16 %v4203
  %v4905 = vunpack.c.l.b16 %v4204
  %v4906 = vunpack.c.h.b16 %v4204
  %v4907 = vunpack.c.l.b16 %v4205
  %v4908 = vunpack.c.h.b16 %v4205
  %v4909 = vunpack.c.l.b16 %v4206
  %v4910 = vunpack.c.h.b16 %v4206
  %v4911 = vunpack.c.l.b16 %v4207
  %v4912 = vunpack.c.h.b16 %v4207
  %v4913 = vunpack.c.l.b16 %v4208
  %v4914 = vunpack.c.h.b16 %v4208
  %v4915 = vunpack.c.l.b16 %v4209
  %v4916 = vunpack.c.h.b16 %v4209
  %v4917 = vunpack.c.l.b16 %v4210
  %v4918 = vunpack.c.h.b16 %v4210
  %v4919 = vunpack.c.l.b16 %v4211
  %v4920 = vunpack.c.h.b16 %v4211
  %v4921 = vunpack.c.l.b16 %v4212
  %v4922 = vunpack.c.h.b16 %v4212
  %v4923 = vunpack.c.l.b16 %v4213
  %v4924 = vunpack.c.h.b16 %v4213
  %v4925 = vunpack.c.l.b16 %v4214
  %v4926 = vunpack.c.h.b16 %v4214
  %v4927 = vunpack.c.l.b16 %v4215
  %v4928 = vunpack.c.h.b16 %v4215
  %v4929 = vunpack.c.l.b16 %v4216
  %v4930 = vunpack.c.h.b16 %v4216
  %v4931 = vunpack.c.l.b16 %v4217
  %v4932 = vunpack.c.h.b16 %v4217
  %v4933 = vunpack.c.l.b16 %v4218
  %v4934 = vunpack.c.h.b16 %v4218
  %v4935 = vunpack.c.l.b16 %v4219
  %v4936 = vunpack.c.h.b16 %v4219
  %v4937 = vunpack.c.l.b16 %v4220
  %v4938 = vunpack.c.h.b16 %v4220
  %v4939 = vunpack.c.l.b16 %v4221
  %v4940 = vunpack.c.h.b16 %v4221
  %v4941 = vunpack.c.l.b16 %v4222
  %v4942 = vunpack.c.h.b16 %v4222
  %v4943 = vunpack.c.l.b16 %v4223
  %v4944 = vunpack.c.h.b16 %v4223
  %v4945 = vunpack.c.l.b16 %v4224
  %v4946 = vunpack.c.h.b16 %v4224
  %v4947 = vunpack.c.l.b16 %v4225
  %v4948 = vunpack.c.h.b16 %v4225
  %v4949 = vunpack.c.l.b16 %v4226
  %v4950 = vunpack.c.h.b16 %v4226
  %v4951 = vunpack.c.l.b16 %v4227
  %v4952 = vunpack.c.h.b16 %v4227
  %v4953 = vunpack.c.l.b16 %v4228
  %v4954 = vunpack.c.h.b16 %v4228
  %v4955 = vunpack.c.l.b16 %v4229
  %v4956 = vunpack.c.h.b16 %v4229
  %v4957 = vunpack.c.l.b16 %v4230
  %v4958 = vunpack.c.h.b16 %v4230
  %v4959 = vunpack.c.l.b16 %v4231
  %v4960 = vunpack.c.h.b16 %v4231
  %v4961 = vunpack.c.l.b16 %v4232
  %v4962 = vunpack.c.h.b16 %v4232
  %v4963 = vunpack.c.l.b16 %v4233
  %v4964 = vunpack.c.h.b16 %v4233
  %v4965 = vunpack.c.l.b16 %v4234
  %v4966 = vunpack.c.h.b16 %v4234
  %v4967 = vunpack.c.l.b16 %v4235
  %v4968 = vunpack.c.h.b16 %v4235
  %v4969 = vunpack.c.l.b16 %v4236
  %v4970 = vunpack.c.h.b16 %v4236
  %v4971 = vunpack.c.l.b16 %v4237
  %v4972 = vunpack.c.h.b16 %v4237
  %v4973 = vunpack.c.l.b16 %v4238
  %v4974 = vunpack.c.h.b16 %v4238
  %v4975 = vunpack.c.l.b16 %v4239
  %v4976 = vunpack.c.h.b16 %v4239
  %v4977 = vunpack.c.l.b16 %v4240
  %v4978 = vunpack.c.h.b16 %v4240
  %v4979 = vunpack.c.l.b16 %v4241
  %v4980 = vunpack.c.h.b16 %v4241
  %v4981 = vunpack.c.l.b16 %v4242
  %v4982 = vunpack.c.h.b16 %v4242
  %v4983 = vunpack.c.l.b16 %v4243
  %v4984 = vunpack.c.h.b16 %v4243
  %v4985 = vunpack.c.l.b16 %v4244
  %v4986 = vunpack.c.h.b16 %v4244
  %v4987 = vunpack.c.l.b16 %v4245
  %v4988 = vunpack.c.h.b16 %v4245
  %v4989 = vunpack.c.l.b16 %v4246
  %v4990 = vunpack.c.h.b16 %v4246
  %v4991 = vunpack.c.l.b16 %v4247
  %v4992 = vunpack.c.h.b16 %v4247
  %v4993 = vunpack.c.l.b16 %v4248
  %v4994 = vunpack.c.h.b16 %v4248
  %v4995 = vunpack.c.l.b16 %v4249
  %v4996 = vunpack.c.h.b16 %v4249
  %v4997 = vunpack.c.l.b16 %v4250
  %v4998 = vunpack.c.h.b16 %v4250
  %v4999 = vunpack.c.l.b16 %v4251
  %v5000 = vunpack.c.h.b16 %v4251
  %v5001 = vunpack.c.l.b16 %v4252
  %v5002 = vunpack.c.h.b16 %v4252
  %v5003 = vunpack.c.l.b16 %v4253
  %v5004 = vunpack.c.h.b16 %v4253
  %v5005 = vunpack.c.l.b16 %v4254
  %v5006 = vunpack.c.h.b16 %v4254
  %v5007 = vunpack.c.l.b16 %v4255
  %v5008 = vunpack.c.h.b16 %v4255
  %v5009 = vunpack.c.l.b16 %v4256
  %v5010 = vunpack.c.h.b16 %v4256
  %v5011 = vunpack.c.l.b16 %v4257
  %v5012 = vunpack.c.h.b16 %v4257
  %v5013 = vunpack.c.l.b16 %v4258
  %v5014 = vunpack.c.h.b16 %v4258
  %v5015 = vunpack.c.l.b16 %v4259
  %v5016 = vunpack.c.h.b16 %v4259
  %v5017 = vunpack.c.l.b16 %v4260
  %v5018 = vunpack.c.h.b16 %v4260
  %v5019 = vunpack.c.l.b16 %v4261
  %v5020 = vunpack.c.h.b16 %v4261
  %v5021 = vunpack.c.l.b16 %v4262
  %v5022 = vunpack.c.h.b16 %v4262
  %v5023 = vunpack.c.l.b16 %v4263
  %v5024 = vunpack.c.h.b16 %v4263
  %v5025 = vunpack.c.l.b16 %v4264
  %v5026 = vunpack.c.h.b16 %v4264
  %v5027 = vunpack.c.l.b16 %v4265
  %v5028 = vunpack.c.h.b16 %v4265
  %v5029 = vunpack.c.l.b16 %v4266
  %v5030 = vunpack.c.h.b16 %v4266
  %v5031 = vunpack.c.l.b16 %v4267
  %v5032 = vunpack.c.h.b16 %v4267
  %v5033 = vunpack.c.l.b16 %v4268
  %v5034 = vunpack.c.h.b16 %v4268
  %v5035 = vunpack.c.l.b16 %v4269
  %v5036 = vunpack.c.h.b16 %v4269
  %v5037 = vunpack.c.l.b16 %v4270
  %v5038 = vunpack.c.h.b16 %v4270
  %v5039 = vunpack.c.l.b16 %v4271
  %v5040 = vunpack.c.h.b16 %v4271
  %v5041 = vunpack.c.l.b16 %v4272
  %v5042 = vunpack.c.h.b16 %v4272
  %v5043 = vunpack.c.l.b16 %v4273
  %v5044 = vunpack.c.h.b16 %v4273
  %v5045 = vunpack.c.l.b16 %v4274
  %v5046 = vunpack.c.h.b16 %v4274
  %v5047 = vunpack.c.l.b16 %v4275
  %v5048 = vunpack.c.h.b16 %v4275
  %v5049 = vunpack.c.l.b16 %v4276
  %v5050 = vunpack.c.h.b16 %v4276
  %v5051 = vunpack.c.l.b16 %v4277
  %v5052 = vunpack.c.h.b16 %v4277
  %v5053 = vunpack.c.l.b16 %v4278
  %v5054 = vunpack.c.h.b16 %v4278
  %v5055 = vunpack.c.l.b16 %v4279
  %v5056 = vunpack.c.h.b16 %v4279
  %v5057 = vunpack.c.l.b16 %v4280
  %v5058 = vunpack.c.h.b16 %v4280
  %v5059 = vunpack.c.l.b16 %v4281
  %v5060 = vunpack.c.h.b16 %v4281
  %v5061 = vunpack.c.l.b16 %v4282
  %v5062 = vunpack.c.h.b16 %v4282
  %v5063 = vunpack.c.l.b16 %v4283
  %v5064 = vunpack.c.h.b16 %v4283
  %v5065 = vunpack.c.l.b16 %v4284
  %v5066 = vunpack.c.h.b16 %v4284
  %v5067 = vunpack.c.l.b16 %v4285
  %v5068 = vunpack.c.h.b16 %v4285
  %v5069 = vunpack.c.l.b16 %v4286
  %v5070 = vunpack.c.h.b16 %v4286
  %v5071 = vunpack.c.l.b16 %v4287
  %v5072 = vunpack.c.h.b16 %v4287
  %v5073 = vunpack.c.l.b16 %v4288
  %v5074 = vunpack.c.h.b16 %v4288
  %v5075 = vunpack.c.l.b16 %v4289
  %v5076 = vunpack.c.h.b16 %v4289
  %v5077 = vunpack.c.l.b16 %v4290
  %v5078 = vunpack.c.h.b16 %v4290
  %v5079 = vunpack.c.l.b16 %v4291
  %v5080 = vunpack.c.h.b16 %v4291
  %v5081 = vunpack.c.l.b16 %v4292
  %v5082 = vunpack.c.h.b16 %v4292
  %v5083 = vunpack.c.l.b16 %v4293
  %v5084 = vunpack.c.h.b16 %v4293
  %v5085 = vunpack.c.l.b16 %v4294
  %v5086 = vunpack.c.h.b16 %v4294
  %v5087 = vunpack.c.l.b16 %v4295
  %v5088 = vunpack.c.h.b16 %v4295
  %v5089 = vunpack.c.l.b16 %v4296
  %v5090 = vunpack.c.h.b16 %v4296
  %v5091 = vunpack.c.l.b16 %v4297
  %v5092 = vunpack.c.h.b16 %v4297
  %v5093 = vunpack.c.l.b16 %v4298
  %v5094 = vunpack.c.h.b16 %v4298
  %v5095 = vunpack.c.l.b16 %v4299
  %v5096 = vunpack.c.h.b16 %v4299
  %v5097 = vunpack.c.l.b16 %v4300
  %v5098 = vunpack.c.h.b16 %v4300
  %v5099 = vunpack.c.l.b16 %v4301
  %v5100 = vunpack.c.h.b16 %v4301
  %v5101 = vunpack.c.l.b16 %v4302
  %v5102 = vunpack.c.h.b16 %v4302
  %v5103 = vunpack.c.l.b16 %v4303
  %v5104 = vunpack.c.h.b16 %v4303
  %v5105 = vunpack.c.l.b16 %v4304
  %v5106 = vunpack.c.h.b16 %v4304
  %v5107 = vunpack.c.l.b16 %v4305
  %v5108 = vunpack.c.h.b16 %v4305
  %v5109 = vunpack.c.l.b16 %v4306
  %v5110 = vunpack.c.h.b16 %v4306
  %v5111 = vunpack.c.l.b16 %v4307
  %v5112 = vunpack.c.h.b16 %v4307
  %v5113 = vunpack.c.l.b16 %v4308
  %v5114 = vunpack.c.h.b16 %v4308
  %v5115 = vunpack.c.l.b16 %v4309
  %v5116 = vunpack.c.h.b16 %v4309
  %v5117 = vunpack.c.l.b16 %v4310
  %v5118 = vunpack.c.h.b16 %v4310
  %v5119 = vunpack.c.l.b16 %v4311
  %v5120 = vunpack.c.h.b16 %v4311
  %v5121 = vunpack.c.l.b16 %v4312
  %v5122 = vunpack.c.h.b16 %v4312
  %v5123 = vunpack.c.l.b16 %v4313
  %v5124 = vunpack.c.h.b16 %v4313
  %v5125 = vunpack.c.l.b16 %v4314
  %v5126 = vunpack.c.h.b16 %v4314
  %v5127 = vunpack.c.l.b16 %v4315
  %v5128 = vunpack.c.h.b16 %v4315
  %v5129 = vunpack.c.l.b16 %v4316
  %v5130 = vunpack.c.h.b16 %v4316
  %v5131 = vunpack.c.l.b16 %v4317
  %v5132 = vunpack.c.h.b16 %v4317
  %v5133 = vunpack.c.l.b16 %v4318
  %v5134 = vunpack.c.h.b16 %v4318
  %v5135 = vunpack.c.l.b16 %v4319
  %v5136 = vunpack.c.h.b16 %v4319
  %v5137 = vunpack.c.l.b16 %v4320
  %v5138 = vunpack.c.h.b16 %v4320
  %v5139 = vunpack.c.l.b16 %v4321
  %v5140 = vunpack.c.h.b16 %v4321
  %v5141 = vunpack.c.l.b16 %v4322
  %v5142 = vunpack.c.h.b16 %v4322
  %v5143 = vunpack.c.l.b16 %v4323
  %v5144 = vunpack.c.h.b16 %v4323
  %v5145 = vunpack.c.l.b16 %v4324
  %v5146 = vunpack.c.h.b16 %v4324
  %v5147 = vunpack.c.l.b16 %v4325
  %v5148 = vunpack.c.h.b16 %v4325
  %v5149 = vunpack.c.l.b16 %v4326
  %v5150 = vunpack.c.h.b16 %v4326
  %v5151 = vunpack.c.l.b16 %v4327
  %v5152 = vunpack.c.h.b16 %v4327
  %v5153 = vunpack.c.l.b16 %v4328
  %v5154 = vunpack.c.h.b16 %v4328
  %v5155 = vunpack.c.l.b16 %v4329
  %v5156 = vunpack.c.h.b16 %v4329
  %v5157 = vunpack.c.l.b16 %v4330
  %v5158 = vunpack.c.h.b16 %v4330
  %v5159 = vunpack.c.l.b16 %v4331
  %v5160 = vunpack.c.h.b16 %v4331
  %v5161 = vunpack.c.l.b16 %v4332
  %v5162 = vunpack.c.h.b16 %v4332
  %v5163 = vunpack.c.l.b16 %v4333
  %v5164 = vunpack.c.h.b16 %v4333
  %v5165 = vunpack.c.l.b16 %v4334
  %v5166 = vunpack.c.h.b16 %v4334
  %v5167 = vpack.c.b16 %v4799, %v4783
  %v5168 = vpack.c.b16 %v4800, %v4784
  %v5169 = vpack.c.b16 %v4801, %v4785
  %v5170 = vpack.c.b16 %v4802, %v4786
  %v5171 = vpack.c.b16 %v4803, %v4787
  %v5172 = vpack.c.b16 %v4804, %v4788
  %v5173 = vpack.c.b16 %v4805, %v4789
  %v5174 = vpack.c.b16 %v4806, %v4790
  %v5175 = vpack.c.b16 %v4807, %v4791
  %v5176 = vpack.c.b16 %v4808, %v4792
  %v5177 = vpack.c.b16 %v4809, %v4793
  %v5178 = vpack.c.b16 %v4810, %v4794
  %v5179 = vpack.c.b16 %v4811, %v4795
  %v5180 = vpack.c.b16 %v4812, %v4796
  %v5181 = vpack.c.b16 %v4813, %v4797
  %v5182 = vpack.c.b16 %v4814, %v4798
  %v5183 = vpack.c.b16 %v4831, %v4815
  %v5184 = vpack.c.b16 %v4832, %v4816
  %v5185 = vpack.c.b16 %v4833, %v4817
  %v5186 = vpack.c.b16 %v4834, %v4818
  %v5187 = vpack.c.b16 %v4835, %v4819
  %v5188 = vpack.c.b16 %v4836, %v4820
  %v5189 = vpack.c.b16 %v4837, %v4821
  %v5190 = vpack.c.b16 %v4838, %v4822
  %v5191 = vpack.c.b16 %v4839, %v4823
  %v5192 = vpack.c.b16 %v4840, %v4824
  %v5193 = vpack.c.b16 %v4841, %v4825
  %v5194 = vpack.c.b16 %v4842, %v4826
  %v5195 = vpack.c.b16 %v4843, %v4827
  %v5196 = vpack.c.b16 %v4844, %v4828
  %v5197 = vpack.c.b16 %v4845, %v4829
  %v5198 = vpack.c.b16 %v4846, %v4830
  %v5199 = vpack.c.b16 %v4863, %v4847
  %v5200 = vpack.c.b16 %v4864, %v4848
  %v5201 = vpack.c.b16 %v4865, %v4849
  %v5202 = vpack.c.b16 %v4866, %v4850
  %v5203 = vpack.c.b16 %v4867, %v4851
  %v5204 = vpack.c.b16 %v4868, %v4852
  %v5205 = vpack.c.b16 %v4869, %v4853
  %v5206 = vpack.c.b16 %v4870, %v4854
  %v5207 = vpack.c.b16 %v4871, %v4855
  %v5208 = vpack.c.b16 %v4872, %v4856
  %v5209 = vpack.c.b16 %v4873, %v4857
  %v5210 = vpack.c.b16 %v4874, %v4858
  %v5211 = vpack.c.b16 %v4875, %v4859
  %v5212 = vpack.c.b16 %v4876, %v4860
  %v5213 = vpack.c.b16 %v4877, %v4861
  %v5214 = vpack.c.b16 %v4878, %v4862
  %v5215 = vpack.c.b16 %v4895, %v4879
  %v5216 = vpack.c.b16 %v4896, %v4880
  %v5217 = vpack.c.b16 %v4897, %v4881
  %v5218 = vpack.c.b16 %v4898, %v4882
  %v5219 = vpack.c.b16 %v4899, %v4883
  %v5220 = vpack.c.b16 %v4900, %v4884
  %v5221 = vpack.c.b16 %v4901, %v4885
  %v5222 = vpack.c.b16 %v4902, %v4886
  %v5223 = vpack.c.b16 %v4903, %v4887
  %v5224 = vpack.c.b16 %v4904, %v4888
  %v5225 = vpack.c.b16 %v4905, %v4889
  %v5226 = vpack.c.b16 %v4906, %v4890
  %v5227 = vpack.c.b16 %v4907, %v4891
  %v5228 = vpack.c.b16 %v4908, %v4892
  %v5229 = vpack.c.b16 %v4909, %v4893
  %v5230 = vpack.c.b16 %v4910, %v4894
  %v5231 = vpack.c.b16 %v4927, %v4911
  %v5232 = vpack.c.b16 %v4928, %v4912
  %v5233 = vpack.c.b16 %v4929, %v4913
  %v5234 = vpack.c.b16 %v4930, %v4914
  %v5235 = vpack.c.b16 %v4931, %v4915
  %v5236 = vpack.c.b16 %v4932, %v4916
  %v5237 = vpack.c.b16 %v4933, %v4917
  %v5238 = vpack.c.b16 %v4934, %v4918
  %v5239 = vpack.c.b16 %v4935, %v4919
  %v5240 = vpack.c.b16 %v4936, %v4920
  %v5241 = vpack.c.b16 %v4937, %v4921
  %v5242 = vpack.c.b16 %v4938, %v4922
  %v5243 = vpack.c.b16 %v4939, %v4923
  %v5244 = vpack.c.b16 %v4940, %v4924
  %v5245 = vpack.c.b16 %v4941, %v4925
  %v5246 = vpack.c.b16 %v4942, %v4926
  %v5247 = vpack.c.b16 %v4959, %v4943
  %v5248 = vpack.c.b16 %v4960, %v4944
  %v5249 = vpack.c.b16 %v4961, %v4945
  %v5250 = vpack.c.b16 %v4962, %v4946
  %v5251 = vpack.c.b16 %v4963, %v4947
  %v5252 = vpack.c.b16 %v4964, %v4948
  %v5253 = vpack.c.b16 %v4965, %v4949
  %v5254 = vpack.c.b16 %v4966, %v4950
  %v5255 = vpack.c.b16 %v4967, %v4951
  %v5256 = vpack.c.b16 %v4968, %v4952
  %v5257 = vpack.c.b16 %v4969, %v4953
  %v5258 = vpack.c.b16 %v4970, %v4954
  %v5259 = vpack.c.b16 %v4971, %v4955
  %v5260 = vpack.c.b16 %v4972, %v4956
  %v5261 = vpack.c.b16 %v4973, %v4957
  %v5262 = vpack.c.b16 %v4974, %v4958
  %v5263 = vpack.c.b16 %v4991, %v4975
  %v5264 = vpack.c.b16 %v4992, %v4976
  %v5265 = vpack.c.b16 %v4993, %v4977
  %v5266 = vpack.c.b16 %v4994, %v4978
  %v5267 = vpack.c.b16 %v4995, %v4979
  %v5268 = vpack.c.b16 %v4996, %v4980
  %v5269 = vpack.c.b16 %v4997, %v4981
  %v5270 = vpack.c.b16 %v4998, %v4982
  %v5271 = vpack.c.b16 %v4999, %v4983
  %v5272 = vpack.c.b16 %v5000, %v4984
  %v5273 = vpack.c.b16 %v5001, %v4985
  %v5274 = vpack.c.b16 %v5002, %v4986
  %v5275 = vpack.c.b16 %v5003, %v4987
  %v5276 = vpack.c.b16 %v5004, %v4988
  %v5277 = vpack.c.b16 %v5005, %v4989
  %v5278 = vpack.c.b16 %v5006, %v4990
  %v5279 = vpack.c.b16 %v5023, %v5007
  %v5280 = vpack.c.b16 %v5024, %v5008
  %v5281 = vpack.c.b16 %v5025, %v5009
  %v5282 = vpack.c.b16 %v5026, %v5010
  %v5283 = vpack.c.b16 %v5027, %v5011
  %v5284 = vpack.c.b16 %v5028, %v5012
  %v5285 = vpack.c.b16 %v5029, %v5013
  %v5286 = vpack.c.b16 %v5030, %v5014
  %v5287 = vpack.c.b16 %v5031, %v5015
  %v5288 = vpack.c.b16 %v5032, %v5016
  %v5289 = vpack.c.b16 %v5033, %v5017
  %v5290 = vpack.c.b16 %v5034, %v5018
  %v5291 = vpack.c.b16 %v5035, %v5019
  %v5292 = vpack.c.b16 %v5036, %v5020
  %v5293 = vpack.c.b16 %v5037, %v5021
  %v5294 = vpack.c.b16 %v5038, %v5022
  %v5295 = vpack.c.b16 %v5055, %v5039
  %v5296 = vpack.c.b16 %v5056, %v5040
  %v5297 = vpack.c.b16 %v5057, %v5041
  %v5298 = vpack.c.b16 %v5058, %v5042
  %v5299 = vpack.c.b16 %v5059, %v5043
  %v5300 = vpack.c.b16 %v5060, %v5044
  %v5301 = vpack.c.b16 %v5061, %v5045
  %v5302 = vpack.c.b16 %v5062, %v5046
  %v5303 = vpack.c.b16 %v5063, %v5047
  %v5304 = vpack.c.b16 %v5064, %v5048
  %v5305 = vpack.c.b16 %v5065, %v5049
  %v5306 = vpack.c.b16 %v5066, %v5050
  %v5307 = vpack.c.b16 %v5067, %v5051
  %v5308 = vpack.c.b16 %v5068, %v5052
  %v5309 = vpack.c.b16 %v5069, %v5053
  %v5310 = vpack.c.b16 %v5070, %v5054
  %v5311 = vpack.c.b16 %v5087, %v5071
  %v5312 = vpack.c.b16 %v5088, %v5072
  %v5313 = vpack.c.b16 %v5089, %v5073
  %v5314 = vpack.c.b16 %v5090, %v5074
  %v5315 = vpack.c.b16 %v5091, %v5075
  %v5316 = vpack.c.b16 %v5092, %v5076
  %v5317 = vpack.c.b16 %v5093, %v5077
  %v5318 = vpack.c.b16 %v5094, %v5078
  %v5319 = vpack.c.b16 %v5095, %v5079
  %v5320 = vpack.c.b16 %v5096, %v5080
  %v5321 = vpack.c.b16 %v5097, %v5081
  %v5322 = vpack.c.b16 %v5098, %v5082
  %v5323 = vpack.c.b16 %v5099, %v5083
  %v5324 = vpack.c.b16 %v5100, %v5084
  %v5325 = vpack.c.b16 %v5101, %v5085
  %v5326 = vpack.c.b16 %v5102, %v5086
  %v5327 = vpack.c.b16 %v5119, %v5103
  %v5328 = vpack.c.b16 %v5120, %v5104
  %v5329 = vpack.c.b16 %v5121, %v5105
  %v5330 = vpack.c.b16 %v5122, %v5106
  %v5331 = vpack.c.b16 %v5123, %v5107
  %v5332 = vpack.c.b16 %v5124, %v5108
  %v5333 = vpack.c.b16 %v5125, %v5109
  %v5334 = vpack.c.b16 %v5126, %v5110
  %v5335 = vpack.c.b16 %v5127, %v5111
  %v5336 = vpack.c.b16 %v5128, %v5112
  %v5337 = vpack.c.b16 %v5129, %v5113
  %v5338 = vpack.c.b16 %v5130, %v5114
  %v5339 = vpack.c.b16 %v5131, %v5115
  %v5340 = vpack.c.b16 %v5132, %v5116
  %v5341 = vpack.c.b16 %v5133, %v5117
  %v5342 = vpack.c.b16 %v5134, %v5118
  %v5343 = vpack.c.b16 %v5151, %v5135
  %v5344 = vpack.c.b16 %v5152, %v5136
  %v5345 = vpack.c.b16 %v5153, %v5137
  %v5346 = vpack.c.b16 %v5154, %v5138
  %v5347 = vpack.c.b16 %v5155, %v5139
  %v5348 = vpack.c.b16 %v5156, %v5140
  %v5349 = vpack.c.b16 %v5157, %v5141
  %v5350 = vpack.c.b16 %v5158, %v5142
  %v5351 = vpack.c.b16 %v5159, %v5143
  %v5352 = vpack.c.b16 %v5160, %v5144
  %v5353 = vpack.c.b16 %v5161, %v5145
  %v5354 = vpack.c.b16 %v5162, %v5146
  %v5355 = vpack.c.b16 %v5163, %v5147
  %v5356 = vpack.c.b16 %v5164, %v5148
  %v5357 = vpack.c.b16 %v5165, %v5149
  %v5358 = vpack.c.b16 %v5166, %v5150
  %v5807 = vunpack.c.l.b16 %v4335
  %v5808 = vunpack.c.l.b16 %v4336
  %v5809 = vunpack.c.l.b16 %v4337
  %v5810 = vunpack.c.l.b16 %v4338
  %v5811 = vunpack.c.l.b16 %v4339
  %v5812 = vunpack.c.l.b16 %v4340
  %v5813 = vunpack.c.l.b16 %v4341
  %v5814 = vunpack.c.l.b16 %v4342
  %v5815 = vunpack.c.l.b16 %v4343
  %v5816 = vunpack.c.l.b16 %v4344
  %v5817 = vunpack.c.l.b16 %v4345
  %v5818 = vunpack.c.l.b16 %v4346
  %v5819 = vunpack.c.l.b16 %v4347
  %v5820 = vunpack.c.l.b16 %v4348
  %v5821 = vunpack.c.l.b16 %v4349
  %v5822 = vunpack.c.l.b16 %v4350
  %v5823 = vunpack.c.l.b16 %v4351
  %v5824 = vunpack.c.l.b16 %v4352
  %v5825 = vunpack.c.l.b16 %v4353
  %v5826 = vunpack.c.l.b16 %v4354
  %v5827 = vunpack.c.l.b16 %v4355
  %v5828 = vunpack.c.l.b16 %v4356
  %v5829 = vunpack.c.l.b16 %v4357
  %v5830 = vunpack.c.l.b16 %v4358
  %v5831 = vunpack.c.l.b16 %v4359
  %v5832 = vunpack.c.l.b16 %v4360
  %v5833 = vunpack.c.l.b16 %v4361
  %v5834 = vunpack.c.l.b16 %v4362
  %v5835 = vunpack.c.l.b16 %v4363
  %v5836 = vunpack.c.l.b16 %v4364
  %v5837 = vunpack.c.l.b16 %v4365
  %v5838 = vunpack.c.l.b16 %v4366
  %v5839 = vunpack.c.l.b16 %v4367
  %v5840 = vunpack.c.l.b16 %v4368
  %v5841 = vunpack.c.l.b16 %v4369
  %v5842 = vunpack.c.l.b16 %v4370
  %v5843 = vunpack.c.l.b16 %v4371
  %v5844 = vunpack.c.l.b16 %v4372
  %v5845 = vunpack.c.l.b16 %v4373
  %v5846 = vunpack.c.l.b16 %v4374
  %v5847 = vunpack.c.l.b16 %v4375
  %v5848 = vunpack.c.l.b16 %v4376
  %v5849 = vunpack.c.l.b16 %v4377
  %v5850 = vunpack.c.l.b16 %v4378
  %v5851 = vunpack.c.l.b16 %v4379
  %v5852 = vunpack.c.l.b16 %v4380
  %v5853 = vunpack.c.l.b16 %v4381
  %v5854 = vunpack.c.l.b16 %v4382
  %v5855 = vunpack.c.l.b16 %v4383
  %v5856 = vunpack.c.l.b16 %v4384
  %v5857 = vunpack.c.l.b16 %v4385
  %v5858 = vunpack.c.l.b16 %v4386
  %v5859 = vunpack.c.l.b16 %v4387
  %v5860 = vunpack.c.l.b16 %v4388
  %v5861 = vunpack.c.l.b16 %v4389
  %v5862 = vunpack.c.l.b16 %v4390
  %v5863 = vunpack.c.l.b16 %v4391
  %v5864 = vunpack.c.l.b16 %v4392
  %v5865 = vunpack.c.l.b16 %v4393
  %v5866 = vunpack.c.l.b16 %v4394
  %v5867 = vunpack.c.l.b16 %v4395
  %v5868 = vunpack.c.l.b16 %v4396
  %v5869 = vunpack.c.l.b16 %v4397
  %v5870 = vunpack.c.l.b16 %v4398
  %v5871 = vunpack.c.l.b16 %v4399
  %v5872 = vunpack.c.l.b16 %v4400
  %v5873 = vunpack.c.l.b16 %v4401
  %v5874 = vunpack.c.l.b16 %v4402
  %v5875 = vunpack.c.l.b16 %v4403
  %v5876 = vunpack.c.l.b16 %v4404
  %v5877 = vunpack.c.l.b16 %v4405
  %v5878 = vunpack.c.l.b16 %v4406
  %v5879 = vunpack.c.l.b16 %v4407
  %v5880 = vunpack.c.l.b16 %v4408
  %v5881 = vunpack.c.l.b16 %v4409
  %v5882 = vunpack.c.l.b16 %v4410
  %v5883 = vunpack.c.l.b16 %v4411
  %v5884 = vunpack.c.l.b16 %v4412
  %v5885 = vunpack.c.l.b16 %v4413
  %v5886 = vunpack.c.l.b16 %v4414
  %v5887 = vunpack.c.l.b16 %v4415
  %v5888 = vunpack.c.l.b16 %v4416
  %v5889 = vunpack.c.l.b16 %v4417
  %v5890 = vunpack.c.l.b16 %v4418
  %v5891 = vunpack.c.l.b16 %v4419
  %v5892 = vunpack.c.l.b16 %v4420
  %v5893 = vunpack.c.l.b16 %v4421
  %v5894 = vunpack.c.l.b16 %v4422
  %v5895 = vunpack.c.l.b16 %v4423
  %v5896 = vunpack.c.l.b16 %v4424
  %v5897 = vunpack.c.l.b16 %v4425
  %v5898 = vunpack.c.l.b16 %v4426
  %v5899 = vunpack.c.l.b16 %v4427
  %v5900 = vunpack.c.l.b16 %v4428
  %v5901 = vunpack.c.l.b16 %v4429
  %v5902 = vunpack.c.l.b16 %v4430
  %v5903 = vunpack.c.l.b16 %v4431
  %v5904 = vunpack.c.l.b16 %v4432
  %v5905 = vunpack.c.l.b16 %v4433
  %v5906 = vunpack.c.l.b16 %v4434
  %v5907 = vunpack.c.l.b16 %v4435
  %v5908 = vunpack.c.l.b16 %v4436
  %v5909 = vunpack.c.l.b16 %v4437
  %v5910 = vunpack.c.l.b16 %v4438
  %v5911 = vunpack.c.l.b16 %v4439
  %v5912 = vunpack.c.l.b16 %v4440
  %v5913 = vunpack.c.l.b16 %v4441
  %v5914 = vunpack.c.l.b16 %v4442
  %v5915 = vunpack.c.l.b16 %v4443
  %v5916 = vunpack.c.l.b16 %v4444
  %v5917 = vunpack.c.l.b16 %v4445
  %v5918 = vunpack.c.l.b16 %v4446
  %v5919 = vunpack.c.l.b16 %v4447
  %v5920 = vunpack.c.l.b16 %v4448
  %v5921 = vunpack.c.l.b16 %v4449
  %v5922 = vunpack.c.l.b16 %v4450
  %v5923 = vunpack.c.l.b16 %v4451
  %v5924 = vunpack.c.l.b16 %v4452
  %v5925 = vunpack.c.l.b16 %v4453
  %v5926 = vunpack.c.l.b16 %v4454
  %v5927 = vunpack.c.l.b16 %v4455
  %v5928 = vunpack.c.l.b16 %v4456
  %v5929 = vunpack.c.l.b16 %v4457
  %v5930 = vunpack.c.l.b16 %v4458
  %v5931 = vunpack.c.l.b16 %v4459
  %v5932 = vunpack.c.l.b16 %v4460
  %v5933 = vunpack.c.l.b16 %v4461
  %v5934 = vunpack.c.l.b16 %v4462
  %v5935 = vunpack.c.l.b16 %v4463
  %v5936 = vunpack.c.l.b16 %v4464
  %v5937 = vunpack.c.l.b16 %v4465
  %v5938 = vunpack.c.l.b16 %v4466
  %v5939 = vunpack.c.l.b16 %v4467
  %v5940 = vunpack.c.l.b16 %v4468
  %v5941 = vunpack.c.l.b16 %v4469
  %v5942 = vunpack.c.l.b16 %v4470
  %v5943 = vunpack.c.l.b16 %v4471
  %v5944 = vunpack.c.l.b16 %v4472
  %v5945 = vunpack.c.l.b16 %v4473
  %v5946 = vunpack.c.l.b16 %v4474
  %v5947 = vunpack.c.l.b16 %v4475
  %v5948 = vunpack.c.l.b16 %v4476
  %v5949 = vunpack.c.l.b16 %v4477
  %v5950 = vunpack.c.l.b16 %v4478
  %v5951 = vunpack.c.l.b16 %v4479
  %v5952 = vunpack.c.l.b16 %v4480
  %v5953 = vunpack.c.l.b16 %v4481
  %v5954 = vunpack.c.l.b16 %v4482
  %v5955 = vunpack.c.l.b16 %v4483
  %v5956 = vunpack.c.l.b16 %v4484
  %v5957 = vunpack.c.l.b16 %v4485
  %v5958 = vunpack.c.l.b16 %v4486
  %v5959 = vunpack.c.l.b16 %v4487
  %v5960 = vunpack.c.l.b16 %v4488
  %v5961 = vunpack.c.l.b16 %v4489
  %v5962 = vunpack.c.l.b16 %v4490
  %v5963 = vunpack.c.l.b16 %v4491
  %v5964 = vunpack.c.l.b16 %v4492
  %v5965 = vunpack.c.l.b16 %v4493
  %v5966 = vunpack.c.l.b16 %v4494
  %v5967 = vunpack.c.l.b16 %v4495
  %v5968 = vunpack.c.l.b16 %v4496
  %v5969 = vunpack.c.l.b16 %v4497
  %v5970 = vunpack.c.l.b16 %v4498
  %v5971 = vunpack.c.l.b16 %v4499
  %v5972 = vunpack.c.l.b16 %v4500
  %v5973 = vunpack.c.l.b16 %v4501
  %v5974 = vunpack.c.l.b16 %v4502
  %v5975 = vunpack.c.l.b16 %v4503
  %v5976 = vunpack.c.l.b16 %v4504
  %v5977 = vunpack.c.l.b16 %v4505
  %v5978 = vunpack.c.l.b16 %v4506
  %v5979 = vunpack.c.l.b16 %v4507
  %v5980 = vunpack.c.l.b16 %v4508
  %v5981 = vunpack.c.l.b16 %v4509
  %v5982 = vunpack.c.l.b16 %v4510
  %v5983 = vunpack.c.l.b16 %v4511
  %v5984 = vunpack.c.l.b16 %v4512
  %v5985 = vunpack.c.l.b16 %v4513
  %v5986 = vunpack.c.l.b16 %v4514
  %v5987 = vunpack.c.l.b16 %v4515
  %v5988 = vunpack.c.l.b16 %v4516
  %v5989 = vunpack.c.l.b16 %v4517
  %v5990 = vunpack.c.l.b16 %v4518
  %v5991 = vunpack.c.l.b16 %v4519
  %v5992 = vunpack.c.l.b16 %v4520
  %v5993 = vunpack.c.l.b16 %v4521
  %v5994 = vunpack.c.l.b16 %v4522
  %v5995 = vunpack.c.l.b16 %v4523
  %v5996 = vunpack.c.l.b16 %v4524
  %v5997 = vunpack.c.l.b16 %v4525
  %v5998 = vunpack.c.l.b16 %v4526
  %v5999 = vunpack.c.l.b16 %v4527
  %v6000 = vunpack.c.l.b16 %v4528
  %v6001 = vunpack.c.l.b16 %v4529
  %v6002 = vunpack.c.l.b16 %v4530
  %v6003 = vunpack.c.l.b16 %v4531
  %v6004 = vunpack.c.l.b16 %v4532
  %v6005 = vunpack.c.l.b16 %v4533
  %v6006 = vunpack.c.l.b16 %v4534
  %v6007 = vunpack.c.l.b16 %v4535
  %v6008 = vunpack.c.l.b16 %v4536
  %v6009 = vunpack.c.l.b16 %v4537
  %v6010 = vunpack.c.l.b16 %v4538
  %v6011 = vunpack.c.l.b16 %v4539
  %v6012 = vunpack.c.l.b16 %v4540
  %v6013 = vunpack.c.l.b16 %v4541
  %v6014 = vunpack.c.l.b16 %v4542
  %v6015 = vunpack.c.l.b16 %v4543
  %v6016 = vunpack.c.l.b16 %v4544
  %v6017 = vunpack.c.l.b16 %v4545
  %v6018 = vunpack.c.l.b16 %v4546
  %v6019 = vunpack.c.l.b16 %v4547
  %v6020 = vunpack.c.l.b16 %v4548
  %v6021 = vunpack.c.l.b16 %v4549
  %v6022 = vunpack.c.l.b16 %v4550
  %v6023 = vunpack.c.l.b16 %v4551
  %v6024 = vunpack.c.l.b16 %v4552
  %v6025 = vunpack.c.l.b16 %v4553
  %v6026 = vunpack.c.l.b16 %v4554
  %v6027 = vunpack.c.l.b16 %v4555
  %v6028 = vunpack.c.l.b16 %v4556
  %v6029 = vunpack.c.l.b16 %v4557
  %v6030 = vunpack.c.l.b16 %v4558
  %v6031 = vunpack.c.l.b16 %v4559
  %v6032 = vunpack.c.l.b16 %v4560
  %v6033 = vunpack.c.l.b16 %v4561
  %v6034 = vunpack.c.l.b16 %v4562
  %v6035 = vunpack.c.l.b16 %v4563
  %v6036 = vunpack.c.l.b16 %v4564
  %v6037 = vunpack.c.l.b16 %v4565
  %v6038 = vunpack.c.l.b16 %v4566
  %v6039 = vunpack.c.l.b16 %v4567
  %v6040 = vunpack.c.l.b16 %v4568
  %v6041 = vunpack.c.l.b16 %v4569
  %v6042 = vunpack.c.l.b16 %v4570
  %v6043 = vunpack.c.l.b16 %v4571
  %v6044 = vunpack.c.l.b16 %v4572
  %v6045 = vunpack.c.l.b16 %v4573
  %v6046 = vunpack.c.l.b16 %v4574
  %v6047 = vunpack.c.l.b16 %v4575
  %v6048 = vunpack.c.l.b16 %v4576
  %v6049 = vunpack.c.l.b16 %v4577
  %v6050 = vunpack.c.l.b16 %v4578
  %v6051 = vunpack.c.l.b16 %v4579
  %v6052 = vunpack.c.l.b16 %v4580
  %v6053 = vunpack.c.l.b16 %v4581
  %v6054 = vunpack.c.l.b16 %v4582
  %v6055 = vunpack.c.l.b16 %v4583
  %v6056 = vunpack.c.l.b16 %v4584
  %v6057 = vunpack.c.l.b16 %v4585
  %v6058 = vunpack.c.l.b16 %v4586
  %v6059 = vunpack.c.l.b16 %v4587
  %v6060 = vunpack.c.l.b16 %v4588
  %v6061 = vunpack.c.l.b16 %v4589
  %v6062 = vunpack.c.l.b16 %v4590
  %v6063 = vpack.c.b16 %v5808, %v5807
  %v6064 = vpack.c.b16 %v5810, %v5809
  %v6065 = vpack.c.b16 %v5812, %v5811
  %v6066 = vpack.c.b16 %v5814, %v5813
  %v6067 = vpack.c.b16 %v5816, %v5815
  %v6068 = vpack.c.b16 %v5818, %v5817
  %v6069 = vpack.c.b16 %v5820, %v5819
  %v6070 = vpack.c.b16 %v5822, %v5821
  %v6071 = vpack.c.b16 %v5824, %v5823
  %v6072 = vpack.c.b16 %v5826, %v5825
  %v6073 = vpack.c.b16 %v5828, %v5827
  %v6074 = vpack.c.b16 %v5830, %v5829
  %v6075 = vpack.c.b16 %v5832, %v5831
  %v6076 = vpack.c.b16 %v5834, %v5833
  %v6077 = vpack.c.b16 %v5836, %v5835
  %v6078 = vpack.c.b16 %v5838, %v5837
  %v6079 = vpack.c.b16 %v5840, %v5839
  %v6080 = vpack.c.b16 %v5842, %v5841
  %v6081 = vpack.c.b16 %v5844, %v5843
  %v6082 = vpack.c.b16 %v5846, %v5845
  %v6083 = vpack.c.b16 %v5848, %v5847
  %v6084 = vpack.c.b16 %v5850, %v5849
  %v6085 = vpack.c.b16 %v5852, %v5851
  %v6086 = vpack.c.b16 %v5854, %v5853
  %v6087 = vpack.c.b16 %v5856, %v5855
  %v6088 = vpack.c.b16 %v5858, %v5857
  %v6089 = vpack.c.b16 %v5860, %v5859
  %v6090 = vpack.c.b16 %v5862, %v5861
  %v6091 = vpack.c.b16 %v5864, %v5863
  %v6092 = vpack.c.b16 %v5866, %v5865
  %v6093 = vpack.c.b16 %v5868, %v5867
  %v6094 = vpack.c.b16 %v5870, %v5869
  %v6095 = vpack.c.b16 %v5872, %v5871
  %v6096 = vpack.c.b16 %v5874, %v5873
  %v6097 = vpack.c.b16 %v5876, %v5875
  %v6098 = vpack.c.b16 %v5878, %v5877
  %v6099 = vpack.c.b16 %v5880, %v5879
  %v6100 = vpack.c.b16 %v5882, %v5881
  %v6101 = vpack.c.b16 %v5884, %v5883
  %v6102 = vpack.c.b16 %v5886, %v5885
  %v6103 = vpack.c.b16 %v5888, %v5887
  %v6104 = vpack.c.b16 %v5890, %v5889
  %v6105 = vpack.c.b16 %v5892, %v5891
  %v6106 = vpack.c.b16 %v5894, %v5893
  %v6107 = vpack.c.b16 %v5896, %v5895
  %v6108 = vpack.c.b16 %v5898, %v5897
  %v6109 = vpack.c.b16 %v5900, %v5899
  %v6110 = vpack.c.b16 %v5902, %v5901
  %v6111 = vpack.c.b16 %v5904, %v5903
  %v6112 = vpack.c.b16 %v5906, %v5905
  %v6113 = vpack.c.b16 %v5908, %v5907
  %v6114 = vpack.c.b16 %v5910, %v5909
  %v6115 = vpack.c.b16 %v5912, %v5911
  %v6116 = vpack.c.b16 %v5914, %v5913
  %v6117 = vpack.c.b16 %v5916, %v5915
  %v6118 = vpack.c.b16 %v5918, %v5917
  %v6119 = vpack.c.b16 %v5920, %v5919
  %v6120 = vpack.c.b16 %v5922, %v5921
  %v6121 = vpack.c.b16 %v5924, %v5923
  %v6122 = vpack.c.b16 %v5926, %v5925
  %v6123 = vpack.c.b16 %v5928, %v5927
  %v6124 = vpack.c.b16 %v5930, %v5929
  %v6125 = vpack.c.b16 %v5932, %v5931
  %v6126 = vpack.c.b16 %v5934, %v5933
  %v6127 = vpack.c.b16 %v5936, %v5935
  %v6128 = vpack.c.b16 %v5938, %v5937
  %v6129 = vpack.c.b16 %v5940, %v5939
  %v6130 = vpack.c.b16 %v5942, %v5941
  %v6131 = vpack.c.b16 %v5944, %v5943
  %v6132 = vpack.c.b16 %v5946, %v5945
  %v6133 = vpack.c.b16 %v5948, %v5947
  %v6134 = vpack.c.b16 %v5950, %v5949
  %v6135 = vpack.c.b16 %v5952, %v5951
  %v6136 = vpack.c.b16 %v5954, %v5953
  %v6137 = vpack.c.b16 %v5956, %v5955
  %v6138 = vpack.c.b16 %v5958, %v5957
  %v6139 = vpack.c.b16 %v5960, %v5959
  %v6140 = vpack.c.b16 %v5962, %v5961
  %v6141 = vpack.c.b16 %v5964, %v5963
  %v6142 = vpack.c.b16 %v5966, %v5965
  %v6143 = vpack.c.b16 %v5968, %v5967
  %v6144 = vpack.c.b16 %v5970, %v5969
  %v6145 = vpack.c.b16 %v5972, %v5971
  %v6146 = vpack.c.b16 %v5974, %v5973
  %v6147 = vpack.c.b16 %v5976, %v5975
  %v6148 = vpack.c.b16 %v5978, %v5977
  %v6149 = vpack.c.b16 %v5980, %v5979
  %v6150 = vpack.c.b16 %v5982, %v5981
  %v6151 = vpack.c.b16 %v5984, %v5983
  %v6152 = vpack.c.b16 %v5986, %v5985
  %v6153 = vpack.c.b16 %v5988, %v5987
  %v6154 = vpack.c.b16 %v5990, %v5989
  %v6155 = vpack.c.b16 %v5992, %v5991
  %v6156 = vpack.c.b16 %v5994, %v5993
  %v6157 = vpack.c.b16 %v5996, %v5995
  %v6158 = vpack.c.b16 %v5998, %v5997
  %v6159 = vpack.c.b16 %v6000, %v5999
  %v6160 = vpack.c.b16 %v6002, %v6001
  %v6161 = vpack.c.b16 %v6004, %v6003
  %v6162 = vpack.c.b16 %v6006, %v6005
  %v6163 = vpack.c.b16 %v6008, %v6007
  %v6164 = vpack.c.b16 %v6010, %v6009
  %v6165 = vpack.c.b16 %v6012, %v6011
  %v6166 = vpack.c.b16 %v6014, %v6013
  %v6167 = vpack.c.b16 %v6016, %v6015
  %v6168 = vpack.c.b16 %v6018, %v6017
  %v6169 = vpack.c.b16 %v6020, %v6019
  %v6170 = vpack.c.b16 %v6022, %v6021
  %v6171 = vpack.c.b16 %v6024, %v6023
  %v6172 = vpack.c.b16 %v6026, %v6025
  %v6173 = vpack.c.b16 %v6028, %v6027
  %v6174 = vpack.c.b16 %v6030, %v6029
  %v6175 = vpack.c.b16 %v6032, %v6031
  %v6176 = vpack.c.b16 %v6034, %v6033
  %v6177 = vpack.c.b16 %v6036, %v6035
  %v6178 = vpack.c.b16 %v6038, %v6037
  %v6179 = vpack.c.b16 %v6040, %v6039
  %v6180 = vpack.c.b16 %v6042, %v6041
  %v6181 = vpack.c.b16 %v6044, %v6043
  %v6182 = vpack.c.b16 %v6046, %v6045
  %v6183 = vpack.c.b16 %v6048, %v6047
  %v6184 = vpack.c.b16 %v6050, %v6049
  %v6185 = vpack.c.b16 %v6052, %v6051
  %v6186 = vpack.c.b16 %v6054, %v6053
  %v6187 = vpack.c.b16 %v6056, %v6055
  %v6188 = vpack.c.b16 %v6058, %v6057
  %v6189 = vpack.c.b16 %v6060, %v6059
  %v6190 = vpack.c.b16 %v6062, %v6061
  %6319 = vmatpush.bf16.msra.mxu0 %v6070
  %6320 = vmatpush.bf16.msra.mxu0 %v6069
  %6321 = vmatpush.bf16.msra.mxu0 %v6068
  %6322 = vmatpush.bf16.msra.mxu0 %v6067
  %6323 = vmatpush.bf16.msra.mxu0 %v6066
  %6324 = vmatpush.bf16.msra.mxu0 %v6065
  %6325 = vmatpush.bf16.msra.mxu0 %v6064
  %6326 = vmatpush.bf16.msra.mxu0 %v6063
  %6327 = vmatmul.bf16.gmra.mxu0 %v5167
  %v6328 = vpop.f32.mrf.mxu0
  %v6329 = vadd.f32 0.0, %v6328
  %v6330 = vpop.f32.mrf.mxu0
  %v6331 = vadd.f32 0.0, %v6330
  %6332 = vmatmul.bf16.gmra.mxu0 %v5183
  %v6333 = vpop.f32.mrf.mxu0
  %v6334 = vadd.f32 0.0, %v6333
  %v6335 = vpop.f32.mrf.mxu0
  %v6336 = vadd.f32 0.0, %v6335
  %6337 = vmatmul.bf16.gmra.mxu0 %v5199
  %v6338 = vpop.f32.mrf.mxu0
  %v6339 = vadd.f32 0.0, %v6338
  %v6340 = vpop.f32.mrf.mxu0
  %v6341 = vadd.f32 0.0, %v6340
  %6342 = vmatmul.bf16.gmra.mxu0 %v5215
  %v6343 = vpop.f32.mrf.mxu0
  %v6344 = vadd.f32 0.0, %v6343
  %v6345 = vpop.f32.mrf.mxu0
  %v6346 = vadd.f32 0.0, %v6345
  %6347 = vmatmul.bf16.gmra.mxu0 %v5231
  %v6348 = vpop.f32.mrf.mxu0
  %v6349 = vadd.f32 0.0, %v6348
  %v6350 = vpop.f32.mrf.mxu0
  %v6351 = vadd.f32 0.0, %v6350
  %6352 = vmatmul.bf16.gmra.mxu0 %v5247
  %v6353 = vpop.f32.mrf.mxu0
  %v6354 = vadd.f32 0.0, %v6353
  %v6355 = vpop.f32.mrf.mxu0
  %v6356 = vadd.f32 0.0, %v6355
  %6357 = vmatmul.bf16.gmra.mxu0 %v5263
  %v6358 = vpop.f32.mrf.mxu0
  %v6359 = vadd.f32 0.0, %v6358
  %v6360 = vpop.f32.mrf.mxu0
  %v6361 = vadd.f32 0.0, %v6360
  %6362 = vmatmul.bf16.gmra.mxu0 %v5279
  %v6363 = vpop.f32.mrf.mxu0
  %v6364 = vadd.f32 0.0, %v6363
  %v6365 = vpop.f32.mrf.mxu0
  %v6366 = vadd.f32 0.0, %v6365
  %6367 = vmatmul.bf16.gmra.mxu0 %v5295
  %v6368 = vpop.f32.mrf.mxu0
  %v6369 = vadd.f32 0.0, %v6368
  %v6370 = vpop.f32.mrf.mxu0
  %v6371 = vadd.f32 0.0, %v6370
  %6372 = vmatmul.bf16.gmra.mxu0 %v5311
  %v6373 = vpop.f32.mrf.mxu0
  %v6374 = vadd.f32 0.0, %v6373
  %v6375 = vpop.f32.mrf.mxu0
  %v6376 = vadd.f32 0.0, %v6375
  %6377 = vmatmul.bf16.gmra.mxu0 %v5327
  %v6378 = vpop.f32.mrf.mxu0
  %v6379 = vadd.f32 0.0, %v6378
  %v6380 = vpop.f32.mrf.mxu0
  %v6381 = vadd.f32 0.0, %v6380
  %6382 = vmatmul.bf16.gmra.mxu0 %v5343
  %v6383 = vpop.f32.mrf.mxu0
  %v6384 = vadd.f32 0.0, %v6383
  %v6385 = vpop.f32.mrf.mxu0
  %v6386 = vadd.f32 0.0, %v6385
  %6387 = vdwg.mxu0
  %6388 = vmatpush.bf16.msra.mxu0 %v6078
  %6389 = vmatpush.bf16.msra.mxu0 %v6077
  %6390 = vmatpush.bf16.msra.mxu0 %v6076
  %6391 = vmatpush.bf16.msra.mxu0 %v6075
  %6392 = vmatpush.bf16.msra.mxu0 %v6074
  %6393 = vmatpush.bf16.msra.mxu0 %v6073
  %6394 = vmatpush.bf16.msra.mxu0 %v6072
  %6395 = vmatpush.bf16.msra.mxu0 %v6071
  %6396 = vmatmul.bf16.gmra.mxu0 %v5168
  %v6397 = vpop.f32.mrf.mxu0
  %v6398 = vadd.f32 %v6329, %v6397
  %v6399 = vpop.f32.mrf.mxu0
  %v6400 = vadd.f32 %v6331, %v6399
  %6401 = vmatmul.bf16.gmra.mxu0 %v5184
  %v6402 = vpop.f32.mrf.mxu0
  %v6403 = vadd.f32 %v6334, %v6402
  %v6404 = vpop.f32.mrf.mxu0
  %v6405 = vadd.f32 %v6336, %v6404
  %6406 = vmatmul.bf16.gmra.mxu0 %v5200
  %v6407 = vpop.f32.mrf.mxu0
  %v6408 = vadd.f32 %v6339, %v6407
  %v6409 = vpop.f32.mrf.mxu0
  %v6410 = vadd.f32 %v6341, %v6409
  %6411 = vmatmul.bf16.gmra.mxu0 %v5216
  %v6412 = vpop.f32.mrf.mxu0
  %v6413 = vadd.f32 %v6344, %v6412
  %v6414 = vpop.f32.mrf.mxu0
  %v6415 = vadd.f32 %v6346, %v6414
  %6416 = vmatmul.bf16.gmra.mxu0 %v5232
  %v6417 = vpop.f32.mrf.mxu0
  %v6418 = vadd.f32 %v6349, %v6417
  %v6419 = vpop.f32.mrf.mxu0
  %v6420 = vadd.f32 %v6351, %v6419
  %6421 = vmatmul.bf16.gmra.mxu0 %v5248
  %v6422 = vpop.f32.mrf.mxu0
  %v6423 = vadd.f32 %v6354, %v6422
  %v6424 = vpop.f32.mrf.mxu0
  %v6425 = vadd.f32 %v6356, %v6424
  %6426 = vmatmul.bf16.gmra.mxu0 %v5264
  %v6427 = vpop.f32.mrf.mxu0
  %v6428 = vadd.f32 %v6359, %v6427
  %v6429 = vpop.f32.mrf.mxu0
  %v6430 = vadd.f32 %v6361, %v6429
  %6431 = vmatmul.bf16.gmra.mxu0 %v5280
  %v6432 = vpop.f32.mrf.mxu0
  %v6433 = vadd.f32 %v6364, %v6432
  %v6434 = vpop.f32.mrf.mxu0
  %v6435 = vadd.f32 %v6366, %v6434
  %6436 = vmatmul.bf16.gmra.mxu0 %v5296
  %v6437 = vpop.f32.mrf.mxu0
  %v6438 = vadd.f32 %v6369, %v6437
  %v6439 = vpop.f32.mrf.mxu0
  %v6440 = vadd.f32 %v6371, %v6439
  %6441 = vmatmul.bf16.gmra.mxu0 %v5312
  %v6442 = vpop.f32.mrf.mxu0
  %v6443 = vadd.f32 %v6374, %v6442
  %v6444 = vpop.f32.mrf.mxu0
  %v6445 = vadd.f32 %v6376, %v6444
  %6446 = vmatmul.bf16.gmra.mxu0 %v5328
  %v6447 = vpop.f32.mrf.mxu0
  %v6448 = vadd.f32 %v6379, %v6447
  %v6449 = vpop.f32.mrf.mxu0
  %v6450 = vadd.f32 %v6381, %v6449
  %6451 = vmatmul.bf16.gmra.mxu0 %v5344
  %v6452 = vpop.f32.mrf.mxu0
  %v6453 = vadd.f32 %v6384, %v6452
  %v6454 = vpop.f32.mrf.mxu0
  %v6455 = vadd.f32 %v6386, %v6454
  %6456 = vdwg.mxu0
  %6457 = vmatpush.bf16.msra.mxu0 %v6086
  %6458 = vmatpush.bf16.msra.mxu0 %v6085
  %6459 = vmatpush.bf16.msra.mxu0 %v6084
  %6460 = vmatpush.bf16.msra.mxu0 %v6083
  %6461 = vmatpush.bf16.msra.mxu0 %v6082
  %6462 = vmatpush.bf16.msra.mxu0 %v6081
  %6463 = vmatpush.bf16.msra.mxu0 %v6080
  %6464 = vmatpush.bf16.msra.mxu0 %v6079
  %6465 = vmatmul.bf16.gmra.mxu0 %v5169
  %v6466 = vpop.f32.mrf.mxu0
  %v6467 = vadd.f32 %v6398, %v6466
  %v6468 = vpop.f32.mrf.mxu0
  %v6469 = vadd.f32 %v6400, %v6468
  %6470 = vmatmul.bf16.gmra.mxu0 %v5185
  %v6471 = vpop.f32.mrf.mxu0
  %v6472 = vadd.f32 %v6403, %v6471
  %v6473 = vpop.f32.mrf.mxu0
  %v6474 = vadd.f32 %v6405, %v6473
  %6475 = vmatmul.bf16.gmra.mxu0 %v5201
  %v6476 = vpop.f32.mrf.mxu0
  %v6477 = vadd.f32 %v6408, %v6476
  %v6478 = vpop.f32.mrf.mxu0
  %v6479 = vadd.f32 %v6410, %v6478
  %6480 = vmatmul.bf16.gmra.mxu0 %v5217
  %v6481 = vpop.f32.mrf.mxu0
  %v6482 = vadd.f32 %v6413, %v6481
  %v6483 = vpop.f32.mrf.mxu0
  %v6484 = vadd.f32 %v6415, %v6483
  %6485 = vmatmul.bf16.gmra.mxu0 %v5233
  %v6486 = vpop.f32.mrf.mxu0
  %v6487 = vadd.f32 %v6418, %v6486
  %v6488 = vpop.f32.mrf.mxu0
  %v6489 = vadd.f32 %v6420, %v6488
  %6490 = vmatmul.bf16.gmra.mxu0 %v5249
  %v6491 = vpop.f32.mrf.mxu0
  %v6492 = vadd.f32 %v6423, %v6491
  %v6493 = vpop.f32.mrf.mxu0
  %v6494 = vadd.f32 %v6425, %v6493
  %6495 = vmatmul.bf16.gmra.mxu0 %v5265
  %v6496 = vpop.f32.mrf.mxu0
  %v6497 = vadd.f32 %v6428, %v6496
  %v6498 = vpop.f32.mrf.mxu0
  %v6499 = vadd.f32 %v6430, %v6498
  %6500 = vmatmul.bf16.gmra.mxu0 %v5281
  %v6501 = vpop.f32.mrf.mxu0
  %v6502 = vadd.f32 %v6433, %v6501
  %v6503 = vpop.f32.mrf.mxu0
  %v6504 = vadd.f32 %v6435, %v6503
  %6505 = vmatmul.bf16.gmra.mxu0 %v5297
  %v6506 = vpop.f32.mrf.mxu0
  %v6507 = vadd.f32 %v6438, %v6506
  %v6508 = vpop.f32.mrf.mxu0
  %v6509 = vadd.f32 %v6440, %v6508
  %6510 = vmatmul.bf16.gmra.mxu0 %v5313
  %v6511 = vpop.f32.mrf.mxu0
  %v6512 = vadd.f32 %v6443, %v6511
  %v6513 = vpop.f32.mrf.mxu0
  %v6514 = vadd.f32 %v6445, %v6513
  %6515 = vmatmul.bf16.gmra.mxu0 %v5329
  %v6516 = vpop.f32.mrf.mxu0
  %v6517 = vadd.f32 %v6448, %v6516
  %v6518 = vpop.f32.mrf.mxu0
  %v6519 = vadd.f32 %v6450, %v6518
  %6520 = vmatmul.bf16.gmra.mxu0 %v5345
  %v6521 = vpop.f32.mrf.mxu0
  %v6522 = vadd.f32 %v6453, %v6521
  %v6523 = vpop.f32.mrf.mxu0
  %v6524 = vadd.f32 %v6455, %v6523
  %6525 = vdwg.mxu0
  %6526 = vmatpush.bf16.msra.mxu0 %v6094
  %6527 = vmatpush.bf16.msra.mxu0 %v6093
  %6528 = vmatpush.bf16.msra.mxu0 %v6092
  %6529 = vmatpush.bf16.msra.mxu0 %v6091
  %6530 = vmatpush.bf16.msra.mxu0 %v6090
  %6531 = vmatpush.bf16.msra.mxu0 %v6089
  %6532 = vmatpush.bf16.msra.mxu0 %v6088
  %6533 = vmatpush.bf16.msra.mxu0 %v6087
  %6534 = vmatmul.bf16.gmra.mxu0 %v5170
  %v6535 = vpop.f32.mrf.mxu0
  %v6536 = vadd.f32 %v6467, %v6535
  %v6537 = vpop.f32.mrf.mxu0
  %v6538 = vadd.f32 %v6469, %v6537
  %6539 = vmatmul.bf16.gmra.mxu0 %v5186
  %v6540 = vpop.f32.mrf.mxu0
  %v6541 = vadd.f32 %v6472, %v6540
  %v6542 = vpop.f32.mrf.mxu0
  %v6543 = vadd.f32 %v6474, %v6542
  %6544 = vmatmul.bf16.gmra.mxu0 %v5202
  %v6545 = vpop.f32.mrf.mxu0
  %v6546 = vadd.f32 %v6477, %v6545
  %v6547 = vpop.f32.mrf.mxu0
  %v6548 = vadd.f32 %v6479, %v6547
  %6549 = vmatmul.bf16.gmra.mxu0 %v5218
  %v6550 = vpop.f32.mrf.mxu0
  %v6551 = vadd.f32 %v6482, %v6550
  %v6552 = vpop.f32.mrf.mxu0
  %v6553 = vadd.f32 %v6484, %v6552
  %6554 = vmatmul.bf16.gmra.mxu0 %v5234
  %v6555 = vpop.f32.mrf.mxu0
  %v6556 = vadd.f32 %v6487, %v6555
  %v6557 = vpop.f32.mrf.mxu0
  %v6558 = vadd.f32 %v6489, %v6557
  %6559 = vmatmul.bf16.gmra.mxu0 %v5250
  %v6560 = vpop.f32.mrf.mxu0
  %v6561 = vadd.f32 %v6492, %v6560
  %v6562 = vpop.f32.mrf.mxu0
  %v6563 = vadd.f32 %v6494, %v6562
  %6564 = vmatmul.bf16.gmra.mxu0 %v5266
  %v6565 = vpop.f32.mrf.mxu0
  %v6566 = vadd.f32 %v6497, %v6565
  %v6567 = vpop.f32.mrf.mxu0
  %v6568 = vadd.f32 %v6499, %v6567
  %6569 = vmatmul.bf16.gmra.mxu0 %v5282
  %v6570 = vpop.f32.mrf.mxu0
  %v6571 = vadd.f32 %v6502, %v6570
  %v6572 = vpop.f32.mrf.mxu0
  %v6573 = vadd.f32 %v6504, %v6572
  %6574 = vmatmul.bf16.gmra.mxu0 %v5298
  %v6575 = vpop.f32.mrf.mxu0
  %v6576 = vadd.f32 %v6507, %v6575
  %v6577 = vpop.f32.mrf.mxu0
  %v6578 = vadd.f32 %v6509, %v6577
  %6579 = vmatmul.bf16.gmra.mxu0 %v5314
  %v6580 = vpop.f32.mrf.mxu0
  %v6581 = vadd.f32 %v6512, %v6580
  %v6582 = vpop.f32.mrf.mxu0
  %v6583 = vadd.f32 %v6514, %v6582
  %6584 = vmatmul.bf16.gmra.mxu0 %v5330
  %v6585 = vpop.f32.mrf.mxu0
  %v6586 = vadd.f32 %v6517, %v6585
  %v6587 = vpop.f32.mrf.mxu0
  %v6588 = vadd.f32 %v6519, %v6587
  %6589 = vmatmul.bf16.gmra.mxu0 %v5346
  %v6590 = vpop.f32.mrf.mxu0
  %v6591 = vadd.f32 %v6522, %v6590
  %v6592 = vpop.f32.mrf.mxu0
  %v6593 = vadd.f32 %v6524, %v6592
  %6594 = vdwg.mxu0
  %6595 = vmatpush.bf16.msra.mxu0 %v6102
  %6596 = vmatpush.bf16.msra.mxu0 %v6101
  %6597 = vmatpush.bf16.msra.mxu0 %v6100
  %6598 = vmatpush.bf16.msra.mxu0 %v6099
  %6599 = vmatpush.bf16.msra.mxu0 %v6098
  %6600 = vmatpush.bf16.msra.mxu0 %v6097
  %6601 = vmatpush.bf16.msra.mxu0 %v6096
  %6602 = vmatpush.bf16.msra.mxu0 %v6095
  %6603 = vmatmul.bf16.gmra.mxu0 %v5171
  %v6604 = vpop.f32.mrf.mxu0
  %v6605 = vadd.f32 %v6536, %v6604
  %v6606 = vpop.f32.mrf.mxu0
  %v6607 = vadd.f32 %v6538, %v6606
  %6608 = vmatmul.bf16.gmra.mxu0 %v5187
  %v6609 = vpop.f32.mrf.mxu0
  %v6610 = vadd.f32 %v6541, %v6609
  %v6611 = vpop.f32.mrf.mxu0
  %v6612 = vadd.f32 %v6543, %v6611
  %6613 = vmatmul.bf16.gmra.mxu0 %v5203
  %v6614 = vpop.f32.mrf.mxu0
  %v6615 = vadd.f32 %v6546, %v6614
  %v6616 = vpop.f32.mrf.mxu0
  %v6617 = vadd.f32 %v6548, %v6616
  %6618 = vmatmul.bf16.gmra.mxu0 %v5219
  %v6619 = vpop.f32.mrf.mxu0
  %v6620 = vadd.f32 %v6551, %v6619
  %v6621 = vpop.f32.mrf.mxu0
  %v6622 = vadd.f32 %v6553, %v6621
  %6623 = vmatmul.bf16.gmra.mxu0 %v5235
  %v6624 = vpop.f32.mrf.mxu0
  %v6625 = vadd.f32 %v6556, %v6624
  %v6626 = vpop.f32.mrf.mxu0
  %v6627 = vadd.f32 %v6558, %v6626
  %6628 = vmatmul.bf16.gmra.mxu0 %v5251
  %v6629 = vpop.f32.mrf.mxu0
  %v6630 = vadd.f32 %v6561, %v6629
  %v6631 = vpop.f32.mrf.mxu0
  %v6632 = vadd.f32 %v6563, %v6631
  %6633 = vmatmul.bf16.gmra.mxu0 %v5267
  %v6634 = vpop.f32.mrf.mxu0
  %v6635 = vadd.f32 %v6566, %v6634
  %v6636 = vpop.f32.mrf.mxu0
  %v6637 = vadd.f32 %v6568, %v6636
  %6638 = vmatmul.bf16.gmra.mxu0 %v5283
  %v6639 = vpop.f32.mrf.mxu0
  %v6640 = vadd.f32 %v6571, %v6639
  %v6641 = vpop.f32.mrf.mxu0
  %v6642 = vadd.f32 %v6573, %v6641
  %6643 = vmatmul.bf16.gmra.mxu0 %v5299
  %v6644 = vpop.f32.mrf.mxu0
  %v6645 = vadd.f32 %v6576, %v6644
  %v6646 = vpop.f32.mrf.mxu0
  %v6647 = vadd.f32 %v6578, %v6646
  %6648 = vmatmul.bf16.gmra.mxu0 %v5315
  %v6649 = vpop.f32.mrf.mxu0
  %v6650 = vadd.f32 %v6581, %v6649
  %v6651 = vpop.f32.mrf.mxu0
  %v6652 = vadd.f32 %v6583, %v6651
  %6653 = vmatmul.bf16.gmra.mxu0 %v5331
  %v6654 = vpop.f32.mrf.mxu0
  %v6655 = vadd.f32 %v6586, %v6654
  %v6656 = vpop.f32.mrf.mxu0
  %v6657 = vadd.f32 %v6588, %v6656
  %6658 = vmatmul.bf16.gmra.mxu0 %v5347
  %v6659 = vpop.f32.mrf.mxu0
  %v6660 = vadd.f32 %v6591, %v6659
  %v6661 = vpop.f32.mrf.mxu0
  %v6662 = vadd.f32 %v6593, %v6661
  %6663 = vdwg.mxu0
  %6664 = vmatpush.bf16.msra.mxu0 %v6110
  %6665 = vmatpush.bf16.msra.mxu0 %v6109
  %6666 = vmatpush.bf16.msra.mxu0 %v6108
  %6667 = vmatpush.bf16.msra.mxu0 %v6107
  %6668 = vmatpush.bf16.msra.mxu0 %v6106
  %6669 = vmatpush.bf16.msra.mxu0 %v6105
  %6670 = vmatpush.bf16.msra.mxu0 %v6104
  %6671 = vmatpush.bf16.msra.mxu0 %v6103
  %6672 = vmatmul.bf16.gmra.mxu0 %v5172
  %v6673 = vpop.f32.mrf.mxu0
  %v6674 = vadd.f32 %v6605, %v6673
  %v6675 = vpop.f32.mrf.mxu0
  %v6676 = vadd.f32 %v6607, %v6675
  %6677 = vmatmul.bf16.gmra.mxu0 %v5188
  %v6678 = vpop.f32.mrf.mxu0
  %v6679 = vadd.f32 %v6610, %v6678
  %v6680 = vpop.f32.mrf.mxu0
  %v6681 = vadd.f32 %v6612, %v6680
  %6682 = vmatmul.bf16.gmra.mxu0 %v5204
  %v6683 = vpop.f32.mrf.mxu0
  %v6684 = vadd.f32 %v6615, %v6683
  %v6685 = vpop.f32.mrf.mxu0
  %v6686 = vadd.f32 %v6617, %v6685
  %6687 = vmatmul.bf16.gmra.mxu0 %v5220
  %v6688 = vpop.f32.mrf.mxu0
  %v6689 = vadd.f32 %v6620, %v6688
  %v6690 = vpop.f32.mrf.mxu0
  %v6691 = vadd.f32 %v6622, %v6690
  %6692 = vmatmul.bf16.gmra.mxu0 %v5236
  %v6693 = vpop.f32.mrf.mxu0
  %v6694 = vadd.f32 %v6625, %v6693
  %v6695 = vpop.f32.mrf.mxu0
  %v6696 = vadd.f32 %v6627, %v6695
  %6697 = vmatmul.bf16.gmra.mxu0 %v5252
  %v6698 = vpop.f32.mrf.mxu0
  %v6699 = vadd.f32 %v6630, %v6698
  %v6700 = vpop.f32.mrf.mxu0
  %v6701 = vadd.f32 %v6632, %v6700
  %6702 = vmatmul.bf16.gmra.mxu0 %v5268
  %v6703 = vpop.f32.mrf.mxu0
  %v6704 = vadd.f32 %v6635, %v6703
  %v6705 = vpop.f32.mrf.mxu0
  %v6706 = vadd.f32 %v6637, %v6705
  %6707 = vmatmul.bf16.gmra.mxu0 %v5284
  %v6708 = vpop.f32.mrf.mxu0
  %v6709 = vadd.f32 %v6640, %v6708
  %v6710 = vpop.f32.mrf.mxu0
  %v6711 = vadd.f32 %v6642, %v6710
  %6712 = vmatmul.bf16.gmra.mxu0 %v5300
  %v6713 = vpop.f32.mrf.mxu0
  %v6714 = vadd.f32 %v6645, %v6713
  %v6715 = vpop.f32.mrf.mxu0
  %v6716 = vadd.f32 %v6647, %v6715
  %6717 = vmatmul.bf16.gmra.mxu0 %v5316
  %v6718 = vpop.f32.mrf.mxu0
  %v6719 = vadd.f32 %v6650, %v6718
  %v6720 = vpop.f32.mrf.mxu0
  %v6721 = vadd.f32 %v6652, %v6720
  %6722 = vmatmul.bf16.gmra.mxu0 %v5332
  %v6723 = vpop.f32.mrf.mxu0
  %v6724 = vadd.f32 %v6655, %v6723
  %v6725 = vpop.f32.mrf.mxu0
  %v6726 = vadd.f32 %v6657, %v6725
  %6727 = vmatmul.bf16.gmra.mxu0 %v5348
  %v6728 = vpop.f32.mrf.mxu0
  %v6729 = vadd.f32 %v6660, %v6728
  %v6730 = vpop.f32.mrf.mxu0
  %v6731 = vadd.f32 %v6662, %v6730
  %6732 = vdwg.mxu0
  %6733 = vmatpush.bf16.msra.mxu0 %v6118
  %6734 = vmatpush.bf16.msra.mxu0 %v6117
  %6735 = vmatpush.bf16.msra.mxu0 %v6116
  %6736 = vmatpush.bf16.msra.mxu0 %v6115
  %6737 = vmatpush.bf16.msra.mxu0 %v6114
  %6738 = vmatpush.bf16.msra.mxu0 %v6113
  %6739 = vmatpush.bf16.msra.mxu0 %v6112
  %6740 = vmatpush.bf16.msra.mxu0 %v6111
  %6741 = vmatmul.bf16.gmra.mxu0 %v5173
  %v6742 = vpop.f32.mrf.mxu0
  %v6743 = vadd.f32 %v6674, %v6742
  %v6744 = vpop.f32.mrf.mxu0
  %v6745 = vadd.f32 %v6676, %v6744
  %6746 = vmatmul.bf16.gmra.mxu0 %v5189
  %v6747 = vpop.f32.mrf.mxu0
  %v6748 = vadd.f32 %v6679, %v6747
  %v6749 = vpop.f32.mrf.mxu0
  %v6750 = vadd.f32 %v6681, %v6749
  %6751 = vmatmul.bf16.gmra.mxu0 %v5205
  %v6752 = vpop.f32.mrf.mxu0
  %v6753 = vadd.f32 %v6684, %v6752
  %v6754 = vpop.f32.mrf.mxu0
  %v6755 = vadd.f32 %v6686, %v6754
  %6756 = vmatmul.bf16.gmra.mxu0 %v5221
  %v6757 = vpop.f32.mrf.mxu0
  %v6758 = vadd.f32 %v6689, %v6757
  %v6759 = vpop.f32.mrf.mxu0
  %v6760 = vadd.f32 %v6691, %v6759
  %6761 = vmatmul.bf16.gmra.mxu0 %v5237
  %v6762 = vpop.f32.mrf.mxu0
  %v6763 = vadd.f32 %v6694, %v6762
  %v6764 = vpop.f32.mrf.mxu0
  %v6765 = vadd.f32 %v6696, %v6764
  %6766 = vmatmul.bf16.gmra.mxu0 %v5253
  %v6767 = vpop.f32.mrf.mxu0
  %v6768 = vadd.f32 %v6699, %v6767
  %v6769 = vpop.f32.mrf.mxu0
  %v6770 = vadd.f32 %v6701, %v6769
  %6771 = vmatmul.bf16.gmra.mxu0 %v5269
  %v6772 = vpop.f32.mrf.mxu0
  %v6773 = vadd.f32 %v6704, %v6772
  %v6774 = vpop.f32.mrf.mxu0
  %v6775 = vadd.f32 %v6706, %v6774
  %6776 = vmatmul.bf16.gmra.mxu0 %v5285
  %v6777 = vpop.f32.mrf.mxu0
  %v6778 = vadd.f32 %v6709, %v6777
  %v6779 = vpop.f32.mrf.mxu0
  %v6780 = vadd.f32 %v6711, %v6779
  %6781 = vmatmul.bf16.gmra.mxu0 %v5301
  %v6782 = vpop.f32.mrf.mxu0
  %v6783 = vadd.f32 %v6714, %v6782
  %v6784 = vpop.f32.mrf.mxu0
  %v6785 = vadd.f32 %v6716, %v6784
  %6786 = vmatmul.bf16.gmra.mxu0 %v5317
  %v6787 = vpop.f32.mrf.mxu0
  %v6788 = vadd.f32 %v6719, %v6787
  %v6789 = vpop.f32.mrf.mxu0
  %v6790 = vadd.f32 %v6721, %v6789
  %6791 = vmatmul.bf16.gmra.mxu0 %v5333
  %v6792 = vpop.f32.mrf.mxu0
  %v6793 = vadd.f32 %v6724, %v6792
  %v6794 = vpop.f32.mrf.mxu0
  %v6795 = vadd.f32 %v6726, %v6794
  %6796 = vmatmul.bf16.gmra.mxu0 %v5349
  %v6797 = vpop.f32.mrf.mxu0
  %v6798 = vadd.f32 %v6729, %v6797
  %v6799 = vpop.f32.mrf.mxu0
  %v6800 = vadd.f32 %v6731, %v6799
  %6801 = vdwg.mxu0
  %6802 = vmatpush.bf16.msra.mxu0 %v6126
  %6803 = vmatpush.bf16.msra.mxu0 %v6125
  %6804 = vmatpush.bf16.msra.mxu0 %v6124
  %6805 = vmatpush.bf16.msra.mxu0 %v6123
  %6806 = vmatpush.bf16.msra.mxu0 %v6122
  %6807 = vmatpush.bf16.msra.mxu0 %v6121
  %6808 = vmatpush.bf16.msra.mxu0 %v6120
  %6809 = vmatpush.bf16.msra.mxu0 %v6119
  %6810 = vmatmul.bf16.gmra.mxu0 %v5174
  %v6811 = vpop.f32.mrf.mxu0
  %v6812 = vadd.f32 %v6743, %v6811
  %v6813 = vpop.f32.mrf.mxu0
  %v6814 = vadd.f32 %v6745, %v6813
  %6815 = vmatmul.bf16.gmra.mxu0 %v5190
  %v6816 = vpop.f32.mrf.mxu0
  %v6817 = vadd.f32 %v6748, %v6816
  %v6818 = vpop.f32.mrf.mxu0
  %v6819 = vadd.f32 %v6750, %v6818
  %6820 = vmatmul.bf16.gmra.mxu0 %v5206
  %v6821 = vpop.f32.mrf.mxu0
  %v6822 = vadd.f32 %v6753, %v6821
  %v6823 = vpop.f32.mrf.mxu0
  %v6824 = vadd.f32 %v6755, %v6823
  %6825 = vmatmul.bf16.gmra.mxu0 %v5222
  %v6826 = vpop.f32.mrf.mxu0
  %v6827 = vadd.f32 %v6758, %v6826
  %v6828 = vpop.f32.mrf.mxu0
  %v6829 = vadd.f32 %v6760, %v6828
  %6830 = vmatmul.bf16.gmra.mxu0 %v5238
  %v6831 = vpop.f32.mrf.mxu0
  %v6832 = vadd.f32 %v6763, %v6831
  %v6833 = vpop.f32.mrf.mxu0
  %v6834 = vadd.f32 %v6765, %v6833
  %6835 = vmatmul.bf16.gmra.mxu0 %v5254
  %v6836 = vpop.f32.mrf.mxu0
  %v6837 = vadd.f32 %v6768, %v6836
  %v6838 = vpop.f32.mrf.mxu0
  %v6839 = vadd.f32 %v6770, %v6838
  %6840 = vmatmul.bf16.gmra.mxu0 %v5270
  %v6841 = vpop.f32.mrf.mxu0
  %v6842 = vadd.f32 %v6773, %v6841
  %v6843 = vpop.f32.mrf.mxu0
  %v6844 = vadd.f32 %v6775, %v6843
  %6845 = vmatmul.bf16.gmra.mxu0 %v5286
  %v6846 = vpop.f32.mrf.mxu0
  %v6847 = vadd.f32 %v6778, %v6846
  %v6848 = vpop.f32.mrf.mxu0
  %v6849 = vadd.f32 %v6780, %v6848
  %6850 = vmatmul.bf16.gmra.mxu0 %v5302
  %v6851 = vpop.f32.mrf.mxu0
  %v6852 = vadd.f32 %v6783, %v6851
  %v6853 = vpop.f32.mrf.mxu0
  %v6854 = vadd.f32 %v6785, %v6853
  %6855 = vmatmul.bf16.gmra.mxu0 %v5318
  %v6856 = vpop.f32.mrf.mxu0
  %v6857 = vadd.f32 %v6788, %v6856
  %v6858 = vpop.f32.mrf.mxu0
  %v6859 = vadd.f32 %v6790, %v6858
  %6860 = vmatmul.bf16.gmra.mxu0 %v5334
  %v6861 = vpop.f32.mrf.mxu0
  %v6862 = vadd.f32 %v6793, %v6861
  %v6863 = vpop.f32.mrf.mxu0
  %v6864 = vadd.f32 %v6795, %v6863
  %6865 = vmatmul.bf16.gmra.mxu0 %v5350
  %v6866 = vpop.f32.mrf.mxu0
  %v6867 = vadd.f32 %v6798, %v6866
  %v6868 = vpop.f32.mrf.mxu0
  %v6869 = vadd.f32 %v6800, %v6868
  %6870 = vdwg.mxu0
  %6871 = vmatpush.bf16.msra.mxu0 %v6134
  %6872 = vmatpush.bf16.msra.mxu0 %v6133
  %6873 = vmatpush.bf16.msra.mxu0 %v6132
  %6874 = vmatpush.bf16.msra.mxu0 %v6131
  %6875 = vmatpush.bf16.msra.mxu0 %v6130
  %6876 = vmatpush.bf16.msra.mxu0 %v6129
  %6877 = vmatpush.bf16.msra.mxu0 %v6128
  %6878 = vmatpush.bf16.msra.mxu0 %v6127
  %6879 = vmatmul.bf16.gmra.mxu0 %v5175
  %v6880 = vpop.f32.mrf.mxu0
  %v6881 = vadd.f32 %v6812, %v6880
  %v6882 = vpop.f32.mrf.mxu0
  %v6883 = vadd.f32 %v6814, %v6882
  %6884 = vmatmul.bf16.gmra.mxu0 %v5191
  %v6885 = vpop.f32.mrf.mxu0
  %v6886 = vadd.f32 %v6817, %v6885
  %v6887 = vpop.f32.mrf.mxu0
  %v6888 = vadd.f32 %v6819, %v6887
  %6889 = vmatmul.bf16.gmra.mxu0 %v5207
  %v6890 = vpop.f32.mrf.mxu0
  %v6891 = vadd.f32 %v6822, %v6890
  %v6892 = vpop.f32.mrf.mxu0
  %v6893 = vadd.f32 %v6824, %v6892
  %6894 = vmatmul.bf16.gmra.mxu0 %v5223
  %v6895 = vpop.f32.mrf.mxu0
  %v6896 = vadd.f32 %v6827, %v6895
  %v6897 = vpop.f32.mrf.mxu0
  %v6898 = vadd.f32 %v6829, %v6897
  %6899 = vmatmul.bf16.gmra.mxu0 %v5239
  %v6900 = vpop.f32.mrf.mxu0
  %v6901 = vadd.f32 %v6832, %v6900
  %v6902 = vpop.f32.mrf.mxu0
  %v6903 = vadd.f32 %v6834, %v6902
  %6904 = vmatmul.bf16.gmra.mxu0 %v5255
  %v6905 = vpop.f32.mrf.mxu0
  %v6906 = vadd.f32 %v6837, %v6905
  %v6907 = vpop.f32.mrf.mxu0
  %v6908 = vadd.f32 %v6839, %v6907
  %6909 = vmatmul.bf16.gmra.mxu0 %v5271
  %v6910 = vpop.f32.mrf.mxu0
  %v6911 = vadd.f32 %v6842, %v6910
  %v6912 = vpop.f32.mrf.mxu0
  %v6913 = vadd.f32 %v6844, %v6912
  %6914 = vmatmul.bf16.gmra.mxu0 %v5287
  %v6915 = vpop.f32.mrf.mxu0
  %v6916 = vadd.f32 %v6847, %v6915
  %v6917 = vpop.f32.mrf.mxu0
  %v6918 = vadd.f32 %v6849, %v6917
  %6919 = vmatmul.bf16.gmra.mxu0 %v5303
  %v6920 = vpop.f32.mrf.mxu0
  %v6921 = vadd.f32 %v6852, %v6920
  %v6922 = vpop.f32.mrf.mxu0
  %v6923 = vadd.f32 %v6854, %v6922
  %6924 = vmatmul.bf16.gmra.mxu0 %v5319
  %v6925 = vpop.f32.mrf.mxu0
  %v6926 = vadd.f32 %v6857, %v6925
  %v6927 = vpop.f32.mrf.mxu0
  %v6928 = vadd.f32 %v6859, %v6927
  %6929 = vmatmul.bf16.gmra.mxu0 %v5335
  %v6930 = vpop.f32.mrf.mxu0
  %v6931 = vadd.f32 %v6862, %v6930
  %v6932 = vpop.f32.mrf.mxu0
  %v6933 = vadd.f32 %v6864, %v6932
  %6934 = vmatmul.bf16.gmra.mxu0 %v5351
  %v6935 = vpop.f32.mrf.mxu0
  %v6936 = vadd.f32 %v6867, %v6935
  %v6937 = vpop.f32.mrf.mxu0
  %v6938 = vadd.f32 %v6869, %v6937
  %6939 = vdwg.mxu0
  %6940 = vmatpush.bf16.msra.mxu0 %v6142
  %6941 = vmatpush.bf16.msra.mxu0 %v6141
  %6942 = vmatpush.bf16.msra.mxu0 %v6140
  %6943 = vmatpush.bf16.msra.mxu0 %v6139
  %6944 = vmatpush.bf16.msra.mxu0 %v6138
  %6945 = vmatpush.bf16.msra.mxu0 %v6137
  %6946 = vmatpush.bf16.msra.mxu0 %v6136
  %6947 = vmatpush.bf16.msra.mxu0 %v6135
  %6948 = vmatmul.bf16.gmra.mxu0 %v5176
  %v6949 = vpop.f32.mrf.mxu0
  %v6950 = vadd.f32 %v6881, %v6949
  %v6951 = vpop.f32.mrf.mxu0
  %v6952 = vadd.f32 %v6883, %v6951
  %6953 = vmatmul.bf16.gmra.mxu0 %v5192
  %v6954 = vpop.f32.mrf.mxu0
  %v6955 = vadd.f32 %v6886, %v6954
  %v6956 = vpop.f32.mrf.mxu0
  %v6957 = vadd.f32 %v6888, %v6956
  %6958 = vmatmul.bf16.gmra.mxu0 %v5208
  %v6959 = vpop.f32.mrf.mxu0
  %v6960 = vadd.f32 %v6891, %v6959
  %v6961 = vpop.f32.mrf.mxu0
  %v6962 = vadd.f32 %v6893, %v6961
  %6963 = vmatmul.bf16.gmra.mxu0 %v5224
  %v6964 = vpop.f32.mrf.mxu0
  %v6965 = vadd.f32 %v6896, %v6964
  %v6966 = vpop.f32.mrf.mxu0
  %v6967 = vadd.f32 %v6898, %v6966
  %6968 = vmatmul.bf16.gmra.mxu0 %v5240
  %v6969 = vpop.f32.mrf.mxu0
  %v6970 = vadd.f32 %v6901, %v6969
  %v6971 = vpop.f32.mrf.mxu0
  %v6972 = vadd.f32 %v6903, %v6971
  %6973 = vmatmul.bf16.gmra.mxu0 %v5256
  %v6974 = vpop.f32.mrf.mxu0
  %v6975 = vadd.f32 %v6906, %v6974
  %v6976 = vpop.f32.mrf.mxu0
  %v6977 = vadd.f32 %v6908, %v6976
  %6978 = vmatmul.bf16.gmra.mxu0 %v5272
  %v6979 = vpop.f32.mrf.mxu0
  %v6980 = vadd.f32 %v6911, %v6979
  %v6981 = vpop.f32.mrf.mxu0
  %v6982 = vadd.f32 %v6913, %v6981
  %6983 = vmatmul.bf16.gmra.mxu0 %v5288
  %v6984 = vpop.f32.mrf.mxu0
  %v6985 = vadd.f32 %v6916, %v6984
  %v6986 = vpop.f32.mrf.mxu0
  %v6987 = vadd.f32 %v6918, %v6986
  %6988 = vmatmul.bf16.gmra.mxu0 %v5304
  %v6989 = vpop.f32.mrf.mxu0
  %v6990 = vadd.f32 %v6921, %v6989
  %v6991 = vpop.f32.mrf.mxu0
  %v6992 = vadd.f32 %v6923, %v6991
  %6993 = vmatmul.bf16.gmra.mxu0 %v5320
  %v6994 = vpop.f32.mrf.mxu0
  %v6995 = vadd.f32 %v6926, %v6994
  %v6996 = vpop.f32.mrf.mxu0
  %v6997 = vadd.f32 %v6928, %v6996
  %6998 = vmatmul.bf16.gmra.mxu0 %v5336
  %v6999 = vpop.f32.mrf.mxu0
  %v7000 = vadd.f32 %v6931, %v6999
  %v7001 = vpop.f32.mrf.mxu0
  %v7002 = vadd.f32 %v6933, %v7001
  %7003 = vmatmul.bf16.gmra.mxu0 %v5352
  %v7004 = vpop.f32.mrf.mxu0
  %v7005 = vadd.f32 %v6936, %v7004
  %v7006 = vpop.f32.mrf.mxu0
  %v7007 = vadd.f32 %v6938, %v7006
  %7008 = vdwg.mxu0
  %7009 = vmatpush.bf16.msra.mxu0 %v6150
  %7010 = vmatpush.bf16.msra.mxu0 %v6149
  %7011 = vmatpush.bf16.msra.mxu0 %v6148
  %7012 = vmatpush.bf16.msra.mxu0 %v6147
  %7013 = vmatpush.bf16.msra.mxu0 %v6146
  %7014 = vmatpush.bf16.msra.mxu0 %v6145
  %7015 = vmatpush.bf16.msra.mxu0 %v6144
  %7016 = vmatpush.bf16.msra.mxu0 %v6143
  %7017 = vmatmul.bf16.gmra.mxu0 %v5177
  %v7018 = vpop.f32.mrf.mxu0
  %v7019 = vadd.f32 %v6950, %v7018
  %v7020 = vpop.f32.mrf.mxu0
  %v7021 = vadd.f32 %v6952, %v7020
  %7022 = vmatmul.bf16.gmra.mxu0 %v5193
  %v7023 = vpop.f32.mrf.mxu0
  %v7024 = vadd.f32 %v6955, %v7023
  %v7025 = vpop.f32.mrf.mxu0
  %v7026 = vadd.f32 %v6957, %v7025
  %7027 = vmatmul.bf16.gmra.mxu0 %v5209
  %v7028 = vpop.f32.mrf.mxu0
  %v7029 = vadd.f32 %v6960, %v7028
  %v7030 = vpop.f32.mrf.mxu0
  %v7031 = vadd.f32 %v6962, %v7030
  %7032 = vmatmul.bf16.gmra.mxu0 %v5225
  %v7033 = vpop.f32.mrf.mxu0
  %v7034 = vadd.f32 %v6965, %v7033
  %v7035 = vpop.f32.mrf.mxu0
  %v7036 = vadd.f32 %v6967, %v7035
  %7037 = vmatmul.bf16.gmra.mxu0 %v5241
  %v7038 = vpop.f32.mrf.mxu0
  %v7039 = vadd.f32 %v6970, %v7038
  %v7040 = vpop.f32.mrf.mxu0
  %v7041 = vadd.f32 %v6972, %v7040
  %7042 = vmatmul.bf16.gmra.mxu0 %v5257
  %v7043 = vpop.f32.mrf.mxu0
  %v7044 = vadd.f32 %v6975, %v7043
  %v7045 = vpop.f32.mrf.mxu0
  %v7046 = vadd.f32 %v6977, %v7045
  %7047 = vmatmul.bf16.gmra.mxu0 %v5273
  %v7048 = vpop.f32.mrf.mxu0
  %v7049 = vadd.f32 %v6980, %v7048
  %v7050 = vpop.f32.mrf.mxu0
  %v7051 = vadd.f32 %v6982, %v7050
  %7052 = vmatmul.bf16.gmra.mxu0 %v5289
  %v7053 = vpop.f32.mrf.mxu0
  %v7054 = vadd.f32 %v6985, %v7053
  %v7055 = vpop.f32.mrf.mxu0
  %v7056 = vadd.f32 %v6987, %v7055
  %7057 = vmatmul.bf16.gmra.mxu0 %v5305
  %v7058 = vpop.f32.mrf.mxu0
  %v7059 = vadd.f32 %v6990, %v7058
  %v7060 = vpop.f32.mrf.mxu0
  %v7061 = vadd.f32 %v6992, %v7060
  %7062 = vmatmul.bf16.gmra.mxu0 %v5321
  %v7063 = vpop.f32.mrf.mxu0
  %v7064 = vadd.f32 %v6995, %v7063
  %v7065 = vpop.f32.mrf.mxu0
  %v7066 = vadd.f32 %v6997, %v7065
  %7067 = vmatmul.bf16.gmra.mxu0 %v5337
  %v7068 = vpop.f32.mrf.mxu0
  %v7069 = vadd.f32 %v7000, %v7068
  %v7070 = vpop.f32.mrf.mxu0
  %v7071 = vadd.f32 %v7002, %v7070
  %7072 = vmatmul.bf16.gmra.mxu0 %v5353
  %v7073 = vpop.f32.mrf.mxu0
  %v7074 = vadd.f32 %v7005, %v7073
  %v7075 = vpop.f32.mrf.mxu0
  %v7076 = vadd.f32 %v7007, %v7075
  %7077 = vdwg.mxu0
  %7078 = vmatpush.bf16.msra.mxu0 %v6158
  %7079 = vmatpush.bf16.msra.mxu0 %v6157
  %7080 = vmatpush.bf16.msra.mxu0 %v6156
  %7081 = vmatpush.bf16.msra.mxu0 %v6155
  %7082 = vmatpush.bf16.msra.mxu0 %v6154
  %7083 = vmatpush.bf16.msra.mxu0 %v6153
  %7084 = vmatpush.bf16.msra.mxu0 %v6152
  %7085 = vmatpush.bf16.msra.mxu0 %v6151
  %7086 = vmatmul.bf16.gmra.mxu0 %v5178
  %v7087 = vpop.f32.mrf.mxu0
  %v7088 = vadd.f32 %v7019, %v7087
  %v7089 = vpop.f32.mrf.mxu0
  %v7090 = vadd.f32 %v7021, %v7089
  %7091 = vmatmul.bf16.gmra.mxu0 %v5194
  %v7092 = vpop.f32.mrf.mxu0
  %v7093 = vadd.f32 %v7024, %v7092
  %v7094 = vpop.f32.mrf.mxu0
  %v7095 = vadd.f32 %v7026, %v7094
  %7096 = vmatmul.bf16.gmra.mxu0 %v5210
  %v7097 = vpop.f32.mrf.mxu0
  %v7098 = vadd.f32 %v7029, %v7097
  %v7099 = vpop.f32.mrf.mxu0
  %v7100 = vadd.f32 %v7031, %v7099
  %7101 = vmatmul.bf16.gmra.mxu0 %v5226
  %v7102 = vpop.f32.mrf.mxu0
  %v7103 = vadd.f32 %v7034, %v7102
  %v7104 = vpop.f32.mrf.mxu0
  %v7105 = vadd.f32 %v7036, %v7104
  %7106 = vmatmul.bf16.gmra.mxu0 %v5242
  %v7107 = vpop.f32.mrf.mxu0
  %v7108 = vadd.f32 %v7039, %v7107
  %v7109 = vpop.f32.mrf.mxu0
  %v7110 = vadd.f32 %v7041, %v7109
  %7111 = vmatmul.bf16.gmra.mxu0 %v5258
  %v7112 = vpop.f32.mrf.mxu0
  %v7113 = vadd.f32 %v7044, %v7112
  %v7114 = vpop.f32.mrf.mxu0
  %v7115 = vadd.f32 %v7046, %v7114
  %7116 = vmatmul.bf16.gmra.mxu0 %v5274
  %v7117 = vpop.f32.mrf.mxu0
  %v7118 = vadd.f32 %v7049, %v7117
  %v7119 = vpop.f32.mrf.mxu0
  %v7120 = vadd.f32 %v7051, %v7119
  %7121 = vmatmul.bf16.gmra.mxu0 %v5290
  %v7122 = vpop.f32.mrf.mxu0
  %v7123 = vadd.f32 %v7054, %v7122
  %v7124 = vpop.f32.mrf.mxu0
  %v7125 = vadd.f32 %v7056, %v7124
  %7126 = vmatmul.bf16.gmra.mxu0 %v5306
  %v7127 = vpop.f32.mrf.mxu0
  %v7128 = vadd.f32 %v7059, %v7127
  %v7129 = vpop.f32.mrf.mxu0
  %v7130 = vadd.f32 %v7061, %v7129
  %7131 = vmatmul.bf16.gmra.mxu0 %v5322
  %v7132 = vpop.f32.mrf.mxu0
  %v7133 = vadd.f32 %v7064, %v7132
  %v7134 = vpop.f32.mrf.mxu0
  %v7135 = vadd.f32 %v7066, %v7134
  %7136 = vmatmul.bf16.gmra.mxu0 %v5338
  %v7137 = vpop.f32.mrf.mxu0
  %v7138 = vadd.f32 %v7069, %v7137
  %v7139 = vpop.f32.mrf.mxu0
  %v7140 = vadd.f32 %v7071, %v7139
  %7141 = vmatmul.bf16.gmra.mxu0 %v5354
  %v7142 = vpop.f32.mrf.mxu0
  %v7143 = vadd.f32 %v7074, %v7142
  %v7144 = vpop.f32.mrf.mxu0
  %v7145 = vadd.f32 %v7076, %v7144
  %7146 = vdwg.mxu0
  %7147 = vmatpush.bf16.msra.mxu0 %v6166
  %7148 = vmatpush.bf16.msra.mxu0 %v6165
  %7149 = vmatpush.bf16.msra.mxu0 %v6164
  %7150 = vmatpush.bf16.msra.mxu0 %v6163
  %7151 = vmatpush.bf16.msra.mxu0 %v6162
  %7152 = vmatpush.bf16.msra.mxu0 %v6161
  %7153 = vmatpush.bf16.msra.mxu0 %v6160
  %7154 = vmatpush.bf16.msra.mxu0 %v6159
  %7155 = vmatmul.bf16.gmra.mxu0 %v5179
  %v7156 = vpop.f32.mrf.mxu0
  %v7157 = vadd.f32 %v7088, %v7156
  %v7158 = vpop.f32.mrf.mxu0
  %v7159 = vadd.f32 %v7090, %v7158
  %7160 = vmatmul.bf16.gmra.mxu0 %v5195
  %v7161 = vpop.f32.mrf.mxu0
  %v7162 = vadd.f32 %v7093, %v7161
  %v7163 = vpop.f32.mrf.mxu0
  %v7164 = vadd.f32 %v7095, %v7163
  %7165 = vmatmul.bf16.gmra.mxu0 %v5211
  %v7166 = vpop.f32.mrf.mxu0
  %v7167 = vadd.f32 %v7098, %v7166
  %v7168 = vpop.f32.mrf.mxu0
  %v7169 = vadd.f32 %v7100, %v7168
  %7170 = vmatmul.bf16.gmra.mxu0 %v5227
  %v7171 = vpop.f32.mrf.mxu0
  %v7172 = vadd.f32 %v7103, %v7171
  %v7173 = vpop.f32.mrf.mxu0
  %v7174 = vadd.f32 %v7105, %v7173
  %7175 = vmatmul.bf16.gmra.mxu0 %v5243
  %v7176 = vpop.f32.mrf.mxu0
  %v7177 = vadd.f32 %v7108, %v7176
  %v7178 = vpop.f32.mrf.mxu0
  %v7179 = vadd.f32 %v7110, %v7178
  %7180 = vmatmul.bf16.gmra.mxu0 %v5259
  %v7181 = vpop.f32.mrf.mxu0
  %v7182 = vadd.f32 %v7113, %v7181
  %v7183 = vpop.f32.mrf.mxu0
  %v7184 = vadd.f32 %v7115, %v7183
  %7185 = vmatmul.bf16.gmra.mxu0 %v5275
  %v7186 = vpop.f32.mrf.mxu0
  %v7187 = vadd.f32 %v7118, %v7186
  %v7188 = vpop.f32.mrf.mxu0
  %v7189 = vadd.f32 %v7120, %v7188
  %7190 = vmatmul.bf16.gmra.mxu0 %v5291
  %v7191 = vpop.f32.mrf.mxu0
  %v7192 = vadd.f32 %v7123, %v7191
  %v7193 = vpop.f32.mrf.mxu0
  %v7194 = vadd.f32 %v7125, %v7193
  %7195 = vmatmul.bf16.gmra.mxu0 %v5307
  %v7196 = vpop.f32.mrf.mxu0
  %v7197 = vadd.f32 %v7128, %v7196
  %v7198 = vpop.f32.mrf.mxu0
  %v7199 = vadd.f32 %v7130, %v7198
  %7200 = vmatmul.bf16.gmra.mxu0 %v5323
  %v7201 = vpop.f32.mrf.mxu0
  %v7202 = vadd.f32 %v7133, %v7201
  %v7203 = vpop.f32.mrf.mxu0
  %v7204 = vadd.f32 %v7135, %v7203
  %7205 = vmatmul.bf16.gmra.mxu0 %v5339
  %v7206 = vpop.f32.mrf.mxu0
  %v7207 = vadd.f32 %v7138, %v7206
  %v7208 = vpop.f32.mrf.mxu0
  %v7209 = vadd.f32 %v7140, %v7208
  %7210 = vmatmul.bf16.gmra.mxu0 %v5355
  %v7211 = vpop.f32.mrf.mxu0
  %v7212 = vadd.f32 %v7143, %v7211
  %v7213 = vpop.f32.mrf.mxu0
  %v7214 = vadd.f32 %v7145, %v7213
  %7215 = vdwg.mxu0
  %7216 = vmatpush.bf16.msra.mxu0 %v6174
  %7217 = vmatpush.bf16.msra.mxu0 %v6173
  %7218 = vmatpush.bf16.msra.mxu0 %v6172
  %7219 = vmatpush.bf16.msra.mxu0 %v6171
  %7220 = vmatpush.bf16.msra.mxu0 %v6170
  %7221 = vmatpush.bf16.msra.mxu0 %v6169
  %7222 = vmatpush.bf16.msra.mxu0 %v6168
  %7223 = vmatpush.bf16.msra.mxu0 %v6167
  %7224 = vmatmul.bf16.gmra.mxu0 %v5180
  %v7225 = vpop.f32.mrf.mxu0
  %v7226 = vadd.f32 %v7157, %v7225
  %v7227 = vpop.f32.mrf.mxu0
  %v7228 = vadd.f32 %v7159, %v7227
  %7229 = vmatmul.bf16.gmra.mxu0 %v5196
  %v7230 = vpop.f32.mrf.mxu0
  %v7231 = vadd.f32 %v7162, %v7230
  %v7232 = vpop.f32.mrf.mxu0
  %v7233 = vadd.f32 %v7164, %v7232
  %7234 = vmatmul.bf16.gmra.mxu0 %v5212
  %v7235 = vpop.f32.mrf.mxu0
  %v7236 = vadd.f32 %v7167, %v7235
  %v7237 = vpop.f32.mrf.mxu0
  %v7238 = vadd.f32 %v7169, %v7237
  %7239 = vmatmul.bf16.gmra.mxu0 %v5228
  %v7240 = vpop.f32.mrf.mxu0
  %v7241 = vadd.f32 %v7172, %v7240
  %v7242 = vpop.f32.mrf.mxu0
  %v7243 = vadd.f32 %v7174, %v7242
  %7244 = vmatmul.bf16.gmra.mxu0 %v5244
  %v7245 = vpop.f32.mrf.mxu0
  %v7246 = vadd.f32 %v7177, %v7245
  %v7247 = vpop.f32.mrf.mxu0
  %v7248 = vadd.f32 %v7179, %v7247
  %7249 = vmatmul.bf16.gmra.mxu0 %v5260
  %v7250 = vpop.f32.mrf.mxu0
  %v7251 = vadd.f32 %v7182, %v7250
  %v7252 = vpop.f32.mrf.mxu0
  %v7253 = vadd.f32 %v7184, %v7252
  %7254 = vmatmul.bf16.gmra.mxu0 %v5276
  %v7255 = vpop.f32.mrf.mxu0
  %v7256 = vadd.f32 %v7187, %v7255
  %v7257 = vpop.f32.mrf.mxu0
  %v7258 = vadd.f32 %v7189, %v7257
  %7259 = vmatmul.bf16.gmra.mxu0 %v5292
  %v7260 = vpop.f32.mrf.mxu0
  %v7261 = vadd.f32 %v7192, %v7260
  %v7262 = vpop.f32.mrf.mxu0
  %v7263 = vadd.f32 %v7194, %v7262
  %7264 = vmatmul.bf16.gmra.mxu0 %v5308
  %v7265 = vpop.f32.mrf.mxu0
  %v7266 = vadd.f32 %v7197, %v7265
  %v7267 = vpop.f32.mrf.mxu0
  %v7268 = vadd.f32 %v7199, %v7267
  %7269 = vmatmul.bf16.gmra.mxu0 %v5324
  %v7270 = vpop.f32.mrf.mxu0
  %v7271 = vadd.f32 %v7202, %v7270
  %v7272 = vpop.f32.mrf.mxu0
  %v7273 = vadd.f32 %v7204, %v7272
  %7274 = vmatmul.bf16.gmra.mxu0 %v5340
  %v7275 = vpop.f32.mrf.mxu0
  %v7276 = vadd.f32 %v7207, %v7275
  %v7277 = vpop.f32.mrf.mxu0
  %v7278 = vadd.f32 %v7209, %v7277
  %7279 = vmatmul.bf16.gmra.mxu0 %v5356
  %v7280 = vpop.f32.mrf.mxu0
  %v7281 = vadd.f32 %v7212, %v7280
  %v7282 = vpop.f32.mrf.mxu0
  %v7283 = vadd.f32 %v7214, %v7282
  %7284 = vdwg.mxu0
  %7285 = vmatpush.bf16.msra.mxu0 %v6182
  %7286 = vmatpush.bf16.msra.mxu0 %v6181
  %7287 = vmatpush.bf16.msra.mxu0 %v6180
  %7288 = vmatpush.bf16.msra.mxu0 %v6179
  %7289 = vmatpush.bf16.msra.mxu0 %v6178
  %7290 = vmatpush.bf16.msra.mxu0 %v6177
  %7291 = vmatpush.bf16.msra.mxu0 %v6176
  %7292 = vmatpush.bf16.msra.mxu0 %v6175
  %7293 = vmatmul.bf16.gmra.mxu0 %v5181
  %v7294 = vpop.f32.mrf.mxu0
  %v7295 = vadd.f32 %v7226, %v7294
  %v7296 = vpop.f32.mrf.mxu0
  %v7297 = vadd.f32 %v7228, %v7296
  %7298 = vmatmul.bf16.gmra.mxu0 %v5197
  %v7299 = vpop.f32.mrf.mxu0
  %v7300 = vadd.f32 %v7231, %v7299
  %v7301 = vpop.f32.mrf.mxu0
  %v7302 = vadd.f32 %v7233, %v7301
  %7303 = vmatmul.bf16.gmra.mxu0 %v5213
  %v7304 = vpop.f32.mrf.mxu0
  %v7305 = vadd.f32 %v7236, %v7304
  %v7306 = vpop.f32.mrf.mxu0
  %v7307 = vadd.f32 %v7238, %v7306
  %7308 = vmatmul.bf16.gmra.mxu0 %v5229
  %v7309 = vpop.f32.mrf.mxu0
  %v7310 = vadd.f32 %v7241, %v7309
  %v7311 = vpop.f32.mrf.mxu0
  %v7312 = vadd.f32 %v7243, %v7311
  %7313 = vmatmul.bf16.gmra.mxu0 %v5245
  %v7314 = vpop.f32.mrf.mxu0
  %v7315 = vadd.f32 %v7246, %v7314
  %v7316 = vpop.f32.mrf.mxu0
  %v7317 = vadd.f32 %v7248, %v7316
  %7318 = vmatmul.bf16.gmra.mxu0 %v5261
  %v7319 = vpop.f32.mrf.mxu0
  %v7320 = vadd.f32 %v7251, %v7319
  %v7321 = vpop.f32.mrf.mxu0
  %v7322 = vadd.f32 %v7253, %v7321
  %7323 = vmatmul.bf16.gmra.mxu0 %v5277
  %v7324 = vpop.f32.mrf.mxu0
  %v7325 = vadd.f32 %v7256, %v7324
  %v7326 = vpop.f32.mrf.mxu0
  %v7327 = vadd.f32 %v7258, %v7326
  %7328 = vmatmul.bf16.gmra.mxu0 %v5293
  %v7329 = vpop.f32.mrf.mxu0
  %v7330 = vadd.f32 %v7261, %v7329
  %v7331 = vpop.f32.mrf.mxu0
  %v7332 = vadd.f32 %v7263, %v7331
  %7333 = vmatmul.bf16.gmra.mxu0 %v5309
  %v7334 = vpop.f32.mrf.mxu0
  %v7335 = vadd.f32 %v7266, %v7334
  %v7336 = vpop.f32.mrf.mxu0
  %v7337 = vadd.f32 %v7268, %v7336
  %7338 = vmatmul.bf16.gmra.mxu0 %v5325
  %v7339 = vpop.f32.mrf.mxu0
  %v7340 = vadd.f32 %v7271, %v7339
  %v7341 = vpop.f32.mrf.mxu0
  %v7342 = vadd.f32 %v7273, %v7341
  %7343 = vmatmul.bf16.gmra.mxu0 %v5341
  %v7344 = vpop.f32.mrf.mxu0
  %v7345 = vadd.f32 %v7276, %v7344
  %v7346 = vpop.f32.mrf.mxu0
  %v7347 = vadd.f32 %v7278, %v7346
  %7348 = vmatmul.bf16.gmra.mxu0 %v5357
  %v7349 = vpop.f32.mrf.mxu0
  %v7350 = vadd.f32 %v7281, %v7349
  %v7351 = vpop.f32.mrf.mxu0
  %v7352 = vadd.f32 %v7283, %v7351
  %7353 = vdwg.mxu0
  %7354 = vmatpush.bf16.msra.mxu0 %v6190
  %7355 = vmatpush.bf16.msra.mxu0 %v6189
  %7356 = vmatpush.bf16.msra.mxu0 %v6188
  %7357 = vmatpush.bf16.msra.mxu0 %v6187
  %7358 = vmatpush.bf16.msra.mxu0 %v6186
  %7359 = vmatpush.bf16.msra.mxu0 %v6185
  %7360 = vmatpush.bf16.msra.mxu0 %v6184
  %7361 = vmatpush.bf16.msra.mxu0 %v6183
  %7362 = vmatmul.bf16.gmra.mxu0 %v5182
  %v7363 = vpop.f32.mrf.mxu0
  %v7364 = vadd.f32 %v7295, %v7363
  %v7365 = vpop.f32.mrf.mxu0
  %v7366 = vadd.f32 %v7297, %v7365
  %7367 = vmatmul.bf16.gmra.mxu0 %v5198
  %v7368 = vpop.f32.mrf.mxu0
  %v7369 = vadd.f32 %v7300, %v7368
  %v7370 = vpop.f32.mrf.mxu0
  %v7371 = vadd.f32 %v7302, %v7370
  %7372 = vmatmul.bf16.gmra.mxu0 %v5214
  %v7373 = vpop.f32.mrf.mxu0
  %v7374 = vadd.f32 %v7305, %v7373
  %v7375 = vpop.f32.mrf.mxu0
  %v7376 = vadd.f32 %v7307, %v7375
  %7377 = vmatmul.bf16.gmra.mxu0 %v5230
  %v7378 = vpop.f32.mrf.mxu0
  %v7379 = vadd.f32 %v7310, %v7378
  %v7380 = vpop.f32.mrf.mxu0
  %v7381 = vadd.f32 %v7312, %v7380
  %7382 = vmatmul.bf16.gmra.mxu0 %v5246
  %v7383 = vpop.f32.mrf.mxu0
  %v7384 = vadd.f32 %v7315, %v7383
  %v7385 = vpop.f32.mrf.mxu0
  %v7386 = vadd.f32 %v7317, %v7385
  %7387 = vmatmul.bf16.gmra.mxu0 %v5262
  %v7388 = vpop.f32.mrf.mxu0
  %v7389 = vadd.f32 %v7320, %v7388
  %v7390 = vpop.f32.mrf.mxu0
  %v7391 = vadd.f32 %v7322, %v7390
  %7392 = vmatmul.bf16.gmra.mxu0 %v5278
  %v7393 = vpop.f32.mrf.mxu0
  %v7394 = vadd.f32 %v7325, %v7393
  %v7395 = vpop.f32.mrf.mxu0
  %v7396 = vadd.f32 %v7327, %v7395
  %7397 = vmatmul.bf16.gmra.mxu0 %v5294
  %v7398 = vpop.f32.mrf.mxu0
  %v7399 = vadd.f32 %v7330, %v7398
  %v7400 = vpop.f32.mrf.mxu0
  %v7401 = vadd.f32 %v7332, %v7400
  %7402 = vmatmul.bf16.gmra.mxu0 %v5310
  %v7403 = vpop.f32.mrf.mxu0
  %v7404 = vadd.f32 %v7335, %v7403
  %v7405 = vpop.f32.mrf.mxu0
  %v7406 = vadd.f32 %v7337, %v7405
  %7407 = vmatmul.bf16.gmra.mxu0 %v5326
  %v7408 = vpop.f32.mrf.mxu0
  %v7409 = vadd.f32 %v7340, %v7408
  %v7410 = vpop.f32.mrf.mxu0
  %v7411 = vadd.f32 %v7342, %v7410
  %7412 = vmatmul.bf16.gmra.mxu0 %v5342
  %v7413 = vpop.f32.mrf.mxu0
  %v7414 = vadd.f32 %v7345, %v7413
  %v7415 = vpop.f32.mrf.mxu0
  %v7416 = vadd.f32 %v7347, %v7415
  %7417 = vmatmul.bf16.gmra.mxu0 %v5358
  %v7418 = vpop.f32.mrf.mxu0
  %v7419 = vadd.f32 %v7350, %v7418
  %v7420 = vpop.f32.mrf.mxu0
  %v7421 = vadd.f32 %v7352, %v7420
  %7422 = vdwg.mxu0
  %v7423 = vlaneseq
  %v7424 = vshrl.u32 %v7423, 7
  %v7425 = vadd.s32 %v7424, 8
  %v7426 = vadd.s32 %v7424, 16
  %v7427 = vadd.s32 %v7424, 24
  %v7428 = vadd.s32 %v7424, 32
  %v7429 = vadd.s32 %v7424, 40
  %v7430 = vadd.s32 %v7424, 48
  %v7431 = vadd.s32 %v7424, 56
  %v7432 = vadd.s32 %v7424, 64
  %v7433 = vadd.s32 %v7424, 72
  %v7434 = vadd.s32 %v7424, 80
  %v7435 = vadd.s32 %v7424, 88
  %v7436 = vadd.s32 %v7424, 96
  %v7437 = vadd.s32 %v7424, 104
  %v7438 = vadd.s32 %v7424, 112
  %v7439 = vadd.s32 %v7424, 120
  %v7440 = vadd.s32 %v7424, 128
  %v7441 = vadd.s32 %v7424, 136
  %v7442 = vadd.s32 %v7424, 144
  %v7443 = vadd.s32 %v7424, 152
  %v7444 = vadd.s32 %v7424, 160
  %v7445 = vadd.s32 %v7424, 168
  %v7446 = vadd.s32 %v7424, 176
  %v7447 = vadd.s32 %v7424, 184
  %vm7448 = vcmp.lt.s32.totalorder %v7424, 0
  %v7449 = vsub.s32 0, %v7424
  %v7450 = vsel %vm7448, %v7449, %v7424
  %v7451 = vshrl.u32 %v7450, 4
  %v7452 = vand.u32 %v7450, 15
  %v7453 = vsub.s32 0, %v7452
  %v7454 = vsel %vm7448, %v7453, %v7452
  %vm7455 = vcmp.lt.s32.totalorder %v7425, 0
  %v7456 = vsub.s32 0, %v7425
  %v7457 = vsel %vm7455, %v7456, %v7425
  %v7458 = vshrl.u32 %v7457, 4
  %v7459 = vand.u32 %v7457, 15
  %v7460 = vsub.s32 0, %v7459
  %v7461 = vsel %vm7455, %v7460, %v7459
  %vm7462 = vcmp.lt.s32.totalorder %v7426, 0
  %v7463 = vsub.s32 0, %v7426
  %v7464 = vsel %vm7462, %v7463, %v7426
  %v7465 = vshrl.u32 %v7464, 4
  %v7466 = vand.u32 %v7464, 15
  %v7467 = vsub.s32 0, %v7466
  %v7468 = vsel %vm7462, %v7467, %v7466
  %vm7469 = vcmp.lt.s32.totalorder %v7427, 0
  %v7470 = vsub.s32 0, %v7427
  %v7471 = vsel %vm7469, %v7470, %v7427
  %v7472 = vshrl.u32 %v7471, 4
  %v7473 = vand.u32 %v7471, 15
  %v7474 = vsub.s32 0, %v7473
  %v7475 = vsel %vm7469, %v7474, %v7473
  %vm7476 = vcmp.lt.s32.totalorder %v7428, 0
  %v7477 = vsub.s32 0, %v7428
  %v7478 = vsel %vm7476, %v7477, %v7428
  %v7479 = vshrl.u32 %v7478, 4
  %v7480 = vand.u32 %v7478, 15
  %v7481 = vsub.s32 0, %v7480
  %v7482 = vsel %vm7476, %v7481, %v7480
  %vm7483 = vcmp.lt.s32.totalorder %v7429, 0
  %v7484 = vsub.s32 0, %v7429
  %v7485 = vsel %vm7483, %v7484, %v7429
  %v7486 = vshrl.u32 %v7485, 4
  %v7487 = vand.u32 %v7485, 15
  %v7488 = vsub.s32 0, %v7487
  %v7489 = vsel %vm7483, %v7488, %v7487
  %vm7490 = vcmp.lt.s32.totalorder %v7430, 0
  %v7491 = vsub.s32 0, %v7430
  %v7492 = vsel %vm7490, %v7491, %v7430
  %v7493 = vshrl.u32 %v7492, 4
  %v7494 = vand.u32 %v7492, 15
  %v7495 = vsub.s32 0, %v7494
  %v7496 = vsel %vm7490, %v7495, %v7494
  %vm7497 = vcmp.lt.s32.totalorder %v7431, 0
  %v7498 = vsub.s32 0, %v7431
  %v7499 = vsel %vm7497, %v7498, %v7431
  %v7500 = vshrl.u32 %v7499, 4
  %v7501 = vand.u32 %v7499, 15
  %v7502 = vsub.s32 0, %v7501
  %v7503 = vsel %vm7497, %v7502, %v7501
  %vm7504 = vcmp.lt.s32.totalorder %v7432, 0
  %v7505 = vsub.s32 0, %v7432
  %v7506 = vsel %vm7504, %v7505, %v7432
  %v7507 = vshrl.u32 %v7506, 4
  %v7508 = vand.u32 %v7506, 15
  %v7509 = vsub.s32 0, %v7508
  %v7510 = vsel %vm7504, %v7509, %v7508
  %vm7511 = vcmp.lt.s32.totalorder %v7433, 0
  %v7512 = vsub.s32 0, %v7433
  %v7513 = vsel %vm7511, %v7512, %v7433
  %v7514 = vshrl.u32 %v7513, 4
  %v7515 = vand.u32 %v7513, 15
  %v7516 = vsub.s32 0, %v7515
  %v7517 = vsel %vm7511, %v7516, %v7515
  %vm7518 = vcmp.lt.s32.totalorder %v7434, 0
  %v7519 = vsub.s32 0, %v7434
  %v7520 = vsel %vm7518, %v7519, %v7434
  %v7521 = vshrl.u32 %v7520, 4
  %v7522 = vand.u32 %v7520, 15
  %v7523 = vsub.s32 0, %v7522
  %v7524 = vsel %vm7518, %v7523, %v7522
  %vm7525 = vcmp.lt.s32.totalorder %v7435, 0
  %v7526 = vsub.s32 0, %v7435
  %v7527 = vsel %vm7525, %v7526, %v7435
  %v7528 = vshrl.u32 %v7527, 4
  %v7529 = vand.u32 %v7527, 15
  %v7530 = vsub.s32 0, %v7529
  %v7531 = vsel %vm7525, %v7530, %v7529
  %vm7532 = vcmp.lt.s32.totalorder %v7436, 0
  %v7533 = vsub.s32 0, %v7436
  %v7534 = vsel %vm7532, %v7533, %v7436
  %v7535 = vshrl.u32 %v7534, 4
  %v7536 = vand.u32 %v7534, 15
  %v7537 = vsub.s32 0, %v7536
  %v7538 = vsel %vm7532, %v7537, %v7536
  %vm7539 = vcmp.lt.s32.totalorder %v7437, 0
  %v7540 = vsub.s32 0, %v7437
  %v7541 = vsel %vm7539, %v7540, %v7437
  %v7542 = vshrl.u32 %v7541, 4
  %v7543 = vand.u32 %v7541, 15
  %v7544 = vsub.s32 0, %v7543
  %v7545 = vsel %vm7539, %v7544, %v7543
  %vm7546 = vcmp.lt.s32.totalorder %v7438, 0
  %v7547 = vsub.s32 0, %v7438
  %v7548 = vsel %vm7546, %v7547, %v7438
  %v7549 = vshrl.u32 %v7548, 4
  %v7550 = vand.u32 %v7548, 15
  %v7551 = vsub.s32 0, %v7550
  %v7552 = vsel %vm7546, %v7551, %v7550
  %vm7553 = vcmp.lt.s32.totalorder %v7439, 0
  %v7554 = vsub.s32 0, %v7439
  %v7555 = vsel %vm7553, %v7554, %v7439
  %v7556 = vshrl.u32 %v7555, 4
  %v7557 = vand.u32 %v7555, 15
  %v7558 = vsub.s32 0, %v7557
  %v7559 = vsel %vm7553, %v7558, %v7557
  %vm7560 = vcmp.lt.s32.totalorder %v7440, 0
  %v7561 = vsub.s32 0, %v7440
  %v7562 = vsel %vm7560, %v7561, %v7440
  %v7563 = vshrl.u32 %v7562, 4
  %v7564 = vand.u32 %v7562, 15
  %v7565 = vsub.s32 0, %v7564
  %v7566 = vsel %vm7560, %v7565, %v7564
  %vm7567 = vcmp.lt.s32.totalorder %v7441, 0
  %v7568 = vsub.s32 0, %v7441
  %v7569 = vsel %vm7567, %v7568, %v7441
  %v7570 = vshrl.u32 %v7569, 4
  %v7571 = vand.u32 %v7569, 15
  %v7572 = vsub.s32 0, %v7571
  %v7573 = vsel %vm7567, %v7572, %v7571
  %vm7574 = vcmp.lt.s32.totalorder %v7442, 0
  %v7575 = vsub.s32 0, %v7442
  %v7576 = vsel %vm7574, %v7575, %v7442
  %v7577 = vshrl.u32 %v7576, 4
  %v7578 = vand.u32 %v7576, 15
  %v7579 = vsub.s32 0, %v7578
  %v7580 = vsel %vm7574, %v7579, %v7578
  %vm7581 = vcmp.lt.s32.totalorder %v7443, 0
  %v7582 = vsub.s32 0, %v7443
  %v7583 = vsel %vm7581, %v7582, %v7443
  %v7584 = vshrl.u32 %v7583, 4
  %v7585 = vand.u32 %v7583, 15
  %v7586 = vsub.s32 0, %v7585
  %v7587 = vsel %vm7581, %v7586, %v7585
  %vm7588 = vcmp.lt.s32.totalorder %v7444, 0
  %v7589 = vsub.s32 0, %v7444
  %v7590 = vsel %vm7588, %v7589, %v7444
  %v7591 = vshrl.u32 %v7590, 4
  %v7592 = vand.u32 %v7590, 15
  %v7593 = vsub.s32 0, %v7592
  %v7594 = vsel %vm7588, %v7593, %v7592
  %vm7595 = vcmp.lt.s32.totalorder %v7445, 0
  %v7596 = vsub.s32 0, %v7445
  %v7597 = vsel %vm7595, %v7596, %v7445
  %v7598 = vshrl.u32 %v7597, 4
  %v7599 = vand.u32 %v7597, 15
  %v7600 = vsub.s32 0, %v7599
  %v7601 = vsel %vm7595, %v7600, %v7599
  %vm7602 = vcmp.lt.s32.totalorder %v7446, 0
  %v7603 = vsub.s32 0, %v7446
  %v7604 = vsel %vm7602, %v7603, %v7446
  %v7605 = vshrl.u32 %v7604, 4
  %v7606 = vand.u32 %v7604, 15
  %v7607 = vsub.s32 0, %v7606
  %v7608 = vsel %vm7602, %v7607, %v7606
  %vm7609 = vcmp.lt.s32.totalorder %v7447, 0
  %v7610 = vsub.s32 0, %v7447
  %v7611 = vsel %vm7609, %v7610, %v7447
  %v7612 = vshrl.u32 %v7611, 4
  %v7613 = vand.u32 %v7611, 15
  %v7614 = vsub.s32 0, %v7613
  %v7615 = vsel %vm7609, %v7614, %v7613
  %vm7616 = vcmp.ne.s32.totalorder %v7454, 0
  %vm7617 = vcmp.ne.s32.totalorder %v7461, 0
  %vm7618 = vcmp.ne.s32.totalorder %v7468, 0
  %vm7619 = vcmp.ne.s32.totalorder %v7475, 0
  %vm7620 = vcmp.ne.s32.totalorder %v7482, 0
  %vm7621 = vcmp.ne.s32.totalorder %v7489, 0
  %vm7622 = vcmp.ne.s32.totalorder %v7496, 0
  %vm7623 = vcmp.ne.s32.totalorder %v7503, 0
  %vm7624 = vcmp.ne.s32.totalorder %v7510, 0
  %vm7625 = vcmp.ne.s32.totalorder %v7517, 0
  %vm7626 = vcmp.ne.s32.totalorder %v7524, 0
  %vm7627 = vcmp.ne.s32.totalorder %v7531, 0
  %vm7628 = vcmp.ne.s32.totalorder %v7538, 0
  %vm7629 = vcmp.ne.s32.totalorder %v7545, 0
  %vm7630 = vcmp.ne.s32.totalorder %v7552, 0
  %vm7631 = vcmp.ne.s32.totalorder %v7559, 0
  %vm7632 = vcmp.ne.s32.totalorder %v7566, 0
  %vm7633 = vcmp.ne.s32.totalorder %v7573, 0
  %vm7634 = vcmp.ne.s32.totalorder %v7580, 0
  %vm7635 = vcmp.ne.s32.totalorder %v7587, 0
  %vm7636 = vcmp.ne.s32.totalorder %v7594, 0
  %vm7637 = vcmp.ne.s32.totalorder %v7601, 0
  %vm7638 = vcmp.ne.s32.totalorder %v7608, 0
  %vm7639 = vcmp.ne.s32.totalorder %v7615, 0
  %vm7640 = vcmp.lt.s32.totalorder %v7454, 0
  %vm7641 = vcmp.lt.s32.totalorder %v7461, 0
  %vm7642 = vcmp.lt.s32.totalorder %v7468, 0
  %vm7643 = vcmp.lt.s32.totalorder %v7475, 0
  %vm7644 = vcmp.lt.s32.totalorder %v7482, 0
  %vm7645 = vcmp.lt.s32.totalorder %v7489, 0
  %vm7646 = vcmp.lt.s32.totalorder %v7496, 0
  %vm7647 = vcmp.lt.s32.totalorder %v7503, 0
  %vm7648 = vcmp.lt.s32.totalorder %v7510, 0
  %vm7649 = vcmp.lt.s32.totalorder %v7517, 0
  %vm7650 = vcmp.lt.s32.totalorder %v7524, 0
  %vm7651 = vcmp.lt.s32.totalorder %v7531, 0
  %vm7652 = vcmp.lt.s32.totalorder %v7538, 0
  %vm7653 = vcmp.lt.s32.totalorder %v7545, 0
  %vm7654 = vcmp.lt.s32.totalorder %v7552, 0
  %vm7655 = vcmp.lt.s32.totalorder %v7559, 0
  %vm7656 = vcmp.lt.s32.totalorder %v7566, 0
  %vm7657 = vcmp.lt.s32.totalorder %v7573, 0
  %vm7658 = vcmp.lt.s32.totalorder %v7580, 0
  %vm7659 = vcmp.lt.s32.totalorder %v7587, 0
  %vm7660 = vcmp.lt.s32.totalorder %v7594, 0
  %vm7661 = vcmp.lt.s32.totalorder %v7601, 0
  %vm7662 = vcmp.lt.s32.totalorder %v7608, 0
  %vm7663 = vcmp.lt.s32.totalorder %v7615, 0
  %vm7664 = vmand %vm7640, %vm7616
  %vm7665 = vmand %vm7641, %vm7617
  %vm7666 = vmand %vm7642, %vm7618
  %vm7667 = vmand %vm7643, %vm7619
  %vm7668 = vmand %vm7644, %vm7620
  %vm7669 = vmand %vm7645, %vm7621
  %vm7670 = vmand %vm7646, %vm7622
  %vm7671 = vmand %vm7647, %vm7623
  %vm7672 = vmand %vm7648, %vm7624
  %vm7673 = vmand %vm7649, %vm7625
  %vm7674 = vmand %vm7650, %vm7626
  %vm7675 = vmand %vm7651, %vm7627
  %vm7676 = vmand %vm7652, %vm7628
  %vm7677 = vmand %vm7653, %vm7629
  %vm7678 = vmand %vm7654, %vm7630
  %vm7679 = vmand %vm7655, %vm7631
  %vm7680 = vmand %vm7656, %vm7632
  %vm7681 = vmand %vm7657, %vm7633
  %vm7682 = vmand %vm7658, %vm7634
  %vm7683 = vmand %vm7659, %vm7635
  %vm7684 = vmand %vm7660, %vm7636
  %vm7685 = vmand %vm7661, %vm7637
  %vm7686 = vmand %vm7662, %vm7638
  %vm7687 = vmand %vm7663, %vm7639
  %v7688 = vadd.s32 %v7454, 16
  %v7689 = vadd.s32 %v7461, 16
  %v7690 = vadd.s32 %v7468, 16
  %v7691 = vadd.s32 %v7475, 16
  %v7692 = vadd.s32 %v7482, 16
  %v7693 = vadd.s32 %v7489, 16
  %v7694 = vadd.s32 %v7496, 16
  %v7695 = vadd.s32 %v7503, 16
  %v7696 = vadd.s32 %v7510, 16
  %v7697 = vadd.s32 %v7517, 16
  %v7698 = vadd.s32 %v7524, 16
  %v7699 = vadd.s32 %v7531, 16
  %v7700 = vadd.s32 %v7538, 16
  %v7701 = vadd.s32 %v7545, 16
  %v7702 = vadd.s32 %v7552, 16
  %v7703 = vadd.s32 %v7559, 16
  %v7704 = vadd.s32 %v7566, 16
  %v7705 = vadd.s32 %v7573, 16
  %v7706 = vadd.s32 %v7580, 16
  %v7707 = vadd.s32 %v7587, 16
  %v7708 = vadd.s32 %v7594, 16
  %v7709 = vadd.s32 %v7601, 16
  %v7710 = vadd.s32 %v7608, 16
  %v7711 = vadd.s32 %v7615, 16
  %v7712 = vsel %vm7664, %v7688, %v7454
  %v7713 = vsel %vm7665, %v7689, %v7461
  %v7714 = vsel %vm7666, %v7690, %v7468
  %v7715 = vsel %vm7667, %v7691, %v7475
  %v7716 = vsel %vm7668, %v7692, %v7482
  %v7717 = vsel %vm7669, %v7693, %v7489
  %v7718 = vsel %vm7670, %v7694, %v7496
  %v7719 = vsel %vm7671, %v7695, %v7503
  %v7720 = vsel %vm7672, %v7696, %v7510
  %v7721 = vsel %vm7673, %v7697, %v7517
  %v7722 = vsel %vm7674, %v7698, %v7524
  %v7723 = vsel %vm7675, %v7699, %v7531
  %v7724 = vsel %vm7676, %v7700, %v7538
  %v7725 = vsel %vm7677, %v7701, %v7545
  %v7726 = vsel %vm7678, %v7702, %v7552
  %v7727 = vsel %vm7679, %v7703, %v7559
  %v7728 = vsel %vm7680, %v7704, %v7566
  %v7729 = vsel %vm7681, %v7705, %v7573
  %v7730 = vsel %vm7682, %v7706, %v7580
  %v7731 = vsel %vm7683, %v7707, %v7587
  %v7732 = vsel %vm7684, %v7708, %v7594
  %v7733 = vsel %vm7685, %v7709, %v7601
  %v7734 = vsel %vm7686, %v7710, %v7608
  %v7735 = vsel %vm7687, %v7711, %v7615
  %vm7736 = vcmp.lt.s32.totalorder %v7712, 6
  %vm7737 = vcmp.lt.s32.totalorder %v7713, 6
  %vm7738 = vcmp.lt.s32.totalorder %v7714, 6
  %vm7739 = vcmp.lt.s32.totalorder %v7715, 6
  %vm7740 = vcmp.lt.s32.totalorder %v7716, 6
  %vm7741 = vcmp.lt.s32.totalorder %v7717, 6
  %vm7742 = vcmp.lt.s32.totalorder %v7718, 6
  %vm7743 = vcmp.lt.s32.totalorder %v7719, 6
  %vm7744 = vcmp.lt.s32.totalorder %v7720, 6
  %vm7745 = vcmp.lt.s32.totalorder %v7721, 6
  %vm7746 = vcmp.lt.s32.totalorder %v7722, 6
  %vm7747 = vcmp.lt.s32.totalorder %v7723, 6
  %vm7748 = vcmp.lt.s32.totalorder %v7724, 6
  %vm7749 = vcmp.lt.s32.totalorder %v7725, 6
  %vm7750 = vcmp.lt.s32.totalorder %v7726, 6
  %vm7751 = vcmp.lt.s32.totalorder %v7727, 6
  %vm7752 = vcmp.lt.s32.totalorder %v7728, 6
  %vm7753 = vcmp.lt.s32.totalorder %v7729, 6
  %vm7754 = vcmp.lt.s32.totalorder %v7730, 6
  %vm7755 = vcmp.lt.s32.totalorder %v7731, 6
  %vm7756 = vcmp.lt.s32.totalorder %v7732, 6
  %vm7757 = vcmp.lt.s32.totalorder %v7733, 6
  %vm7758 = vcmp.lt.s32.totalorder %v7734, 6
  %vm7759 = vcmp.lt.s32.totalorder %v7735, 6
  %v7760 = vsel %vm7736, 1, 0
  %v7761 = vsel %vm7737, 1, 0
  %v7762 = vsel %vm7738, 1, 0
  %v7763 = vsel %vm7739, 1, 0
  %v7764 = vsel %vm7740, 1, 0
  %v7765 = vsel %vm7741, 1, 0
  %v7766 = vsel %vm7742, 1, 0
  %v7767 = vsel %vm7743, 1, 0
  %v7768 = vsel %vm7744, 1, 0
  %v7769 = vsel %vm7745, 1, 0
  %v7770 = vsel %vm7746, 1, 0
  %v7771 = vsel %vm7747, 1, 0
  %v7772 = vsel %vm7748, 1, 0
  %v7773 = vsel %vm7749, 1, 0
  %v7774 = vsel %vm7750, 1, 0
  %v7775 = vsel %vm7751, 1, 0
  %v7776 = vsel %vm7752, 1, 0
  %v7777 = vsel %vm7753, 1, 0
  %v7778 = vsel %vm7754, 1, 0
  %v7779 = vsel %vm7755, 1, 0
  %v7780 = vsel %vm7756, 1, 0
  %v7781 = vsel %vm7757, 1, 0
  %v7782 = vsel %vm7758, 1, 0
  %v7783 = vsel %vm7759, 1, 0
  %v7784 = vcvt.s32.f32 %v7760
  %v7785 = vcvt.s32.f32 %v7761
  %v7786 = vcvt.s32.f32 %v7762
  %v7787 = vcvt.s32.f32 %v7763
  %v7788 = vcvt.s32.f32 %v7764
  %v7789 = vcvt.s32.f32 %v7765
  %v7790 = vcvt.s32.f32 %v7766
  %v7791 = vcvt.s32.f32 %v7767
  %v7792 = vcvt.s32.f32 %v7768
  %v7793 = vcvt.s32.f32 %v7769
  %v7794 = vcvt.s32.f32 %v7770
  %v7795 = vcvt.s32.f32 %v7771
  %v7796 = vcvt.s32.f32 %v7772
  %v7797 = vcvt.s32.f32 %v7773
  %v7798 = vcvt.s32.f32 %v7774
  %v7799 = vcvt.s32.f32 %v7775
  %v7800 = vcvt.s32.f32 %v7776
  %v7801 = vcvt.s32.f32 %v7777
  %v7802 = vcvt.s32.f32 %v7778
  %v7803 = vcvt.s32.f32 %v7779
  %v7804 = vcvt.s32.f32 %v7780
  %v7805 = vcvt.s32.f32 %v7781
  %v7806 = vcvt.s32.f32 %v7782
  %v7807 = vcvt.s32.f32 %v7783
  %v7808 = vld [vmem:[%s4] sm:$0x1]
  %v7809 = vld [vmem:[%s4 + $0x1] sm:$0x1]
  %v7810 = vmul.f32 %v7364, %v7784
  %v7811 = vmul.f32 %v7366, %v7785
  %v7812 = vmul.f32 %v7369, %v7786
  %v7813 = vmul.f32 %v7371, %v7787
  %v7814 = vmul.f32 %v7374, %v7788
  %v7815 = vmul.f32 %v7376, %v7789
  %v7816 = vmul.f32 %v7379, %v7790
  %v7817 = vmul.f32 %v7381, %v7791
  %v7818 = vmul.f32 %v7384, %v7792
  %v7819 = vmul.f32 %v7386, %v7793
  %v7820 = vmul.f32 %v7389, %v7794
  %v7821 = vmul.f32 %v7391, %v7795
  %v7822 = vmul.f32 %v7394, %v7796
  %v7823 = vmul.f32 %v7396, %v7797
  %v7824 = vmul.f32 %v7399, %v7798
  %v7825 = vmul.f32 %v7401, %v7799
  %v7826 = vmul.f32 %v7404, %v7800
  %v7827 = vmul.f32 %v7406, %v7801
  %v7828 = vmul.f32 %v7409, %v7802
  %v7829 = vmul.f32 %v7411, %v7803
  %v7830 = vmul.f32 %v7414, %v7804
  %v7831 = vmul.f32 %v7416, %v7805
  %v7832 = vmul.f32 %v7419, %v7806
  %v7833 = vmul.f32 %v7421, %v7807
  %v7834 = vadd.f32 %v7810, %v7811
  %v7835 = vadd.f32 %v7834, %v7812
  %v7836 = vadd.f32 %v7835, %v7813
  %v7837 = vadd.f32 %v7836, %v7814
  %v7838 = vadd.f32 %v7837, %v7815
  %v7839 = vadd.f32 %v7838, %v7816
  %v7840 = vadd.f32 %v7839, %v7817
  %v7841 = vadd.f32 %v7840, %v7818
  %v7842 = vadd.f32 %v7841, %v7819
  %v7843 = vadd.f32 %v7842, %v7820
  %v7844 = vadd.f32 %v7843, %v7821
  %v7845 = vadd.f32 %v7844, %v7822
  %v7846 = vadd.f32 %v7845, %v7823
  %v7847 = vadd.f32 %v7846, %v7824
  %v7848 = vadd.f32 %v7847, %v7825
  %v7849 = vadd.f32 %v7848, %v7826
  %v7850 = vadd.f32 %v7849, %v7827
  %v7851 = vadd.f32 %v7850, %v7828
  %v7852 = vadd.f32 %v7851, %v7829
  %v7853 = vadd.f32 %v7852, %v7830
  %v7854 = vadd.f32 %v7853, %v7831
  %v7855 = vadd.f32 %v7854, %v7832
  %v7856 = vadd.f32 %v7855, %v7833
  %v7857 = vrot.slane %v7856, 4
  %v7858 = vadd.f32 %v7856, %v7857
  %v7859 = vrot.slane %v7858, 2
  %v7860 = vadd.f32 %v7858, %v7859
  %v7861 = vrot.slane %v7860, 1
  %v7862 = vadd.f32 %v7860, %v7861
  %v7863 = vmul.f32 %v7862, 0.013888889
  %v7864 = vmul.f32 %v7810, %v7364
  %v7865 = vmul.f32 %v7811, %v7366
  %v7866 = vmul.f32 %v7812, %v7369
  %v7867 = vmul.f32 %v7813, %v7371
  %v7868 = vmul.f32 %v7814, %v7374
  %v7869 = vmul.f32 %v7815, %v7376
  %v7870 = vmul.f32 %v7816, %v7379
  %v7871 = vmul.f32 %v7817, %v7381
  %v7872 = vmul.f32 %v7818, %v7384
  %v7873 = vmul.f32 %v7819, %v7386
  %v7874 = vmul.f32 %v7820, %v7389
  %v7875 = vmul.f32 %v7821, %v7391
  %v7876 = vmul.f32 %v7822, %v7394
  %v7877 = vmul.f32 %v7823, %v7396
  %v7878 = vmul.f32 %v7824, %v7399
  %v7879 = vmul.f32 %v7825, %v7401
  %v7880 = vmul.f32 %v7826, %v7404
  %v7881 = vmul.f32 %v7827, %v7406
  %v7882 = vmul.f32 %v7828, %v7409
  %v7883 = vmul.f32 %v7829, %v7411
  %v7884 = vmul.f32 %v7830, %v7414
  %v7885 = vmul.f32 %v7831, %v7416
  %v7886 = vmul.f32 %v7832, %v7419
  %v7887 = vmul.f32 %v7833, %v7421
  %v7888 = vadd.f32 %v7864, %v7865
  %v7889 = vadd.f32 %v7888, %v7866
  %v7890 = vadd.f32 %v7889, %v7867
  %v7891 = vadd.f32 %v7890, %v7868
  %v7892 = vadd.f32 %v7891, %v7869
  %v7893 = vadd.f32 %v7892, %v7870
  %v7894 = vadd.f32 %v7893, %v7871
  %v7895 = vadd.f32 %v7894, %v7872
  %v7896 = vadd.f32 %v7895, %v7873
  %v7897 = vadd.f32 %v7896, %v7874
  %v7898 = vadd.f32 %v7897, %v7875
  %v7899 = vadd.f32 %v7898, %v7876
  %v7900 = vadd.f32 %v7899, %v7877
  %v7901 = vadd.f32 %v7900, %v7878
  %v7902 = vadd.f32 %v7901, %v7879
  %v7903 = vadd.f32 %v7902, %v7880
  %v7904 = vadd.f32 %v7903, %v7881
  %v7905 = vadd.f32 %v7904, %v7882
  %v7906 = vadd.f32 %v7905, %v7883
  %v7907 = vadd.f32 %v7906, %v7884
  %v7908 = vadd.f32 %v7907, %v7885
  %v7909 = vadd.f32 %v7908, %v7886
  %v7910 = vadd.f32 %v7909, %v7887
  %v7911 = vrot.slane %v7910, 4
  %v7912 = vadd.f32 %v7910, %v7911
  %v7913 = vrot.slane %v7912, 2
  %v7914 = vadd.f32 %v7912, %v7913
  %v7915 = vrot.slane %v7914, 1
  %v7916 = vadd.f32 %v7914, %v7915
  %v7917 = vmul.f32 %v7916, 0.013888889
  %v7918 = vmul.f32 %v7863, %v7863
  %v7919 = vsub.f32 %v7917, %v7918
  %v7920 = vmax.f32 %v7919, 0.0
  %v7921 = vadd.f32 %v7920, 1e-05
  %v7922 = vrsqrt.pop %v7921
  %v7923 = vmul.f32 %v7922, %v7921
  %v7924 = vmul.f32 %v7923, %v7922
  %v7925 = vmul.f32 0.5, %v7924
  %v7926 = vsub.f32 1.5, %v7925
  %v7927 = vmul.f32 %v7922, %v7926
  %vm7928 = vweird.f32 %v7921
  %vm7929 = vweird.f32 %v7922
  %vm7930 = vmor %vm7928, %vm7929
  %v7931 = vsel %vm7930, %v7922, %v7927
  %v7932 = vmul.f32 %v7808, %v7931
  %v7933 = vsub.f32 %v7364, %v7863
  %v7934 = vsub.f32 %v7366, %v7863
  %v7935 = vsub.f32 %v7369, %v7863
  %v7936 = vsub.f32 %v7371, %v7863
  %v7937 = vsub.f32 %v7374, %v7863
  %v7938 = vsub.f32 %v7376, %v7863
  %v7939 = vsub.f32 %v7379, %v7863
  %v7940 = vsub.f32 %v7381, %v7863
  %v7941 = vsub.f32 %v7384, %v7863
  %v7942 = vsub.f32 %v7386, %v7863
  %v7943 = vsub.f32 %v7389, %v7863
  %v7944 = vsub.f32 %v7391, %v7863
  %v7945 = vsub.f32 %v7394, %v7863
  %v7946 = vsub.f32 %v7396, %v7863
  %v7947 = vsub.f32 %v7399, %v7863
  %v7948 = vsub.f32 %v7401, %v7863
  %v7949 = vsub.f32 %v7404, %v7863
  %v7950 = vsub.f32 %v7406, %v7863
  %v7951 = vsub.f32 %v7409, %v7863
  %v7952 = vsub.f32 %v7411, %v7863
  %v7953 = vsub.f32 %v7414, %v7863
  %v7954 = vsub.f32 %v7416, %v7863
  %v7955 = vsub.f32 %v7419, %v7863
  %v7956 = vsub.f32 %v7421, %v7863
  %v7957 = vperm.slane %v7932, 0
  %v7958 = vmul.f32 %v7933, %v7957
  %v7959 = vmul.f32 %v7934, %v7957
  %v7960 = vmul.f32 %v7935, %v7957
  %v7961 = vmul.f32 %v7936, %v7957
  %v7962 = vmul.f32 %v7937, %v7957
  %v7963 = vmul.f32 %v7938, %v7957
  %v7964 = vmul.f32 %v7939, %v7957
  %v7965 = vmul.f32 %v7940, %v7957
  %v7966 = vmul.f32 %v7941, %v7957
  %v7967 = vmul.f32 %v7942, %v7957
  %v7968 = vmul.f32 %v7943, %v7957
  %v7969 = vmul.f32 %v7944, %v7957
  %v7970 = vmul.f32 %v7945, %v7957
  %v7971 = vmul.f32 %v7946, %v7957
  %v7972 = vmul.f32 %v7947, %v7957
  %v7973 = vmul.f32 %v7948, %v7957
  %v7974 = vmul.f32 %v7949, %v7957
  %v7975 = vmul.f32 %v7950, %v7957
  %v7976 = vmul.f32 %v7951, %v7957
  %v7977 = vmul.f32 %v7952, %v7957
  %v7978 = vmul.f32 %v7953, %v7957
  %v7979 = vmul.f32 %v7954, %v7957
  %v7980 = vmul.f32 %v7955, %v7957
  %v7981 = vmul.f32 %v7956, %v7957
  %v7982 = vperm.slane %v7809, 0
  %v7983 = vadd.f32 %v7958, %v7982
  %v7984 = vadd.f32 %v7959, %v7982
  %v7985 = vadd.f32 %v7960, %v7982
  %v7986 = vadd.f32 %v7961, %v7982
  %v7987 = vadd.f32 %v7962, %v7982
  %v7988 = vadd.f32 %v7963, %v7982
  %v7989 = vadd.f32 %v7964, %v7982
  %v7990 = vadd.f32 %v7965, %v7982
  %v7991 = vadd.f32 %v7966, %v7982
  %v7992 = vadd.f32 %v7967, %v7982
  %v7993 = vadd.f32 %v7968, %v7982
  %v7994 = vadd.f32 %v7969, %v7982
  %v7995 = vadd.f32 %v7970, %v7982
  %v7996 = vadd.f32 %v7971, %v7982
  %v7997 = vadd.f32 %v7972, %v7982
  %v7998 = vadd.f32 %v7973, %v7982
  %v7999 = vadd.f32 %v7974, %v7982
  %v8000 = vadd.f32 %v7975, %v7982
  %v8001 = vadd.f32 %v7976, %v7982
  %v8002 = vadd.f32 %v7977, %v7982
  %v8003 = vadd.f32 %v7978, %v7982
  %v8004 = vadd.f32 %v7979, %v7982
  %v8005 = vadd.f32 %v7980, %v7982
  %v8006 = vadd.f32 %v7981, %v7982
  %vm8007 = vcmp.gt.f32.partialorder %v7983, 0.0
  %vm8008 = vcmp.gt.f32.partialorder %v7984, 0.0
  %vm8009 = vcmp.gt.f32.partialorder %v7985, 0.0
  %vm8010 = vcmp.gt.f32.partialorder %v7986, 0.0
  %vm8011 = vcmp.gt.f32.partialorder %v7987, 0.0
  %vm8012 = vcmp.gt.f32.partialorder %v7988, 0.0
  %vm8013 = vcmp.gt.f32.partialorder %v7989, 0.0
  %vm8014 = vcmp.gt.f32.partialorder %v7990, 0.0
  %vm8015 = vcmp.gt.f32.partialorder %v7991, 0.0
  %vm8016 = vcmp.gt.f32.partialorder %v7992, 0.0
  %vm8017 = vcmp.gt.f32.partialorder %v7993, 0.0
  %vm8018 = vcmp.gt.f32.partialorder %v7994, 0.0
  %vm8019 = vcmp.gt.f32.partialorder %v7995, 0.0
  %vm8020 = vcmp.gt.f32.partialorder %v7996, 0.0
  %vm8021 = vcmp.gt.f32.partialorder %v7997, 0.0
  %vm8022 = vcmp.gt.f32.partialorder %v7998, 0.0
  %vm8023 = vcmp.gt.f32.partialorder %v7999, 0.0
  %vm8024 = vcmp.gt.f32.partialorder %v8000, 0.0
  %vm8025 = vcmp.gt.f32.partialorder %v8001, 0.0
  %vm8026 = vcmp.gt.f32.partialorder %v8002, 0.0
  %vm8027 = vcmp.gt.f32.partialorder %v8003, 0.0
  %vm8028 = vcmp.gt.f32.partialorder %v8004, 0.0
  %vm8029 = vcmp.gt.f32.partialorder %v8005, 0.0
  %vm8030 = vcmp.gt.f32.partialorder %v8006, 0.0
  %v8031 = vmul.f32 %v7983, 0.2
  %v8032 = vmul.f32 %v7984, 0.2
  %v8033 = vmul.f32 %v7985, 0.2
  %v8034 = vmul.f32 %v7986, 0.2
  %v8035 = vmul.f32 %v7987, 0.2
  %v8036 = vmul.f32 %v7988, 0.2
  %v8037 = vmul.f32 %v7989, 0.2
  %v8038 = vmul.f32 %v7990, 0.2
  %v8039 = vmul.f32 %v7991, 0.2
  %v8040 = vmul.f32 %v7992, 0.2
  %v8041 = vmul.f32 %v7993, 0.2
  %v8042 = vmul.f32 %v7994, 0.2
  %v8043 = vmul.f32 %v7995, 0.2
  %v8044 = vmul.f32 %v7996, 0.2
  %v8045 = vmul.f32 %v7997, 0.2
  %v8046 = vmul.f32 %v7998, 0.2
  %v8047 = vmul.f32 %v7999, 0.2
  %v8048 = vmul.f32 %v8000, 0.2
  %v8049 = vmul.f32 %v8001, 0.2
  %v8050 = vmul.f32 %v8002, 0.2
  %v8051 = vmul.f32 %v8003, 0.2
  %v8052 = vmul.f32 %v8004, 0.2
  %v8053 = vmul.f32 %v8005, 0.2
  %v8054 = vmul.f32 %v8006, 0.2
  %v8055 = vsel %vm8007, %v7983, %v8031
  %v8056 = vsel %vm8008, %v7984, %v8032
  %v8057 = vsel %vm8009, %v7985, %v8033
  %v8058 = vsel %vm8010, %v7986, %v8034
  %v8059 = vsel %vm8011, %v7987, %v8035
  %v8060 = vsel %vm8012, %v7988, %v8036
  %v8061 = vsel %vm8013, %v7989, %v8037
  %v8062 = vsel %vm8014, %v7990, %v8038
  %v8063 = vsel %vm8015, %v7991, %v8039
  %v8064 = vsel %vm8016, %v7992, %v8040
  %v8065 = vsel %vm8017, %v7993, %v8041
  %v8066 = vsel %vm8018, %v7994, %v8042
  %v8067 = vsel %vm8019, %v7995, %v8043
  %v8068 = vsel %vm8020, %v7996, %v8044
  %v8069 = vsel %vm8021, %v7997, %v8045
  %v8070 = vsel %vm8022, %v7998, %v8046
  %v8071 = vsel %vm8023, %v7999, %v8047
  %v8072 = vsel %vm8024, %v8000, %v8048
  %v8073 = vsel %vm8025, %v8001, %v8049
  %v8074 = vsel %vm8026, %v8002, %v8050
  %v8075 = vsel %vm8027, %v8003, %v8051
  %v8076 = vsel %vm8028, %v8004, %v8052
  %v8077 = vsel %vm8029, %v8005, %v8053
  %v8078 = vsel %vm8030, %v8006, %v8054
  %v8079 = vpack.c.bf16 %v8056, %v8055
  %v8080 = vpack.c.bf16 %v8058, %v8057
  %v8081 = vpack.c.bf16 %v8060, %v8059
  %v8082 = vpack.c.bf16 %v8062, %v8061
  %v8083 = vpack.c.bf16 %v8064, %v8063
  %v8084 = vpack.c.bf16 %v8066, %v8065
  %v8085 = vpack.c.bf16 %v8068, %v8067
  %v8086 = vpack.c.bf16 %v8070, %v8069
  %v8087 = vpack.c.bf16 %v8072, %v8071
  %v8088 = vpack.c.bf16 %v8074, %v8073
  %v8089 = vpack.c.bf16 %v8076, %v8075
  %v8090 = vpack.c.bf16 %v8078, %v8077
  %v8091 = vld [vmem:[%s5] sm:$0xf]
  %v8092 = vld [vmem:[%s5 + $0x4] sm:$0xf]
  %v8093 = vld [vmem:[%s5 + $0x8] sm:$0xf]
  %v8094 = vld [vmem:[%s5 + $0xc] sm:$0xf]
  %v8095 = vld [vmem:[%s5 + $0x10] sm:$0xf]
  %v8096 = vld [vmem:[%s5 + $0x14] sm:$0xf]
  %v8097 = vld [vmem:[%s5 + $0x18] sm:$0xf]
  %v8098 = vld [vmem:[%s5 + $0x1c] sm:$0xf]
  %v8099 = vld [vmem:[%s5 + $0x20] sm:$0xf]
  %v8100 = vld [vmem:[%s5 + $0x24] sm:$0xf]
  %v8101 = vld [vmem:[%s5 + $0x28] sm:$0xf]
  %v8102 = vld [vmem:[%s5 + $0x2c] sm:$0xf]
  %v8103 = vld [vmem:[%s5 + $0x30] sm:$0xf]
  %v8104 = vld [vmem:[%s5 + $0x34] sm:$0xf]
  %v8105 = vld [vmem:[%s5 + $0x38] sm:$0xf]
  %v8106 = vld [vmem:[%s5 + $0x3c] sm:$0xf]
  %v8123 = vunpack.c.l.b16 %v8091
  %v8124 = vunpack.c.l.b16 %v8092
  %v8125 = vunpack.c.l.b16 %v8093
  %v8126 = vunpack.c.l.b16 %v8094
  %v8127 = vunpack.c.l.b16 %v8095
  %v8128 = vunpack.c.l.b16 %v8096
  %v8129 = vunpack.c.l.b16 %v8097
  %v8130 = vunpack.c.l.b16 %v8098
  %v8131 = vunpack.c.l.b16 %v8099
  %v8132 = vunpack.c.l.b16 %v8100
  %v8133 = vunpack.c.l.b16 %v8101
  %v8134 = vunpack.c.l.b16 %v8102
  %v8135 = vunpack.c.l.b16 %v8103
  %v8136 = vunpack.c.l.b16 %v8104
  %v8137 = vunpack.c.l.b16 %v8105
  %v8138 = vunpack.c.l.b16 %v8106
  %v8139 = vpack.c.b16 %v8124, %v8123
  %v8140 = vpack.c.b16 %v8126, %v8125
  %v8141 = vpack.c.b16 %v8128, %v8127
  %v8142 = vpack.c.b16 %v8130, %v8129
  %v8143 = vpack.c.b16 %v8132, %v8131
  %v8144 = vpack.c.b16 %v8134, %v8133
  %v8145 = vpack.c.b16 %v8136, %v8135
  %v8146 = vpack.c.b16 %v8138, %v8137
  %8155 = vmatpush.bf16.msra.mxu0 %v8146
  %8156 = vmatpush.bf16.msra.mxu0 %v8145
  %8157 = vmatpush.bf16.msra.mxu0 %v8144
  %8158 = vmatpush.bf16.msra.mxu0 %v8143
  %8159 = vmatpush.bf16.msra.mxu0 %v8142
  %8160 = vmatpush.bf16.msra.mxu0 %v8141
  %8161 = vmatpush.bf16.msra.mxu0 %v8140
  %8162 = vmatpush.bf16.msra.mxu0 %v8139
  %8163 = vmatmul.bf16.gmra.mxu0 %v8079
  %v8164 = vpop.f32.mrf.mxu0
  %v8165 = vadd.f32 0.0, %v8164
  %v8166 = vpop.f32.mrf.mxu0
  %v8167 = vadd.f32 0.0, %v8166
  %8168 = vmatmul.bf16.gmra.mxu0 %v8080
  %v8169 = vpop.f32.mrf.mxu0
  %v8170 = vadd.f32 0.0, %v8169
  %v8171 = vpop.f32.mrf.mxu0
  %v8172 = vadd.f32 0.0, %v8171
  %8173 = vmatmul.bf16.gmra.mxu0 %v8081
  %v8174 = vpop.f32.mrf.mxu0
  %v8175 = vadd.f32 0.0, %v8174
  %v8176 = vpop.f32.mrf.mxu0
  %v8177 = vadd.f32 0.0, %v8176
  %8178 = vmatmul.bf16.gmra.mxu0 %v8082
  %v8179 = vpop.f32.mrf.mxu0
  %v8180 = vadd.f32 0.0, %v8179
  %v8181 = vpop.f32.mrf.mxu0
  %v8182 = vadd.f32 0.0, %v8181
  %8183 = vmatmul.bf16.gmra.mxu0 %v8083
  %v8184 = vpop.f32.mrf.mxu0
  %v8185 = vadd.f32 0.0, %v8184
  %v8186 = vpop.f32.mrf.mxu0
  %v8187 = vadd.f32 0.0, %v8186
  %8188 = vmatmul.bf16.gmra.mxu0 %v8084
  %v8189 = vpop.f32.mrf.mxu0
  %v8190 = vadd.f32 0.0, %v8189
  %v8191 = vpop.f32.mrf.mxu0
  %v8192 = vadd.f32 0.0, %v8191
  %8193 = vmatmul.bf16.gmra.mxu0 %v8085
  %v8194 = vpop.f32.mrf.mxu0
  %v8195 = vadd.f32 0.0, %v8194
  %v8196 = vpop.f32.mrf.mxu0
  %v8197 = vadd.f32 0.0, %v8196
  %8198 = vmatmul.bf16.gmra.mxu0 %v8086
  %v8199 = vpop.f32.mrf.mxu0
  %v8200 = vadd.f32 0.0, %v8199
  %v8201 = vpop.f32.mrf.mxu0
  %v8202 = vadd.f32 0.0, %v8201
  %8203 = vmatmul.bf16.gmra.mxu0 %v8087
  %v8204 = vpop.f32.mrf.mxu0
  %v8205 = vadd.f32 0.0, %v8204
  %v8206 = vpop.f32.mrf.mxu0
  %v8207 = vadd.f32 0.0, %v8206
  %8208 = vmatmul.bf16.gmra.mxu0 %v8088
  %v8209 = vpop.f32.mrf.mxu0
  %v8210 = vadd.f32 0.0, %v8209
  %v8211 = vpop.f32.mrf.mxu0
  %v8212 = vadd.f32 0.0, %v8211
  %8213 = vmatmul.bf16.gmra.mxu0 %v8089
  %v8214 = vpop.f32.mrf.mxu0
  %v8215 = vadd.f32 0.0, %v8214
  %v8216 = vpop.f32.mrf.mxu0
  %v8217 = vadd.f32 0.0, %v8216
  %8218 = vmatmul.bf16.gmra.mxu0 %v8090
  %v8219 = vpop.f32.mrf.mxu0
  %v8220 = vadd.f32 0.0, %v8219
  %v8221 = vpop.f32.mrf.mxu0
  %v8222 = vadd.f32 0.0, %v8221
  %8223 = vdwg.mxu0
  %8224 = vst [vmem:[%s6] sm:$0xff] %v8165
  %8225 = vst [vmem:[%s6 + $0x8] sm:$0xff] %v8167
  %8226 = vst [vmem:[%s6 + $0x10] sm:$0xff] %v8170
  %8227 = vst [vmem:[%s6 + $0x18] sm:$0xff] %v8172
  %8228 = vst [vmem:[%s6 + $0x20] sm:$0xff] %v8175
  %8229 = vst [vmem:[%s6 + $0x28] sm:$0xff] %v8177
  %8230 = vst [vmem:[%s6 + $0x30] sm:$0xff] %v8180
  %8231 = vst [vmem:[%s6 + $0x38] sm:$0xff] %v8182
  %8232 = vst [vmem:[%s6 + $0x40] sm:$0xff] %v8185
  %8233 = vst [vmem:[%s6 + $0x48] sm:$0xff] %v8187
  %8234 = vst [vmem:[%s6 + $0x50] sm:$0xff] %v8190
  %8235 = vst [vmem:[%s6 + $0x58] sm:$0xff] %v8192
  %8236 = vst [vmem:[%s6 + $0x60] sm:$0xff] %v8195
  %8237 = vst [vmem:[%s6 + $0x68] sm:$0xff] %v8197
  %8238 = vst [vmem:[%s6 + $0x70] sm:$0xff] %v8200
  %8239 = vst [vmem:[%s6 + $0x78] sm:$0xff] %v8202
  %8240 = vst [vmem:[%s6 + $0x80] sm:$0xff] %v8205
  %8241 = vst [vmem:[%s6 + $0x88] sm:$0xff] %v8207
  %8242 = vst [vmem:[%s6 + $0x90] sm:$0xff] %v8210
  %8243 = vst [vmem:[%s6 + $0x98] sm:$0xff] %v8212
  %8244 = vst [vmem:[%s6 + $0xa0] sm:$0xff] %v8215
  %8245 = vst [vmem:[%s6 + $0xa8] sm:$0xff] %v8217
  %8246 = vst [vmem:[%s6 + $0xb0] sm:$0xff] %v8220
  %8247 = vst [vmem:[%s6 + $0xb8] sm:$0xff] %v8222
  // Predicated region
  $region26: #{discriminator_forward.1} parent=0 // pred_check
    _
  $region27: #{discriminator_forward.1} parent=0 // pred_check_branch
    %8249 = sbr.rel (0) target = $region29
  $region28: #{discriminator_forward.1} parent=0 // pred_region
    _
  $region29: #{discriminator_forward.1} parent=0 // pred_fallthru
    _
  // Predicated region
  $region30: #{discriminator_forward.1} parent=0 // pred_check
    _
  $region31: #{discriminator_forward.1} parent=0 // pred_check_branch
    %8251 = sbr.rel (0) target = $region33
  $region32: #{discriminator_forward.1} parent=0 // pred_region
    _
  $region33: #{discriminator_forward.1} parent=0 // pred_fallthru
    _

</llo_original>
